<compile_context>
chip_gen: v6e
topology: v6e:2x2x1
jax: 0.10.0
libtpu: 0.0.40
codegen_flags: <defaults>
</compile_context>

<pallas_src>
import numpy as np

import jax
import jax.numpy as jnp
from jax.experimental import pallas as pl
from jax.experimental.pallas import tpu as pltpu


# ----------------------------- static network dims --------------------------
H, W, CIN = 32, 32, 3                  # input spatial / channels (NCHW input)
K1, C1 = 3, 32                         # conv1: 3x3, 32 output channels
K2, C2 = 5, 64                         # conv2: 5x5, 64 output channels
OH1, OW1 = H - K1 + 1, W - K1 + 1      # 30, 30  conv1 output
PH1, PW1 = OH1 // 2, OW1 // 2          # 15, 15  after 2x2 max-pool
OH2, OW2 = PH1 - K2 + 1, PW1 - K2 + 1  # 11, 11  conv2 output
PH2, PW2 = OH2 // 2, OW2 // 2          # 5, 5    after 2x2 max-pool
HID = 32                               # hidden width of the MLP head

F1 = PW1 * C1                          # 480 lanes = (pooled x position, chan)
F2 = PW2 * C2                          # 320 lanes


# ------------------------------- fused kernel --------------------------------
def _fused_net_kernel(x_ref, t1e_ref, t1o_ref, t2e_ref, t2o_ref,
                      b1_ref, b2_ref, w1_ref, bh1_ref, w2_ref, bh2_ref, o_ref):
    """One batch element per grid step; everything stays in VMEM."""
    f32 = jnp.float32
    xs = x_ref[0]                                          # (H, W*CIN) = (32, 96)

    # ---- conv1 + 2x2 max-pool ----------------------------------------------
    # Even / odd output columns come from two Toeplitz operands, so the
    # width-pool is a plain element-wise max (pure VPU, no strided slicing).
    ce = jnp.zeros((OH1, F1), f32)
    co = jnp.zeros((OH1, F1), f32)
    for dy in range(K1):                                   # static unroll (3)
        lhs = xs[dy:dy + OH1, :]                           # (30, 96)
        ce = ce + jnp.dot(lhs, t1e_ref[dy], preferred_element_type=f32)
        co = co + jnp.dot(lhs, t1o_ref[dy], preferred_element_type=f32)
    cw = jnp.maximum(ce, co)                               # (30, 480) width-pooled
    # Height pooling = max over adjacent row pairs; conv1 bias is constant
    # inside each pooling window so it commutes with the max and is added once.
    p1 = jnp.concatenate(
        [jnp.maximum(cw[2 * i:2 * i + 1, :], cw[2 * i + 1:2 * i + 2, :])
         for i in range(PH1)], axis=0) + b1_ref[...]       # (15, 480)

    # ---- conv2 + 2x2 max-pool ----------------------------------------------
    # Only the 2*PH2 = 10 conv2 rows consumed by the floor-mode pool are
    # computed (row 10 of the 11-row conv2 output is dropped by MaxPool2d).
    de = jnp.zeros((2 * PH2, F2), f32)
    do = jnp.zeros((2 * PH2, F2), f32)
    for dy in range(K2):                                   # static unroll (5)
        lhs = p1[dy:dy + 2 * PH2, :]                       # (10, 480)
        de = de + jnp.dot(lhs, t2e_ref[dy], preferred_element_type=f32)
        do = do + jnp.dot(lhs, t2o_ref[dy], preferred_element_type=f32)
    dw = jnp.maximum(de, do)                               # (10, 320) width-pooled
    p2 = jnp.concatenate(
        [jnp.maximum(dw[2 * i:2 * i + 1, :], dw[2 * i + 1:2 * i + 2, :])
         for i in range(PH2)], axis=0) + b2_ref[...]       # (5, 320)

    # Dropout2d(p=0.1): identity at inference time.
    # TODO(synk): training-mode channel dropout (RNG mask) not implemented.

    # ---- adaptive max pool (1,1) + flatten ----------------------------------
    g = jnp.max(p2, axis=0, keepdims=True)                 # (1, 320) height max
    feat = g[:, 0:C2]
    for qx in range(1, PW2):                               # width max per channel
        feat = jnp.maximum(feat, g[:, qx * C2:(qx + 1) * C2])   # (1, 64)

    # ---- linear -> relu -> linear -> sigmoid --------------------------------
    h = jnp.maximum(
        jnp.dot(feat, w1_ref[...], preferred_element_type=f32) + bh1_ref[...],
        0.0)                                               # (1, 32)
    z = jnp.dot(h, w2_ref[...], preferred_element_type=f32) + bh2_ref[...]
    o_ref[0] = jax.nn.sigmoid(z)                           # (1, 1)


# ------------------------------ forward wrapper ------------------------------
def _resident(shape):
    """Full-array block with a constant index map -> stays resident in VMEM."""
    return pl.BlockSpec(shape, lambda i, _nd=len(shape): (0,) * _nd)


@jax.jit
def net_forward(x_nchw, packed):
    n = x_nchw.shape[0]
    # Tiny host-side layout prep: NCHW -> (N, H, W*CIN) with channels minor.
    x3 = jnp.transpose(x_nchw, (0, 2, 3, 1)).reshape(n, H, W * CIN)

    out = pl.pallas_call(
        _fused_net_kernel,
        out_shape=jax.ShapeDtypeStruct((n, 1, 1), jnp.float32),
        grid=(n,),
        in_specs=[
            pl.BlockSpec((1, H, W * CIN), lambda i: (i, 0, 0)),   # activations
            _resident((K1, W * CIN, F1)),                         # conv1 Toeplitz even
            _resident((K1, W * CIN, F1)),                         # conv1 Toeplitz odd
            _resident((K2, F1, F2)),                              # conv2 Toeplitz even
            _resident((K2, F1, F2)),                              # conv2 Toeplitz odd
            _resident((1, F1)),                                   # conv1 bias (tiled)
            _resident((1, F2)),                                   # conv2 bias (tiled)
            _resident((C2, HID)),                                 # linear1 weight.T
            _resident((1, HID)),                                  # linear1 bias
            _resident((HID, 1)),                                  # linear2 weight.T
            _resident((1, 1)),                                    # linear2 bias
        ],
        out_specs=pl.BlockSpec((1, 1, 1), lambda i: (i, 0, 0)),
        compiler_params=pltpu.CompilerParams(
            dimension_semantics=("parallel",),        # v7x: one sample per core
            vmem_limit_bytes=48 * 1024 * 1024,
        ),
    )(x3, packed["t1e"], packed["t1o"], packed["t2e"], packed["t2o"],
      packed["b1t"], packed["b2t"], packed["w1t"], packed["bh1"],
      packed["w2t"], packed["bh2"])
    return out.reshape(n, 1)


# -------------------------- one-time parameter packing -----------------------
def pack_params(params):
    """Expand the conv kernels into MXU-friendly 'Toeplitz' operands (host,
    once per set of weights).  Column blocks are split by output-x parity so
    the 2x2 max-pool becomes a pure element-wise max inside the kernel."""
    w1 = np.asarray(params["w_conv1"], np.float32)        # (C1, CIN, K1, K1)
    bc1 = np.asarray(params["b_conv1"], np.float32)       # (C1,)
    w2 = np.asarray(params["w_conv2"], np.float32)        # (C2, C1, K2, K2)
    bc2 = np.asarray(params["b_conv2"], np.float32)       # (C2,)

    # conv1: rows = (input x position, input channel), cols = (pooled x, out chan)
    t1e = np.zeros((K1, W * CIN, F1), np.float32)
    t1o = np.zeros((K1, W * CIN, F1), np.float32)
    for dy in range(K1):
        for dx in range(K1):
            blk = w1[:, :, dy, dx].T                      # (CIN, C1)
            for px in range(PW1):
                we = 2 * px + dx                          # even output column 2*px
                wo = 2 * px + 1 + dx                      # odd  output column 2*px+1
                t1e[dy, we * CIN:(we + 1) * CIN, px * C1:(px + 1) * C1] = blk
                t1o[dy, wo * CIN:(wo + 1) * CIN, px * C1:(px + 1) * C1] = blk

    # conv2: rows = (pooled x, channel) of conv1, cols = (pooled x, out channel)
    t2e = np.zeros((K2, F1, F2), np.float32)
    t2o = np.zeros((K2, F1, F2), np.float32)
    for dy in range(K2):
        for dx in range(K2):
            blk = w2[:, :, dy, dx].T                      # (C1, C2)
            for qx in range(PW2):
                we = 2 * qx + dx
                wo = 2 * qx + 1 + dx
                t2e[dy, we * C1:(we + 1) * C1, qx * C2:(qx + 1) * C2] = blk
                t2o[dy, wo * C1:(wo + 1) * C1, qx * C2:(qx + 1) * C2] = blk

    return {
        "t1e": jnp.asarray(t1e), "t1o": jnp.asarray(t1o),
        "t2e": jnp.asarray(t2e), "t2o": jnp.asarray(t2o),
        "b1t": jnp.asarray(np.tile(bc1, PW1)[None, :]),   # (1, 480)
        "b2t": jnp.asarray(np.tile(bc2, PW2)[None, :]),   # (1, 320)
        "w1t": params["w1t"], "bh1": params["b1"],
        "w2t": params["w2t"], "bh2": params["b2"],
    }


# ------------------------------- params / reference --------------------------
def init_params(key):
    ks = jax.random.split(key, 8)
    return {
        "w_conv1": 0.1 * jax.random.normal(ks[0], (C1, CIN, K1, K1), jnp.float32),
        "b_conv1": 0.1 * jax.random.normal(ks[1], (C1,), jnp.float32),
        "w_conv2": 0.05 * jax.random.normal(ks[2], (C2, C1, K2, K2), jnp.float32),
        "b_conv2": 0.1 * jax.random.normal(ks[3], (C2,), jnp.float32),
        # Linear weights stored pre-transposed: (in, out)
        "w1t": 0.1 * jax.random.normal(ks[4], (C2, HID), jnp.float32),
        "b1": 0.1 * jax.random.normal(ks[5], (1, HID), jnp.float32),
        "w2t": 0.1 * jax.random.normal(ks[6], (HID, 1), jnp.float32),
        "b2": 0.1 * jax.random.normal(ks[7], (1, 1), jnp.float32),
    }


def reference_forward(x, params):
    """Pure-JAX reference of the PyTorch module (eval mode), for sanity check."""
    hi = jax.lax.Precision.HIGHEST
    y = jax.lax.conv_general_dilated(
        x, params["w_conv1"], window_strides=(1, 1), padding="VALID",
        dimension_numbers=("NCHW", "OIHW", "NCHW"), precision=hi)
    y = y + params["b_conv1"][None, :, None, None]
    y = jax.lax.reduce_window(y, -jnp.inf, jax.lax.max,
                              window_dimensions=(1, 1, 2, 2),
                              window_strides=(1, 1, 2, 2), padding="VALID")
    y = jax.lax.conv_general_dilated(
        y, params["w_conv2"], window_strides=(1, 1), padding="VALID",
        dimension_numbers=("NCHW", "OIHW", "NCHW"), precision=hi)
    y = y + params["b_conv2"][None, :, None, None]
    y = jax.lax.reduce_window(y, -jnp.inf, jax.lax.max,
                              window_dimensions=(1, 1, 2, 2),
                              window_strides=(1, 1, 2, 2), padding="VALID")
    y = jnp.max(y, axis=(2, 3))                            # adaptive pool + flatten
    y = jnp.maximum(y @ params["w1t"] + params["b1"], 0.0)
    return jax.nn.sigmoid(y @ params["w2t"] + params["b2"])


if __name__ == "__main__":
    key = jax.random.PRNGKey(0)
    k_in, k_par = jax.random.split(key)
    x = jax.random.normal(k_in, (2, CIN, H, W), jnp.float32)   # NCHW, like torch
    params = init_params(k_par)
    packed = pack_params(params)                               # one-time host prep

    y = net_forward(x, packed)
    y = jax.block_until_ready(y)

    assert y.shape == (2, 1) and y.dtype == jnp.float32
    assert bool(jnp.all((y >= 0.0) & (y <= 1.0)))

    # Loose-tolerance sanity check vs. a pure-JAX reference (tolerates MXU vs.
    # XLA conv precision differences, catches structural/indexing errors).
    y_ref = jax.block_until_ready(reference_forward(x, params))
    assert float(jnp.max(jnp.abs(y - y_ref))) < 5e-2

    print("KERNEL_OK")
</pallas_src>

<mosaic_0001>
module attributes {stable_mosaic.version = 11 : i64} {
  func.func @_fused_net_kernel(%arg0: i32, %arg1: memref<1x32x96xf32, #tpu.memory_space<vmem>>, %arg2: memref<3x96x480xf32, #tpu.memory_space<vmem>>, %arg3: memref<3x96x480xf32, #tpu.memory_space<vmem>>, %arg4: memref<5x480x320xf32, #tpu.memory_space<vmem>>, %arg5: memref<5x480x320xf32, #tpu.memory_space<vmem>>, %arg6: memref<1x480xf32, #tpu.memory_space<vmem>>, %arg7: memref<1x320xf32, #tpu.memory_space<vmem>>, %arg8: memref<64x32xf32, #tpu.memory_space<vmem>>, %arg9: memref<1x32xf32, #tpu.memory_space<vmem>>, %arg10: memref<32x1xf32, #tpu.memory_space<vmem>>, %arg11: memref<1x1xf32, #tpu.memory_space<vmem>>, %arg12: memref<1x1x1xf32, #tpu.memory_space<vmem>>) attributes {dimension_semantics = [#tpu.dimension_semantics<parallel>], iteration_bounds = array<i64: 2>, scalar_prefetch = 0 : i64, scratch_operands = 0 : i64, tpu.core_type = #tpu.core_type<tc>, window_params = [{transform_indices = @transform_0, window_bounds = array<i64: 1, 32, 96>}, {pipeline_mode = #tpu.pipeline_mode<synchronous>, transform_indices = @transform_1, window_bounds = array<i64: 3, 96, 480>}, {pipeline_mode = #tpu.pipeline_mode<synchronous>, transform_indices = @transform_2, window_bounds = array<i64: 3, 96, 480>}, {pipeline_mode = #tpu.pipeline_mode<synchronous>, transform_indices = @transform_3, window_bounds = array<i64: 5, 480, 320>}, {pipeline_mode = #tpu.pipeline_mode<synchronous>, transform_indices = @transform_4, window_bounds = array<i64: 5, 480, 320>}, {pipeline_mode = #tpu.pipeline_mode<synchronous>, transform_indices = @transform_5, window_bounds = array<i64: 1, 480>}, {pipeline_mode = #tpu.pipeline_mode<synchronous>, transform_indices = @transform_6, window_bounds = array<i64: 1, 320>}, {pipeline_mode = #tpu.pipeline_mode<synchronous>, transform_indices = @transform_7, window_bounds = array<i64: 64, 32>}, {pipeline_mode = #tpu.pipeline_mode<synchronous>, transform_indices = @transform_8, window_bounds = array<i64: 1, 32>}, {pipeline_mode = #tpu.pipeline_mode<synchronous>, transform_indices = @transform_9, window_bounds = array<i64: 32, 1>}, {pipeline_mode = #tpu.pipeline_mode<synchronous>, transform_indices = @transform_10, window_bounds = array<i64: 1, 1>}, {transform_indices = @transform_11, window_bounds = array<i64: 1, 1, 1>}]} {
    %c0 = arith.constant 0 : index
    %c0_0 = arith.constant 0 : index
    %c0_1 = arith.constant 0 : index
    %0 = vector.load %arg1[%c0, %c0_0, %c0_1] : memref<1x32x96xf32, #tpu.memory_space<vmem>>, vector<1x32x96xf32>
    %1 = vector.shape_cast %0 : vector<1x32x96xf32> to vector<32x96xf32>
    %cst = arith.constant 0.000000e+00 : f32
    %2 = vector.broadcast %cst : f32 to vector<30x480xf32>
    %cst_2 = arith.constant 0.000000e+00 : f32
    %3 = vector.broadcast %cst_2 : f32 to vector<30x480xf32>
    %4 = vector.extract_strided_slice %1 {offsets = [0, 0], sizes = [30, 96], strides = [1, 1]} : vector<32x96xf32> to vector<30x96xf32>
    %c0_3 = arith.constant 0 : index
    %c0_4 = arith.constant 0 : index
    %c0_5 = arith.constant 0 : index
    %5 = vector.load %arg2[%c0_3, %c0_4, %c0_5] : memref<3x96x480xf32, #tpu.memory_space<vmem>>, vector<1x96x480xf32>
    %6 = vector.shape_cast %5 : vector<1x96x480xf32> to vector<96x480xf32>
    %cst_6 = arith.constant dense<0.000000e+00> : vector<30x480xf32>
    %7 = tpu.matmul %4, %6, %cst_6 {dimension_numbers = #tpu.dot_dimension_numbers<[1], [0], [0], [1], [0, 0, 1, 1], [], []>} : vector<30x96xf32>, vector<96x480xf32>, vector<30x480xf32> -> vector<30x480xf32>
    %8 = arith.addf %2, %7 : vector<30x480xf32>
    %c0_7 = arith.constant 0 : index
    %c0_8 = arith.constant 0 : index
    %c0_9 = arith.constant 0 : index
    %9 = vector.load %arg3[%c0_7, %c0_8, %c0_9] : memref<3x96x480xf32, #tpu.memory_space<vmem>>, vector<1x96x480xf32>
    %10 = vector.shape_cast %9 : vector<1x96x480xf32> to vector<96x480xf32>
    %cst_10 = arith.constant dense<0.000000e+00> : vector<30x480xf32>
    %11 = tpu.matmul %4, %10, %cst_10 {dimension_numbers = #tpu.dot_dimension_numbers<[1], [0], [0], [1], [0, 0, 1, 1], [], []>} : vector<30x96xf32>, vector<96x480xf32>, vector<30x480xf32> -> vector<30x480xf32>
    %12 = arith.addf %3, %11 : vector<30x480xf32>
    %13 = vector.extract_strided_slice %1 {offsets = [1, 0], sizes = [30, 96], strides = [1, 1]} : vector<32x96xf32> to vector<30x96xf32>
    %c1 = arith.constant 1 : index
    %c0_11 = arith.constant 0 : index
    %c0_12 = arith.constant 0 : index
    %14 = vector.load %arg2[%c1, %c0_11, %c0_12] : memref<3x96x480xf32, #tpu.memory_space<vmem>>, vector<1x96x480xf32>
    %15 = vector.shape_cast %14 : vector<1x96x480xf32> to vector<96x480xf32>
    %cst_13 = arith.constant dense<0.000000e+00> : vector<30x480xf32>
    %16 = tpu.matmul %13, %15, %cst_13 {dimension_numbers = #tpu.dot_dimension_numbers<[1], [0], [0], [1], [0, 0, 1, 1], [], []>} : vector<30x96xf32>, vector<96x480xf32>, vector<30x480xf32> -> vector<30x480xf32>
    %17 = arith.addf %8, %16 : vector<30x480xf32>
    %c1_14 = arith.constant 1 : index
    %c0_15 = arith.constant 0 : index
    %c0_16 = arith.constant 0 : index
    %18 = vector.load %arg3[%c1_14, %c0_15, %c0_16] : memref<3x96x480xf32, #tpu.memory_space<vmem>>, vector<1x96x480xf32>
    %19 = vector.shape_cast %18 : vector<1x96x480xf32> to vector<96x480xf32>
    %cst_17 = arith.constant dense<0.000000e+00> : vector<30x480xf32>
    %20 = tpu.matmul %13, %19, %cst_17 {dimension_numbers = #tpu.dot_dimension_numbers<[1], [0], [0], [1], [0, 0, 1, 1], [], []>} : vector<30x96xf32>, vector<96x480xf32>, vector<30x480xf32> -> vector<30x480xf32>
    %21 = arith.addf %12, %20 : vector<30x480xf32>
    %22 = vector.extract_strided_slice %1 {offsets = [2, 0], sizes = [30, 96], strides = [1, 1]} : vector<32x96xf32> to vector<30x96xf32>
    %c2 = arith.constant 2 : index
    %c0_18 = arith.constant 0 : index
    %c0_19 = arith.constant 0 : index
    %23 = vector.load %arg2[%c2, %c0_18, %c0_19] : memref<3x96x480xf32, #tpu.memory_space<vmem>>, vector<1x96x480xf32>
    %24 = vector.shape_cast %23 : vector<1x96x480xf32> to vector<96x480xf32>
    %cst_20 = arith.constant dense<0.000000e+00> : vector<30x480xf32>
    %25 = tpu.matmul %22, %24, %cst_20 {dimension_numbers = #tpu.dot_dimension_numbers<[1], [0], [0], [1], [0, 0, 1, 1], [], []>} : vector<30x96xf32>, vector<96x480xf32>, vector<30x480xf32> -> vector<30x480xf32>
    %26 = arith.addf %17, %25 : vector<30x480xf32>
    %c2_21 = arith.constant 2 : index
    %c0_22 = arith.constant 0 : index
    %c0_23 = arith.constant 0 : index
    %27 = vector.load %arg3[%c2_21, %c0_22, %c0_23] : memref<3x96x480xf32, #tpu.memory_space<vmem>>, vector<1x96x480xf32>
    %28 = vector.shape_cast %27 : vector<1x96x480xf32> to vector<96x480xf32>
    %cst_24 = arith.constant dense<0.000000e+00> : vector<30x480xf32>
    %29 = tpu.matmul %22, %28, %cst_24 {dimension_numbers = #tpu.dot_dimension_numbers<[1], [0], [0], [1], [0, 0, 1, 1], [], []>} : vector<30x96xf32>, vector<96x480xf32>, vector<30x480xf32> -> vector<30x480xf32>
    %30 = arith.addf %21, %29 : vector<30x480xf32>
    %31 = arith.maximumf %26, %30 : vector<30x480xf32>
    %32 = vector.extract_strided_slice %31 {offsets = [0, 0], sizes = [1, 480], strides = [1, 1]} : vector<30x480xf32> to vector<1x480xf32>
    %33 = vector.extract_strided_slice %31 {offsets = [1, 0], sizes = [1, 480], strides = [1, 1]} : vector<30x480xf32> to vector<1x480xf32>
    %34 = arith.maximumf %32, %33 : vector<1x480xf32>
    %35 = vector.extract_strided_slice %31 {offsets = [2, 0], sizes = [1, 480], strides = [1, 1]} : vector<30x480xf32> to vector<1x480xf32>
    %36 = vector.extract_strided_slice %31 {offsets = [3, 0], sizes = [1, 480], strides = [1, 1]} : vector<30x480xf32> to vector<1x480xf32>
    %37 = arith.maximumf %35, %36 : vector<1x480xf32>
    %38 = vector.extract_strided_slice %31 {offsets = [4, 0], sizes = [1, 480], strides = [1, 1]} : vector<30x480xf32> to vector<1x480xf32>
    %39 = vector.extract_strided_slice %31 {offsets = [5, 0], sizes = [1, 480], strides = [1, 1]} : vector<30x480xf32> to vector<1x480xf32>
    %40 = arith.maximumf %38, %39 : vector<1x480xf32>
    %41 = vector.extract_strided_slice %31 {offsets = [6, 0], sizes = [1, 480], strides = [1, 1]} : vector<30x480xf32> to vector<1x480xf32>
    %42 = vector.extract_strided_slice %31 {offsets = [7, 0], sizes = [1, 480], strides = [1, 1]} : vector<30x480xf32> to vector<1x480xf32>
    %43 = arith.maximumf %41, %42 : vector<1x480xf32>
    %44 = vector.extract_strided_slice %31 {offsets = [8, 0], sizes = [1, 480], strides = [1, 1]} : vector<30x480xf32> to vector<1x480xf32>
    %45 = vector.extract_strided_slice %31 {offsets = [9, 0], sizes = [1, 480], strides = [1, 1]} : vector<30x480xf32> to vector<1x480xf32>
    %46 = arith.maximumf %44, %45 : vector<1x480xf32>
    %47 = vector.extract_strided_slice %31 {offsets = [10, 0], sizes = [1, 480], strides = [1, 1]} : vector<30x480xf32> to vector<1x480xf32>
    %48 = vector.extract_strided_slice %31 {offsets = [11, 0], sizes = [1, 480], strides = [1, 1]} : vector<30x480xf32> to vector<1x480xf32>
    %49 = arith.maximumf %47, %48 : vector<1x480xf32>
    %50 = vector.extract_strided_slice %31 {offsets = [12, 0], sizes = [1, 480], strides = [1, 1]} : vector<30x480xf32> to vector<1x480xf32>
    %51 = vector.extract_strided_slice %31 {offsets = [13, 0], sizes = [1, 480], strides = [1, 1]} : vector<30x480xf32> to vector<1x480xf32>
    %52 = arith.maximumf %50, %51 : vector<1x480xf32>
    %53 = vector.extract_strided_slice %31 {offsets = [14, 0], sizes = [1, 480], strides = [1, 1]} : vector<30x480xf32> to vector<1x480xf32>
    %54 = vector.extract_strided_slice %31 {offsets = [15, 0], sizes = [1, 480], strides = [1, 1]} : vector<30x480xf32> to vector<1x480xf32>
    %55 = arith.maximumf %53, %54 : vector<1x480xf32>
    %56 = vector.extract_strided_slice %31 {offsets = [16, 0], sizes = [1, 480], strides = [1, 1]} : vector<30x480xf32> to vector<1x480xf32>
    %57 = vector.extract_strided_slice %31 {offsets = [17, 0], sizes = [1, 480], strides = [1, 1]} : vector<30x480xf32> to vector<1x480xf32>
    %58 = arith.maximumf %56, %57 : vector<1x480xf32>
    %59 = vector.extract_strided_slice %31 {offsets = [18, 0], sizes = [1, 480], strides = [1, 1]} : vector<30x480xf32> to vector<1x480xf32>
    %60 = vector.extract_strided_slice %31 {offsets = [19, 0], sizes = [1, 480], strides = [1, 1]} : vector<30x480xf32> to vector<1x480xf32>
    %61 = arith.maximumf %59, %60 : vector<1x480xf32>
    %62 = vector.extract_strided_slice %31 {offsets = [20, 0], sizes = [1, 480], strides = [1, 1]} : vector<30x480xf32> to vector<1x480xf32>
    %63 = vector.extract_strided_slice %31 {offsets = [21, 0], sizes = [1, 480], strides = [1, 1]} : vector<30x480xf32> to vector<1x480xf32>
    %64 = arith.maximumf %62, %63 : vector<1x480xf32>
    %65 = vector.extract_strided_slice %31 {offsets = [22, 0], sizes = [1, 480], strides = [1, 1]} : vector<30x480xf32> to vector<1x480xf32>
    %66 = vector.extract_strided_slice %31 {offsets = [23, 0], sizes = [1, 480], strides = [1, 1]} : vector<30x480xf32> to vector<1x480xf32>
    %67 = arith.maximumf %65, %66 : vector<1x480xf32>
    %68 = vector.extract_strided_slice %31 {offsets = [24, 0], sizes = [1, 480], strides = [1, 1]} : vector<30x480xf32> to vector<1x480xf32>
    %69 = vector.extract_strided_slice %31 {offsets = [25, 0], sizes = [1, 480], strides = [1, 1]} : vector<30x480xf32> to vector<1x480xf32>
    %70 = arith.maximumf %68, %69 : vector<1x480xf32>
    %71 = vector.extract_strided_slice %31 {offsets = [26, 0], sizes = [1, 480], strides = [1, 1]} : vector<30x480xf32> to vector<1x480xf32>
    %72 = vector.extract_strided_slice %31 {offsets = [27, 0], sizes = [1, 480], strides = [1, 1]} : vector<30x480xf32> to vector<1x480xf32>
    %73 = arith.maximumf %71, %72 : vector<1x480xf32>
    %74 = vector.extract_strided_slice %31 {offsets = [28, 0], sizes = [1, 480], strides = [1, 1]} : vector<30x480xf32> to vector<1x480xf32>
    %75 = vector.extract_strided_slice %31 {offsets = [29, 0], sizes = [1, 480], strides = [1, 1]} : vector<30x480xf32> to vector<1x480xf32>
    %76 = arith.maximumf %74, %75 : vector<1x480xf32>
    %77 = tpu.concatenate %34, %37, %40, %43, %46, %49, %52, %55, %58, %61, %64, %67, %70, %73, %76 in 0 : vector<1x480xf32>, vector<1x480xf32>, vector<1x480xf32>, vector<1x480xf32>, vector<1x480xf32>, vector<1x480xf32>, vector<1x480xf32>, vector<1x480xf32>, vector<1x480xf32>, vector<1x480xf32>, vector<1x480xf32>, vector<1x480xf32>, vector<1x480xf32>, vector<1x480xf32>, vector<1x480xf32> -> vector<15x480xf32>
    %c0_25 = arith.constant 0 : index
    %c0_26 = arith.constant 0 : index
    %78 = vector.load %arg6[%c0_25, %c0_26] : memref<1x480xf32, #tpu.memory_space<vmem>>, vector<1x480xf32>
    %79 = vector.broadcast %78 : vector<1x480xf32> to vector<15x480xf32>
    %80 = arith.addf %77, %79 : vector<15x480xf32>
    %cst_27 = arith.constant 0.000000e+00 : f32
    %81 = vector.broadcast %cst_27 : f32 to vector<10x320xf32>
    %cst_28 = arith.constant 0.000000e+00 : f32
    %82 = vector.broadcast %cst_28 : f32 to vector<10x320xf32>
    %83 = vector.extract_strided_slice %80 {offsets = [0, 0], sizes = [10, 480], strides = [1, 1]} : vector<15x480xf32> to vector<10x480xf32>
    %c0_29 = arith.constant 0 : index
    %c0_30 = arith.constant 0 : index
    %c0_31 = arith.constant 0 : index
    %84 = vector.load %arg4[%c0_29, %c0_30, %c0_31] : memref<5x480x320xf32, #tpu.memory_space<vmem>>, vector<1x480x320xf32>
    %85 = vector.shape_cast %84 : vector<1x480x320xf32> to vector<480x320xf32>
    %cst_32 = arith.constant dense<0.000000e+00> : vector<10x320xf32>
    %86 = tpu.matmul %83, %85, %cst_32 {dimension_numbers = #tpu.dot_dimension_numbers<[1], [0], [0], [1], [0, 0, 1, 1], [], []>} : vector<10x480xf32>, vector<480x320xf32>, vector<10x320xf32> -> vector<10x320xf32>
    %87 = arith.addf %81, %86 : vector<10x320xf32>
    %c0_33 = arith.constant 0 : index
    %c0_34 = arith.constant 0 : index
    %c0_35 = arith.constant 0 : index
    %88 = vector.load %arg5[%c0_33, %c0_34, %c0_35] : memref<5x480x320xf32, #tpu.memory_space<vmem>>, vector<1x480x320xf32>
    %89 = vector.shape_cast %88 : vector<1x480x320xf32> to vector<480x320xf32>
    %cst_36 = arith.constant dense<0.000000e+00> : vector<10x320xf32>
    %90 = tpu.matmul %83, %89, %cst_36 {dimension_numbers = #tpu.dot_dimension_numbers<[1], [0], [0], [1], [0, 0, 1, 1], [], []>} : vector<10x480xf32>, vector<480x320xf32>, vector<10x320xf32> -> vector<10x320xf32>
    %91 = arith.addf %82, %90 : vector<10x320xf32>
    %92 = vector.extract_strided_slice %80 {offsets = [1, 0], sizes = [10, 480], strides = [1, 1]} : vector<15x480xf32> to vector<10x480xf32>
    %c1_37 = arith.constant 1 : index
    %c0_38 = arith.constant 0 : index
    %c0_39 = arith.constant 0 : index
    %93 = vector.load %arg4[%c1_37, %c0_38, %c0_39] : memref<5x480x320xf32, #tpu.memory_space<vmem>>, vector<1x480x320xf32>
    %94 = vector.shape_cast %93 : vector<1x480x320xf32> to vector<480x320xf32>
    %cst_40 = arith.constant dense<0.000000e+00> : vector<10x320xf32>
    %95 = tpu.matmul %92, %94, %cst_40 {dimension_numbers = #tpu.dot_dimension_numbers<[1], [0], [0], [1], [0, 0, 1, 1], [], []>} : vector<10x480xf32>, vector<480x320xf32>, vector<10x320xf32> -> vector<10x320xf32>
    %96 = arith.addf %87, %95 : vector<10x320xf32>
    %c1_41 = arith.constant 1 : index
    %c0_42 = arith.constant 0 : index
    %c0_43 = arith.constant 0 : index
    %97 = vector.load %arg5[%c1_41, %c0_42, %c0_43] : memref<5x480x320xf32, #tpu.memory_space<vmem>>, vector<1x480x320xf32>
    %98 = vector.shape_cast %97 : vector<1x480x320xf32> to vector<480x320xf32>
    %cst_44 = arith.constant dense<0.000000e+00> : vector<10x320xf32>
    %99 = tpu.matmul %92, %98, %cst_44 {dimension_numbers = #tpu.dot_dimension_numbers<[1], [0], [0], [1], [0, 0, 1, 1], [], []>} : vector<10x480xf32>, vector<480x320xf32>, vector<10x320xf32> -> vector<10x320xf32>
    %100 = arith.addf %91, %99 : vector<10x320xf32>
    %101 = vector.extract_strided_slice %80 {offsets = [2, 0], sizes = [10, 480], strides = [1, 1]} : vector<15x480xf32> to vector<10x480xf32>
    %c2_45 = arith.constant 2 : index
    %c0_46 = arith.constant 0 : index
    %c0_47 = arith.constant 0 : index
    %102 = vector.load %arg4[%c2_45, %c0_46, %c0_47] : memref<5x480x320xf32, #tpu.memory_space<vmem>>, vector<1x480x320xf32>
    %103 = vector.shape_cast %102 : vector<1x480x320xf32> to vector<480x320xf32>
    %cst_48 = arith.constant dense<0.000000e+00> : vector<10x320xf32>
    %104 = tpu.matmul %101, %103, %cst_48 {dimension_numbers = #tpu.dot_dimension_numbers<[1], [0], [0], [1], [0, 0, 1, 1], [], []>} : vector<10x480xf32>, vector<480x320xf32>, vector<10x320xf32> -> vector<10x320xf32>
    %105 = arith.addf %96, %104 : vector<10x320xf32>
    %c2_49 = arith.constant 2 : index
    %c0_50 = arith.constant 0 : index
    %c0_51 = arith.constant 0 : index
    %106 = vector.load %arg5[%c2_49, %c0_50, %c0_51] : memref<5x480x320xf32, #tpu.memory_space<vmem>>, vector<1x480x320xf32>
    %107 = vector.shape_cast %106 : vector<1x480x320xf32> to vector<480x320xf32>
    %cst_52 = arith.constant dense<0.000000e+00> : vector<10x320xf32>
    %108 = tpu.matmul %101, %107, %cst_52 {dimension_numbers = #tpu.dot_dimension_numbers<[1], [0], [0], [1], [0, 0, 1, 1], [], []>} : vector<10x480xf32>, vector<480x320xf32>, vector<10x320xf32> -> vector<10x320xf32>
    %109 = arith.addf %100, %108 : vector<10x320xf32>
    %110 = vector.extract_strided_slice %80 {offsets = [3, 0], sizes = [10, 480], strides = [1, 1]} : vector<15x480xf32> to vector<10x480xf32>
    %c3 = arith.constant 3 : index
    %c0_53 = arith.constant 0 : index
    %c0_54 = arith.constant 0 : index
    %111 = vector.load %arg4[%c3, %c0_53, %c0_54] : memref<5x480x320xf32, #tpu.memory_space<vmem>>, vector<1x480x320xf32>
    %112 = vector.shape_cast %111 : vector<1x480x320xf32> to vector<480x320xf32>
    %cst_55 = arith.constant dense<0.000000e+00> : vector<10x320xf32>
    %113 = tpu.matmul %110, %112, %cst_55 {dimension_numbers = #tpu.dot_dimension_numbers<[1], [0], [0], [1], [0, 0, 1, 1], [], []>} : vector<10x480xf32>, vector<480x320xf32>, vector<10x320xf32> -> vector<10x320xf32>
    %114 = arith.addf %105, %113 : vector<10x320xf32>
    %c3_56 = arith.constant 3 : index
    %c0_57 = arith.constant 0 : index
    %c0_58 = arith.constant 0 : index
    %115 = vector.load %arg5[%c3_56, %c0_57, %c0_58] : memref<5x480x320xf32, #tpu.memory_space<vmem>>, vector<1x480x320xf32>
    %116 = vector.shape_cast %115 : vector<1x480x320xf32> to vector<480x320xf32>
    %cst_59 = arith.constant dense<0.000000e+00> : vector<10x320xf32>
    %117 = tpu.matmul %110, %116, %cst_59 {dimension_numbers = #tpu.dot_dimension_numbers<[1], [0], [0], [1], [0, 0, 1, 1], [], []>} : vector<10x480xf32>, vector<480x320xf32>, vector<10x320xf32> -> vector<10x320xf32>
    %118 = arith.addf %109, %117 : vector<10x320xf32>
    %119 = vector.extract_strided_slice %80 {offsets = [4, 0], sizes = [10, 480], strides = [1, 1]} : vector<15x480xf32> to vector<10x480xf32>
    %c4 = arith.constant 4 : index
    %c0_60 = arith.constant 0 : index
    %c0_61 = arith.constant 0 : index
    %120 = vector.load %arg4[%c4, %c0_60, %c0_61] : memref<5x480x320xf32, #tpu.memory_space<vmem>>, vector<1x480x320xf32>
    %121 = vector.shape_cast %120 : vector<1x480x320xf32> to vector<480x320xf32>
    %cst_62 = arith.constant dense<0.000000e+00> : vector<10x320xf32>
    %122 = tpu.matmul %119, %121, %cst_62 {dimension_numbers = #tpu.dot_dimension_numbers<[1], [0], [0], [1], [0, 0, 1, 1], [], []>} : vector<10x480xf32>, vector<480x320xf32>, vector<10x320xf32> -> vector<10x320xf32>
    %123 = arith.addf %114, %122 : vector<10x320xf32>
    %c4_63 = arith.constant 4 : index
    %c0_64 = arith.constant 0 : index
    %c0_65 = arith.constant 0 : index
    %124 = vector.load %arg5[%c4_63, %c0_64, %c0_65] : memref<5x480x320xf32, #tpu.memory_space<vmem>>, vector<1x480x320xf32>
    %125 = vector.shape_cast %124 : vector<1x480x320xf32> to vector<480x320xf32>
    %cst_66 = arith.constant dense<0.000000e+00> : vector<10x320xf32>
    %126 = tpu.matmul %119, %125, %cst_66 {dimension_numbers = #tpu.dot_dimension_numbers<[1], [0], [0], [1], [0, 0, 1, 1], [], []>} : vector<10x480xf32>, vector<480x320xf32>, vector<10x320xf32> -> vector<10x320xf32>
    %127 = arith.addf %118, %126 : vector<10x320xf32>
    %128 = arith.maximumf %123, %127 : vector<10x320xf32>
    %129 = vector.extract_strided_slice %128 {offsets = [0, 0], sizes = [1, 320], strides = [1, 1]} : vector<10x320xf32> to vector<1x320xf32>
    %130 = vector.extract_strided_slice %128 {offsets = [1, 0], sizes = [1, 320], strides = [1, 1]} : vector<10x320xf32> to vector<1x320xf32>
    %131 = arith.maximumf %129, %130 : vector<1x320xf32>
    %132 = vector.extract_strided_slice %128 {offsets = [2, 0], sizes = [1, 320], strides = [1, 1]} : vector<10x320xf32> to vector<1x320xf32>
    %133 = vector.extract_strided_slice %128 {offsets = [3, 0], sizes = [1, 320], strides = [1, 1]} : vector<10x320xf32> to vector<1x320xf32>
    %134 = arith.maximumf %132, %133 : vector<1x320xf32>
    %135 = vector.extract_strided_slice %128 {offsets = [4, 0], sizes = [1, 320], strides = [1, 1]} : vector<10x320xf32> to vector<1x320xf32>
    %136 = vector.extract_strided_slice %128 {offsets = [5, 0], sizes = [1, 320], strides = [1, 1]} : vector<10x320xf32> to vector<1x320xf32>
    %137 = arith.maximumf %135, %136 : vector<1x320xf32>
    %138 = vector.extract_strided_slice %128 {offsets = [6, 0], sizes = [1, 320], strides = [1, 1]} : vector<10x320xf32> to vector<1x320xf32>
    %139 = vector.extract_strided_slice %128 {offsets = [7, 0], sizes = [1, 320], strides = [1, 1]} : vector<10x320xf32> to vector<1x320xf32>
    %140 = arith.maximumf %138, %139 : vector<1x320xf32>
    %141 = vector.extract_strided_slice %128 {offsets = [8, 0], sizes = [1, 320], strides = [1, 1]} : vector<10x320xf32> to vector<1x320xf32>
    %142 = vector.extract_strided_slice %128 {offsets = [9, 0], sizes = [1, 320], strides = [1, 1]} : vector<10x320xf32> to vector<1x320xf32>
    %143 = arith.maximumf %141, %142 : vector<1x320xf32>
    %144 = tpu.concatenate %131, %134, %137, %140, %143 in 0 : vector<1x320xf32>, vector<1x320xf32>, vector<1x320xf32>, vector<1x320xf32>, vector<1x320xf32> -> vector<5x320xf32>
    %c0_67 = arith.constant 0 : index
    %c0_68 = arith.constant 0 : index
    %145 = vector.load %arg7[%c0_67, %c0_68] : memref<1x320xf32, #tpu.memory_space<vmem>>, vector<1x320xf32>
    %146 = vector.broadcast %145 : vector<1x320xf32> to vector<5x320xf32>
    %147 = arith.addf %144, %146 : vector<5x320xf32>
    %cst_69 = arith.constant dense<0xFF800000> : vector<320xf32>
    %148 = vector.multi_reduction <maximumf>, %147, %cst_69 [0] : vector<5x320xf32> to vector<320xf32>
    %149 = vector.shape_cast %148 : vector<320xf32> to vector<1x320xf32>
    %150 = vector.extract_strided_slice %149 {offsets = [0, 0], sizes = [1, 64], strides = [1, 1]} : vector<1x320xf32> to vector<1x64xf32>
    %151 = vector.extract_strided_slice %149 {offsets = [0, 64], sizes = [1, 64], strides = [1, 1]} : vector<1x320xf32> to vector<1x64xf32>
    %152 = arith.maximumf %150, %151 : vector<1x64xf32>
    %153 = vector.extract_strided_slice %149 {offsets = [0, 128], sizes = [1, 64], strides = [1, 1]} : vector<1x320xf32> to vector<1x64xf32>
    %154 = arith.maximumf %152, %153 : vector<1x64xf32>
    %155 = vector.extract_strided_slice %149 {offsets = [0, 192], sizes = [1, 64], strides = [1, 1]} : vector<1x320xf32> to vector<1x64xf32>
    %156 = arith.maximumf %154, %155 : vector<1x64xf32>
    %157 = vector.extract_strided_slice %149 {offsets = [0, 256], sizes = [1, 64], strides = [1, 1]} : vector<1x320xf32> to vector<1x64xf32>
    %158 = arith.maximumf %156, %157 : vector<1x64xf32>
    %c0_70 = arith.constant 0 : index
    %c0_71 = arith.constant 0 : index
    %159 = vector.load %arg8[%c0_70, %c0_71] : memref<64x32xf32, #tpu.memory_space<vmem>>, vector<64x32xf32>
    %cst_72 = arith.constant dense<0.000000e+00> : vector<1x32xf32>
    %160 = tpu.matmul %158, %159, %cst_72 {dimension_numbers = #tpu.dot_dimension_numbers<[1], [0], [0], [1], [0, 0, 1, 1], [], []>} : vector<1x64xf32>, vector<64x32xf32>, vector<1x32xf32> -> vector<1x32xf32>
    %c0_73 = arith.constant 0 : index
    %c0_74 = arith.constant 0 : index
    %161 = vector.load %arg9[%c0_73, %c0_74] : memref<1x32xf32, #tpu.memory_space<vmem>>, vector<1x32xf32>
    %162 = arith.addf %160, %161 : vector<1x32xf32>
    %cst_75 = arith.constant 0.000000e+00 : f32
    %163 = vector.broadcast %cst_75 : f32 to vector<1x32xf32>
    %164 = arith.maximumf %162, %163 : vector<1x32xf32>
    %c0_76 = arith.constant 0 : index
    %c0_77 = arith.constant 0 : index
    %165 = vector.load %arg10[%c0_76, %c0_77] : memref<32x1xf32, #tpu.memory_space<vmem>>, vector<32x1xf32>
    %cst_78 = arith.constant dense<0.000000e+00> : vector<1x1xf32>
    %166 = tpu.matmul %164, %165, %cst_78 {dimension_numbers = #tpu.dot_dimension_numbers<[1], [0], [0], [1], [0, 0, 1, 1], [], []>} : vector<1x32xf32>, vector<32x1xf32>, vector<1x1xf32> -> vector<1x1xf32>
    %c0_79 = arith.constant 0 : index
    %c0_80 = arith.constant 0 : index
    %167 = vector.load %arg11[%c0_79, %c0_80] : memref<1x1xf32, #tpu.memory_space<vmem>>, vector<1x1xf32>
    %168 = arith.addf %166, %167 : vector<1x1xf32>
    %169 = arith.negf %168 : vector<1x1xf32>
    %170 = math.exp %169 : vector<1x1xf32>
    %cst_81 = arith.constant 1.000000e+00 : f32
    %171 = vector.broadcast %cst_81 : f32 to vector<1x1xf32>
    %172 = arith.addf %171, %170 : vector<1x1xf32>
    %173 = arith.divf %171, %172 : vector<1x1xf32>
    %c0_82 = arith.constant 0 : index
    %c0_83 = arith.constant 0 : index
    %c0_84 = arith.constant 0 : index
    %174 = vector.load %arg12[%c0_82, %c0_83, %c0_84] : memref<1x1x1xf32, #tpu.memory_space<vmem>>, vector<1x1x1xf32>
    %175 = vector.shape_cast %174 : vector<1x1x1xf32> to vector<1x1xf32>
    %176 = vector.shape_cast %173 : vector<1x1xf32> to vector<1x1x1xf32>
    tpu.vector_store %arg12[%c0_82, %c0_83, %c0_84], %176 {strides = array<i32>} : memref<1x1x1xf32, #tpu.memory_space<vmem>>, vector<1x1x1xf32>,
    return
  }
  func.func @transform_0(%arg0: i32) -> (i32, i32, i32) {
    %c0_i32 = arith.constant 0 : i32
    %c0_i32_0 = arith.constant 0 : i32
    %c0_i32_1 = arith.constant 0 : i32
    return %arg0, %c0_i32, %c0_i32_0 : i32, i32, i32
  }
  func.func @transform_1(%arg0: i32) -> (i32, i32, i32) {
    %c0_i32 = arith.constant 0 : i32
    %c0_i32_0 = arith.constant 0 : i32
    %c0_i32_1 = arith.constant 0 : i32
    %c0_i32_2 = arith.constant 0 : i32
    return %c0_i32, %c0_i32_0, %c0_i32_1 : i32, i32, i32
  }
  func.func @transform_2(%arg0: i32) -> (i32, i32, i32) {
    %c0_i32 = arith.constant 0 : i32
    %c0_i32_0 = arith.constant 0 : i32
    %c0_i32_1 = arith.constant 0 : i32
    %c0_i32_2 = arith.constant 0 : i32
    return %c0_i32, %c0_i32_0, %c0_i32_1 : i32, i32, i32
  }
  func.func @transform_3(%arg0: i32) -> (i32, i32, i32) {
    %c0_i32 = arith.constant 0 : i32
    %c0_i32_0 = arith.constant 0 : i32
    %c0_i32_1 = arith.constant 0 : i32
    %c0_i32_2 = arith.constant 0 : i32
    return %c0_i32, %c0_i32_0, %c0_i32_1 : i32, i32, i32
  }
  func.func @transform_4(%arg0: i32) -> (i32, i32, i32) {
    %c0_i32 = arith.constant 0 : i32
    %c0_i32_0 = arith.constant 0 : i32
    %c0_i32_1 = arith.constant 0 : i32
    %c0_i32_2 = arith.constant 0 : i32
    return %c0_i32, %c0_i32_0, %c0_i32_1 : i32, i32, i32
  }
  func.func @transform_5(%arg0: i32) -> (i32, i32) {
    %c0_i32 = arith.constant 0 : i32
    %c0_i32_0 = arith.constant 0 : i32
    %c0_i32_1 = arith.constant 0 : i32
    return %c0_i32, %c0_i32_0 : i32, i32
  }
  func.func @transform_6(%arg0: i32) -> (i32, i32) {
    %c0_i32 = arith.constant 0 : i32
    %c0_i32_0 = arith.constant 0 : i32
    %c0_i32_1 = arith.constant 0 : i32
    return %c0_i32, %c0_i32_0 : i32, i32
  }
  func.func @transform_7(%arg0: i32) -> (i32, i32) {
    %c0_i32 = arith.constant 0 : i32
    %c0_i32_0 = arith.constant 0 : i32
    %c0_i32_1 = arith.constant 0 : i32
    return %c0_i32, %c0_i32_0 : i32, i32
  }
  func.func @transform_8(%arg0: i32) -> (i32, i32) {
    %c0_i32 = arith.constant 0 : i32
    %c0_i32_0 = arith.constant 0 : i32
    %c0_i32_1 = arith.constant 0 : i32
    return %c0_i32, %c0_i32_0 : i32, i32
  }
  func.func @transform_9(%arg0: i32) -> (i32, i32) {
    %c0_i32 = arith.constant 0 : i32
    %c0_i32_0 = arith.constant 0 : i32
    %c0_i32_1 = arith.constant 0 : i32
    return %c0_i32, %c0_i32_0 : i32, i32
  }
  func.func @transform_10(%arg0: i32) -> (i32, i32) {
    %c0_i32 = arith.constant 0 : i32
    %c0_i32_0 = arith.constant 0 : i32
    %c0_i32_1 = arith.constant 0 : i32
    return %c0_i32, %c0_i32_0 : i32, i32
  }
  func.func @transform_11(%arg0: i32) -> (i32, i32, i32) {
    %c0_i32 = arith.constant 0 : i32
    %c0_i32_0 = arith.constant 0 : i32
    %c0_i32_1 = arith.constant 0 : i32
    return %arg0, %c0_i32, %c0_i32_0 : i32, i32, i32
  }
}

</mosaic_0001>

<llo_original>
// kernel: net_forward.1
$region0: #{net_forward.1}
  #allocation0 [shape = 'u32[]', space=smem, size = 0x4, offset = 0x4, fixed_abs, tag = 'smem constant byte address 0x4 - core index']
  #allocation1 [shape = 'u32[144,128]{1,0:T(1,128)}', space=vmem, size = 0x12000, scoped, tag = 'internal scratch']
  #allocation2 [shape = 'f32[1,1]{1,0:T(1,128)S(1)}', space=vmem, size = 0x200, scoped, tag = 'scoped memory for net_forward.1']
  %s0 = inlined_call_operand.vmem [shape: f32[2,32,96], index: 0, kind: input, shape index: {}]
  %s1 = inlined_call_operand.vmem [shape: f32[3,96,480], index: 1, kind: input, shape index: {}]
  %s2 = inlined_call_operand.vmem [shape: f32[3,96,480], index: 2, kind: input, shape index: {}]
  %s3 = inlined_call_operand.vmem [shape: f32[5,480,320], index: 3, kind: input, shape index: {}]
  %s4 = inlined_call_operand.vmem [shape: f32[5,480,320], index: 4, kind: input, shape index: {}]
  %s5 = inlined_call_operand.vmem [shape: f32[1,480], index: 5, kind: input, shape index: {}]
  %s6 = inlined_call_operand.vmem [shape: f32[1,320], index: 6, kind: input, shape index: {}]
  %s7 = inlined_call_operand.vmem [shape: f32[64,32], index: 7, kind: input, shape index: {}]
  %s8 = inlined_call_operand.vmem [shape: f32[1,32], index: 8, kind: input, shape index: {}]
  %s9 = inlined_call_operand.vmem [shape: f32[32,1], index: 9, kind: input, shape index: {}]
  %s10 = inlined_call_operand.<no memory space> [shape: f32[1,1], index: 10, kind: input, shape index: {}]
  %s11 = inlined_call_operand.vmem [shape: f32[2,1,1], index: 11, kind: output, shape index: {}]
  %s12 = sld [smem:[#allocation0]]
  $region77: #{net_forward.1} parent=0
    _
  %s14 = ssub.s32 1, %s12
  %s15 = scalar_select 0, %s14, %s12
  %v16 = vstv %s10
  %17 = vst [vmem:[#allocation2] sm:$0x1] %v16
  loop: start=0, step=1, limit=4
  $region2: #{net_forward.1} parent=0 // loop_pre_header
    _
  $region3: #{net_forward.1} parent=0 // loop_header
    %s19 = sphi 0, %s23
    %p20 = scmp.ge.s32.totalorder %s19, 4
    %s29 = sphi 0, %s31
    %s32 = sphi 0, %s29
    %s33 = sphi 0, %s32
    %s49 = sphi 0, %s33
    %s53 = sphi 0, %s53
    %s55 = sphi 0, %s53
    %s56 = sphi 0, %s55
    %s70 = sphi 0, %s56
    %s74 = sphi 0, %s74
    %s76 = sphi 0, %s74
    %s77 = sphi 0, %s76
    %s91 = sphi 0, %s77
    %s95 = sphi 0, %s95
    %s97 = sphi 0, %s95
    %s98 = sphi 0, %s97
    %s112 = sphi 0, %s98
    %s116 = sphi 0, %s116
    %s118 = sphi 0, %s116
    %s119 = sphi 0, %s118
    %s133 = sphi 0, %s119
    %s137 = sphi 0, %s137
    %s139 = sphi 0, %s137
    %s140 = sphi 0, %s139
    %s154 = sphi 0, %s140
    %s158 = sphi 0, %s158
    %s160 = sphi 0, %s158
    %s161 = sphi 0, %s160
    %s175 = sphi 0, %s161
    %s179 = sphi 0, %s179
    %s181 = sphi 0, %s179
    %s182 = sphi 0, %s181
    %s196 = sphi 0, %s182
    %s200 = sphi 0, %s200
    %s202 = sphi 0, %s200
    %s203 = sphi 0, %s202
    %s217 = sphi 0, %s203
    %s221 = sphi 0, %s221
    %s223 = sphi 0, %s221
    %s224 = sphi 0, %s223
    %s238 = sphi 0, %s224
    %s242 = sphi 0, %s242
    %s244 = sphi 0, %s242
    %s245 = sphi 0, %s244
    %s259 = sphi 0, %s245
    %s265 = sphi 0, %s267
    %s268 = sphi 0, %s265
    %s269 = sphi 0, %s268
    %s285 = sphi 0, %s269
  $region4: #{net_forward.1} parent=0 // loop_header_branch
    %22 = sbr.rel (%p20) target = $region8
  $region5: #{net_forward.1} parent=0 // loop_body
    %s24 = ssub.s32 %s19, 1
    %s25 = ssub.s32 %s19, 2
    %s26 = sadd.s32 %s19, 1
    %s27 = ssub.s32 %s19, %s26
    %p28 = scmp.eq.s32.totalorder %s27, 0
    %s30 = sadd.s32 %s29, 1
    %s31 = scalar_select %p28, %s29, %s30
    %p34 = pneg %p28
    %p35 = scmp.eq.s32.totalorder %s19, 1
    %p36 = por %p34, %p35
    %p37 = scmp.ne.s32.totalorder %s29, %s32
    %p38 = scmp.eq.s32.totalorder %s19, 0
    %p39 = por %p37, %p38
    %p40 = scmp.ne.s32.totalorder %s29, %s32
    %p41 = scmp.eq.s32.totalorder %s24, 1
    %p42 = por %p40, %p41
    %p43 = scmp.ne.s32.totalorder %s32, %s33
    %p44 = scmp.eq.s32.totalorder %s24, 0
    %p45 = por %p43, %p44
    %p46 = scmp.ne.s32.totalorder %s32, %s33
    %p47 = scmp.eq.s32.totalorder %s25, 1
    %p48 = por %p46, %p47
    %p50 = scmp.ne.s32.totalorder %s33, %s49
    %p51 = scmp.eq.s32.totalorder %s25, 0
    %p52 = por %p50, %p51
    %s54 = sadd.s32 %s53, 1
    %p57 = scmp.eq.s32.totalorder %s19, 1
    %p58 = scmp.ne.s32.totalorder %s53, %s55
    %p59 = scmp.eq.s32.totalorder %s19, 0
    %p60 = por %p58, %p59
    %p61 = scmp.ne.s32.totalorder %s53, %s55
    %p62 = scmp.eq.s32.totalorder %s24, 1
    %p63 = por %p61, %p62
    %p64 = scmp.ne.s32.totalorder %s55, %s56
    %p65 = scmp.eq.s32.totalorder %s24, 0
    %p66 = por %p64, %p65
    %p67 = scmp.ne.s32.totalorder %s55, %s56
    %p68 = scmp.eq.s32.totalorder %s25, 1
    %p69 = por %p67, %p68
    %p71 = scmp.ne.s32.totalorder %s56, %s70
    %p72 = scmp.eq.s32.totalorder %s25, 0
    %p73 = por %p71, %p72
    %s75 = sadd.s32 %s74, 1
    %p78 = scmp.eq.s32.totalorder %s19, 1
    %p79 = scmp.ne.s32.totalorder %s74, %s76
    %p80 = scmp.eq.s32.totalorder %s19, 0
    %p81 = por %p79, %p80
    %p82 = scmp.ne.s32.totalorder %s74, %s76
    %p83 = scmp.eq.s32.totalorder %s24, 1
    %p84 = por %p82, %p83
    %p85 = scmp.ne.s32.totalorder %s76, %s77
    %p86 = scmp.eq.s32.totalorder %s24, 0
    %p87 = por %p85, %p86
    %p88 = scmp.ne.s32.totalorder %s76, %s77
    %p89 = scmp.eq.s32.totalorder %s25, 1
    %p90 = por %p88, %p89
    %p92 = scmp.ne.s32.totalorder %s77, %s91
    %p93 = scmp.eq.s32.totalorder %s25, 0
    %p94 = por %p92, %p93
    %s96 = sadd.s32 %s95, 1
    %p99 = scmp.eq.s32.totalorder %s19, 1
    %p100 = scmp.ne.s32.totalorder %s95, %s97
    %p101 = scmp.eq.s32.totalorder %s19, 0
    %p102 = por %p100, %p101
    %p103 = scmp.ne.s32.totalorder %s95, %s97
    %p104 = scmp.eq.s32.totalorder %s24, 1
    %p105 = por %p103, %p104
    %p106 = scmp.ne.s32.totalorder %s97, %s98
    %p107 = scmp.eq.s32.totalorder %s24, 0
    %p108 = por %p106, %p107
    %p109 = scmp.ne.s32.totalorder %s97, %s98
    %p110 = scmp.eq.s32.totalorder %s25, 1
    %p111 = por %p109, %p110
    %p113 = scmp.ne.s32.totalorder %s98, %s112
    %p114 = scmp.eq.s32.totalorder %s25, 0
    %p115 = por %p113, %p114
    %s117 = sadd.s32 %s116, 1
    %p120 = scmp.eq.s32.totalorder %s19, 1
    %p121 = scmp.ne.s32.totalorder %s116, %s118
    %p122 = scmp.eq.s32.totalorder %s19, 0
    %p123 = por %p121, %p122
    %p124 = scmp.ne.s32.totalorder %s116, %s118
    %p125 = scmp.eq.s32.totalorder %s24, 1
    %p126 = por %p124, %p125
    %p127 = scmp.ne.s32.totalorder %s118, %s119
    %p128 = scmp.eq.s32.totalorder %s24, 0
    %p129 = por %p127, %p128
    %p130 = scmp.ne.s32.totalorder %s118, %s119
    %p131 = scmp.eq.s32.totalorder %s25, 1
    %p132 = por %p130, %p131
    %p134 = scmp.ne.s32.totalorder %s119, %s133
    %p135 = scmp.eq.s32.totalorder %s25, 0
    %p136 = por %p134, %p135
    %s138 = sadd.s32 %s137, 1
    %p141 = scmp.eq.s32.totalorder %s19, 1
    %p142 = scmp.ne.s32.totalorder %s137, %s139
    %p143 = scmp.eq.s32.totalorder %s19, 0
    %p144 = por %p142, %p143
    %p145 = scmp.ne.s32.totalorder %s137, %s139
    %p146 = scmp.eq.s32.totalorder %s24, 1
    %p147 = por %p145, %p146
    %p148 = scmp.ne.s32.totalorder %s139, %s140
    %p149 = scmp.eq.s32.totalorder %s24, 0
    %p150 = por %p148, %p149
    %p151 = scmp.ne.s32.totalorder %s139, %s140
    %p152 = scmp.eq.s32.totalorder %s25, 1
    %p153 = por %p151, %p152
    %p155 = scmp.ne.s32.totalorder %s140, %s154
    %p156 = scmp.eq.s32.totalorder %s25, 0
    %p157 = por %p155, %p156
    %s159 = sadd.s32 %s158, 1
    %p162 = scmp.eq.s32.totalorder %s19, 1
    %p163 = scmp.ne.s32.totalorder %s158, %s160
    %p164 = scmp.eq.s32.totalorder %s19, 0
    %p165 = por %p163, %p164
    %p166 = scmp.ne.s32.totalorder %s158, %s160
    %p167 = scmp.eq.s32.totalorder %s24, 1
    %p168 = por %p166, %p167
    %p169 = scmp.ne.s32.totalorder %s160, %s161
    %p170 = scmp.eq.s32.totalorder %s24, 0
    %p171 = por %p169, %p170
    %p172 = scmp.ne.s32.totalorder %s160, %s161
    %p173 = scmp.eq.s32.totalorder %s25, 1
    %p174 = por %p172, %p173
    %p176 = scmp.ne.s32.totalorder %s161, %s175
    %p177 = scmp.eq.s32.totalorder %s25, 0
    %p178 = por %p176, %p177
    %s180 = sadd.s32 %s179, 1
    %p183 = scmp.eq.s32.totalorder %s19, 1
    %p184 = scmp.ne.s32.totalorder %s179, %s181
    %p185 = scmp.eq.s32.totalorder %s19, 0
    %p186 = por %p184, %p185
    %p187 = scmp.ne.s32.totalorder %s179, %s181
    %p188 = scmp.eq.s32.totalorder %s24, 1
    %p189 = por %p187, %p188
    %p190 = scmp.ne.s32.totalorder %s181, %s182
    %p191 = scmp.eq.s32.totalorder %s24, 0
    %p192 = por %p190, %p191
    %p193 = scmp.ne.s32.totalorder %s181, %s182
    %p194 = scmp.eq.s32.totalorder %s25, 1
    %p195 = por %p193, %p194
    %p197 = scmp.ne.s32.totalorder %s182, %s196
    %p198 = scmp.eq.s32.totalorder %s25, 0
    %p199 = por %p197, %p198
    %s201 = sadd.s32 %s200, 1
    %p204 = scmp.eq.s32.totalorder %s19, 1
    %p205 = scmp.ne.s32.totalorder %s200, %s202
    %p206 = scmp.eq.s32.totalorder %s19, 0
    %p207 = por %p205, %p206
    %p208 = scmp.ne.s32.totalorder %s200, %s202
    %p209 = scmp.eq.s32.totalorder %s24, 1
    %p210 = por %p208, %p209
    %p211 = scmp.ne.s32.totalorder %s202, %s203
    %p212 = scmp.eq.s32.totalorder %s24, 0
    %p213 = por %p211, %p212
    %p214 = scmp.ne.s32.totalorder %s202, %s203
    %p215 = scmp.eq.s32.totalorder %s25, 1
    %p216 = por %p214, %p215
    %p218 = scmp.ne.s32.totalorder %s203, %s217
    %p219 = scmp.eq.s32.totalorder %s25, 0
    %p220 = por %p218, %p219
    %s222 = sadd.s32 %s221, 1
    %p225 = scmp.eq.s32.totalorder %s19, 1
    %p226 = scmp.ne.s32.totalorder %s221, %s223
    %p227 = scmp.eq.s32.totalorder %s19, 0
    %p228 = por %p226, %p227
    %p229 = scmp.ne.s32.totalorder %s221, %s223
    %p230 = scmp.eq.s32.totalorder %s24, 1
    %p231 = por %p229, %p230
    %p232 = scmp.ne.s32.totalorder %s223, %s224
    %p233 = scmp.eq.s32.totalorder %s24, 0
    %p234 = por %p232, %p233
    %p235 = scmp.ne.s32.totalorder %s223, %s224
    %p236 = scmp.eq.s32.totalorder %s25, 1
    %p237 = por %p235, %p236
    %p239 = scmp.ne.s32.totalorder %s224, %s238
    %p240 = scmp.eq.s32.totalorder %s25, 0
    %p241 = por %p239, %p240
    %s243 = sadd.s32 %s242, 1
    %p246 = scmp.eq.s32.totalorder %s19, 1
    %p247 = scmp.ne.s32.totalorder %s242, %s244
    %p248 = scmp.eq.s32.totalorder %s19, 0
    %p249 = por %p247, %p248
    %p250 = scmp.ne.s32.totalorder %s242, %s244
    %p251 = scmp.eq.s32.totalorder %s24, 1
    %p252 = por %p250, %p251
    %p253 = scmp.ne.s32.totalorder %s244, %s245
    %p254 = scmp.eq.s32.totalorder %s24, 0
    %p255 = por %p253, %p254
    %p256 = scmp.ne.s32.totalorder %s244, %s245
    %p257 = scmp.eq.s32.totalorder %s25, 1
    %p258 = por %p256, %p257
    %p260 = scmp.ne.s32.totalorder %s245, %s259
    %p261 = scmp.eq.s32.totalorder %s25, 0
    %p262 = por %p260, %p261
    %s263 = ssub.s32 %s19, %s26
    %p264 = scmp.eq.s32.totalorder %s263, 0
    %s266 = sadd.s32 %s265, 1
    %s267 = scalar_select %p264, %s265, %s266
    %p270 = pneg %p264
    %p271 = scmp.eq.s32.totalorder %s19, 1
    %p272 = por %p270, %p271
    %p273 = scmp.ne.s32.totalorder %s265, %s268
    %p274 = scmp.eq.s32.totalorder %s19, 0
    %p275 = por %p273, %p274
    %p276 = scmp.ne.s32.totalorder %s265, %s268
    %p277 = scmp.eq.s32.totalorder %s24, 1
    %p278 = por %p276, %p277
    %p279 = scmp.ne.s32.totalorder %s268, %s269
    %p280 = scmp.eq.s32.totalorder %s24, 0
    %p281 = por %p279, %p280
    %p282 = scmp.ne.s32.totalorder %s268, %s269
    %p283 = scmp.eq.s32.totalorder %s25, 1
    %p284 = por %p282, %p283
    %p286 = scmp.ne.s32.totalorder %s269, %s285
    %p287 = scmp.eq.s32.totalorder %s25, 0
    %p288 = por %p286, %p287
    %p289 = scmp.le.s32.totalorder 1, %s19
    %p290 = scmp.lt.s32.totalorder %s19, 3
    %p291 = pnand %p289, %p290
    %p292 = pneg %p291
    // Predicated region
    $region9: #{net_forward.1} parent=5 // pred_check
      _
    $region10: #{net_forward.1} parent=5 // pred_check_branch
      %294 = sbr.rel (%p291) target = $region12
    $region11: #{net_forward.1} parent=5 // pred_region
      %s295 = ssub.s32 %s19, 1
      // Predicated region
      $region13: #{net_forward.1} parent=11 // pred_check
        %p296 = pneg %p66
      $region14: #{net_forward.1} parent=11 // pred_check_branch
        %298 = sbr.rel (%p296) target = $region16
      $region15: #{net_forward.1} parent=11 // pred_region
        _
      $region16: #{net_forward.1} parent=11 // pred_fallthru
        _
      // Predicated region
      $region17: #{net_forward.1} parent=11 // pred_check
        %p299 = pneg %p87
      $region18: #{net_forward.1} parent=11 // pred_check_branch
        %301 = sbr.rel (%p299) target = $region20
      $region19: #{net_forward.1} parent=11 // pred_region
        _
      $region20: #{net_forward.1} parent=11 // pred_fallthru
        _
      // Predicated region
      $region21: #{net_forward.1} parent=11 // pred_check
        %p302 = pneg %p108
      $region22: #{net_forward.1} parent=11 // pred_check_branch
        %304 = sbr.rel (%p302) target = $region24
      $region23: #{net_forward.1} parent=11 // pred_region
        _
      $region24: #{net_forward.1} parent=11 // pred_fallthru
        _
      // Predicated region
      $region25: #{net_forward.1} parent=11 // pred_check
        %p305 = pneg %p129
      $region26: #{net_forward.1} parent=11 // pred_check_branch
        %307 = sbr.rel (%p305) target = $region28
      $region27: #{net_forward.1} parent=11 // pred_region
        _
      $region28: #{net_forward.1} parent=11 // pred_fallthru
        _
      // Predicated region
      $region29: #{net_forward.1} parent=11 // pred_check
        %p308 = pneg %p150
      $region30: #{net_forward.1} parent=11 // pred_check_branch
        %310 = sbr.rel (%p308) target = $region32
      $region31: #{net_forward.1} parent=11 // pred_region
        _
      $region32: #{net_forward.1} parent=11 // pred_fallthru
        _
      // Predicated region
      $region33: #{net_forward.1} parent=11 // pred_check
        %p311 = pneg %p171
      $region34: #{net_forward.1} parent=11 // pred_check_branch
        %313 = sbr.rel (%p311) target = $region36
      $region35: #{net_forward.1} parent=11 // pred_region
        _
      $region36: #{net_forward.1} parent=11 // pred_fallthru
        _
      // Predicated region
      $region37: #{net_forward.1} parent=11 // pred_check
        %p314 = pneg %p192
      $region38: #{net_forward.1} parent=11 // pred_check_branch
        %316 = sbr.rel (%p314) target = $region40
      $region39: #{net_forward.1} parent=11 // pred_region
        _
      $region40: #{net_forward.1} parent=11 // pred_fallthru
        _
      // Predicated region
      $region41: #{net_forward.1} parent=11 // pred_check
        %p317 = pneg %p213
      $region42: #{net_forward.1} parent=11 // pred_check_branch
        %319 = sbr.rel (%p317) target = $region44
      $region43: #{net_forward.1} parent=11 // pred_region
        _
      $region44: #{net_forward.1} parent=11 // pred_fallthru
        _
      // Predicated region
      $region45: #{net_forward.1} parent=11 // pred_check
        %p320 = pneg %p234
      $region46: #{net_forward.1} parent=11 // pred_check_branch
        %322 = sbr.rel (%p320) target = $region48
      $region47: #{net_forward.1} parent=11 // pred_region
        _
      $region48: #{net_forward.1} parent=11 // pred_fallthru
        _
      // Predicated region
      $region49: #{net_forward.1} parent=11 // pred_check
        %p323 = pneg %p255
      $region50: #{net_forward.1} parent=11 // pred_check_branch
        %325 = sbr.rel (%p323) target = $region52
      $region51: #{net_forward.1} parent=11 // pred_region
        _
      $region52: #{net_forward.1} parent=11 // pred_fallthru
        _
    $region12: #{net_forward.1} parent=5 // pred_fallthru
      _
    %p326 = scmp.lt.s32.totalorder %s19, 2
    // Predicated region
    $region53: #{net_forward.1} parent=5 // pred_check
      %p327 = pneg %p326
    $region54: #{net_forward.1} parent=5 // pred_check_branch
      %329 = sbr.rel (%p327) target = $region56
    $region55: #{net_forward.1} parent=5 // pred_region
      // Predicated region
      $region57: #{net_forward.1} parent=55 // pred_check
        %p330 = pneg %p39
      $region58: #{net_forward.1} parent=55 // pred_check_branch
        %332 = sbr.rel (%p330) target = $region60
      $region59: #{net_forward.1} parent=55 // pred_region
        %p333 = scmp.lt.s32.totalorder %s19, 1
        %s334 = scalar_select %p333, %s19, 1
        %s335 = smul.addr %s334, 4
        %s336 = smul.addr %s335, 8
        %s337 = scalar_lea.vmem %s0, %s336
      $region60: #{net_forward.1} parent=55 // pred_fallthru
        _
    $region56: #{net_forward.1} parent=5 // pred_fallthru
      _
    %p338 = scmp.le.s32.totalorder 1, %s19
    %p339 = scmp.lt.s32.totalorder %s19, 3
    %p340 = pnand %p338, %p339
    %p341 = pneg %p340
    // Predicated region
    $region61: #{net_forward.1} parent=5 // pred_check
      _
    $region62: #{net_forward.1} parent=5 // pred_check_branch
      %343 = sbr.rel (%p340) target = $region64
    $region63: #{net_forward.1} parent=5 // pred_region
      %s344 = ssub.s32 %s19, 1
      %p345 = scmp.lt.s32.totalorder %s24, 1
      %s346 = scalar_select %p345, %s24, 1
      %s347 = smul.addr %s346, 4
      %s348 = smul.addr %s347, 8
      %s349 = scalar_lea.vmem %s0, %s348
      %p350 = pneg %p45
      %p351 = pneg %p42
      %p352 = pneg %p66
      %p353 = pneg %p63
      %p354 = pneg %p87
      %p355 = pneg %p84
      %p356 = pneg %p108
      %p357 = pneg %p105
      %p358 = pneg %p129
      %p359 = pneg %p126
      %p360 = pneg %p150
      %p361 = pneg %p147
      %p362 = pneg %p171
      %p363 = pneg %p168
      %p364 = pneg %p192
      %p365 = pneg %p189
      %p366 = pneg %p213
      %p367 = pneg %p210
      %p368 = pneg %p234
      %p369 = pneg %p231
      %p370 = pneg %p255
      %p371 = pneg %p252
      %p372 = pneg %p281
      %p373 = pneg %p278
      %p374 = scmp.lt.s32.totalorder %s24, 1
      %s375 = scalar_select %p374, %s24, 1
      %s376 = scalar_lea.vmem %s11, %s375
      %p377 = scmp.lt.s32.totalorder %s24, 1
      %s378 = scalar_select %p377, %s24, 1
      %s379 = smul.addr %s378, 4
      %s380 = smul.addr %s379, 8
      %s381 = scalar_lea.vmem %s0, %s380
      %p382 = scmp.lt.s32.totalorder %s24, 1
      %s383 = scalar_select %p382, %s24, 1
      %s384 = scalar_lea.vmem %s11, %s383
      %v385 = vld [vmem:[%s381] sm:$0xff]
      %v386 = vld [vmem:[%s381 + $0x8] sm:$0xff]
      %v387 = vld [vmem:[%s381 + $0x10] sm:$0xff]
      %v388 = vld [vmem:[%s381 + $0x18] sm:$0xff]
      %v389 = vld [vmem:[%s1] sm:$0xff]
      %v390 = vld [vmem:[%s1 + $0x8] sm:$0xff]
      %v391 = vld [vmem:[%s1 + $0x10] sm:$0xff]
      %v392 = vld [vmem:[%s1 + $0x18] sm:$0xff]
      %v393 = vld [vmem:[%s1 + $0x20] sm:$0xff]
      %v394 = vld [vmem:[%s1 + $0x28] sm:$0xff]
      %v395 = vld [vmem:[%s1 + $0x30] sm:$0xff]
      %v396 = vld [vmem:[%s1 + $0x38] sm:$0xff]
      %v397 = vld [vmem:[%s1 + $0x40] sm:$0xff]
      %v398 = vld [vmem:[%s1 + $0x48] sm:$0xff]
      %v399 = vld [vmem:[%s1 + $0x50] sm:$0xff]
      %v400 = vld [vmem:[%s1 + $0x58] sm:$0xff]
      %v401 = vld [vmem:[%s1 + $0x60] sm:$0xff]
      %v402 = vld [vmem:[%s1 + $0x68] sm:$0xff]
      %v403 = vld [vmem:[%s1 + $0x70] sm:$0xff]
      %v404 = vld [vmem:[%s1 + $0x78] sm:$0xff]
      %v405 = vld [vmem:[%s1 + $0x80] sm:$0xff]
      %v406 = vld [vmem:[%s1 + $0x88] sm:$0xff]
      %v407 = vld [vmem:[%s1 + $0x90] sm:$0xff]
      %v408 = vld [vmem:[%s1 + $0x98] sm:$0xff]
      %v409 = vld [vmem:[%s1 + $0xa0] sm:$0xff]
      %v410 = vld [vmem:[%s1 + $0xa8] sm:$0xff]
      %v411 = vld [vmem:[%s1 + $0xb0] sm:$0xff]
      %v412 = vld [vmem:[%s1 + $0xb8] sm:$0xff]
      %v413 = vld [vmem:[%s1 + $0xc0] sm:$0xff]
      %v414 = vld [vmem:[%s1 + $0xc8] sm:$0xff]
      %v415 = vld [vmem:[%s1 + $0xd0] sm:$0xff]
      %v416 = vld [vmem:[%s1 + $0xd8] sm:$0xff]
      %v417 = vld [vmem:[%s1 + $0xe0] sm:$0xff]
      %v418 = vld [vmem:[%s1 + $0xe8] sm:$0xff]
      %v419 = vld [vmem:[%s1 + $0xf0] sm:$0xff]
      %v420 = vld [vmem:[%s1 + $0xf8] sm:$0xff]
      %v421 = vld [vmem:[%s1 + $0x100] sm:$0xff]
      %v422 = vld [vmem:[%s1 + $0x108] sm:$0xff]
      %v423 = vld [vmem:[%s1 + $0x110] sm:$0xff]
      %v424 = vld [vmem:[%s1 + $0x118] sm:$0xff]
      %v425 = vld [vmem:[%s1 + $0x120] sm:$0xff]
      %v426 = vld [vmem:[%s1 + $0x128] sm:$0xff]
      %v427 = vld [vmem:[%s1 + $0x130] sm:$0xff]
      %v428 = vld [vmem:[%s1 + $0x138] sm:$0xff]
      %v429 = vld [vmem:[%s1 + $0x140] sm:$0xff]
      %v430 = vld [vmem:[%s1 + $0x148] sm:$0xff]
      %v431 = vld [vmem:[%s1 + $0x150] sm:$0xff]
      %v432 = vld [vmem:[%s1 + $0x158] sm:$0xff]
      %v433 = vld [vmem:[%s1 + $0x160] sm:$0xff]
      %v434 = vld [vmem:[%s1 + $0x168] sm:$0xff]
      %v435 = vld [vmem:[%s1 + $0x170] sm:$0xff]
      %v436 = vld [vmem:[%s1 + $0x178] sm:$0xff]
      %v437 = vld [vmem:[%s2] sm:$0xff]
      %v438 = vld [vmem:[%s2 + $0x8] sm:$0xff]
      %v439 = vld [vmem:[%s2 + $0x10] sm:$0xff]
      %v440 = vld [vmem:[%s2 + $0x18] sm:$0xff]
      %v441 = vld [vmem:[%s2 + $0x20] sm:$0xff]
      %v442 = vld [vmem:[%s2 + $0x28] sm:$0xff]
      %v443 = vld [vmem:[%s2 + $0x30] sm:$0xff]
      %v444 = vld [vmem:[%s2 + $0x38] sm:$0xff]
      %v445 = vld [vmem:[%s2 + $0x40] sm:$0xff]
      %v446 = vld [vmem:[%s2 + $0x48] sm:$0xff]
      %v447 = vld [vmem:[%s2 + $0x50] sm:$0xff]
      %v448 = vld [vmem:[%s2 + $0x58] sm:$0xff]
      %v449 = vld [vmem:[%s2 + $0x60] sm:$0xff]
      %v450 = vld [vmem:[%s2 + $0x68] sm:$0xff]
      %v451 = vld [vmem:[%s2 + $0x70] sm:$0xff]
      %v452 = vld [vmem:[%s2 + $0x78] sm:$0xff]
      %v453 = vld [vmem:[%s2 + $0x80] sm:$0xff]
      %v454 = vld [vmem:[%s2 + $0x88] sm:$0xff]
      %v455 = vld [vmem:[%s2 + $0x90] sm:$0xff]
      %v456 = vld [vmem:[%s2 + $0x98] sm:$0xff]
      %v457 = vld [vmem:[%s2 + $0xa0] sm:$0xff]
      %v458 = vld [vmem:[%s2 + $0xa8] sm:$0xff]
      %v459 = vld [vmem:[%s2 + $0xb0] sm:$0xff]
      %v460 = vld [vmem:[%s2 + $0xb8] sm:$0xff]
      %v461 = vld [vmem:[%s2 + $0xc0] sm:$0xff]
      %v462 = vld [vmem:[%s2 + $0xc8] sm:$0xff]
      %v463 = vld [vmem:[%s2 + $0xd0] sm:$0xff]
      %v464 = vld [vmem:[%s2 + $0xd8] sm:$0xff]
      %v465 = vld [vmem:[%s2 + $0xe0] sm:$0xff]
      %v466 = vld [vmem:[%s2 + $0xe8] sm:$0xff]
      %v467 = vld [vmem:[%s2 + $0xf0] sm:$0xff]
      %v468 = vld [vmem:[%s2 + $0xf8] sm:$0xff]
      %v469 = vld [vmem:[%s2 + $0x100] sm:$0xff]
      %v470 = vld [vmem:[%s2 + $0x108] sm:$0xff]
      %v471 = vld [vmem:[%s2 + $0x110] sm:$0xff]
      %v472 = vld [vmem:[%s2 + $0x118] sm:$0xff]
      %v473 = vld [vmem:[%s2 + $0x120] sm:$0xff]
      %v474 = vld [vmem:[%s2 + $0x128] sm:$0xff]
      %v475 = vld [vmem:[%s2 + $0x130] sm:$0xff]
      %v476 = vld [vmem:[%s2 + $0x138] sm:$0xff]
      %v477 = vld [vmem:[%s2 + $0x140] sm:$0xff]
      %v478 = vld [vmem:[%s2 + $0x148] sm:$0xff]
      %v479 = vld [vmem:[%s2 + $0x150] sm:$0xff]
      %v480 = vld [vmem:[%s2 + $0x158] sm:$0xff]
      %v481 = vld [vmem:[%s2 + $0x160] sm:$0xff]
      %v482 = vld [vmem:[%s2 + $0x168] sm:$0xff]
      %v483 = vld [vmem:[%s2 + $0x170] sm:$0xff]
      %v484 = vld [vmem:[%s2 + $0x178] sm:$0xff]
      %s485 = scalar_lea.vmem %s1, 384
      %v486 = vld [vmem:[%s485] sm:$0xff]
      %v487 = vld [vmem:[%s485 + $0x8] sm:$0xff]
      %v488 = vld [vmem:[%s485 + $0x10] sm:$0xff]
      %v489 = vld [vmem:[%s485 + $0x18] sm:$0xff]
      %v490 = vld [vmem:[%s485 + $0x20] sm:$0xff]
      %v491 = vld [vmem:[%s485 + $0x28] sm:$0xff]
      %v492 = vld [vmem:[%s485 + $0x30] sm:$0xff]
      %v493 = vld [vmem:[%s485 + $0x38] sm:$0xff]
      %v494 = vld [vmem:[%s485 + $0x40] sm:$0xff]
      %v495 = vld [vmem:[%s485 + $0x48] sm:$0xff]
      %v496 = vld [vmem:[%s485 + $0x50] sm:$0xff]
      %v497 = vld [vmem:[%s485 + $0x58] sm:$0xff]
      %v498 = vld [vmem:[%s485 + $0x60] sm:$0xff]
      %v499 = vld [vmem:[%s485 + $0x68] sm:$0xff]
      %v500 = vld [vmem:[%s485 + $0x70] sm:$0xff]
      %v501 = vld [vmem:[%s485 + $0x78] sm:$0xff]
      %v502 = vld [vmem:[%s485 + $0x80] sm:$0xff]
      %v503 = vld [vmem:[%s485 + $0x88] sm:$0xff]
      %v504 = vld [vmem:[%s485 + $0x90] sm:$0xff]
      %v505 = vld [vmem:[%s485 + $0x98] sm:$0xff]
      %v506 = vld [vmem:[%s485 + $0xa0] sm:$0xff]
      %v507 = vld [vmem:[%s485 + $0xa8] sm:$0xff]
      %v508 = vld [vmem:[%s485 + $0xb0] sm:$0xff]
      %v509 = vld [vmem:[%s485 + $0xb8] sm:$0xff]
      %v510 = vld [vmem:[%s485 + $0xc0] sm:$0xff]
      %v511 = vld [vmem:[%s485 + $0xc8] sm:$0xff]
      %v512 = vld [vmem:[%s485 + $0xd0] sm:$0xff]
      %v513 = vld [vmem:[%s485 + $0xd8] sm:$0xff]
      %v514 = vld [vmem:[%s485 + $0xe0] sm:$0xff]
      %v515 = vld [vmem:[%s485 + $0xe8] sm:$0xff]
      %v516 = vld [vmem:[%s485 + $0xf0] sm:$0xff]
      %v517 = vld [vmem:[%s485 + $0xf8] sm:$0xff]
      %v518 = vld [vmem:[%s485 + $0x100] sm:$0xff]
      %v519 = vld [vmem:[%s485 + $0x108] sm:$0xff]
      %v520 = vld [vmem:[%s485 + $0x110] sm:$0xff]
      %v521 = vld [vmem:[%s485 + $0x118] sm:$0xff]
      %v522 = vld [vmem:[%s485 + $0x120] sm:$0xff]
      %v523 = vld [vmem:[%s485 + $0x128] sm:$0xff]
      %v524 = vld [vmem:[%s485 + $0x130] sm:$0xff]
      %v525 = vld [vmem:[%s485 + $0x138] sm:$0xff]
      %v526 = vld [vmem:[%s485 + $0x140] sm:$0xff]
      %v527 = vld [vmem:[%s485 + $0x148] sm:$0xff]
      %v528 = vld [vmem:[%s485 + $0x150] sm:$0xff]
      %v529 = vld [vmem:[%s485 + $0x158] sm:$0xff]
      %v530 = vld [vmem:[%s485 + $0x160] sm:$0xff]
      %v531 = vld [vmem:[%s485 + $0x168] sm:$0xff]
      %v532 = vld [vmem:[%s485 + $0x170] sm:$0xff]
      %v533 = vld [vmem:[%s485 + $0x178] sm:$0xff]
      %vm538 = vcmask 1046528
      %v539 = vrot.slane %v385, 1
      %v540 = vrot.slane %v386, 1
      %v541 = vsel %vm538, %v539, %v540
      %v542 = vrot.slane %v387, 1
      %v543 = vsel %vm538, %v540, %v542
      %v544 = vrot.slane %v388, 1
      %v545 = vsel %vm538, %v542, %v544
      %vm546 = vcmask 785408
      %v547 = vsel %vm546, %v541, 0
      %v549 = vsel %vm546, %v543, 0
      %v551 = vsel %vm546, %v545, 0
      %v553 = vsel %vm546, %v544, 0
      %555 = vmatprep.subr.mxu0 0.0
      %556 = vmatpush1.msra.mxu0 0.0
      %557 = vmatprep.subr.mxu0 0.0
      %558 = vmatpush1.msra.mxu0 0.0
      %559 = vmatprep.subr.mxu0 0.0
      %560 = vmatpush1.msra.mxu0 0.0
      %561 = vmatprep.subr.mxu0 0.0
      %562 = vmatpush1.msra.mxu0 0.0
      %563 = vmatprep.subr.mxu0 %v531
      %564 = vmatpush1.msra.mxu0 %v530
      %565 = vmatprep.subr.mxu0 %v527
      %566 = vmatpush1.msra.mxu0 %v526
      %567 = vmatprep.subr.mxu0 %v523
      %568 = vmatpush1.msra.mxu0 %v522
      %569 = vmatprep.subr.mxu0 %v519
      %570 = vmatpush1.msra.mxu0 %v518
      %571 = vmatprep.subr.mxu0 %v515
      %572 = vmatpush1.msra.mxu0 %v514
      %573 = vmatprep.subr.mxu0 %v511
      %574 = vmatpush1.msra.mxu0 %v510
      %575 = vmatprep.subr.mxu0 %v507
      %576 = vmatpush1.msra.mxu0 %v506
      %577 = vmatprep.subr.mxu0 %v503
      %578 = vmatpush1.msra.mxu0 %v502
      %579 = vmatprep.subr.mxu0 %v499
      %580 = vmatpush1.msra.mxu0 %v498
      %581 = vmatprep.subr.mxu0 %v495
      %582 = vmatpush1.msra.mxu0 %v494
      %583 = vmatprep.subr.mxu0 %v491
      %584 = vmatpush1.msra.mxu0 %v490
      %585 = vmatprep.subr.mxu0 %v487
      %586 = vmatpush1.msra.mxu0 %v486
      %587 = vmatprep.subr.mxu0 0.0
      %588 = vmatpush2.msra.mxu0 0.0
      %589 = vmatprep.subr.mxu0 0.0
      %590 = vmatpush2.msra.mxu0 0.0
      %591 = vmatprep.subr.mxu0 0.0
      %592 = vmatpush2.msra.mxu0 0.0
      %593 = vmatprep.subr.mxu0 0.0
      %594 = vmatpush2.msra.mxu0 0.0
      %595 = vmatprep.subr.mxu0 0.0
      %596 = vmatpush2.msra.mxu0 0.0
      %597 = vmatprep.subr.mxu0 0.0
      %598 = vmatpush2.msra.mxu0 0.0
      %599 = vmatprep.subr.mxu0 0.0
      %600 = vmatpush2.msra.mxu0 0.0
      %601 = vmatprep.subr.mxu0 0.0
      %602 = vmatpush2.msra.mxu0 0.0
      %603 = vmatprep.subr.mxu0 0.0
      %604 = vmatpush2.msra.mxu0 0.0
      %605 = vmatprep.subr.mxu0 0.0
      %606 = vmatpush2.msra.mxu0 0.0
      %607 = vmatprep.subr.mxu0 0.0
      %608 = vmatpush2.msra.mxu0 0.0
      %609 = vmatprep.subr.mxu0 0.0
      %610 = vmatpush2.msra.mxu0 0.0
      %611 = vmatprep.subr.mxu0 0.0
      %612 = vmatpush2.msra.mxu0 0.0
      %613 = vmatprep.subr.mxu0 0.0
      %614 = vmatpush2.msra.mxu0 0.0
      %615 = vmatprep.subr.mxu0 0.0
      %616 = vmatpush2.msra.mxu0 0.0
      %617 = vmatprep.subr.mxu0 0.0
      %618 = vmatpush2.msra.mxu0 0.0
      %619 = vmatprep.mubr.f32.mxu0 0.0
      %620 = vmatmul.mubr.f32.gmra.mxu0 %v547
      %v621 = vpop.f32.mrf.mxu0
      %v622 = vadd.f32 0.0, %v621
      %v623 = vpop.f32.mrf.mxu0
      %v624 = vadd.f32 0.0, %v623
      %625 = vmatprep.mubr.f32.mxu0 0.0
      %626 = vmatmul.mubr.f32.gmra.mxu0 %v549
      %v627 = vpop.f32.mrf.mxu0
      %v628 = vadd.f32 0.0, %v627
      %v629 = vpop.f32.mrf.mxu0
      %v630 = vadd.f32 0.0, %v629
      %631 = vmatprep.mubr.f32.mxu0 0.0
      %632 = vmatmul.mubr.f32.gmra.mxu0 %v551
      %v633 = vpop.f32.mrf.mxu0
      %v634 = vadd.f32 0.0, %v633
      %v635 = vpop.f32.mrf.mxu0
      %v636 = vadd.f32 0.0, %v635
      %637 = vmatprep.mubr.f32.mxu0 0.0
      %638 = vmatmul.mubr.f32.gmra.mxu0 %v553
      %v639 = vpop.f32.mrf.mxu0
      %v640 = vadd.f32 0.0, %v639
      %v641 = vpop.f32.mrf.mxu0
      %v642 = vadd.f32 0.0, %v641
      %643 = vdwg.mxu0
      %644 = vmatprep.subr.mxu0 0.0
      %645 = vmatpush1.msra.mxu0 0.0
      %646 = vmatprep.subr.mxu0 0.0
      %647 = vmatpush1.msra.mxu0 0.0
      %648 = vmatprep.subr.mxu0 0.0
      %649 = vmatpush1.msra.mxu0 0.0
      %650 = vmatprep.subr.mxu0 0.0
      %651 = vmatpush1.msra.mxu0 0.0
      %652 = vmatprep.subr.mxu0 %v533
      %653 = vmatpush1.msra.mxu0 %v532
      %654 = vmatprep.subr.mxu0 %v529
      %655 = vmatpush1.msra.mxu0 %v528
      %656 = vmatprep.subr.mxu0 %v525
      %657 = vmatpush1.msra.mxu0 %v524
      %658 = vmatprep.subr.mxu0 %v521
      %659 = vmatpush1.msra.mxu0 %v520
      %660 = vmatprep.subr.mxu0 %v517
      %661 = vmatpush1.msra.mxu0 %v516
      %662 = vmatprep.subr.mxu0 %v513
      %663 = vmatpush1.msra.mxu0 %v512
      %664 = vmatprep.subr.mxu0 %v509
      %665 = vmatpush1.msra.mxu0 %v508
      %666 = vmatprep.subr.mxu0 %v505
      %667 = vmatpush1.msra.mxu0 %v504
      %668 = vmatprep.subr.mxu0 %v501
      %669 = vmatpush1.msra.mxu0 %v500
      %670 = vmatprep.subr.mxu0 %v497
      %671 = vmatpush1.msra.mxu0 %v496
      %672 = vmatprep.subr.mxu0 %v493
      %673 = vmatpush1.msra.mxu0 %v492
      %674 = vmatprep.subr.mxu0 %v489
      %675 = vmatpush1.msra.mxu0 %v488
      %676 = vmatprep.subr.mxu0 0.0
      %677 = vmatpush2.msra.mxu0 0.0
      %678 = vmatprep.subr.mxu0 0.0
      %679 = vmatpush2.msra.mxu0 0.0
      %680 = vmatprep.subr.mxu0 0.0
      %681 = vmatpush2.msra.mxu0 0.0
      %682 = vmatprep.subr.mxu0 0.0
      %683 = vmatpush2.msra.mxu0 0.0
      %684 = vmatprep.subr.mxu0 0.0
      %685 = vmatpush2.msra.mxu0 0.0
      %686 = vmatprep.subr.mxu0 0.0
      %687 = vmatpush2.msra.mxu0 0.0
      %688 = vmatprep.subr.mxu0 0.0
      %689 = vmatpush2.msra.mxu0 0.0
      %690 = vmatprep.subr.mxu0 0.0
      %691 = vmatpush2.msra.mxu0 0.0
      %692 = vmatprep.subr.mxu0 0.0
      %693 = vmatpush2.msra.mxu0 0.0
      %694 = vmatprep.subr.mxu0 0.0
      %695 = vmatpush2.msra.mxu0 0.0
      %696 = vmatprep.subr.mxu0 0.0
      %697 = vmatpush2.msra.mxu0 0.0
      %698 = vmatprep.subr.mxu0 0.0
      %699 = vmatpush2.msra.mxu0 0.0
      %700 = vmatprep.subr.mxu0 0.0
      %701 = vmatpush2.msra.mxu0 0.0
      %702 = vmatprep.subr.mxu0 0.0
      %703 = vmatpush2.msra.mxu0 0.0
      %704 = vmatprep.subr.mxu0 0.0
      %705 = vmatpush2.msra.mxu0 0.0
      %706 = vmatprep.subr.mxu0 0.0
      %707 = vmatpush2.msra.mxu0 0.0
      %708 = vmatprep.mubr.f32.mxu0 0.0
      %709 = vmatmul.mubr.f32.gmra.mxu0 %v547
      %v710 = vpop.f32.mrf.mxu0
      %v711 = vadd.f32 0.0, %v710
      %v712 = vpop.f32.mrf.mxu0
      %v713 = vadd.f32 0.0, %v712
      %714 = vmatprep.mubr.f32.mxu0 0.0
      %715 = vmatmul.mubr.f32.gmra.mxu0 %v549
      %v716 = vpop.f32.mrf.mxu0
      %v717 = vadd.f32 0.0, %v716
      %v718 = vpop.f32.mrf.mxu0
      %v719 = vadd.f32 0.0, %v718
      %720 = vmatprep.mubr.f32.mxu0 0.0
      %721 = vmatmul.mubr.f32.gmra.mxu0 %v551
      %v722 = vpop.f32.mrf.mxu0
      %v723 = vadd.f32 0.0, %v722
      %v724 = vpop.f32.mrf.mxu0
      %v725 = vadd.f32 0.0, %v724
      %726 = vmatprep.mubr.f32.mxu0 0.0
      %727 = vmatmul.mubr.f32.gmra.mxu0 %v553
      %v728 = vpop.f32.mrf.mxu0
      %v729 = vadd.f32 0.0, %v728
      %v730 = vpop.f32.mrf.mxu0
      %v731 = vadd.f32 0.0, %v730
      %732 = vdwg.mxu0
      %v733 = vsel %vm546, %v385, 0
      %v735 = vsel %vm546, %v386, 0
      %v737 = vsel %vm546, %v387, 0
      %v739 = vsel %vm546, %v388, 0
      %741 = vmatprep.subr.mxu0 0.0
      %742 = vmatpush1.msra.mxu0 0.0
      %743 = vmatprep.subr.mxu0 0.0
      %744 = vmatpush1.msra.mxu0 0.0
      %745 = vmatprep.subr.mxu0 0.0
      %746 = vmatpush1.msra.mxu0 0.0
      %747 = vmatprep.subr.mxu0 0.0
      %748 = vmatpush1.msra.mxu0 0.0
      %749 = vmatprep.subr.mxu0 %v434
      %750 = vmatpush1.msra.mxu0 %v433
      %751 = vmatprep.subr.mxu0 %v430
      %752 = vmatpush1.msra.mxu0 %v429
      %753 = vmatprep.subr.mxu0 %v426
      %754 = vmatpush1.msra.mxu0 %v425
      %755 = vmatprep.subr.mxu0 %v422
      %756 = vmatpush1.msra.mxu0 %v421
      %757 = vmatprep.subr.mxu0 %v418
      %758 = vmatpush1.msra.mxu0 %v417
      %759 = vmatprep.subr.mxu0 %v414
      %760 = vmatpush1.msra.mxu0 %v413
      %761 = vmatprep.subr.mxu0 %v410
      %762 = vmatpush1.msra.mxu0 %v409
      %763 = vmatprep.subr.mxu0 %v406
      %764 = vmatpush1.msra.mxu0 %v405
      %765 = vmatprep.subr.mxu0 %v402
      %766 = vmatpush1.msra.mxu0 %v401
      %767 = vmatprep.subr.mxu0 %v398
      %768 = vmatpush1.msra.mxu0 %v397
      %769 = vmatprep.subr.mxu0 %v394
      %770 = vmatpush1.msra.mxu0 %v393
      %771 = vmatprep.subr.mxu0 %v390
      %772 = vmatpush1.msra.mxu0 %v389
      %773 = vmatprep.subr.mxu0 0.0
      %774 = vmatpush2.msra.mxu0 0.0
      %775 = vmatprep.subr.mxu0 0.0
      %776 = vmatpush2.msra.mxu0 0.0
      %777 = vmatprep.subr.mxu0 0.0
      %778 = vmatpush2.msra.mxu0 0.0
      %779 = vmatprep.subr.mxu0 0.0
      %780 = vmatpush2.msra.mxu0 0.0
      %781 = vmatprep.subr.mxu0 0.0
      %782 = vmatpush2.msra.mxu0 0.0
      %783 = vmatprep.subr.mxu0 0.0
      %784 = vmatpush2.msra.mxu0 0.0
      %785 = vmatprep.subr.mxu0 0.0
      %786 = vmatpush2.msra.mxu0 0.0
      %787 = vmatprep.subr.mxu0 0.0
      %788 = vmatpush2.msra.mxu0 0.0
      %789 = vmatprep.subr.mxu0 0.0
      %790 = vmatpush2.msra.mxu0 0.0
      %791 = vmatprep.subr.mxu0 0.0
      %792 = vmatpush2.msra.mxu0 0.0
      %793 = vmatprep.subr.mxu0 0.0
      %794 = vmatpush2.msra.mxu0 0.0
      %795 = vmatprep.subr.mxu0 0.0
      %796 = vmatpush2.msra.mxu0 0.0
      %797 = vmatprep.subr.mxu0 0.0
      %798 = vmatpush2.msra.mxu0 0.0
      %799 = vmatprep.subr.mxu0 0.0
      %800 = vmatpush2.msra.mxu0 0.0
      %801 = vmatprep.subr.mxu0 0.0
      %802 = vmatpush2.msra.mxu0 0.0
      %803 = vmatprep.subr.mxu0 0.0
      %804 = vmatpush2.msra.mxu0 0.0
      %805 = vmatprep.mubr.f32.mxu0 0.0
      %806 = vmatmul.mubr.f32.gmra.mxu0 %v733
      %v807 = vpop.f32.mrf.mxu0
      %v808 = vadd.f32 %v622, %v807
      %v809 = vpop.f32.mrf.mxu0
      %v810 = vadd.f32 %v624, %v809
      %811 = vmatprep.mubr.f32.mxu0 0.0
      %812 = vmatmul.mubr.f32.gmra.mxu0 %v735
      %v813 = vpop.f32.mrf.mxu0
      %v814 = vadd.f32 %v628, %v813
      %v815 = vpop.f32.mrf.mxu0
      %v816 = vadd.f32 %v630, %v815
      %817 = vmatprep.mubr.f32.mxu0 0.0
      %818 = vmatmul.mubr.f32.gmra.mxu0 %v737
      %v819 = vpop.f32.mrf.mxu0
      %v820 = vadd.f32 %v634, %v819
      %v821 = vpop.f32.mrf.mxu0
      %v822 = vadd.f32 %v636, %v821
      %823 = vmatprep.mubr.f32.mxu0 0.0
      %824 = vmatmul.mubr.f32.gmra.mxu0 %v739
      %v825 = vpop.f32.mrf.mxu0
      %v826 = vadd.f32 %v640, %v825
      %v827 = vpop.f32.mrf.mxu0
      %v828 = vadd.f32 %v642, %v827
      %829 = vdwg.mxu0
      %830 = vmatprep.subr.mxu0 0.0
      %831 = vmatpush1.msra.mxu0 0.0
      %832 = vmatprep.subr.mxu0 0.0
      %833 = vmatpush1.msra.mxu0 0.0
      %834 = vmatprep.subr.mxu0 0.0
      %835 = vmatpush1.msra.mxu0 0.0
      %836 = vmatprep.subr.mxu0 0.0
      %837 = vmatpush1.msra.mxu0 0.0
      %838 = vmatprep.subr.mxu0 %v436
      %839 = vmatpush1.msra.mxu0 %v435
      %840 = vmatprep.subr.mxu0 %v432
      %841 = vmatpush1.msra.mxu0 %v431
      %842 = vmatprep.subr.mxu0 %v428
      %843 = vmatpush1.msra.mxu0 %v427
      %844 = vmatprep.subr.mxu0 %v424
      %845 = vmatpush1.msra.mxu0 %v423
      %846 = vmatprep.subr.mxu0 %v420
      %847 = vmatpush1.msra.mxu0 %v419
      %848 = vmatprep.subr.mxu0 %v416
      %849 = vmatpush1.msra.mxu0 %v415
      %850 = vmatprep.subr.mxu0 %v412
      %851 = vmatpush1.msra.mxu0 %v411
      %852 = vmatprep.subr.mxu0 %v408
      %853 = vmatpush1.msra.mxu0 %v407
      %854 = vmatprep.subr.mxu0 %v404
      %855 = vmatpush1.msra.mxu0 %v403
      %856 = vmatprep.subr.mxu0 %v400
      %857 = vmatpush1.msra.mxu0 %v399
      %858 = vmatprep.subr.mxu0 %v396
      %859 = vmatpush1.msra.mxu0 %v395
      %860 = vmatprep.subr.mxu0 %v392
      %861 = vmatpush1.msra.mxu0 %v391
      %862 = vmatprep.subr.mxu0 0.0
      %863 = vmatpush2.msra.mxu0 0.0
      %864 = vmatprep.subr.mxu0 0.0
      %865 = vmatpush2.msra.mxu0 0.0
      %866 = vmatprep.subr.mxu0 0.0
      %867 = vmatpush2.msra.mxu0 0.0
      %868 = vmatprep.subr.mxu0 0.0
      %869 = vmatpush2.msra.mxu0 0.0
      %870 = vmatprep.subr.mxu0 0.0
      %871 = vmatpush2.msra.mxu0 0.0
      %872 = vmatprep.subr.mxu0 0.0
      %873 = vmatpush2.msra.mxu0 0.0
      %874 = vmatprep.subr.mxu0 0.0
      %875 = vmatpush2.msra.mxu0 0.0
      %876 = vmatprep.subr.mxu0 0.0
      %877 = vmatpush2.msra.mxu0 0.0
      %878 = vmatprep.subr.mxu0 0.0
      %879 = vmatpush2.msra.mxu0 0.0
      %880 = vmatprep.subr.mxu0 0.0
      %881 = vmatpush2.msra.mxu0 0.0
      %882 = vmatprep.subr.mxu0 0.0
      %883 = vmatpush2.msra.mxu0 0.0
      %884 = vmatprep.subr.mxu0 0.0
      %885 = vmatpush2.msra.mxu0 0.0
      %886 = vmatprep.subr.mxu0 0.0
      %887 = vmatpush2.msra.mxu0 0.0
      %888 = vmatprep.subr.mxu0 0.0
      %889 = vmatpush2.msra.mxu0 0.0
      %890 = vmatprep.subr.mxu0 0.0
      %891 = vmatpush2.msra.mxu0 0.0
      %892 = vmatprep.subr.mxu0 0.0
      %893 = vmatpush2.msra.mxu0 0.0
      %894 = vmatprep.mubr.f32.mxu0 0.0
      %895 = vmatmul.mubr.f32.gmra.mxu0 %v733
      %v896 = vpop.f32.mrf.mxu0
      %v897 = vadd.f32 %v711, %v896
      %v898 = vpop.f32.mrf.mxu0
      %v899 = vadd.f32 %v713, %v898
      %900 = vmatprep.mubr.f32.mxu0 0.0
      %901 = vmatmul.mubr.f32.gmra.mxu0 %v735
      %v902 = vpop.f32.mrf.mxu0
      %v903 = vadd.f32 %v717, %v902
      %v904 = vpop.f32.mrf.mxu0
      %v905 = vadd.f32 %v719, %v904
      %906 = vmatprep.mubr.f32.mxu0 0.0
      %907 = vmatmul.mubr.f32.gmra.mxu0 %v737
      %v908 = vpop.f32.mrf.mxu0
      %v909 = vadd.f32 %v723, %v908
      %v910 = vpop.f32.mrf.mxu0
      %v911 = vadd.f32 %v725, %v910
      %912 = vmatprep.mubr.f32.mxu0 0.0
      %913 = vmatmul.mubr.f32.gmra.mxu0 %v739
      %v914 = vpop.f32.mrf.mxu0
      %v915 = vadd.f32 %v729, %v914
      %v916 = vpop.f32.mrf.mxu0
      %v917 = vadd.f32 %v731, %v916
      %918 = vdwg.mxu0
      %s919 = scalar_lea.vmem %s2, 384
      %v920 = vld [vmem:[%s919] sm:$0xff]
      %v921 = vld [vmem:[%s919 + $0x8] sm:$0xff]
      %v922 = vld [vmem:[%s919 + $0x10] sm:$0xff]
      %v923 = vld [vmem:[%s919 + $0x18] sm:$0xff]
      %v924 = vld [vmem:[%s919 + $0x20] sm:$0xff]
      %v925 = vld [vmem:[%s919 + $0x28] sm:$0xff]
      %v926 = vld [vmem:[%s919 + $0x30] sm:$0xff]
      %v927 = vld [vmem:[%s919 + $0x38] sm:$0xff]
      %v928 = vld [vmem:[%s919 + $0x40] sm:$0xff]
      %v929 = vld [vmem:[%s919 + $0x48] sm:$0xff]
      %v930 = vld [vmem:[%s919 + $0x50] sm:$0xff]
      %v931 = vld [vmem:[%s919 + $0x58] sm:$0xff]
      %v932 = vld [vmem:[%s919 + $0x60] sm:$0xff]
      %v933 = vld [vmem:[%s919 + $0x68] sm:$0xff]
      %v934 = vld [vmem:[%s919 + $0x70] sm:$0xff]
      %v935 = vld [vmem:[%s919 + $0x78] sm:$0xff]
      %v936 = vld [vmem:[%s919 + $0x80] sm:$0xff]
      %v937 = vld [vmem:[%s919 + $0x88] sm:$0xff]
      %v938 = vld [vmem:[%s919 + $0x90] sm:$0xff]
      %v939 = vld [vmem:[%s919 + $0x98] sm:$0xff]
      %v940 = vld [vmem:[%s919 + $0xa0] sm:$0xff]
      %v941 = vld [vmem:[%s919 + $0xa8] sm:$0xff]
      %v942 = vld [vmem:[%s919 + $0xb0] sm:$0xff]
      %v943 = vld [vmem:[%s919 + $0xb8] sm:$0xff]
      %v944 = vld [vmem:[%s919 + $0xc0] sm:$0xff]
      %v945 = vld [vmem:[%s919 + $0xc8] sm:$0xff]
      %v946 = vld [vmem:[%s919 + $0xd0] sm:$0xff]
      %v947 = vld [vmem:[%s919 + $0xd8] sm:$0xff]
      %v948 = vld [vmem:[%s919 + $0xe0] sm:$0xff]
      %v949 = vld [vmem:[%s919 + $0xe8] sm:$0xff]
      %v950 = vld [vmem:[%s919 + $0xf0] sm:$0xff]
      %v951 = vld [vmem:[%s919 + $0xf8] sm:$0xff]
      %v952 = vld [vmem:[%s919 + $0x100] sm:$0xff]
      %v953 = vld [vmem:[%s919 + $0x108] sm:$0xff]
      %v954 = vld [vmem:[%s919 + $0x110] sm:$0xff]
      %v955 = vld [vmem:[%s919 + $0x118] sm:$0xff]
      %v956 = vld [vmem:[%s919 + $0x120] sm:$0xff]
      %v957 = vld [vmem:[%s919 + $0x128] sm:$0xff]
      %v958 = vld [vmem:[%s919 + $0x130] sm:$0xff]
      %v959 = vld [vmem:[%s919 + $0x138] sm:$0xff]
      %v960 = vld [vmem:[%s919 + $0x140] sm:$0xff]
      %v961 = vld [vmem:[%s919 + $0x148] sm:$0xff]
      %v962 = vld [vmem:[%s919 + $0x150] sm:$0xff]
      %v963 = vld [vmem:[%s919 + $0x158] sm:$0xff]
      %v964 = vld [vmem:[%s919 + $0x160] sm:$0xff]
      %v965 = vld [vmem:[%s919 + $0x168] sm:$0xff]
      %v966 = vld [vmem:[%s919 + $0x170] sm:$0xff]
      %v967 = vld [vmem:[%s919 + $0x178] sm:$0xff]
      %968 = vmatprep.subr.mxu0 0.0
      %969 = vmatpush1.msra.mxu0 0.0
      %970 = vmatprep.subr.mxu0 0.0
      %971 = vmatpush1.msra.mxu0 0.0
      %972 = vmatprep.subr.mxu0 0.0
      %973 = vmatpush1.msra.mxu0 0.0
      %974 = vmatprep.subr.mxu0 0.0
      %975 = vmatpush1.msra.mxu0 0.0
      %976 = vmatprep.subr.mxu0 %v965
      %977 = vmatpush1.msra.mxu0 %v964
      %978 = vmatprep.subr.mxu0 %v961
      %979 = vmatpush1.msra.mxu0 %v960
      %980 = vmatprep.subr.mxu0 %v957
      %981 = vmatpush1.msra.mxu0 %v956
      %982 = vmatprep.subr.mxu0 %v953
      %983 = vmatpush1.msra.mxu0 %v952
      %984 = vmatprep.subr.mxu0 %v949
      %985 = vmatpush1.msra.mxu0 %v948
      %986 = vmatprep.subr.mxu0 %v945
      %987 = vmatpush1.msra.mxu0 %v944
      %988 = vmatprep.subr.mxu0 %v941
      %989 = vmatpush1.msra.mxu0 %v940
      %990 = vmatprep.subr.mxu0 %v937
      %991 = vmatpush1.msra.mxu0 %v936
      %992 = vmatprep.subr.mxu0 %v933
      %993 = vmatpush1.msra.mxu0 %v932
      %994 = vmatprep.subr.mxu0 %v929
      %995 = vmatpush1.msra.mxu0 %v928
      %996 = vmatprep.subr.mxu0 %v925
      %997 = vmatpush1.msra.mxu0 %v924
      %998 = vmatprep.subr.mxu0 %v921
      %999 = vmatpush1.msra.mxu0 %v920
      %1000 = vmatprep.subr.mxu0 0.0
      %1001 = vmatpush2.msra.mxu0 0.0
      %1002 = vmatprep.subr.mxu0 0.0
      %1003 = vmatpush2.msra.mxu0 0.0
      %1004 = vmatprep.subr.mxu0 0.0
      %1005 = vmatpush2.msra.mxu0 0.0
      %1006 = vmatprep.subr.mxu0 0.0
      %1007 = vmatpush2.msra.mxu0 0.0
      %1008 = vmatprep.subr.mxu0 0.0
      %1009 = vmatpush2.msra.mxu0 0.0
      %1010 = vmatprep.subr.mxu0 0.0
      %1011 = vmatpush2.msra.mxu0 0.0
      %1012 = vmatprep.subr.mxu0 0.0
      %1013 = vmatpush2.msra.mxu0 0.0
      %1014 = vmatprep.subr.mxu0 0.0
      %1015 = vmatpush2.msra.mxu0 0.0
      %1016 = vmatprep.subr.mxu0 0.0
      %1017 = vmatpush2.msra.mxu0 0.0
      %1018 = vmatprep.subr.mxu0 0.0
      %1019 = vmatpush2.msra.mxu0 0.0
      %1020 = vmatprep.subr.mxu0 0.0
      %1021 = vmatpush2.msra.mxu0 0.0
      %1022 = vmatprep.subr.mxu0 0.0
      %1023 = vmatpush2.msra.mxu0 0.0
      %1024 = vmatprep.subr.mxu0 0.0
      %1025 = vmatpush2.msra.mxu0 0.0
      %1026 = vmatprep.subr.mxu0 0.0
      %1027 = vmatpush2.msra.mxu0 0.0
      %1028 = vmatprep.subr.mxu0 0.0
      %1029 = vmatpush2.msra.mxu0 0.0
      %1030 = vmatprep.subr.mxu0 0.0
      %1031 = vmatpush2.msra.mxu0 0.0
      %1032 = vmatprep.mubr.f32.mxu0 0.0
      %1033 = vmatmul.mubr.f32.gmra.mxu0 %v547
      %v1034 = vpop.f32.mrf.mxu0
      %v1035 = vadd.f32 0.0, %v1034
      %v1036 = vpop.f32.mrf.mxu0
      %v1037 = vadd.f32 0.0, %v1036
      %1038 = vmatprep.mubr.f32.mxu0 0.0
      %1039 = vmatmul.mubr.f32.gmra.mxu0 %v549
      %v1040 = vpop.f32.mrf.mxu0
      %v1041 = vadd.f32 0.0, %v1040
      %v1042 = vpop.f32.mrf.mxu0
      %v1043 = vadd.f32 0.0, %v1042
      %1044 = vmatprep.mubr.f32.mxu0 0.0
      %1045 = vmatmul.mubr.f32.gmra.mxu0 %v551
      %v1046 = vpop.f32.mrf.mxu0
      %v1047 = vadd.f32 0.0, %v1046
      %v1048 = vpop.f32.mrf.mxu0
      %v1049 = vadd.f32 0.0, %v1048
      %1050 = vmatprep.mubr.f32.mxu0 0.0
      %1051 = vmatmul.mubr.f32.gmra.mxu0 %v553
      %v1052 = vpop.f32.mrf.mxu0
      %v1053 = vadd.f32 0.0, %v1052
      %v1054 = vpop.f32.mrf.mxu0
      %v1055 = vadd.f32 0.0, %v1054
      %1056 = vdwg.mxu0
      %1057 = vmatprep.subr.mxu0 0.0
      %1058 = vmatpush1.msra.mxu0 0.0
      %1059 = vmatprep.subr.mxu0 0.0
      %1060 = vmatpush1.msra.mxu0 0.0
      %1061 = vmatprep.subr.mxu0 0.0
      %1062 = vmatpush1.msra.mxu0 0.0
      %1063 = vmatprep.subr.mxu0 0.0
      %1064 = vmatpush1.msra.mxu0 0.0
      %1065 = vmatprep.subr.mxu0 %v967
      %1066 = vmatpush1.msra.mxu0 %v966
      %1067 = vmatprep.subr.mxu0 %v963
      %1068 = vmatpush1.msra.mxu0 %v962
      %1069 = vmatprep.subr.mxu0 %v959
      %1070 = vmatpush1.msra.mxu0 %v958
      %1071 = vmatprep.subr.mxu0 %v955
      %1072 = vmatpush1.msra.mxu0 %v954
      %1073 = vmatprep.subr.mxu0 %v951
      %1074 = vmatpush1.msra.mxu0 %v950
      %1075 = vmatprep.subr.mxu0 %v947
      %1076 = vmatpush1.msra.mxu0 %v946
      %1077 = vmatprep.subr.mxu0 %v943
      %1078 = vmatpush1.msra.mxu0 %v942
      %1079 = vmatprep.subr.mxu0 %v939
      %1080 = vmatpush1.msra.mxu0 %v938
      %1081 = vmatprep.subr.mxu0 %v935
      %1082 = vmatpush1.msra.mxu0 %v934
      %1083 = vmatprep.subr.mxu0 %v931
      %1084 = vmatpush1.msra.mxu0 %v930
      %1085 = vmatprep.subr.mxu0 %v927
      %1086 = vmatpush1.msra.mxu0 %v926
      %1087 = vmatprep.subr.mxu0 %v923
      %1088 = vmatpush1.msra.mxu0 %v922
      %1089 = vmatprep.subr.mxu0 0.0
      %1090 = vmatpush2.msra.mxu0 0.0
      %1091 = vmatprep.subr.mxu0 0.0
      %1092 = vmatpush2.msra.mxu0 0.0
      %1093 = vmatprep.subr.mxu0 0.0
      %1094 = vmatpush2.msra.mxu0 0.0
      %1095 = vmatprep.subr.mxu0 0.0
      %1096 = vmatpush2.msra.mxu0 0.0
      %1097 = vmatprep.subr.mxu0 0.0
      %1098 = vmatpush2.msra.mxu0 0.0
      %1099 = vmatprep.subr.mxu0 0.0
      %1100 = vmatpush2.msra.mxu0 0.0
      %1101 = vmatprep.subr.mxu0 0.0
      %1102 = vmatpush2.msra.mxu0 0.0
      %1103 = vmatprep.subr.mxu0 0.0
      %1104 = vmatpush2.msra.mxu0 0.0
      %1105 = vmatprep.subr.mxu0 0.0
      %1106 = vmatpush2.msra.mxu0 0.0
      %1107 = vmatprep.subr.mxu0 0.0
      %1108 = vmatpush2.msra.mxu0 0.0
      %1109 = vmatprep.subr.mxu0 0.0
      %1110 = vmatpush2.msra.mxu0 0.0
      %1111 = vmatprep.subr.mxu0 0.0
      %1112 = vmatpush2.msra.mxu0 0.0
      %1113 = vmatprep.subr.mxu0 0.0
      %1114 = vmatpush2.msra.mxu0 0.0
      %1115 = vmatprep.subr.mxu0 0.0
      %1116 = vmatpush2.msra.mxu0 0.0
      %1117 = vmatprep.subr.mxu0 0.0
      %1118 = vmatpush2.msra.mxu0 0.0
      %1119 = vmatprep.subr.mxu0 0.0
      %1120 = vmatpush2.msra.mxu0 0.0
      %1121 = vmatprep.mubr.f32.mxu0 0.0
      %1122 = vmatmul.mubr.f32.gmra.mxu0 %v547
      %v1123 = vpop.f32.mrf.mxu0
      %v1124 = vadd.f32 0.0, %v1123
      %v1125 = vpop.f32.mrf.mxu0
      %v1126 = vadd.f32 0.0, %v1125
      %1127 = vmatprep.mubr.f32.mxu0 0.0
      %1128 = vmatmul.mubr.f32.gmra.mxu0 %v549
      %v1129 = vpop.f32.mrf.mxu0
      %v1130 = vadd.f32 0.0, %v1129
      %v1131 = vpop.f32.mrf.mxu0
      %v1132 = vadd.f32 0.0, %v1131
      %1133 = vmatprep.mubr.f32.mxu0 0.0
      %1134 = vmatmul.mubr.f32.gmra.mxu0 %v551
      %v1135 = vpop.f32.mrf.mxu0
      %v1136 = vadd.f32 0.0, %v1135
      %v1137 = vpop.f32.mrf.mxu0
      %v1138 = vadd.f32 0.0, %v1137
      %1139 = vmatprep.mubr.f32.mxu0 0.0
      %1140 = vmatmul.mubr.f32.gmra.mxu0 %v553
      %v1141 = vpop.f32.mrf.mxu0
      %v1142 = vadd.f32 0.0, %v1141
      %v1143 = vpop.f32.mrf.mxu0
      %v1144 = vadd.f32 0.0, %v1143
      %1145 = vdwg.mxu0
      %1146 = vmatprep.subr.mxu0 0.0
      %1147 = vmatpush1.msra.mxu0 0.0
      %1148 = vmatprep.subr.mxu0 0.0
      %1149 = vmatpush1.msra.mxu0 0.0
      %1150 = vmatprep.subr.mxu0 0.0
      %1151 = vmatpush1.msra.mxu0 0.0
      %1152 = vmatprep.subr.mxu0 0.0
      %1153 = vmatpush1.msra.mxu0 0.0
      %1154 = vmatprep.subr.mxu0 %v482
      %1155 = vmatpush1.msra.mxu0 %v481
      %1156 = vmatprep.subr.mxu0 %v478
      %1157 = vmatpush1.msra.mxu0 %v477
      %1158 = vmatprep.subr.mxu0 %v474
      %1159 = vmatpush1.msra.mxu0 %v473
      %1160 = vmatprep.subr.mxu0 %v470
      %1161 = vmatpush1.msra.mxu0 %v469
      %1162 = vmatprep.subr.mxu0 %v466
      %1163 = vmatpush1.msra.mxu0 %v465
      %1164 = vmatprep.subr.mxu0 %v462
      %1165 = vmatpush1.msra.mxu0 %v461
      %1166 = vmatprep.subr.mxu0 %v458
      %1167 = vmatpush1.msra.mxu0 %v457
      %1168 = vmatprep.subr.mxu0 %v454
      %1169 = vmatpush1.msra.mxu0 %v453
      %1170 = vmatprep.subr.mxu0 %v450
      %1171 = vmatpush1.msra.mxu0 %v449
      %1172 = vmatprep.subr.mxu0 %v446
      %1173 = vmatpush1.msra.mxu0 %v445
      %1174 = vmatprep.subr.mxu0 %v442
      %1175 = vmatpush1.msra.mxu0 %v441
      %1176 = vmatprep.subr.mxu0 %v438
      %1177 = vmatpush1.msra.mxu0 %v437
      %1178 = vmatprep.subr.mxu0 0.0
      %1179 = vmatpush2.msra.mxu0 0.0
      %1180 = vmatprep.subr.mxu0 0.0
      %1181 = vmatpush2.msra.mxu0 0.0
      %1182 = vmatprep.subr.mxu0 0.0
      %1183 = vmatpush2.msra.mxu0 0.0
      %1184 = vmatprep.subr.mxu0 0.0
      %1185 = vmatpush2.msra.mxu0 0.0
      %1186 = vmatprep.subr.mxu0 0.0
      %1187 = vmatpush2.msra.mxu0 0.0
      %1188 = vmatprep.subr.mxu0 0.0
      %1189 = vmatpush2.msra.mxu0 0.0
      %1190 = vmatprep.subr.mxu0 0.0
      %1191 = vmatpush2.msra.mxu0 0.0
      %1192 = vmatprep.subr.mxu0 0.0
      %1193 = vmatpush2.msra.mxu0 0.0
      %1194 = vmatprep.subr.mxu0 0.0
      %1195 = vmatpush2.msra.mxu0 0.0
      %1196 = vmatprep.subr.mxu0 0.0
      %1197 = vmatpush2.msra.mxu0 0.0
      %1198 = vmatprep.subr.mxu0 0.0
      %1199 = vmatpush2.msra.mxu0 0.0
      %1200 = vmatprep.subr.mxu0 0.0
      %1201 = vmatpush2.msra.mxu0 0.0
      %1202 = vmatprep.subr.mxu0 0.0
      %1203 = vmatpush2.msra.mxu0 0.0
      %1204 = vmatprep.subr.mxu0 0.0
      %1205 = vmatpush2.msra.mxu0 0.0
      %1206 = vmatprep.subr.mxu0 0.0
      %1207 = vmatpush2.msra.mxu0 0.0
      %1208 = vmatprep.subr.mxu0 0.0
      %1209 = vmatpush2.msra.mxu0 0.0
      %1210 = vmatprep.mubr.f32.mxu0 0.0
      %1211 = vmatmul.mubr.f32.gmra.mxu0 %v733
      %v1212 = vpop.f32.mrf.mxu0
      %v1213 = vadd.f32 %v1035, %v1212
      %v1214 = vpop.f32.mrf.mxu0
      %v1215 = vadd.f32 %v1037, %v1214
      %1216 = vmatprep.mubr.f32.mxu0 0.0
      %1217 = vmatmul.mubr.f32.gmra.mxu0 %v735
      %v1218 = vpop.f32.mrf.mxu0
      %v1219 = vadd.f32 %v1041, %v1218
      %v1220 = vpop.f32.mrf.mxu0
      %v1221 = vadd.f32 %v1043, %v1220
      %1222 = vmatprep.mubr.f32.mxu0 0.0
      %1223 = vmatmul.mubr.f32.gmra.mxu0 %v737
      %v1224 = vpop.f32.mrf.mxu0
      %v1225 = vadd.f32 %v1047, %v1224
      %v1226 = vpop.f32.mrf.mxu0
      %v1227 = vadd.f32 %v1049, %v1226
      %1228 = vmatprep.mubr.f32.mxu0 0.0
      %1229 = vmatmul.mubr.f32.gmra.mxu0 %v739
      %v1230 = vpop.f32.mrf.mxu0
      %v1231 = vadd.f32 %v1053, %v1230
      %v1232 = vpop.f32.mrf.mxu0
      %v1233 = vadd.f32 %v1055, %v1232
      %1234 = vdwg.mxu0
      %1235 = vmatprep.subr.mxu0 0.0
      %1236 = vmatpush1.msra.mxu0 0.0
      %1237 = vmatprep.subr.mxu0 0.0
      %1238 = vmatpush1.msra.mxu0 0.0
      %1239 = vmatprep.subr.mxu0 0.0
      %1240 = vmatpush1.msra.mxu0 0.0
      %1241 = vmatprep.subr.mxu0 0.0
      %1242 = vmatpush1.msra.mxu0 0.0
      %1243 = vmatprep.subr.mxu0 %v484
      %1244 = vmatpush1.msra.mxu0 %v483
      %1245 = vmatprep.subr.mxu0 %v480
      %1246 = vmatpush1.msra.mxu0 %v479
      %1247 = vmatprep.subr.mxu0 %v476
      %1248 = vmatpush1.msra.mxu0 %v475
      %1249 = vmatprep.subr.mxu0 %v472
      %1250 = vmatpush1.msra.mxu0 %v471
      %1251 = vmatprep.subr.mxu0 %v468
      %1252 = vmatpush1.msra.mxu0 %v467
      %1253 = vmatprep.subr.mxu0 %v464
      %1254 = vmatpush1.msra.mxu0 %v463
      %1255 = vmatprep.subr.mxu0 %v460
      %1256 = vmatpush1.msra.mxu0 %v459
      %1257 = vmatprep.subr.mxu0 %v456
      %1258 = vmatpush1.msra.mxu0 %v455
      %1259 = vmatprep.subr.mxu0 %v452
      %1260 = vmatpush1.msra.mxu0 %v451
      %1261 = vmatprep.subr.mxu0 %v448
      %1262 = vmatpush1.msra.mxu0 %v447
      %1263 = vmatprep.subr.mxu0 %v444
      %1264 = vmatpush1.msra.mxu0 %v443
      %1265 = vmatprep.subr.mxu0 %v440
      %1266 = vmatpush1.msra.mxu0 %v439
      %1267 = vmatprep.subr.mxu0 0.0
      %1268 = vmatpush2.msra.mxu0 0.0
      %1269 = vmatprep.subr.mxu0 0.0
      %1270 = vmatpush2.msra.mxu0 0.0
      %1271 = vmatprep.subr.mxu0 0.0
      %1272 = vmatpush2.msra.mxu0 0.0
      %1273 = vmatprep.subr.mxu0 0.0
      %1274 = vmatpush2.msra.mxu0 0.0
      %1275 = vmatprep.subr.mxu0 0.0
      %1276 = vmatpush2.msra.mxu0 0.0
      %1277 = vmatprep.subr.mxu0 0.0
      %1278 = vmatpush2.msra.mxu0 0.0
      %1279 = vmatprep.subr.mxu0 0.0
      %1280 = vmatpush2.msra.mxu0 0.0
      %1281 = vmatprep.subr.mxu0 0.0
      %1282 = vmatpush2.msra.mxu0 0.0
      %1283 = vmatprep.subr.mxu0 0.0
      %1284 = vmatpush2.msra.mxu0 0.0
      %1285 = vmatprep.subr.mxu0 0.0
      %1286 = vmatpush2.msra.mxu0 0.0
      %1287 = vmatprep.subr.mxu0 0.0
      %1288 = vmatpush2.msra.mxu0 0.0
      %1289 = vmatprep.subr.mxu0 0.0
      %1290 = vmatpush2.msra.mxu0 0.0
      %1291 = vmatprep.subr.mxu0 0.0
      %1292 = vmatpush2.msra.mxu0 0.0
      %1293 = vmatprep.subr.mxu0 0.0
      %1294 = vmatpush2.msra.mxu0 0.0
      %1295 = vmatprep.subr.mxu0 0.0
      %1296 = vmatpush2.msra.mxu0 0.0
      %1297 = vmatprep.subr.mxu0 0.0
      %1298 = vmatpush2.msra.mxu0 0.0
      %1299 = vmatprep.mubr.f32.mxu0 0.0
      %1300 = vmatmul.mubr.f32.gmra.mxu0 %v733
      %v1301 = vpop.f32.mrf.mxu0
      %v1302 = vadd.f32 %v1124, %v1301
      %v1303 = vpop.f32.mrf.mxu0
      %v1304 = vadd.f32 %v1126, %v1303
      %1305 = vmatprep.mubr.f32.mxu0 0.0
      %1306 = vmatmul.mubr.f32.gmra.mxu0 %v735
      %v1307 = vpop.f32.mrf.mxu0
      %v1308 = vadd.f32 %v1130, %v1307
      %v1309 = vpop.f32.mrf.mxu0
      %v1310 = vadd.f32 %v1132, %v1309
      %1311 = vmatprep.mubr.f32.mxu0 0.0
      %1312 = vmatmul.mubr.f32.gmra.mxu0 %v737
      %v1313 = vpop.f32.mrf.mxu0
      %v1314 = vadd.f32 %v1136, %v1313
      %v1315 = vpop.f32.mrf.mxu0
      %v1316 = vadd.f32 %v1138, %v1315
      %1317 = vmatprep.mubr.f32.mxu0 0.0
      %1318 = vmatmul.mubr.f32.gmra.mxu0 %v739
      %v1319 = vpop.f32.mrf.mxu0
      %v1320 = vadd.f32 %v1142, %v1319
      %v1321 = vpop.f32.mrf.mxu0
      %v1322 = vadd.f32 %v1144, %v1321
      %1323 = vdwg.mxu0
      %s1324 = scalar_lea.vmem %s1, 768
      %v1325 = vld [vmem:[%s1324] sm:$0xff]
      %v1326 = vld [vmem:[%s1324 + $0x8] sm:$0xff]
      %v1327 = vld [vmem:[%s1324 + $0x10] sm:$0xff]
      %v1328 = vld [vmem:[%s1324 + $0x18] sm:$0xff]
      %v1329 = vld [vmem:[%s1324 + $0x20] sm:$0xff]
      %v1330 = vld [vmem:[%s1324 + $0x28] sm:$0xff]
      %v1331 = vld [vmem:[%s1324 + $0x30] sm:$0xff]
      %v1332 = vld [vmem:[%s1324 + $0x38] sm:$0xff]
      %v1333 = vld [vmem:[%s1324 + $0x40] sm:$0xff]
      %v1334 = vld [vmem:[%s1324 + $0x48] sm:$0xff]
      %v1335 = vld [vmem:[%s1324 + $0x50] sm:$0xff]
      %v1336 = vld [vmem:[%s1324 + $0x58] sm:$0xff]
      %v1337 = vld [vmem:[%s1324 + $0x60] sm:$0xff]
      %v1338 = vld [vmem:[%s1324 + $0x68] sm:$0xff]
      %v1339 = vld [vmem:[%s1324 + $0x70] sm:$0xff]
      %v1340 = vld [vmem:[%s1324 + $0x78] sm:$0xff]
      %v1341 = vld [vmem:[%s1324 + $0x80] sm:$0xff]
      %v1342 = vld [vmem:[%s1324 + $0x88] sm:$0xff]
      %v1343 = vld [vmem:[%s1324 + $0x90] sm:$0xff]
      %v1344 = vld [vmem:[%s1324 + $0x98] sm:$0xff]
      %v1345 = vld [vmem:[%s1324 + $0xa0] sm:$0xff]
      %v1346 = vld [vmem:[%s1324 + $0xa8] sm:$0xff]
      %v1347 = vld [vmem:[%s1324 + $0xb0] sm:$0xff]
      %v1348 = vld [vmem:[%s1324 + $0xb8] sm:$0xff]
      %v1349 = vld [vmem:[%s1324 + $0xc0] sm:$0xff]
      %v1350 = vld [vmem:[%s1324 + $0xc8] sm:$0xff]
      %v1351 = vld [vmem:[%s1324 + $0xd0] sm:$0xff]
      %v1352 = vld [vmem:[%s1324 + $0xd8] sm:$0xff]
      %v1353 = vld [vmem:[%s1324 + $0xe0] sm:$0xff]
      %v1354 = vld [vmem:[%s1324 + $0xe8] sm:$0xff]
      %v1355 = vld [vmem:[%s1324 + $0xf0] sm:$0xff]
      %v1356 = vld [vmem:[%s1324 + $0xf8] sm:$0xff]
      %v1357 = vld [vmem:[%s1324 + $0x100] sm:$0xff]
      %v1358 = vld [vmem:[%s1324 + $0x108] sm:$0xff]
      %v1359 = vld [vmem:[%s1324 + $0x110] sm:$0xff]
      %v1360 = vld [vmem:[%s1324 + $0x118] sm:$0xff]
      %v1361 = vld [vmem:[%s1324 + $0x120] sm:$0xff]
      %v1362 = vld [vmem:[%s1324 + $0x128] sm:$0xff]
      %v1363 = vld [vmem:[%s1324 + $0x130] sm:$0xff]
      %v1364 = vld [vmem:[%s1324 + $0x138] sm:$0xff]
      %v1365 = vld [vmem:[%s1324 + $0x140] sm:$0xff]
      %v1366 = vld [vmem:[%s1324 + $0x148] sm:$0xff]
      %v1367 = vld [vmem:[%s1324 + $0x150] sm:$0xff]
      %v1368 = vld [vmem:[%s1324 + $0x158] sm:$0xff]
      %v1369 = vld [vmem:[%s1324 + $0x160] sm:$0xff]
      %v1370 = vld [vmem:[%s1324 + $0x168] sm:$0xff]
      %v1371 = vld [vmem:[%s1324 + $0x170] sm:$0xff]
      %v1372 = vld [vmem:[%s1324 + $0x178] sm:$0xff]
      %vm1373 = vcmask 1045504
      %v1374 = vrot.slane %v385, 2
      %v1375 = vrot.slane %v386, 2
      %v1376 = vsel %vm1373, %v1374, %v1375
      %v1377 = vrot.slane %v387, 2
      %v1378 = vsel %vm1373, %v1375, %v1377
      %v1379 = vrot.slane %v388, 2
      %v1380 = vsel %vm1373, %v1377, %v1379
      %v1381 = vsel %vm546, %v1376, 0
      %v1383 = vsel %vm546, %v1378, 0
      %v1385 = vsel %vm546, %v1380, 0
      %v1387 = vsel %vm546, %v1379, 0
      %1389 = vmatprep.subr.mxu0 0.0
      %1390 = vmatpush1.msra.mxu0 0.0
      %1391 = vmatprep.subr.mxu0 0.0
      %1392 = vmatpush1.msra.mxu0 0.0
      %1393 = vmatprep.subr.mxu0 0.0
      %1394 = vmatpush1.msra.mxu0 0.0
      %1395 = vmatprep.subr.mxu0 0.0
      %1396 = vmatpush1.msra.mxu0 0.0
      %1397 = vmatprep.subr.mxu0 %v1370
      %1398 = vmatpush1.msra.mxu0 %v1369
      %1399 = vmatprep.subr.mxu0 %v1366
      %1400 = vmatpush1.msra.mxu0 %v1365
      %1401 = vmatprep.subr.mxu0 %v1362
      %1402 = vmatpush1.msra.mxu0 %v1361
      %1403 = vmatprep.subr.mxu0 %v1358
      %1404 = vmatpush1.msra.mxu0 %v1357
      %1405 = vmatprep.subr.mxu0 %v1354
      %1406 = vmatpush1.msra.mxu0 %v1353
      %1407 = vmatprep.subr.mxu0 %v1350
      %1408 = vmatpush1.msra.mxu0 %v1349
      %1409 = vmatprep.subr.mxu0 %v1346
      %1410 = vmatpush1.msra.mxu0 %v1345
      %1411 = vmatprep.subr.mxu0 %v1342
      %1412 = vmatpush1.msra.mxu0 %v1341
      %1413 = vmatprep.subr.mxu0 %v1338
      %1414 = vmatpush1.msra.mxu0 %v1337
      %1415 = vmatprep.subr.mxu0 %v1334
      %1416 = vmatpush1.msra.mxu0 %v1333
      %1417 = vmatprep.subr.mxu0 %v1330
      %1418 = vmatpush1.msra.mxu0 %v1329
      %1419 = vmatprep.subr.mxu0 %v1326
      %1420 = vmatpush1.msra.mxu0 %v1325
      %1421 = vmatprep.subr.mxu0 0.0
      %1422 = vmatpush2.msra.mxu0 0.0
      %1423 = vmatprep.subr.mxu0 0.0
      %1424 = vmatpush2.msra.mxu0 0.0
      %1425 = vmatprep.subr.mxu0 0.0
      %1426 = vmatpush2.msra.mxu0 0.0
      %1427 = vmatprep.subr.mxu0 0.0
      %1428 = vmatpush2.msra.mxu0 0.0
      %1429 = vmatprep.subr.mxu0 0.0
      %1430 = vmatpush2.msra.mxu0 0.0
      %1431 = vmatprep.subr.mxu0 0.0
      %1432 = vmatpush2.msra.mxu0 0.0
      %1433 = vmatprep.subr.mxu0 0.0
      %1434 = vmatpush2.msra.mxu0 0.0
      %1435 = vmatprep.subr.mxu0 0.0
      %1436 = vmatpush2.msra.mxu0 0.0
      %1437 = vmatprep.subr.mxu0 0.0
      %1438 = vmatpush2.msra.mxu0 0.0
      %1439 = vmatprep.subr.mxu0 0.0
      %1440 = vmatpush2.msra.mxu0 0.0
      %1441 = vmatprep.subr.mxu0 0.0
      %1442 = vmatpush2.msra.mxu0 0.0
      %1443 = vmatprep.subr.mxu0 0.0
      %1444 = vmatpush2.msra.mxu0 0.0
      %1445 = vmatprep.subr.mxu0 0.0
      %1446 = vmatpush2.msra.mxu0 0.0
      %1447 = vmatprep.subr.mxu0 0.0
      %1448 = vmatpush2.msra.mxu0 0.0
      %1449 = vmatprep.subr.mxu0 0.0
      %1450 = vmatpush2.msra.mxu0 0.0
      %1451 = vmatprep.subr.mxu0 0.0
      %1452 = vmatpush2.msra.mxu0 0.0
      %1453 = vmatprep.mubr.f32.mxu0 0.0
      %1454 = vmatmul.mubr.f32.gmra.mxu0 %v1381
      %v1455 = vpop.f32.mrf.mxu0
      %v1456 = vadd.f32 0.0, %v1455
      %v1457 = vpop.f32.mrf.mxu0
      %v1458 = vadd.f32 0.0, %v1457
      %1459 = vmatprep.mubr.f32.mxu0 0.0
      %1460 = vmatmul.mubr.f32.gmra.mxu0 %v1383
      %v1461 = vpop.f32.mrf.mxu0
      %v1462 = vadd.f32 0.0, %v1461
      %v1463 = vpop.f32.mrf.mxu0
      %v1464 = vadd.f32 0.0, %v1463
      %1465 = vmatprep.mubr.f32.mxu0 0.0
      %1466 = vmatmul.mubr.f32.gmra.mxu0 %v1385
      %v1467 = vpop.f32.mrf.mxu0
      %v1468 = vadd.f32 0.0, %v1467
      %v1469 = vpop.f32.mrf.mxu0
      %v1470 = vadd.f32 0.0, %v1469
      %1471 = vmatprep.mubr.f32.mxu0 0.0
      %1472 = vmatmul.mubr.f32.gmra.mxu0 %v1387
      %v1473 = vpop.f32.mrf.mxu0
      %v1474 = vadd.f32 0.0, %v1473
      %v1475 = vpop.f32.mrf.mxu0
      %v1476 = vadd.f32 0.0, %v1475
      %1477 = vdwg.mxu0
      %1478 = vmatprep.subr.mxu0 0.0
      %1479 = vmatpush1.msra.mxu0 0.0
      %1480 = vmatprep.subr.mxu0 0.0
      %1481 = vmatpush1.msra.mxu0 0.0
      %1482 = vmatprep.subr.mxu0 0.0
      %1483 = vmatpush1.msra.mxu0 0.0
      %1484 = vmatprep.subr.mxu0 0.0
      %1485 = vmatpush1.msra.mxu0 0.0
      %1486 = vmatprep.subr.mxu0 %v1372
      %1487 = vmatpush1.msra.mxu0 %v1371
      %1488 = vmatprep.subr.mxu0 %v1368
      %1489 = vmatpush1.msra.mxu0 %v1367
      %1490 = vmatprep.subr.mxu0 %v1364
      %1491 = vmatpush1.msra.mxu0 %v1363
      %1492 = vmatprep.subr.mxu0 %v1360
      %1493 = vmatpush1.msra.mxu0 %v1359
      %1494 = vmatprep.subr.mxu0 %v1356
      %1495 = vmatpush1.msra.mxu0 %v1355
      %1496 = vmatprep.subr.mxu0 %v1352
      %1497 = vmatpush1.msra.mxu0 %v1351
      %1498 = vmatprep.subr.mxu0 %v1348
      %1499 = vmatpush1.msra.mxu0 %v1347
      %1500 = vmatprep.subr.mxu0 %v1344
      %1501 = vmatpush1.msra.mxu0 %v1343
      %1502 = vmatprep.subr.mxu0 %v1340
      %1503 = vmatpush1.msra.mxu0 %v1339
      %1504 = vmatprep.subr.mxu0 %v1336
      %1505 = vmatpush1.msra.mxu0 %v1335
      %1506 = vmatprep.subr.mxu0 %v1332
      %1507 = vmatpush1.msra.mxu0 %v1331
      %1508 = vmatprep.subr.mxu0 %v1328
      %1509 = vmatpush1.msra.mxu0 %v1327
      %1510 = vmatprep.subr.mxu0 0.0
      %1511 = vmatpush2.msra.mxu0 0.0
      %1512 = vmatprep.subr.mxu0 0.0
      %1513 = vmatpush2.msra.mxu0 0.0
      %1514 = vmatprep.subr.mxu0 0.0
      %1515 = vmatpush2.msra.mxu0 0.0
      %1516 = vmatprep.subr.mxu0 0.0
      %1517 = vmatpush2.msra.mxu0 0.0
      %1518 = vmatprep.subr.mxu0 0.0
      %1519 = vmatpush2.msra.mxu0 0.0
      %1520 = vmatprep.subr.mxu0 0.0
      %1521 = vmatpush2.msra.mxu0 0.0
      %1522 = vmatprep.subr.mxu0 0.0
      %1523 = vmatpush2.msra.mxu0 0.0
      %1524 = vmatprep.subr.mxu0 0.0
      %1525 = vmatpush2.msra.mxu0 0.0
      %1526 = vmatprep.subr.mxu0 0.0
      %1527 = vmatpush2.msra.mxu0 0.0
      %1528 = vmatprep.subr.mxu0 0.0
      %1529 = vmatpush2.msra.mxu0 0.0
      %1530 = vmatprep.subr.mxu0 0.0
      %1531 = vmatpush2.msra.mxu0 0.0
      %1532 = vmatprep.subr.mxu0 0.0
      %1533 = vmatpush2.msra.mxu0 0.0
      %1534 = vmatprep.subr.mxu0 0.0
      %1535 = vmatpush2.msra.mxu0 0.0
      %1536 = vmatprep.subr.mxu0 0.0
      %1537 = vmatpush2.msra.mxu0 0.0
      %1538 = vmatprep.subr.mxu0 0.0
      %1539 = vmatpush2.msra.mxu0 0.0
      %1540 = vmatprep.subr.mxu0 0.0
      %1541 = vmatpush2.msra.mxu0 0.0
      %1542 = vmatprep.mubr.f32.mxu0 0.0
      %1543 = vmatmul.mubr.f32.gmra.mxu0 %v1381
      %v1544 = vpop.f32.mrf.mxu0
      %v1545 = vadd.f32 0.0, %v1544
      %v1546 = vpop.f32.mrf.mxu0
      %v1547 = vadd.f32 0.0, %v1546
      %1548 = vmatprep.mubr.f32.mxu0 0.0
      %1549 = vmatmul.mubr.f32.gmra.mxu0 %v1383
      %v1550 = vpop.f32.mrf.mxu0
      %v1551 = vadd.f32 0.0, %v1550
      %v1552 = vpop.f32.mrf.mxu0
      %v1553 = vadd.f32 0.0, %v1552
      %1554 = vmatprep.mubr.f32.mxu0 0.0
      %1555 = vmatmul.mubr.f32.gmra.mxu0 %v1385
      %v1556 = vpop.f32.mrf.mxu0
      %v1557 = vadd.f32 0.0, %v1556
      %v1558 = vpop.f32.mrf.mxu0
      %v1559 = vadd.f32 0.0, %v1558
      %1560 = vmatprep.mubr.f32.mxu0 0.0
      %1561 = vmatmul.mubr.f32.gmra.mxu0 %v1387
      %v1562 = vpop.f32.mrf.mxu0
      %v1563 = vadd.f32 0.0, %v1562
      %v1564 = vpop.f32.mrf.mxu0
      %v1565 = vadd.f32 0.0, %v1564
      %1566 = vdwg.mxu0
      %v1567 = vadd.f32 %v808, %v1456
      %v1568 = vadd.f32 %v810, %v1458
      %v1569 = vadd.f32 %v897, %v1545
      %v1570 = vadd.f32 %v899, %v1547
      %v1571 = vadd.f32 %v814, %v1462
      %v1572 = vadd.f32 %v816, %v1464
      %v1573 = vadd.f32 %v903, %v1551
      %v1574 = vadd.f32 %v905, %v1553
      %v1575 = vadd.f32 %v820, %v1468
      %v1576 = vadd.f32 %v822, %v1470
      %v1577 = vadd.f32 %v909, %v1557
      %v1578 = vadd.f32 %v911, %v1559
      %v1579 = vadd.f32 %v826, %v1474
      %v1580 = vadd.f32 %v828, %v1476
      %v1581 = vadd.f32 %v915, %v1563
      %v1582 = vadd.f32 %v917, %v1565
      %s1583 = scalar_lea.vmem %s2, 768
      %v1584 = vld [vmem:[%s1583] sm:$0xff]
      %v1585 = vld [vmem:[%s1583 + $0x8] sm:$0xff]
      %v1586 = vld [vmem:[%s1583 + $0x10] sm:$0xff]
      %v1587 = vld [vmem:[%s1583 + $0x18] sm:$0xff]
      %v1588 = vld [vmem:[%s1583 + $0x20] sm:$0xff]
      %v1589 = vld [vmem:[%s1583 + $0x28] sm:$0xff]
      %v1590 = vld [vmem:[%s1583 + $0x30] sm:$0xff]
      %v1591 = vld [vmem:[%s1583 + $0x38] sm:$0xff]
      %v1592 = vld [vmem:[%s1583 + $0x40] sm:$0xff]
      %v1593 = vld [vmem:[%s1583 + $0x48] sm:$0xff]
      %v1594 = vld [vmem:[%s1583 + $0x50] sm:$0xff]
      %v1595 = vld [vmem:[%s1583 + $0x58] sm:$0xff]
      %v1596 = vld [vmem:[%s1583 + $0x60] sm:$0xff]
      %v1597 = vld [vmem:[%s1583 + $0x68] sm:$0xff]
      %v1598 = vld [vmem:[%s1583 + $0x70] sm:$0xff]
      %v1599 = vld [vmem:[%s1583 + $0x78] sm:$0xff]
      %v1600 = vld [vmem:[%s1583 + $0x80] sm:$0xff]
      %v1601 = vld [vmem:[%s1583 + $0x88] sm:$0xff]
      %v1602 = vld [vmem:[%s1583 + $0x90] sm:$0xff]
      %v1603 = vld [vmem:[%s1583 + $0x98] sm:$0xff]
      %v1604 = vld [vmem:[%s1583 + $0xa0] sm:$0xff]
      %v1605 = vld [vmem:[%s1583 + $0xa8] sm:$0xff]
      %v1606 = vld [vmem:[%s1583 + $0xb0] sm:$0xff]
      %v1607 = vld [vmem:[%s1583 + $0xb8] sm:$0xff]
      %v1608 = vld [vmem:[%s1583 + $0xc0] sm:$0xff]
      %v1609 = vld [vmem:[%s1583 + $0xc8] sm:$0xff]
      %v1610 = vld [vmem:[%s1583 + $0xd0] sm:$0xff]
      %v1611 = vld [vmem:[%s1583 + $0xd8] sm:$0xff]
      %v1612 = vld [vmem:[%s1583 + $0xe0] sm:$0xff]
      %v1613 = vld [vmem:[%s1583 + $0xe8] sm:$0xff]
      %v1614 = vld [vmem:[%s1583 + $0xf0] sm:$0xff]
      %v1615 = vld [vmem:[%s1583 + $0xf8] sm:$0xff]
      %v1616 = vld [vmem:[%s1583 + $0x100] sm:$0xff]
      %v1617 = vld [vmem:[%s1583 + $0x108] sm:$0xff]
      %v1618 = vld [vmem:[%s1583 + $0x110] sm:$0xff]
      %v1619 = vld [vmem:[%s1583 + $0x118] sm:$0xff]
      %v1620 = vld [vmem:[%s1583 + $0x120] sm:$0xff]
      %v1621 = vld [vmem:[%s1583 + $0x128] sm:$0xff]
      %v1622 = vld [vmem:[%s1583 + $0x130] sm:$0xff]
      %v1623 = vld [vmem:[%s1583 + $0x138] sm:$0xff]
      %v1624 = vld [vmem:[%s1583 + $0x140] sm:$0xff]
      %v1625 = vld [vmem:[%s1583 + $0x148] sm:$0xff]
      %v1626 = vld [vmem:[%s1583 + $0x150] sm:$0xff]
      %v1627 = vld [vmem:[%s1583 + $0x158] sm:$0xff]
      %v1628 = vld [vmem:[%s1583 + $0x160] sm:$0xff]
      %v1629 = vld [vmem:[%s1583 + $0x168] sm:$0xff]
      %v1630 = vld [vmem:[%s1583 + $0x170] sm:$0xff]
      %v1631 = vld [vmem:[%s1583 + $0x178] sm:$0xff]
      %1632 = vmatprep.subr.mxu0 0.0
      %1633 = vmatpush1.msra.mxu0 0.0
      %1634 = vmatprep.subr.mxu0 0.0
      %1635 = vmatpush1.msra.mxu0 0.0
      %1636 = vmatprep.subr.mxu0 0.0
      %1637 = vmatpush1.msra.mxu0 0.0
      %1638 = vmatprep.subr.mxu0 0.0
      %1639 = vmatpush1.msra.mxu0 0.0
      %1640 = vmatprep.subr.mxu0 %v1629
      %1641 = vmatpush1.msra.mxu0 %v1628
      %1642 = vmatprep.subr.mxu0 %v1625
      %1643 = vmatpush1.msra.mxu0 %v1624
      %1644 = vmatprep.subr.mxu0 %v1621
      %1645 = vmatpush1.msra.mxu0 %v1620
      %1646 = vmatprep.subr.mxu0 %v1617
      %1647 = vmatpush1.msra.mxu0 %v1616
      %1648 = vmatprep.subr.mxu0 %v1613
      %1649 = vmatpush1.msra.mxu0 %v1612
      %1650 = vmatprep.subr.mxu0 %v1609
      %1651 = vmatpush1.msra.mxu0 %v1608
      %1652 = vmatprep.subr.mxu0 %v1605
      %1653 = vmatpush1.msra.mxu0 %v1604
      %1654 = vmatprep.subr.mxu0 %v1601
      %1655 = vmatpush1.msra.mxu0 %v1600
      %1656 = vmatprep.subr.mxu0 %v1597
      %1657 = vmatpush1.msra.mxu0 %v1596
      %1658 = vmatprep.subr.mxu0 %v1593
      %1659 = vmatpush1.msra.mxu0 %v1592
      %1660 = vmatprep.subr.mxu0 %v1589
      %1661 = vmatpush1.msra.mxu0 %v1588
      %1662 = vmatprep.subr.mxu0 %v1585
      %1663 = vmatpush1.msra.mxu0 %v1584
      %1664 = vmatprep.subr.mxu0 0.0
      %1665 = vmatpush2.msra.mxu0 0.0
      %1666 = vmatprep.subr.mxu0 0.0
      %1667 = vmatpush2.msra.mxu0 0.0
      %1668 = vmatprep.subr.mxu0 0.0
      %1669 = vmatpush2.msra.mxu0 0.0
      %1670 = vmatprep.subr.mxu0 0.0
      %1671 = vmatpush2.msra.mxu0 0.0
      %1672 = vmatprep.subr.mxu0 0.0
      %1673 = vmatpush2.msra.mxu0 0.0
      %1674 = vmatprep.subr.mxu0 0.0
      %1675 = vmatpush2.msra.mxu0 0.0
      %1676 = vmatprep.subr.mxu0 0.0
      %1677 = vmatpush2.msra.mxu0 0.0
      %1678 = vmatprep.subr.mxu0 0.0
      %1679 = vmatpush2.msra.mxu0 0.0
      %1680 = vmatprep.subr.mxu0 0.0
      %1681 = vmatpush2.msra.mxu0 0.0
      %1682 = vmatprep.subr.mxu0 0.0
      %1683 = vmatpush2.msra.mxu0 0.0
      %1684 = vmatprep.subr.mxu0 0.0
      %1685 = vmatpush2.msra.mxu0 0.0
      %1686 = vmatprep.subr.mxu0 0.0
      %1687 = vmatpush2.msra.mxu0 0.0
      %1688 = vmatprep.subr.mxu0 0.0
      %1689 = vmatpush2.msra.mxu0 0.0
      %1690 = vmatprep.subr.mxu0 0.0
      %1691 = vmatpush2.msra.mxu0 0.0
      %1692 = vmatprep.subr.mxu0 0.0
      %1693 = vmatpush2.msra.mxu0 0.0
      %1694 = vmatprep.subr.mxu0 0.0
      %1695 = vmatpush2.msra.mxu0 0.0
      %1696 = vmatprep.mubr.f32.mxu0 0.0
      %1697 = vmatmul.mubr.f32.gmra.mxu0 %v1381
      %v1698 = vpop.f32.mrf.mxu0
      %v1699 = vadd.f32 0.0, %v1698
      %v1700 = vpop.f32.mrf.mxu0
      %v1701 = vadd.f32 0.0, %v1700
      %1702 = vmatprep.mubr.f32.mxu0 0.0
      %1703 = vmatmul.mubr.f32.gmra.mxu0 %v1383
      %v1704 = vpop.f32.mrf.mxu0
      %v1705 = vadd.f32 0.0, %v1704
      %v1706 = vpop.f32.mrf.mxu0
      %v1707 = vadd.f32 0.0, %v1706
      %1708 = vmatprep.mubr.f32.mxu0 0.0
      %1709 = vmatmul.mubr.f32.gmra.mxu0 %v1385
      %v1710 = vpop.f32.mrf.mxu0
      %v1711 = vadd.f32 0.0, %v1710
      %v1712 = vpop.f32.mrf.mxu0
      %v1713 = vadd.f32 0.0, %v1712
      %1714 = vmatprep.mubr.f32.mxu0 0.0
      %1715 = vmatmul.mubr.f32.gmra.mxu0 %v1387
      %v1716 = vpop.f32.mrf.mxu0
      %v1717 = vadd.f32 0.0, %v1716
      %v1718 = vpop.f32.mrf.mxu0
      %v1719 = vadd.f32 0.0, %v1718
      %1720 = vdwg.mxu0
      %1721 = vmatprep.subr.mxu0 0.0
      %1722 = vmatpush1.msra.mxu0 0.0
      %1723 = vmatprep.subr.mxu0 0.0
      %1724 = vmatpush1.msra.mxu0 0.0
      %1725 = vmatprep.subr.mxu0 0.0
      %1726 = vmatpush1.msra.mxu0 0.0
      %1727 = vmatprep.subr.mxu0 0.0
      %1728 = vmatpush1.msra.mxu0 0.0
      %1729 = vmatprep.subr.mxu0 %v1631
      %1730 = vmatpush1.msra.mxu0 %v1630
      %1731 = vmatprep.subr.mxu0 %v1627
      %1732 = vmatpush1.msra.mxu0 %v1626
      %1733 = vmatprep.subr.mxu0 %v1623
      %1734 = vmatpush1.msra.mxu0 %v1622
      %1735 = vmatprep.subr.mxu0 %v1619
      %1736 = vmatpush1.msra.mxu0 %v1618
      %1737 = vmatprep.subr.mxu0 %v1615
      %1738 = vmatpush1.msra.mxu0 %v1614
      %1739 = vmatprep.subr.mxu0 %v1611
      %1740 = vmatpush1.msra.mxu0 %v1610
      %1741 = vmatprep.subr.mxu0 %v1607
      %1742 = vmatpush1.msra.mxu0 %v1606
      %1743 = vmatprep.subr.mxu0 %v1603
      %1744 = vmatpush1.msra.mxu0 %v1602
      %1745 = vmatprep.subr.mxu0 %v1599
      %1746 = vmatpush1.msra.mxu0 %v1598
      %1747 = vmatprep.subr.mxu0 %v1595
      %1748 = vmatpush1.msra.mxu0 %v1594
      %1749 = vmatprep.subr.mxu0 %v1591
      %1750 = vmatpush1.msra.mxu0 %v1590
      %1751 = vmatprep.subr.mxu0 %v1587
      %1752 = vmatpush1.msra.mxu0 %v1586
      %1753 = vmatprep.subr.mxu0 0.0
      %1754 = vmatpush2.msra.mxu0 0.0
      %1755 = vmatprep.subr.mxu0 0.0
      %1756 = vmatpush2.msra.mxu0 0.0
      %1757 = vmatprep.subr.mxu0 0.0
      %1758 = vmatpush2.msra.mxu0 0.0
      %1759 = vmatprep.subr.mxu0 0.0
      %1760 = vmatpush2.msra.mxu0 0.0
      %1761 = vmatprep.subr.mxu0 0.0
      %1762 = vmatpush2.msra.mxu0 0.0
      %1763 = vmatprep.subr.mxu0 0.0
      %1764 = vmatpush2.msra.mxu0 0.0
      %1765 = vmatprep.subr.mxu0 0.0
      %1766 = vmatpush2.msra.mxu0 0.0
      %1767 = vmatprep.subr.mxu0 0.0
      %1768 = vmatpush2.msra.mxu0 0.0
      %1769 = vmatprep.subr.mxu0 0.0
      %1770 = vmatpush2.msra.mxu0 0.0
      %1771 = vmatprep.subr.mxu0 0.0
      %1772 = vmatpush2.msra.mxu0 0.0
      %1773 = vmatprep.subr.mxu0 0.0
      %1774 = vmatpush2.msra.mxu0 0.0
      %1775 = vmatprep.subr.mxu0 0.0
      %1776 = vmatpush2.msra.mxu0 0.0
      %1777 = vmatprep.subr.mxu0 0.0
      %1778 = vmatpush2.msra.mxu0 0.0
      %1779 = vmatprep.subr.mxu0 0.0
      %1780 = vmatpush2.msra.mxu0 0.0
      %1781 = vmatprep.subr.mxu0 0.0
      %1782 = vmatpush2.msra.mxu0 0.0
      %1783 = vmatprep.subr.mxu0 0.0
      %1784 = vmatpush2.msra.mxu0 0.0
      %1785 = vmatprep.mubr.f32.mxu0 0.0
      %1786 = vmatmul.mubr.f32.gmra.mxu0 %v1381
      %v1787 = vpop.f32.mrf.mxu0
      %v1788 = vadd.f32 0.0, %v1787
      %v1789 = vpop.f32.mrf.mxu0
      %v1790 = vadd.f32 0.0, %v1789
      %1791 = vmatprep.mubr.f32.mxu0 0.0
      %1792 = vmatmul.mubr.f32.gmra.mxu0 %v1383
      %v1793 = vpop.f32.mrf.mxu0
      %v1794 = vadd.f32 0.0, %v1793
      %v1795 = vpop.f32.mrf.mxu0
      %v1796 = vadd.f32 0.0, %v1795
      %1797 = vmatprep.mubr.f32.mxu0 0.0
      %1798 = vmatmul.mubr.f32.gmra.mxu0 %v1385
      %v1799 = vpop.f32.mrf.mxu0
      %v1800 = vadd.f32 0.0, %v1799
      %v1801 = vpop.f32.mrf.mxu0
      %v1802 = vadd.f32 0.0, %v1801
      %1803 = vmatprep.mubr.f32.mxu0 0.0
      %1804 = vmatmul.mubr.f32.gmra.mxu0 %v1387
      %v1805 = vpop.f32.mrf.mxu0
      %v1806 = vadd.f32 0.0, %v1805
      %v1807 = vpop.f32.mrf.mxu0
      %v1808 = vadd.f32 0.0, %v1807
      %1809 = vdwg.mxu0
      %v1810 = vadd.f32 %v1213, %v1699
      %v1811 = vadd.f32 %v1215, %v1701
      %v1812 = vadd.f32 %v1302, %v1788
      %v1813 = vadd.f32 %v1304, %v1790
      %v1814 = vadd.f32 %v1219, %v1705
      %v1815 = vadd.f32 %v1221, %v1707
      %v1816 = vadd.f32 %v1308, %v1794
      %v1817 = vadd.f32 %v1310, %v1796
      %v1818 = vadd.f32 %v1225, %v1711
      %v1819 = vadd.f32 %v1227, %v1713
      %v1820 = vadd.f32 %v1314, %v1800
      %v1821 = vadd.f32 %v1316, %v1802
      %v1822 = vadd.f32 %v1231, %v1717
      %v1823 = vadd.f32 %v1233, %v1719
      %v1824 = vadd.f32 %v1320, %v1806
      %v1825 = vadd.f32 %v1322, %v1808
      %v1826 = vmax.f32 %v1567, %v1810
      %v1827 = vmax.f32 %v1568, %v1811
      %v1828 = vmax.f32 %v1569, %v1812
      %v1829 = vmax.f32 %v1570, %v1813
      %v1830 = vmax.f32 %v1571, %v1814
      %v1831 = vmax.f32 %v1572, %v1815
      %v1832 = vmax.f32 %v1573, %v1816
      %v1833 = vmax.f32 %v1574, %v1817
      %v1834 = vmax.f32 %v1575, %v1818
      %v1835 = vmax.f32 %v1576, %v1819
      %v1836 = vmax.f32 %v1577, %v1820
      %v1837 = vmax.f32 %v1578, %v1821
      %v1838 = vmax.f32 %v1579, %v1822
      %v1839 = vmax.f32 %v1580, %v1823
      %v1840 = vmax.f32 %v1581, %v1824
      %v1841 = vmax.f32 %v1582, %v1825
      %v1846 = vrot.slane %v1826, 1
      %v1847 = vrot.slane %v1827, 1
      %v1848 = vrot.slane %v1828, 1
      %v1849 = vrot.slane %v1829, 1
      %v1854 = vmax.f32 %v1826, %v1846
      %v1855 = vmax.f32 %v1827, %v1847
      %v1856 = vmax.f32 %v1828, %v1848
      %v1857 = vmax.f32 %v1829, %v1849
      %v1862 = vrot.slane %v1830, 1
      %v1863 = vrot.slane %v1831, 1
      %v1864 = vrot.slane %v1832, 1
      %v1865 = vrot.slane %v1833, 1
      %v1870 = vmax.f32 %v1830, %v1862
      %v1871 = vmax.f32 %v1831, %v1863
      %v1872 = vmax.f32 %v1832, %v1864
      %v1873 = vmax.f32 %v1833, %v1865
      %v1878 = vrot.slane %v1834, 1
      %v1879 = vrot.slane %v1835, 1
      %v1880 = vrot.slane %v1836, 1
      %v1881 = vrot.slane %v1837, 1
      %v1886 = vmax.f32 %v1834, %v1878
      %v1887 = vmax.f32 %v1835, %v1879
      %v1888 = vmax.f32 %v1836, %v1880
      %v1889 = vmax.f32 %v1837, %v1881
      %v1894 = vrot.slane %v1838, 1
      %v1895 = vrot.slane %v1839, 1
      %v1896 = vrot.slane %v1840, 1
      %v1897 = vrot.slane %v1841, 1
      %v1902 = vmax.f32 %v1838, %v1894
      %v1903 = vmax.f32 %v1839, %v1895
      %v1904 = vmax.f32 %v1840, %v1896
      %v1905 = vmax.f32 %v1841, %v1897
      %v1910 = vrot.slane %v1854, 1
      %v1911 = vrot.slane %v1855, 1
      %v1912 = vrot.slane %v1856, 1
      %v1913 = vrot.slane %v1857, 1
      %v1918 = vrot.slane %v1854, 2
      %v1919 = vrot.slane %v1855, 2
      %v1920 = vrot.slane %v1856, 2
      %v1921 = vrot.slane %v1857, 2
      %v1926 = vrot.slane %v1854, 3
      %v1927 = vrot.slane %v1855, 3
      %v1928 = vrot.slane %v1856, 3
      %v1929 = vrot.slane %v1857, 3
      %v1938 = vrot.slane %v1870, 4
      %v1939 = vrot.slane %v1871, 4
      %v1940 = vrot.slane %v1872, 4
      %v1941 = vrot.slane %v1873, 4
      %v1946 = vrot.slane %v1870, 5
      %v1947 = vrot.slane %v1871, 5
      %v1948 = vrot.slane %v1872, 5
      %v1949 = vrot.slane %v1873, 5
      %v1954 = vrot.slane %v1870, 6
      %v1955 = vrot.slane %v1871, 6
      %v1956 = vrot.slane %v1872, 6
      %v1957 = vrot.slane %v1873, 6
      %v1962 = vrot.slane %v1870, 7
      %v1963 = vrot.slane %v1871, 7
      %v1964 = vrot.slane %v1872, 7
      %v1965 = vrot.slane %v1873, 7
      %v1974 = vrot.slane %v1886, 1
      %v1975 = vrot.slane %v1887, 1
      %v1976 = vrot.slane %v1888, 1
      %v1977 = vrot.slane %v1889, 1
      %v1982 = vrot.slane %v1886, 2
      %v1983 = vrot.slane %v1887, 2
      %v1984 = vrot.slane %v1888, 2
      %v1985 = vrot.slane %v1889, 2
      %v1990 = vrot.slane %v1886, 3
      %v1991 = vrot.slane %v1887, 3
      %v1992 = vrot.slane %v1888, 3
      %v1993 = vrot.slane %v1889, 3
      %v2002 = vrot.slane %v1902, 4
      %v2003 = vrot.slane %v1903, 4
      %v2004 = vrot.slane %v1904, 4
      %v2005 = vrot.slane %v1905, 4
      %v2010 = vrot.slane %v1902, 5
      %v2011 = vrot.slane %v1903, 5
      %v2012 = vrot.slane %v1904, 5
      %v2013 = vrot.slane %v1905, 5
      %v2018 = vrot.slane %v1902, 6
      %v2019 = vrot.slane %v1903, 6
      %v2020 = vrot.slane %v1904, 6
      %v2021 = vrot.slane %v1905, 6
      %vm2026 = vcmask 1040384
      %v2027 = vsel %vm2026, %v1854, %v1910
      %v2028 = vsel %vm2026, %v1855, %v1911
      %v2029 = vsel %vm2026, %v1856, %v1912
      %v2030 = vsel %vm2026, %v1857, %v1913
      %vm2031 = vcmask 1041408
      %v2032 = vsel %vm2031, %v2027, %v1918
      %v2033 = vsel %vm2031, %v2028, %v1919
      %v2034 = vsel %vm2031, %v2029, %v1920
      %v2035 = vsel %vm2031, %v2030, %v1921
      %vm2036 = vcmask 1042432
      %v2037 = vsel %vm2036, %v2032, %v1926
      %v2038 = vsel %vm2036, %v2033, %v1927
      %v2039 = vsel %vm2036, %v2034, %v1928
      %v2040 = vsel %vm2036, %v2035, %v1929
      %vm2041 = vcmask 1043456
      %v2042 = vsel %vm2041, %v2037, %v1938
      %v2043 = vsel %vm2041, %v2038, %v1939
      %v2044 = vsel %vm2041, %v2039, %v1940
      %v2045 = vsel %vm2041, %v2040, %v1941
      %vm2046 = vcmask 1044480
      %v2047 = vsel %vm2046, %v2042, %v1946
      %v2048 = vsel %vm2046, %v2043, %v1947
      %v2049 = vsel %vm2046, %v2044, %v1948
      %v2050 = vsel %vm2046, %v2045, %v1949
      %v2051 = vsel %vm1373, %v2047, %v1954
      %v2052 = vsel %vm1373, %v2048, %v1955
      %v2053 = vsel %vm1373, %v2049, %v1956
      %v2054 = vsel %vm1373, %v2050, %v1957
      %v2055 = vsel %vm538, %v2051, %v1962
      %v2056 = vsel %vm538, %v2052, %v1963
      %v2057 = vsel %vm538, %v2053, %v1964
      %v2058 = vsel %vm538, %v2054, %v1965
      %v2059 = vsel %vm2026, %v1886, %v1974
      %v2060 = vsel %vm2026, %v1887, %v1975
      %v2061 = vsel %vm2026, %v1888, %v1976
      %v2062 = vsel %vm2026, %v1889, %v1977
      %v2063 = vsel %vm2031, %v2059, %v1982
      %v2064 = vsel %vm2031, %v2060, %v1983
      %v2065 = vsel %vm2031, %v2061, %v1984
      %v2066 = vsel %vm2031, %v2062, %v1985
      %v2067 = vsel %vm2036, %v2063, %v1990
      %v2068 = vsel %vm2036, %v2064, %v1991
      %v2069 = vsel %vm2036, %v2065, %v1992
      %v2070 = vsel %vm2036, %v2066, %v1993
      %v2071 = vsel %vm2041, %v2067, %v2002
      %v2072 = vsel %vm2041, %v2068, %v2003
      %v2073 = vsel %vm2041, %v2069, %v2004
      %v2074 = vsel %vm2041, %v2070, %v2005
      %v2075 = vsel %vm2046, %v2071, %v2010
      %v2076 = vsel %vm2046, %v2072, %v2011
      %v2077 = vsel %vm2046, %v2073, %v2012
      %v2078 = vsel %vm2046, %v2074, %v2013
      %v2079 = vsel %vm1373, %v2075, %v2018
      %v2080 = vsel %vm1373, %v2076, %v2019
      %v2081 = vsel %vm1373, %v2077, %v2020
      %v2082 = vsel %vm1373, %v2078, %v2021
      %v2083 = vld [vmem:[%s5] sm:$0xf]
      %v2085 = vlaneseq
      %v2086 = vshrl.u32 %v2085, 7
      %v2087 = vsub.s32 0, %v2086
      %v2088 = vrot.slane %v2083, %v2087
      %v2089 = vlaneseq
      %v2090 = vshrl.u32 %v2089, 7
      %v2091 = vsub.s32 1, %v2090
      %v2092 = vrot.slane %v2083, %v2091
      %v2093 = vlaneseq
      %v2094 = vshrl.u32 %v2093, 7
      %v2095 = vsub.s32 2, %v2094
      %v2096 = vrot.slane %v2083, %v2095
      %v2097 = vlaneseq
      %v2098 = vshrl.u32 %v2097, 7
      %v2099 = vsub.s32 3, %v2098
      %v2100 = vrot.slane %v2083, %v2099
      %v2105 = vadd.f32 %v2055, %v2088
      %v2106 = vadd.f32 %v2056, %v2092
      %v2107 = vadd.f32 %v2057, %v2096
      %v2108 = vadd.f32 %v2058, %v2100
      %v2109 = vadd.f32 %v2079, %v2088
      %v2110 = vadd.f32 %v2080, %v2092
      %v2111 = vadd.f32 %v2081, %v2096
      %v2112 = vadd.f32 %v2082, %v2100
      %v2113 = vld [vmem:[%s3] sm:$0xff]
      %v2114 = vld [vmem:[%s3 + $0x8] sm:$0xff]
      %v2115 = vld [vmem:[%s3 + $0x10] sm:$0xff]
      %v2116 = vld [vmem:[%s3 + $0x18] sm:$0xff]
      %v2117 = vld [vmem:[%s3 + $0x20] sm:$0xff]
      %v2118 = vld [vmem:[%s3 + $0x28] sm:$0xff]
      %v2119 = vld [vmem:[%s3 + $0x30] sm:$0xff]
      %v2120 = vld [vmem:[%s3 + $0x38] sm:$0xff]
      %v2121 = vld [vmem:[%s3 + $0x40] sm:$0xff]
      %v2122 = vld [vmem:[%s3 + $0x48] sm:$0xff]
      %v2123 = vld [vmem:[%s3 + $0x50] sm:$0xff]
      %v2124 = vld [vmem:[%s3 + $0x58] sm:$0xff]
      %v2125 = vld [vmem:[%s3 + $0x60] sm:$0xff]
      %v2126 = vld [vmem:[%s3 + $0x68] sm:$0xff]
      %v2127 = vld [vmem:[%s3 + $0x70] sm:$0xff]
      %v2128 = vld [vmem:[%s3 + $0x78] sm:$0xff]
      %v2129 = vld [vmem:[%s3 + $0x80] sm:$0xff]
      %v2130 = vld [vmem:[%s3 + $0x88] sm:$0xff]
      %v2131 = vld [vmem:[%s3 + $0x90] sm:$0xff]
      %v2132 = vld [vmem:[%s3 + $0x98] sm:$0xff]
      %v2133 = vld [vmem:[%s3 + $0xa0] sm:$0xff]
      %v2134 = vld [vmem:[%s3 + $0xa8] sm:$0xff]
      %v2135 = vld [vmem:[%s3 + $0xb0] sm:$0xff]
      %v2136 = vld [vmem:[%s3 + $0xb8] sm:$0xff]
      %v2137 = vld [vmem:[%s3 + $0xc0] sm:$0xff]
      %v2138 = vld [vmem:[%s3 + $0xc8] sm:$0xff]
      %v2139 = vld [vmem:[%s3 + $0xd0] sm:$0xff]
      %v2140 = vld [vmem:[%s3 + $0xd8] sm:$0xff]
      %v2141 = vld [vmem:[%s3 + $0xe0] sm:$0xff]
      %v2142 = vld [vmem:[%s3 + $0xe8] sm:$0xff]
      %v2143 = vld [vmem:[%s3 + $0xf0] sm:$0xff]
      %v2144 = vld [vmem:[%s3 + $0xf8] sm:$0xff]
      %v2145 = vld [vmem:[%s3 + $0x100] sm:$0xff]
      %v2146 = vld [vmem:[%s3 + $0x108] sm:$0xff]
      %v2147 = vld [vmem:[%s3 + $0x110] sm:$0xff]
      %v2148 = vld [vmem:[%s3 + $0x118] sm:$0xff]
      %v2149 = vld [vmem:[%s3 + $0x120] sm:$0xff]
      %v2150 = vld [vmem:[%s3 + $0x128] sm:$0xff]
      %v2151 = vld [vmem:[%s3 + $0x130] sm:$0xff]
      %v2152 = vld [vmem:[%s3 + $0x138] sm:$0xff]
      %v2153 = vld [vmem:[%s3 + $0x140] sm:$0xff]
      %v2154 = vld [vmem:[%s3 + $0x148] sm:$0xff]
      %v2155 = vld [vmem:[%s3 + $0x150] sm:$0xff]
      %v2156 = vld [vmem:[%s3 + $0x158] sm:$0xff]
      %v2157 = vld [vmem:[%s3 + $0x160] sm:$0xff]
      %v2158 = vld [vmem:[%s3 + $0x168] sm:$0xff]
      %v2159 = vld [vmem:[%s3 + $0x170] sm:$0xff]
      %v2160 = vld [vmem:[%s3 + $0x178] sm:$0xff]
      %v2161 = vld [vmem:[%s3 + $0x180] sm:$0xff]
      %v2162 = vld [vmem:[%s3 + $0x188] sm:$0xff]
      %v2163 = vld [vmem:[%s3 + $0x190] sm:$0xff]
      %v2164 = vld [vmem:[%s3 + $0x198] sm:$0xff]
      %v2165 = vld [vmem:[%s3 + $0x1a0] sm:$0xff]
      %v2166 = vld [vmem:[%s3 + $0x1a8] sm:$0xff]
      %v2167 = vld [vmem:[%s3 + $0x1b0] sm:$0xff]
      %v2168 = vld [vmem:[%s3 + $0x1b8] sm:$0xff]
      %v2169 = vld [vmem:[%s3 + $0x1c0] sm:$0xff]
      %v2170 = vld [vmem:[%s3 + $0x1c8] sm:$0xff]
      %v2171 = vld [vmem:[%s3 + $0x1d0] sm:$0xff]
      %v2172 = vld [vmem:[%s3 + $0x1d8] sm:$0xff]
      %v2173 = vld [vmem:[%s3 + $0x1e0] sm:$0xff]
      %v2174 = vld [vmem:[%s3 + $0x1e8] sm:$0xff]
      %v2175 = vld [vmem:[%s3 + $0x1f0] sm:$0xff]
      %v2176 = vld [vmem:[%s3 + $0x1f8] sm:$0xff]
      %v2177 = vld [vmem:[%s3 + $0x200] sm:$0xff]
      %v2178 = vld [vmem:[%s3 + $0x208] sm:$0xff]
      %v2179 = vld [vmem:[%s3 + $0x210] sm:$0xff]
      %v2180 = vld [vmem:[%s3 + $0x218] sm:$0xff]
      %v2181 = vld [vmem:[%s3 + $0x220] sm:$0xff]
      %v2182 = vld [vmem:[%s3 + $0x228] sm:$0xff]
      %v2183 = vld [vmem:[%s3 + $0x230] sm:$0xff]
      %v2184 = vld [vmem:[%s3 + $0x238] sm:$0xff]
      %v2185 = vld [vmem:[%s3 + $0x240] sm:$0xff]
      %v2186 = vld [vmem:[%s3 + $0x248] sm:$0xff]
      %v2187 = vld [vmem:[%s3 + $0x250] sm:$0xff]
      %v2188 = vld [vmem:[%s3 + $0x258] sm:$0xff]
      %v2189 = vld [vmem:[%s3 + $0x260] sm:$0xff]
      %v2190 = vld [vmem:[%s3 + $0x268] sm:$0xff]
      %v2191 = vld [vmem:[%s3 + $0x270] sm:$0xff]
      %v2192 = vld [vmem:[%s3 + $0x278] sm:$0xff]
      %v2193 = vld [vmem:[%s3 + $0x280] sm:$0xff]
      %v2194 = vld [vmem:[%s3 + $0x288] sm:$0xff]
      %v2195 = vld [vmem:[%s3 + $0x290] sm:$0xff]
      %v2196 = vld [vmem:[%s3 + $0x298] sm:$0xff]
      %v2197 = vld [vmem:[%s3 + $0x2a0] sm:$0xff]
      %v2198 = vld [vmem:[%s3 + $0x2a8] sm:$0xff]
      %v2199 = vld [vmem:[%s3 + $0x2b0] sm:$0xff]
      %v2200 = vld [vmem:[%s3 + $0x2b8] sm:$0xff]
      %v2201 = vld [vmem:[%s3 + $0x2c0] sm:$0xff]
      %v2202 = vld [vmem:[%s3 + $0x2c8] sm:$0xff]
      %v2203 = vld [vmem:[%s3 + $0x2d0] sm:$0xff]
      %v2204 = vld [vmem:[%s3 + $0x2d8] sm:$0xff]
      %v2205 = vld [vmem:[%s3 + $0x2e0] sm:$0xff]
      %v2206 = vld [vmem:[%s3 + $0x2e8] sm:$0xff]
      %v2207 = vld [vmem:[%s3 + $0x2f0] sm:$0xff]
      %v2208 = vld [vmem:[%s3 + $0x2f8] sm:$0xff]
      %v2209 = vld [vmem:[%s3 + $0x300] sm:$0xff]
      %v2210 = vld [vmem:[%s3 + $0x308] sm:$0xff]
      %v2211 = vld [vmem:[%s3 + $0x310] sm:$0xff]
      %v2212 = vld [vmem:[%s3 + $0x318] sm:$0xff]
      %v2213 = vld [vmem:[%s3 + $0x320] sm:$0xff]
      %v2214 = vld [vmem:[%s3 + $0x328] sm:$0xff]
      %v2215 = vld [vmem:[%s3 + $0x330] sm:$0xff]
      %v2216 = vld [vmem:[%s3 + $0x338] sm:$0xff]
      %v2217 = vld [vmem:[%s3 + $0x340] sm:$0xff]
      %v2218 = vld [vmem:[%s3 + $0x348] sm:$0xff]
      %v2219 = vld [vmem:[%s3 + $0x350] sm:$0xff]
      %v2220 = vld [vmem:[%s3 + $0x358] sm:$0xff]
      %v2221 = vld [vmem:[%s3 + $0x360] sm:$0xff]
      %v2222 = vld [vmem:[%s3 + $0x368] sm:$0xff]
      %v2223 = vld [vmem:[%s3 + $0x370] sm:$0xff]
      %v2224 = vld [vmem:[%s3 + $0x378] sm:$0xff]
      %v2225 = vld [vmem:[%s3 + $0x380] sm:$0xff]
      %v2226 = vld [vmem:[%s3 + $0x388] sm:$0xff]
      %v2227 = vld [vmem:[%s3 + $0x390] sm:$0xff]
      %v2228 = vld [vmem:[%s3 + $0x398] sm:$0xff]
      %v2229 = vld [vmem:[%s3 + $0x3a0] sm:$0xff]
      %v2230 = vld [vmem:[%s3 + $0x3a8] sm:$0xff]
      %v2231 = vld [vmem:[%s3 + $0x3b0] sm:$0xff]
      %v2232 = vld [vmem:[%s3 + $0x3b8] sm:$0xff]
      %v2233 = vld [vmem:[%s3 + $0x3c0] sm:$0xff]
      %v2234 = vld [vmem:[%s3 + $0x3c8] sm:$0xff]
      %v2235 = vld [vmem:[%s3 + $0x3d0] sm:$0xff]
      %v2236 = vld [vmem:[%s3 + $0x3d8] sm:$0xff]
      %v2237 = vld [vmem:[%s3 + $0x3e0] sm:$0xff]
      %v2238 = vld [vmem:[%s3 + $0x3e8] sm:$0xff]
      %v2239 = vld [vmem:[%s3 + $0x3f0] sm:$0xff]
      %v2240 = vld [vmem:[%s3 + $0x3f8] sm:$0xff]
      %v2241 = vld [vmem:[%s3 + $0x400] sm:$0xff]
      %v2242 = vld [vmem:[%s3 + $0x408] sm:$0xff]
      %v2243 = vld [vmem:[%s3 + $0x410] sm:$0xff]
      %v2244 = vld [vmem:[%s3 + $0x418] sm:$0xff]
      %v2245 = vld [vmem:[%s3 + $0x420] sm:$0xff]
      %v2246 = vld [vmem:[%s3 + $0x428] sm:$0xff]
      %v2247 = vld [vmem:[%s3 + $0x430] sm:$0xff]
      %v2248 = vld [vmem:[%s3 + $0x438] sm:$0xff]
      %v2249 = vld [vmem:[%s3 + $0x440] sm:$0xff]
      %v2250 = vld [vmem:[%s3 + $0x448] sm:$0xff]
      %v2251 = vld [vmem:[%s3 + $0x450] sm:$0xff]
      %v2252 = vld [vmem:[%s3 + $0x458] sm:$0xff]
      %v2253 = vld [vmem:[%s3 + $0x460] sm:$0xff]
      %v2254 = vld [vmem:[%s3 + $0x468] sm:$0xff]
      %v2255 = vld [vmem:[%s3 + $0x470] sm:$0xff]
      %v2256 = vld [vmem:[%s3 + $0x478] sm:$0xff]
      %v2257 = vld [vmem:[%s3 + $0x480] sm:$0xff]
      %v2258 = vld [vmem:[%s3 + $0x488] sm:$0xff]
      %v2259 = vld [vmem:[%s3 + $0x490] sm:$0xff]
      %v2260 = vld [vmem:[%s3 + $0x498] sm:$0xff]
      %v2261 = vld [vmem:[%s3 + $0x4a0] sm:$0xff]
      %v2262 = vld [vmem:[%s3 + $0x4a8] sm:$0xff]
      %v2263 = vld [vmem:[%s3 + $0x4b0] sm:$0xff]
      %v2264 = vld [vmem:[%s3 + $0x4b8] sm:$0xff]
      %v2265 = vld [vmem:[%s3 + $0x4c0] sm:$0xff]
      %v2266 = vld [vmem:[%s3 + $0x4c8] sm:$0xff]
      %v2267 = vld [vmem:[%s3 + $0x4d0] sm:$0xff]
      %v2268 = vld [vmem:[%s3 + $0x4d8] sm:$0xff]
      %v2269 = vld [vmem:[%s3 + $0x4e0] sm:$0xff]
      %v2270 = vld [vmem:[%s3 + $0x4e8] sm:$0xff]
      %v2271 = vld [vmem:[%s3 + $0x4f0] sm:$0xff]
      %v2272 = vld [vmem:[%s3 + $0x4f8] sm:$0xff]
      %v2273 = vld [vmem:[%s3 + $0x500] sm:$0xff]
      %v2274 = vld [vmem:[%s3 + $0x508] sm:$0xff]
      %v2275 = vld [vmem:[%s3 + $0x510] sm:$0xff]
      %v2276 = vld [vmem:[%s3 + $0x518] sm:$0xff]
      %v2277 = vld [vmem:[%s3 + $0x520] sm:$0xff]
      %v2278 = vld [vmem:[%s3 + $0x528] sm:$0xff]
      %v2279 = vld [vmem:[%s3 + $0x530] sm:$0xff]
      %v2280 = vld [vmem:[%s3 + $0x538] sm:$0xff]
      %v2281 = vld [vmem:[%s3 + $0x540] sm:$0xff]
      %v2282 = vld [vmem:[%s3 + $0x548] sm:$0xff]
      %v2283 = vld [vmem:[%s3 + $0x550] sm:$0xff]
      %v2284 = vld [vmem:[%s3 + $0x558] sm:$0xff]
      %v2285 = vld [vmem:[%s3 + $0x560] sm:$0xff]
      %v2286 = vld [vmem:[%s3 + $0x568] sm:$0xff]
      %v2287 = vld [vmem:[%s3 + $0x570] sm:$0xff]
      %v2288 = vld [vmem:[%s3 + $0x578] sm:$0xff]
      %v2289 = vld [vmem:[%s3 + $0x580] sm:$0xff]
      %v2290 = vld [vmem:[%s3 + $0x588] sm:$0xff]
      %v2291 = vld [vmem:[%s3 + $0x590] sm:$0xff]
      %v2292 = vld [vmem:[%s3 + $0x598] sm:$0xff]
      %v2293 = vld [vmem:[%s4] sm:$0xff]
      %v2294 = vld [vmem:[%s4 + $0x8] sm:$0xff]
      %v2295 = vld [vmem:[%s4 + $0x10] sm:$0xff]
      %v2296 = vld [vmem:[%s4 + $0x18] sm:$0xff]
      %v2297 = vld [vmem:[%s4 + $0x20] sm:$0xff]
      %v2298 = vld [vmem:[%s4 + $0x28] sm:$0xff]
      %v2299 = vld [vmem:[%s4 + $0x30] sm:$0xff]
      %v2300 = vld [vmem:[%s4 + $0x38] sm:$0xff]
      %v2301 = vld [vmem:[%s4 + $0x40] sm:$0xff]
      %v2302 = vld [vmem:[%s4 + $0x48] sm:$0xff]
      %v2303 = vld [vmem:[%s4 + $0x50] sm:$0xff]
      %v2304 = vld [vmem:[%s4 + $0x58] sm:$0xff]
      %v2305 = vld [vmem:[%s4 + $0x60] sm:$0xff]
      %v2306 = vld [vmem:[%s4 + $0x68] sm:$0xff]
      %v2307 = vld [vmem:[%s4 + $0x70] sm:$0xff]
      %v2308 = vld [vmem:[%s4 + $0x78] sm:$0xff]
      %v2309 = vld [vmem:[%s4 + $0x80] sm:$0xff]
      %v2310 = vld [vmem:[%s4 + $0x88] sm:$0xff]
      %v2311 = vld [vmem:[%s4 + $0x90] sm:$0xff]
      %v2312 = vld [vmem:[%s4 + $0x98] sm:$0xff]
      %v2313 = vld [vmem:[%s4 + $0xa0] sm:$0xff]
      %v2314 = vld [vmem:[%s4 + $0xa8] sm:$0xff]
      %v2315 = vld [vmem:[%s4 + $0xb0] sm:$0xff]
      %v2316 = vld [vmem:[%s4 + $0xb8] sm:$0xff]
      %v2317 = vld [vmem:[%s4 + $0xc0] sm:$0xff]
      %v2318 = vld [vmem:[%s4 + $0xc8] sm:$0xff]
      %v2319 = vld [vmem:[%s4 + $0xd0] sm:$0xff]
      %v2320 = vld [vmem:[%s4 + $0xd8] sm:$0xff]
      %v2321 = vld [vmem:[%s4 + $0xe0] sm:$0xff]
      %v2322 = vld [vmem:[%s4 + $0xe8] sm:$0xff]
      %v2323 = vld [vmem:[%s4 + $0xf0] sm:$0xff]
      %v2324 = vld [vmem:[%s4 + $0xf8] sm:$0xff]
      %v2325 = vld [vmem:[%s4 + $0x100] sm:$0xff]
      %v2326 = vld [vmem:[%s4 + $0x108] sm:$0xff]
      %v2327 = vld [vmem:[%s4 + $0x110] sm:$0xff]
      %v2328 = vld [vmem:[%s4 + $0x118] sm:$0xff]
      %v2329 = vld [vmem:[%s4 + $0x120] sm:$0xff]
      %v2330 = vld [vmem:[%s4 + $0x128] sm:$0xff]
      %v2331 = vld [vmem:[%s4 + $0x130] sm:$0xff]
      %v2332 = vld [vmem:[%s4 + $0x138] sm:$0xff]
      %v2333 = vld [vmem:[%s4 + $0x140] sm:$0xff]
      %v2334 = vld [vmem:[%s4 + $0x148] sm:$0xff]
      %v2335 = vld [vmem:[%s4 + $0x150] sm:$0xff]
      %v2336 = vld [vmem:[%s4 + $0x158] sm:$0xff]
      %v2337 = vld [vmem:[%s4 + $0x160] sm:$0xff]
      %v2338 = vld [vmem:[%s4 + $0x168] sm:$0xff]
      %v2339 = vld [vmem:[%s4 + $0x170] sm:$0xff]
      %v2340 = vld [vmem:[%s4 + $0x178] sm:$0xff]
      %v2341 = vld [vmem:[%s4 + $0x180] sm:$0xff]
      %v2342 = vld [vmem:[%s4 + $0x188] sm:$0xff]
      %v2343 = vld [vmem:[%s4 + $0x190] sm:$0xff]
      %v2344 = vld [vmem:[%s4 + $0x198] sm:$0xff]
      %v2345 = vld [vmem:[%s4 + $0x1a0] sm:$0xff]
      %v2346 = vld [vmem:[%s4 + $0x1a8] sm:$0xff]
      %v2347 = vld [vmem:[%s4 + $0x1b0] sm:$0xff]
      %v2348 = vld [vmem:[%s4 + $0x1b8] sm:$0xff]
      %v2349 = vld [vmem:[%s4 + $0x1c0] sm:$0xff]
      %v2350 = vld [vmem:[%s4 + $0x1c8] sm:$0xff]
      %v2351 = vld [vmem:[%s4 + $0x1d0] sm:$0xff]
      %v2352 = vld [vmem:[%s4 + $0x1d8] sm:$0xff]
      %v2353 = vld [vmem:[%s4 + $0x1e0] sm:$0xff]
      %v2354 = vld [vmem:[%s4 + $0x1e8] sm:$0xff]
      %v2355 = vld [vmem:[%s4 + $0x1f0] sm:$0xff]
      %v2356 = vld [vmem:[%s4 + $0x1f8] sm:$0xff]
      %v2357 = vld [vmem:[%s4 + $0x200] sm:$0xff]
      %v2358 = vld [vmem:[%s4 + $0x208] sm:$0xff]
      %v2359 = vld [vmem:[%s4 + $0x210] sm:$0xff]
      %v2360 = vld [vmem:[%s4 + $0x218] sm:$0xff]
      %v2361 = vld [vmem:[%s4 + $0x220] sm:$0xff]
      %v2362 = vld [vmem:[%s4 + $0x228] sm:$0xff]
      %v2363 = vld [vmem:[%s4 + $0x230] sm:$0xff]
      %v2364 = vld [vmem:[%s4 + $0x238] sm:$0xff]
      %v2365 = vld [vmem:[%s4 + $0x240] sm:$0xff]
      %v2366 = vld [vmem:[%s4 + $0x248] sm:$0xff]
      %v2367 = vld [vmem:[%s4 + $0x250] sm:$0xff]
      %v2368 = vld [vmem:[%s4 + $0x258] sm:$0xff]
      %v2369 = vld [vmem:[%s4 + $0x260] sm:$0xff]
      %v2370 = vld [vmem:[%s4 + $0x268] sm:$0xff]
      %v2371 = vld [vmem:[%s4 + $0x270] sm:$0xff]
      %v2372 = vld [vmem:[%s4 + $0x278] sm:$0xff]
      %v2373 = vld [vmem:[%s4 + $0x280] sm:$0xff]
      %v2374 = vld [vmem:[%s4 + $0x288] sm:$0xff]
      %v2375 = vld [vmem:[%s4 + $0x290] sm:$0xff]
      %v2376 = vld [vmem:[%s4 + $0x298] sm:$0xff]
      %v2377 = vld [vmem:[%s4 + $0x2a0] sm:$0xff]
      %v2378 = vld [vmem:[%s4 + $0x2a8] sm:$0xff]
      %v2379 = vld [vmem:[%s4 + $0x2b0] sm:$0xff]
      %v2380 = vld [vmem:[%s4 + $0x2b8] sm:$0xff]
      %v2381 = vld [vmem:[%s4 + $0x2c0] sm:$0xff]
      %v2382 = vld [vmem:[%s4 + $0x2c8] sm:$0xff]
      %v2383 = vld [vmem:[%s4 + $0x2d0] sm:$0xff]
      %v2384 = vld [vmem:[%s4 + $0x2d8] sm:$0xff]
      %v2385 = vld [vmem:[%s4 + $0x2e0] sm:$0xff]
      %v2386 = vld [vmem:[%s4 + $0x2e8] sm:$0xff]
      %v2387 = vld [vmem:[%s4 + $0x2f0] sm:$0xff]
      %v2388 = vld [vmem:[%s4 + $0x2f8] sm:$0xff]
      %v2389 = vld [vmem:[%s4 + $0x300] sm:$0xff]
      %v2390 = vld [vmem:[%s4 + $0x308] sm:$0xff]
      %v2391 = vld [vmem:[%s4 + $0x310] sm:$0xff]
      %v2392 = vld [vmem:[%s4 + $0x318] sm:$0xff]
      %v2393 = vld [vmem:[%s4 + $0x320] sm:$0xff]
      %v2394 = vld [vmem:[%s4 + $0x328] sm:$0xff]
      %v2395 = vld [vmem:[%s4 + $0x330] sm:$0xff]
      %v2396 = vld [vmem:[%s4 + $0x338] sm:$0xff]
      %v2397 = vld [vmem:[%s4 + $0x340] sm:$0xff]
      %v2398 = vld [vmem:[%s4 + $0x348] sm:$0xff]
      %v2399 = vld [vmem:[%s4 + $0x350] sm:$0xff]
      %v2400 = vld [vmem:[%s4 + $0x358] sm:$0xff]
      %v2401 = vld [vmem:[%s4 + $0x360] sm:$0xff]
      %v2402 = vld [vmem:[%s4 + $0x368] sm:$0xff]
      %v2403 = vld [vmem:[%s4 + $0x370] sm:$0xff]
      %v2404 = vld [vmem:[%s4 + $0x378] sm:$0xff]
      %v2405 = vld [vmem:[%s4 + $0x380] sm:$0xff]
      %v2406 = vld [vmem:[%s4 + $0x388] sm:$0xff]
      %v2407 = vld [vmem:[%s4 + $0x390] sm:$0xff]
      %v2408 = vld [vmem:[%s4 + $0x398] sm:$0xff]
      %v2409 = vld [vmem:[%s4 + $0x3a0] sm:$0xff]
      %v2410 = vld [vmem:[%s4 + $0x3a8] sm:$0xff]
      %v2411 = vld [vmem:[%s4 + $0x3b0] sm:$0xff]
      %v2412 = vld [vmem:[%s4 + $0x3b8] sm:$0xff]
      %v2413 = vld [vmem:[%s4 + $0x3c0] sm:$0xff]
      %v2414 = vld [vmem:[%s4 + $0x3c8] sm:$0xff]
      %v2415 = vld [vmem:[%s4 + $0x3d0] sm:$0xff]
      %v2416 = vld [vmem:[%s4 + $0x3d8] sm:$0xff]
      %v2417 = vld [vmem:[%s4 + $0x3e0] sm:$0xff]
      %v2418 = vld [vmem:[%s4 + $0x3e8] sm:$0xff]
      %v2419 = vld [vmem:[%s4 + $0x3f0] sm:$0xff]
      %v2420 = vld [vmem:[%s4 + $0x3f8] sm:$0xff]
      %v2421 = vld [vmem:[%s4 + $0x400] sm:$0xff]
      %v2422 = vld [vmem:[%s4 + $0x408] sm:$0xff]
      %v2423 = vld [vmem:[%s4 + $0x410] sm:$0xff]
      %v2424 = vld [vmem:[%s4 + $0x418] sm:$0xff]
      %v2425 = vld [vmem:[%s4 + $0x420] sm:$0xff]
      %v2426 = vld [vmem:[%s4 + $0x428] sm:$0xff]
      %v2427 = vld [vmem:[%s4 + $0x430] sm:$0xff]
      %v2428 = vld [vmem:[%s4 + $0x438] sm:$0xff]
      %v2429 = vld [vmem:[%s4 + $0x440] sm:$0xff]
      %v2430 = vld [vmem:[%s4 + $0x448] sm:$0xff]
      %v2431 = vld [vmem:[%s4 + $0x450] sm:$0xff]
      %v2432 = vld [vmem:[%s4 + $0x458] sm:$0xff]
      %v2433 = vld [vmem:[%s4 + $0x460] sm:$0xff]
      %v2434 = vld [vmem:[%s4 + $0x468] sm:$0xff]
      %v2435 = vld [vmem:[%s4 + $0x470] sm:$0xff]
      %v2436 = vld [vmem:[%s4 + $0x478] sm:$0xff]
      %v2437 = vld [vmem:[%s4 + $0x480] sm:$0xff]
      %v2438 = vld [vmem:[%s4 + $0x488] sm:$0xff]
      %v2439 = vld [vmem:[%s4 + $0x490] sm:$0xff]
      %v2440 = vld [vmem:[%s4 + $0x498] sm:$0xff]
      %v2441 = vld [vmem:[%s4 + $0x4a0] sm:$0xff]
      %v2442 = vld [vmem:[%s4 + $0x4a8] sm:$0xff]
      %v2443 = vld [vmem:[%s4 + $0x4b0] sm:$0xff]
      %v2444 = vld [vmem:[%s4 + $0x4b8] sm:$0xff]
      %v2445 = vld [vmem:[%s4 + $0x4c0] sm:$0xff]
      %v2446 = vld [vmem:[%s4 + $0x4c8] sm:$0xff]
      %v2447 = vld [vmem:[%s4 + $0x4d0] sm:$0xff]
      %v2448 = vld [vmem:[%s4 + $0x4d8] sm:$0xff]
      %v2449 = vld [vmem:[%s4 + $0x4e0] sm:$0xff]
      %v2450 = vld [vmem:[%s4 + $0x4e8] sm:$0xff]
      %v2451 = vld [vmem:[%s4 + $0x4f0] sm:$0xff]
      %v2452 = vld [vmem:[%s4 + $0x4f8] sm:$0xff]
      %v2453 = vld [vmem:[%s4 + $0x500] sm:$0xff]
      %v2454 = vld [vmem:[%s4 + $0x508] sm:$0xff]
      %v2455 = vld [vmem:[%s4 + $0x510] sm:$0xff]
      %v2456 = vld [vmem:[%s4 + $0x518] sm:$0xff]
      %v2457 = vld [vmem:[%s4 + $0x520] sm:$0xff]
      %v2458 = vld [vmem:[%s4 + $0x528] sm:$0xff]
      %v2459 = vld [vmem:[%s4 + $0x530] sm:$0xff]
      %v2460 = vld [vmem:[%s4 + $0x538] sm:$0xff]
      %v2461 = vld [vmem:[%s4 + $0x540] sm:$0xff]
      %v2462 = vld [vmem:[%s4 + $0x548] sm:$0xff]
      %v2463 = vld [vmem:[%s4 + $0x550] sm:$0xff]
      %v2464 = vld [vmem:[%s4 + $0x558] sm:$0xff]
      %v2465 = vld [vmem:[%s4 + $0x560] sm:$0xff]
      %v2466 = vld [vmem:[%s4 + $0x568] sm:$0xff]
      %v2467 = vld [vmem:[%s4 + $0x570] sm:$0xff]
      %v2468 = vld [vmem:[%s4 + $0x578] sm:$0xff]
      %v2469 = vld [vmem:[%s4 + $0x580] sm:$0xff]
      %v2470 = vld [vmem:[%s4 + $0x588] sm:$0xff]
      %v2471 = vld [vmem:[%s4 + $0x590] sm:$0xff]
      %v2472 = vld [vmem:[%s4 + $0x598] sm:$0xff]
      %s2473 = scalar_lea.vmem %s3, 1440
      %v2474 = vld [vmem:[%s2473] sm:$0xff]
      %v2475 = vld [vmem:[%s2473 + $0x8] sm:$0xff]
      %v2476 = vld [vmem:[%s2473 + $0x10] sm:$0xff]
      %v2477 = vld [vmem:[%s2473 + $0x18] sm:$0xff]
      %v2478 = vld [vmem:[%s2473 + $0x20] sm:$0xff]
      %v2479 = vld [vmem:[%s2473 + $0x28] sm:$0xff]
      %v2480 = vld [vmem:[%s2473 + $0x30] sm:$0xff]
      %v2481 = vld [vmem:[%s2473 + $0x38] sm:$0xff]
      %v2482 = vld [vmem:[%s2473 + $0x40] sm:$0xff]
      %v2483 = vld [vmem:[%s2473 + $0x48] sm:$0xff]
      %v2484 = vld [vmem:[%s2473 + $0x50] sm:$0xff]
      %v2485 = vld [vmem:[%s2473 + $0x58] sm:$0xff]
      %v2486 = vld [vmem:[%s2473 + $0x60] sm:$0xff]
      %v2487 = vld [vmem:[%s2473 + $0x68] sm:$0xff]
      %v2488 = vld [vmem:[%s2473 + $0x70] sm:$0xff]
      %v2489 = vld [vmem:[%s2473 + $0x78] sm:$0xff]
      %v2490 = vld [vmem:[%s2473 + $0x80] sm:$0xff]
      %v2491 = vld [vmem:[%s2473 + $0x88] sm:$0xff]
      %v2492 = vld [vmem:[%s2473 + $0x90] sm:$0xff]
      %v2493 = vld [vmem:[%s2473 + $0x98] sm:$0xff]
      %v2494 = vld [vmem:[%s2473 + $0xa0] sm:$0xff]
      %v2495 = vld [vmem:[%s2473 + $0xa8] sm:$0xff]
      %v2496 = vld [vmem:[%s2473 + $0xb0] sm:$0xff]
      %v2497 = vld [vmem:[%s2473 + $0xb8] sm:$0xff]
      %v2498 = vld [vmem:[%s2473 + $0xc0] sm:$0xff]
      %v2499 = vld [vmem:[%s2473 + $0xc8] sm:$0xff]
      %v2500 = vld [vmem:[%s2473 + $0xd0] sm:$0xff]
      %v2501 = vld [vmem:[%s2473 + $0xd8] sm:$0xff]
      %v2502 = vld [vmem:[%s2473 + $0xe0] sm:$0xff]
      %v2503 = vld [vmem:[%s2473 + $0xe8] sm:$0xff]
      %v2504 = vld [vmem:[%s2473 + $0xf0] sm:$0xff]
      %v2505 = vld [vmem:[%s2473 + $0xf8] sm:$0xff]
      %v2506 = vld [vmem:[%s2473 + $0x100] sm:$0xff]
      %v2507 = vld [vmem:[%s2473 + $0x108] sm:$0xff]
      %v2508 = vld [vmem:[%s2473 + $0x110] sm:$0xff]
      %v2509 = vld [vmem:[%s2473 + $0x118] sm:$0xff]
      %v2510 = vld [vmem:[%s2473 + $0x120] sm:$0xff]
      %v2511 = vld [vmem:[%s2473 + $0x128] sm:$0xff]
      %v2512 = vld [vmem:[%s2473 + $0x130] sm:$0xff]
      %v2513 = vld [vmem:[%s2473 + $0x138] sm:$0xff]
      %v2514 = vld [vmem:[%s2473 + $0x140] sm:$0xff]
      %v2515 = vld [vmem:[%s2473 + $0x148] sm:$0xff]
      %v2516 = vld [vmem:[%s2473 + $0x150] sm:$0xff]
      %v2517 = vld [vmem:[%s2473 + $0x158] sm:$0xff]
      %v2518 = vld [vmem:[%s2473 + $0x160] sm:$0xff]
      %v2519 = vld [vmem:[%s2473 + $0x168] sm:$0xff]
      %v2520 = vld [vmem:[%s2473 + $0x170] sm:$0xff]
      %v2521 = vld [vmem:[%s2473 + $0x178] sm:$0xff]
      %v2522 = vld [vmem:[%s2473 + $0x180] sm:$0xff]
      %v2523 = vld [vmem:[%s2473 + $0x188] sm:$0xff]
      %v2524 = vld [vmem:[%s2473 + $0x190] sm:$0xff]
      %v2525 = vld [vmem:[%s2473 + $0x198] sm:$0xff]
      %v2526 = vld [vmem:[%s2473 + $0x1a0] sm:$0xff]
      %v2527 = vld [vmem:[%s2473 + $0x1a8] sm:$0xff]
      %v2528 = vld [vmem:[%s2473 + $0x1b0] sm:$0xff]
      %v2529 = vld [vmem:[%s2473 + $0x1b8] sm:$0xff]
      %v2530 = vld [vmem:[%s2473 + $0x1c0] sm:$0xff]
      %v2531 = vld [vmem:[%s2473 + $0x1c8] sm:$0xff]
      %v2532 = vld [vmem:[%s2473 + $0x1d0] sm:$0xff]
      %v2533 = vld [vmem:[%s2473 + $0x1d8] sm:$0xff]
      %v2534 = vld [vmem:[%s2473 + $0x1e0] sm:$0xff]
      %v2535 = vld [vmem:[%s2473 + $0x1e8] sm:$0xff]
      %v2536 = vld [vmem:[%s2473 + $0x1f0] sm:$0xff]
      %v2537 = vld [vmem:[%s2473 + $0x1f8] sm:$0xff]
      %v2538 = vld [vmem:[%s2473 + $0x200] sm:$0xff]
      %v2539 = vld [vmem:[%s2473 + $0x208] sm:$0xff]
      %v2540 = vld [vmem:[%s2473 + $0x210] sm:$0xff]
      %v2541 = vld [vmem:[%s2473 + $0x218] sm:$0xff]
      %v2542 = vld [vmem:[%s2473 + $0x220] sm:$0xff]
      %v2543 = vld [vmem:[%s2473 + $0x228] sm:$0xff]
      %v2544 = vld [vmem:[%s2473 + $0x230] sm:$0xff]
      %v2545 = vld [vmem:[%s2473 + $0x238] sm:$0xff]
      %v2546 = vld [vmem:[%s2473 + $0x240] sm:$0xff]
      %v2547 = vld [vmem:[%s2473 + $0x248] sm:$0xff]
      %v2548 = vld [vmem:[%s2473 + $0x250] sm:$0xff]
      %v2549 = vld [vmem:[%s2473 + $0x258] sm:$0xff]
      %v2550 = vld [vmem:[%s2473 + $0x260] sm:$0xff]
      %v2551 = vld [vmem:[%s2473 + $0x268] sm:$0xff]
      %v2552 = vld [vmem:[%s2473 + $0x270] sm:$0xff]
      %v2553 = vld [vmem:[%s2473 + $0x278] sm:$0xff]
      %v2554 = vld [vmem:[%s2473 + $0x280] sm:$0xff]
      %v2555 = vld [vmem:[%s2473 + $0x288] sm:$0xff]
      %v2556 = vld [vmem:[%s2473 + $0x290] sm:$0xff]
      %v2557 = vld [vmem:[%s2473 + $0x298] sm:$0xff]
      %v2558 = vld [vmem:[%s2473 + $0x2a0] sm:$0xff]
      %v2559 = vld [vmem:[%s2473 + $0x2a8] sm:$0xff]
      %v2560 = vld [vmem:[%s2473 + $0x2b0] sm:$0xff]
      %v2561 = vld [vmem:[%s2473 + $0x2b8] sm:$0xff]
      %v2562 = vld [vmem:[%s2473 + $0x2c0] sm:$0xff]
      %v2563 = vld [vmem:[%s2473 + $0x2c8] sm:$0xff]
      %v2564 = vld [vmem:[%s2473 + $0x2d0] sm:$0xff]
      %v2565 = vld [vmem:[%s2473 + $0x2d8] sm:$0xff]
      %v2566 = vld [vmem:[%s2473 + $0x2e0] sm:$0xff]
      %v2567 = vld [vmem:[%s2473 + $0x2e8] sm:$0xff]
      %v2568 = vld [vmem:[%s2473 + $0x2f0] sm:$0xff]
      %v2569 = vld [vmem:[%s2473 + $0x2f8] sm:$0xff]
      %v2570 = vld [vmem:[%s2473 + $0x300] sm:$0xff]
      %v2571 = vld [vmem:[%s2473 + $0x308] sm:$0xff]
      %v2572 = vld [vmem:[%s2473 + $0x310] sm:$0xff]
      %v2573 = vld [vmem:[%s2473 + $0x318] sm:$0xff]
      %v2574 = vld [vmem:[%s2473 + $0x320] sm:$0xff]
      %v2575 = vld [vmem:[%s2473 + $0x328] sm:$0xff]
      %v2576 = vld [vmem:[%s2473 + $0x330] sm:$0xff]
      %v2577 = vld [vmem:[%s2473 + $0x338] sm:$0xff]
      %v2578 = vld [vmem:[%s2473 + $0x340] sm:$0xff]
      %v2579 = vld [vmem:[%s2473 + $0x348] sm:$0xff]
      %v2580 = vld [vmem:[%s2473 + $0x350] sm:$0xff]
      %v2581 = vld [vmem:[%s2473 + $0x358] sm:$0xff]
      %v2582 = vld [vmem:[%s2473 + $0x360] sm:$0xff]
      %v2583 = vld [vmem:[%s2473 + $0x368] sm:$0xff]
      %v2584 = vld [vmem:[%s2473 + $0x370] sm:$0xff]
      %v2585 = vld [vmem:[%s2473 + $0x378] sm:$0xff]
      %v2586 = vld [vmem:[%s2473 + $0x380] sm:$0xff]
      %v2587 = vld [vmem:[%s2473 + $0x388] sm:$0xff]
      %v2588 = vld [vmem:[%s2473 + $0x390] sm:$0xff]
      %v2589 = vld [vmem:[%s2473 + $0x398] sm:$0xff]
      %v2590 = vld [vmem:[%s2473 + $0x3a0] sm:$0xff]
      %v2591 = vld [vmem:[%s2473 + $0x3a8] sm:$0xff]
      %v2592 = vld [vmem:[%s2473 + $0x3b0] sm:$0xff]
      %v2593 = vld [vmem:[%s2473 + $0x3b8] sm:$0xff]
      %v2594 = vld [vmem:[%s2473 + $0x3c0] sm:$0xff]
      %v2595 = vld [vmem:[%s2473 + $0x3c8] sm:$0xff]
      %v2596 = vld [vmem:[%s2473 + $0x3d0] sm:$0xff]
      %v2597 = vld [vmem:[%s2473 + $0x3d8] sm:$0xff]
      %v2598 = vld [vmem:[%s2473 + $0x3e0] sm:$0xff]
      %v2599 = vld [vmem:[%s2473 + $0x3e8] sm:$0xff]
      %v2600 = vld [vmem:[%s2473 + $0x3f0] sm:$0xff]
      %v2601 = vld [vmem:[%s2473 + $0x3f8] sm:$0xff]
      %v2602 = vld [vmem:[%s2473 + $0x400] sm:$0xff]
      %v2603 = vld [vmem:[%s2473 + $0x408] sm:$0xff]
      %v2604 = vld [vmem:[%s2473 + $0x410] sm:$0xff]
      %v2605 = vld [vmem:[%s2473 + $0x418] sm:$0xff]
      %v2606 = vld [vmem:[%s2473 + $0x420] sm:$0xff]
      %v2607 = vld [vmem:[%s2473 + $0x428] sm:$0xff]
      %v2608 = vld [vmem:[%s2473 + $0x430] sm:$0xff]
      %v2609 = vld [vmem:[%s2473 + $0x438] sm:$0xff]
      %v2610 = vld [vmem:[%s2473 + $0x440] sm:$0xff]
      %v2611 = vld [vmem:[%s2473 + $0x448] sm:$0xff]
      %v2612 = vld [vmem:[%s2473 + $0x450] sm:$0xff]
      %v2613 = vld [vmem:[%s2473 + $0x458] sm:$0xff]
      %v2614 = vld [vmem:[%s2473 + $0x460] sm:$0xff]
      %v2615 = vld [vmem:[%s2473 + $0x468] sm:$0xff]
      %v2616 = vld [vmem:[%s2473 + $0x470] sm:$0xff]
      %v2617 = vld [vmem:[%s2473 + $0x478] sm:$0xff]
      %v2618 = vld [vmem:[%s2473 + $0x480] sm:$0xff]
      %v2619 = vld [vmem:[%s2473 + $0x488] sm:$0xff]
      %v2620 = vld [vmem:[%s2473 + $0x490] sm:$0xff]
      %v2621 = vld [vmem:[%s2473 + $0x498] sm:$0xff]
      %v2622 = vld [vmem:[%s2473 + $0x4a0] sm:$0xff]
      %v2623 = vld [vmem:[%s2473 + $0x4a8] sm:$0xff]
      %v2624 = vld [vmem:[%s2473 + $0x4b0] sm:$0xff]
      %v2625 = vld [vmem:[%s2473 + $0x4b8] sm:$0xff]
      %v2626 = vld [vmem:[%s2473 + $0x4c0] sm:$0xff]
      %v2627 = vld [vmem:[%s2473 + $0x4c8] sm:$0xff]
      %v2628 = vld [vmem:[%s2473 + $0x4d0] sm:$0xff]
      %v2629 = vld [vmem:[%s2473 + $0x4d8] sm:$0xff]
      %v2630 = vld [vmem:[%s2473 + $0x4e0] sm:$0xff]
      %v2631 = vld [vmem:[%s2473 + $0x4e8] sm:$0xff]
      %v2632 = vld [vmem:[%s2473 + $0x4f0] sm:$0xff]
      %v2633 = vld [vmem:[%s2473 + $0x4f8] sm:$0xff]
      %v2634 = vld [vmem:[%s2473 + $0x500] sm:$0xff]
      %v2635 = vld [vmem:[%s2473 + $0x508] sm:$0xff]
      %v2636 = vld [vmem:[%s2473 + $0x510] sm:$0xff]
      %v2637 = vld [vmem:[%s2473 + $0x518] sm:$0xff]
      %v2638 = vld [vmem:[%s2473 + $0x520] sm:$0xff]
      %v2639 = vld [vmem:[%s2473 + $0x528] sm:$0xff]
      %v2640 = vld [vmem:[%s2473 + $0x530] sm:$0xff]
      %v2641 = vld [vmem:[%s2473 + $0x538] sm:$0xff]
      %v2642 = vld [vmem:[%s2473 + $0x540] sm:$0xff]
      %v2643 = vld [vmem:[%s2473 + $0x548] sm:$0xff]
      %v2644 = vld [vmem:[%s2473 + $0x550] sm:$0xff]
      %v2645 = vld [vmem:[%s2473 + $0x558] sm:$0xff]
      %v2646 = vld [vmem:[%s2473 + $0x560] sm:$0xff]
      %v2647 = vld [vmem:[%s2473 + $0x568] sm:$0xff]
      %v2648 = vld [vmem:[%s2473 + $0x570] sm:$0xff]
      %v2649 = vld [vmem:[%s2473 + $0x578] sm:$0xff]
      %v2650 = vld [vmem:[%s2473 + $0x580] sm:$0xff]
      %v2651 = vld [vmem:[%s2473 + $0x588] sm:$0xff]
      %v2652 = vld [vmem:[%s2473 + $0x590] sm:$0xff]
      %v2653 = vld [vmem:[%s2473 + $0x598] sm:$0xff]
      %v2662 = vrot.slane %v2105, 1
      %v2663 = vrot.slane %v2109, 1
      %v2664 = vsel %vm538, %v2662, %v2663
      %v2665 = vrot.slane %v2106, 1
      %v2666 = vrot.slane %v2110, 1
      %v2667 = vsel %vm538, %v2665, %v2666
      %v2668 = vrot.slane %v2107, 1
      %v2669 = vrot.slane %v2111, 1
      %v2670 = vsel %vm538, %v2668, %v2669
      %v2671 = vrot.slane %v2108, 1
      %v2672 = vrot.slane %v2112, 1
      %v2673 = vsel %vm538, %v2671, %v2672
      %v2680 = vsel %vm546, %v2673, 0
      %v2682 = vsel %vm546, %v2672, 0
      %2684 = vmatprep.subr.mxu0 %v2520
      %2685 = vmatpush1.msra.mxu0 %v2519
      %2686 = vmatprep.subr.mxu0 %v2517
      %2687 = vmatpush1.msra.mxu0 %v2516
      %2688 = vmatprep.subr.mxu0 %v2514
      %2689 = vmatpush1.msra.mxu0 %v2513
      %2690 = vmatprep.subr.mxu0 %v2511
      %2691 = vmatpush1.msra.mxu0 %v2510
      %2692 = vmatprep.subr.mxu0 %v2508
      %2693 = vmatpush1.msra.mxu0 %v2507
      %2694 = vmatprep.subr.mxu0 %v2505
      %2695 = vmatpush1.msra.mxu0 %v2504
      %2696 = vmatprep.subr.mxu0 %v2502
      %2697 = vmatpush1.msra.mxu0 %v2501
      %2698 = vmatprep.subr.mxu0 %v2499
      %2699 = vmatpush1.msra.mxu0 %v2498
      %2700 = vmatprep.subr.mxu0 %v2496
      %2701 = vmatpush1.msra.mxu0 %v2495
      %2702 = vmatprep.subr.mxu0 %v2493
      %2703 = vmatpush1.msra.mxu0 %v2492
      %2704 = vmatprep.subr.mxu0 %v2490
      %2705 = vmatpush1.msra.mxu0 %v2489
      %2706 = vmatprep.subr.mxu0 %v2487
      %2707 = vmatpush1.msra.mxu0 %v2486
      %2708 = vmatprep.subr.mxu0 %v2484
      %2709 = vmatpush1.msra.mxu0 %v2483
      %2710 = vmatprep.subr.mxu0 %v2481
      %2711 = vmatpush1.msra.mxu0 %v2480
      %2712 = vmatprep.subr.mxu0 %v2478
      %2713 = vmatpush1.msra.mxu0 %v2477
      %2714 = vmatprep.subr.mxu0 %v2475
      %2715 = vmatpush1.msra.mxu0 %v2474
      %2716 = vmatprep.subr.mxu0 %v2568
      %2717 = vmatpush2.msra.mxu0 %v2567
      %2718 = vmatprep.subr.mxu0 %v2565
      %2719 = vmatpush2.msra.mxu0 %v2564
      %2720 = vmatprep.subr.mxu0 %v2562
      %2721 = vmatpush2.msra.mxu0 %v2561
      %2722 = vmatprep.subr.mxu0 %v2559
      %2723 = vmatpush2.msra.mxu0 %v2558
      %2724 = vmatprep.subr.mxu0 %v2556
      %2725 = vmatpush2.msra.mxu0 %v2555
      %2726 = vmatprep.subr.mxu0 %v2553
      %2727 = vmatpush2.msra.mxu0 %v2552
      %2728 = vmatprep.subr.mxu0 %v2550
      %2729 = vmatpush2.msra.mxu0 %v2549
      %2730 = vmatprep.subr.mxu0 %v2547
      %2731 = vmatpush2.msra.mxu0 %v2546
      %2732 = vmatprep.subr.mxu0 %v2544
      %2733 = vmatpush2.msra.mxu0 %v2543
      %2734 = vmatprep.subr.mxu0 %v2541
      %2735 = vmatpush2.msra.mxu0 %v2540
      %2736 = vmatprep.subr.mxu0 %v2538
      %2737 = vmatpush2.msra.mxu0 %v2537
      %2738 = vmatprep.subr.mxu0 %v2535
      %2739 = vmatpush2.msra.mxu0 %v2534
      %2740 = vmatprep.subr.mxu0 %v2532
      %2741 = vmatpush2.msra.mxu0 %v2531
      %2742 = vmatprep.subr.mxu0 %v2529
      %2743 = vmatpush2.msra.mxu0 %v2528
      %2744 = vmatprep.subr.mxu0 %v2526
      %2745 = vmatpush2.msra.mxu0 %v2525
      %2746 = vmatprep.subr.mxu0 %v2523
      %2747 = vmatpush2.msra.mxu0 %v2522
      %2748 = vmatprep.mubr.f32.mxu0 %v2667
      %2749 = vmatmul.mubr.f32.gmra.mxu0 %v2664
      %v2750 = vpop.f32.mrf.mxu0
      %v2751 = vadd.f32 0.0, %v2750
      %v2752 = vpop.f32.mrf.mxu0
      %v2753 = vadd.f32 0.0, %v2752
      %2754 = vmatprep.mubr.f32.mxu0 %v2666
      %2755 = vmatmul.mubr.f32.gmra.mxu0 %v2663
      %v2756 = vpop.f32.mrf.mxu0
      %v2757 = vadd.f32 0.0, %v2756
      %v2758 = vpop.f32.mrf.mxu0
      %v2759 = vadd.f32 0.0, %v2758
      %2760 = vdwg.mxu0
      %2761 = vmatprep.subr.mxu0 %v2616
      %2762 = vmatpush1.msra.mxu0 %v2615
      %2763 = vmatprep.subr.mxu0 %v2613
      %2764 = vmatpush1.msra.mxu0 %v2612
      %2765 = vmatprep.subr.mxu0 %v2610
      %2766 = vmatpush1.msra.mxu0 %v2609
      %2767 = vmatprep.subr.mxu0 %v2607
      %2768 = vmatpush1.msra.mxu0 %v2606
      %2769 = vmatprep.subr.mxu0 %v2604
      %2770 = vmatpush1.msra.mxu0 %v2603
      %2771 = vmatprep.subr.mxu0 %v2601
      %2772 = vmatpush1.msra.mxu0 %v2600
      %2773 = vmatprep.subr.mxu0 %v2598
      %2774 = vmatpush1.msra.mxu0 %v2597
      %2775 = vmatprep.subr.mxu0 %v2595
      %2776 = vmatpush1.msra.mxu0 %v2594
      %2777 = vmatprep.subr.mxu0 %v2592
      %2778 = vmatpush1.msra.mxu0 %v2591
      %2779 = vmatprep.subr.mxu0 %v2589
      %2780 = vmatpush1.msra.mxu0 %v2588
      %2781 = vmatprep.subr.mxu0 %v2586
      %2782 = vmatpush1.msra.mxu0 %v2585
      %2783 = vmatprep.subr.mxu0 %v2583
      %2784 = vmatpush1.msra.mxu0 %v2582
      %2785 = vmatprep.subr.mxu0 %v2580
      %2786 = vmatpush1.msra.mxu0 %v2579
      %2787 = vmatprep.subr.mxu0 %v2577
      %2788 = vmatpush1.msra.mxu0 %v2576
      %2789 = vmatprep.subr.mxu0 %v2574
      %2790 = vmatpush1.msra.mxu0 %v2573
      %2791 = vmatprep.subr.mxu0 %v2571
      %2792 = vmatpush1.msra.mxu0 %v2570
      %2793 = vmatprep.subr.mxu0 0.0
      %2794 = vmatpush2.msra.mxu0 0.0
      %2795 = vmatprep.subr.mxu0 0.0
      %2796 = vmatpush2.msra.mxu0 0.0
      %2797 = vmatprep.subr.mxu0 0.0
      %2798 = vmatpush2.msra.mxu0 0.0
      %2799 = vmatprep.subr.mxu0 0.0
      %2800 = vmatpush2.msra.mxu0 0.0
      %2801 = vmatprep.subr.mxu0 %v2652
      %2802 = vmatpush2.msra.mxu0 %v2651
      %2803 = vmatprep.subr.mxu0 %v2649
      %2804 = vmatpush2.msra.mxu0 %v2648
      %2805 = vmatprep.subr.mxu0 %v2646
      %2806 = vmatpush2.msra.mxu0 %v2645
      %2807 = vmatprep.subr.mxu0 %v2643
      %2808 = vmatpush2.msra.mxu0 %v2642
      %2809 = vmatprep.subr.mxu0 %v2640
      %2810 = vmatpush2.msra.mxu0 %v2639
      %2811 = vmatprep.subr.mxu0 %v2637
      %2812 = vmatpush2.msra.mxu0 %v2636
      %2813 = vmatprep.subr.mxu0 %v2634
      %2814 = vmatpush2.msra.mxu0 %v2633
      %2815 = vmatprep.subr.mxu0 %v2631
      %2816 = vmatpush2.msra.mxu0 %v2630
      %2817 = vmatprep.subr.mxu0 %v2628
      %2818 = vmatpush2.msra.mxu0 %v2627
      %2819 = vmatprep.subr.mxu0 %v2625
      %2820 = vmatpush2.msra.mxu0 %v2624
      %2821 = vmatprep.subr.mxu0 %v2622
      %2822 = vmatpush2.msra.mxu0 %v2621
      %2823 = vmatprep.subr.mxu0 %v2619
      %2824 = vmatpush2.msra.mxu0 %v2618
      %2825 = vmatprep.mubr.f32.mxu0 %v2680
      %2826 = vmatmul.mubr.f32.gmra.mxu0 %v2670
      %v2827 = vpop.f32.mrf.mxu0
      %v2828 = vadd.f32 %v2751, %v2827
      %v2829 = vpop.f32.mrf.mxu0
      %v2830 = vadd.f32 %v2753, %v2829
      %2831 = vmatprep.mubr.f32.mxu0 %v2682
      %2832 = vmatmul.mubr.f32.gmra.mxu0 %v2669
      %v2833 = vpop.f32.mrf.mxu0
      %v2834 = vadd.f32 %v2757, %v2833
      %v2835 = vpop.f32.mrf.mxu0
      %v2836 = vadd.f32 %v2759, %v2835
      %2837 = vdwg.mxu0
      %2838 = vmatprep.subr.mxu0 0.0
      %2839 = vmatpush1.msra.mxu0 %v2521
      %2840 = vmatprep.subr.mxu0 0.0
      %2841 = vmatpush1.msra.mxu0 %v2518
      %2842 = vmatprep.subr.mxu0 0.0
      %2843 = vmatpush1.msra.mxu0 %v2515
      %2844 = vmatprep.subr.mxu0 0.0
      %2845 = vmatpush1.msra.mxu0 %v2512
      %2846 = vmatprep.subr.mxu0 0.0
      %2847 = vmatpush1.msra.mxu0 %v2509
      %2848 = vmatprep.subr.mxu0 0.0
      %2849 = vmatpush1.msra.mxu0 %v2506
      %2850 = vmatprep.subr.mxu0 0.0
      %2851 = vmatpush1.msra.mxu0 %v2503
      %2852 = vmatprep.subr.mxu0 0.0
      %2853 = vmatpush1.msra.mxu0 %v2500
      %2854 = vmatprep.subr.mxu0 0.0
      %2855 = vmatpush1.msra.mxu0 %v2497
      %2856 = vmatprep.subr.mxu0 0.0
      %2857 = vmatpush1.msra.mxu0 %v2494
      %2858 = vmatprep.subr.mxu0 0.0
      %2859 = vmatpush1.msra.mxu0 %v2491
      %2860 = vmatprep.subr.mxu0 0.0
      %2861 = vmatpush1.msra.mxu0 %v2488
      %2862 = vmatprep.subr.mxu0 0.0
      %2863 = vmatpush1.msra.mxu0 %v2485
      %2864 = vmatprep.subr.mxu0 0.0
      %2865 = vmatpush1.msra.mxu0 %v2482
      %2866 = vmatprep.subr.mxu0 0.0
      %2867 = vmatpush1.msra.mxu0 %v2479
      %2868 = vmatprep.subr.mxu0 0.0
      %2869 = vmatpush1.msra.mxu0 %v2476
      %2870 = vmatprep.subr.mxu0 0.0
      %2871 = vmatpush2.msra.mxu0 %v2569
      %2872 = vmatprep.subr.mxu0 0.0
      %2873 = vmatpush2.msra.mxu0 %v2566
      %2874 = vmatprep.subr.mxu0 0.0
      %2875 = vmatpush2.msra.mxu0 %v2563
      %2876 = vmatprep.subr.mxu0 0.0
      %2877 = vmatpush2.msra.mxu0 %v2560
      %2878 = vmatprep.subr.mxu0 0.0
      %2879 = vmatpush2.msra.mxu0 %v2557
      %2880 = vmatprep.subr.mxu0 0.0
      %2881 = vmatpush2.msra.mxu0 %v2554
      %2882 = vmatprep.subr.mxu0 0.0
      %2883 = vmatpush2.msra.mxu0 %v2551
      %2884 = vmatprep.subr.mxu0 0.0
      %2885 = vmatpush2.msra.mxu0 %v2548
      %2886 = vmatprep.subr.mxu0 0.0
      %2887 = vmatpush2.msra.mxu0 %v2545
      %2888 = vmatprep.subr.mxu0 0.0
      %2889 = vmatpush2.msra.mxu0 %v2542
      %2890 = vmatprep.subr.mxu0 0.0
      %2891 = vmatpush2.msra.mxu0 %v2539
      %2892 = vmatprep.subr.mxu0 0.0
      %2893 = vmatpush2.msra.mxu0 %v2536
      %2894 = vmatprep.subr.mxu0 0.0
      %2895 = vmatpush2.msra.mxu0 %v2533
      %2896 = vmatprep.subr.mxu0 0.0
      %2897 = vmatpush2.msra.mxu0 %v2530
      %2898 = vmatprep.subr.mxu0 0.0
      %2899 = vmatpush2.msra.mxu0 %v2527
      %2900 = vmatprep.subr.mxu0 0.0
      %2901 = vmatpush2.msra.mxu0 %v2524
      %2902 = vmatprep.mubr.f32.mxu0 %v2667
      %2903 = vmatmul.mubr.f32.gmra.mxu0 %v2664
      %v2904 = vpop.f32.mrf.mxu0
      %v2905 = vadd.f32 0.0, %v2904
      %v2906 = vpop.f32.mrf.mxu0
      %2907 = vmatprep.mubr.f32.mxu0 %v2666
      %2908 = vmatmul.mubr.f32.gmra.mxu0 %v2663
      %v2909 = vpop.f32.mrf.mxu0
      %v2910 = vadd.f32 0.0, %v2909
      %v2911 = vpop.f32.mrf.mxu0
      %2912 = vdwg.mxu0
      %2913 = vmatprep.subr.mxu0 0.0
      %2914 = vmatpush1.msra.mxu0 %v2617
      %2915 = vmatprep.subr.mxu0 0.0
      %2916 = vmatpush1.msra.mxu0 %v2614
      %2917 = vmatprep.subr.mxu0 0.0
      %2918 = vmatpush1.msra.mxu0 %v2611
      %2919 = vmatprep.subr.mxu0 0.0
      %2920 = vmatpush1.msra.mxu0 %v2608
      %2921 = vmatprep.subr.mxu0 0.0
      %2922 = vmatpush1.msra.mxu0 %v2605
      %2923 = vmatprep.subr.mxu0 0.0
      %2924 = vmatpush1.msra.mxu0 %v2602
      %2925 = vmatprep.subr.mxu0 0.0
      %2926 = vmatpush1.msra.mxu0 %v2599
      %2927 = vmatprep.subr.mxu0 0.0
      %2928 = vmatpush1.msra.mxu0 %v2596
      %2929 = vmatprep.subr.mxu0 0.0
      %2930 = vmatpush1.msra.mxu0 %v2593
      %2931 = vmatprep.subr.mxu0 0.0
      %2932 = vmatpush1.msra.mxu0 %v2590
      %2933 = vmatprep.subr.mxu0 0.0
      %2934 = vmatpush1.msra.mxu0 %v2587
      %2935 = vmatprep.subr.mxu0 0.0
      %2936 = vmatpush1.msra.mxu0 %v2584
      %2937 = vmatprep.subr.mxu0 0.0
      %2938 = vmatpush1.msra.mxu0 %v2581
      %2939 = vmatprep.subr.mxu0 0.0
      %2940 = vmatpush1.msra.mxu0 %v2578
      %2941 = vmatprep.subr.mxu0 0.0
      %2942 = vmatpush1.msra.mxu0 %v2575
      %2943 = vmatprep.subr.mxu0 0.0
      %2944 = vmatpush1.msra.mxu0 %v2572
      %2945 = vmatprep.subr.mxu0 0.0
      %2946 = vmatpush2.msra.mxu0 0.0
      %2947 = vmatprep.subr.mxu0 0.0
      %2948 = vmatpush2.msra.mxu0 0.0
      %2949 = vmatprep.subr.mxu0 0.0
      %2950 = vmatpush2.msra.mxu0 0.0
      %2951 = vmatprep.subr.mxu0 0.0
      %2952 = vmatpush2.msra.mxu0 0.0
      %2953 = vmatprep.subr.mxu0 0.0
      %2954 = vmatpush2.msra.mxu0 %v2653
      %2955 = vmatprep.subr.mxu0 0.0
      %2956 = vmatpush2.msra.mxu0 %v2650
      %2957 = vmatprep.subr.mxu0 0.0
      %2958 = vmatpush2.msra.mxu0 %v2647
      %2959 = vmatprep.subr.mxu0 0.0
      %2960 = vmatpush2.msra.mxu0 %v2644
      %2961 = vmatprep.subr.mxu0 0.0
      %2962 = vmatpush2.msra.mxu0 %v2641
      %2963 = vmatprep.subr.mxu0 0.0
      %2964 = vmatpush2.msra.mxu0 %v2638
      %2965 = vmatprep.subr.mxu0 0.0
      %2966 = vmatpush2.msra.mxu0 %v2635
      %2967 = vmatprep.subr.mxu0 0.0
      %2968 = vmatpush2.msra.mxu0 %v2632
      %2969 = vmatprep.subr.mxu0 0.0
      %2970 = vmatpush2.msra.mxu0 %v2629
      %2971 = vmatprep.subr.mxu0 0.0
      %2972 = vmatpush2.msra.mxu0 %v2626
      %2973 = vmatprep.subr.mxu0 0.0
      %2974 = vmatpush2.msra.mxu0 %v2623
      %2975 = vmatprep.subr.mxu0 0.0
      %2976 = vmatpush2.msra.mxu0 %v2620
      %2977 = vmatprep.mubr.f32.mxu0 %v2680
      %2978 = vmatmul.mubr.f32.gmra.mxu0 %v2670
      %v2979 = vpop.f32.mrf.mxu0
      %v2980 = vadd.f32 %v2905, %v2979
      %v2981 = vpop.f32.mrf.mxu0
      %2982 = vmatprep.mubr.f32.mxu0 %v2682
      %2983 = vmatmul.mubr.f32.gmra.mxu0 %v2669
      %v2984 = vpop.f32.mrf.mxu0
      %v2985 = vadd.f32 %v2910, %v2984
      %v2986 = vpop.f32.mrf.mxu0
      %2987 = vdwg.mxu0
      %v2988 = vsel %vm546, %v2108, 0
      %v2990 = vsel %vm546, %v2112, 0
      %2992 = vmatprep.subr.mxu0 %v2159
      %2993 = vmatpush1.msra.mxu0 %v2158
      %2994 = vmatprep.subr.mxu0 %v2156
      %2995 = vmatpush1.msra.mxu0 %v2155
      %2996 = vmatprep.subr.mxu0 %v2153
      %2997 = vmatpush1.msra.mxu0 %v2152
      %2998 = vmatprep.subr.mxu0 %v2150
      %2999 = vmatpush1.msra.mxu0 %v2149
      %3000 = vmatprep.subr.mxu0 %v2147
      %3001 = vmatpush1.msra.mxu0 %v2146
      %3002 = vmatprep.subr.mxu0 %v2144
      %3003 = vmatpush1.msra.mxu0 %v2143
      %3004 = vmatprep.subr.mxu0 %v2141
      %3005 = vmatpush1.msra.mxu0 %v2140
      %3006 = vmatprep.subr.mxu0 %v2138
      %3007 = vmatpush1.msra.mxu0 %v2137
      %3008 = vmatprep.subr.mxu0 %v2135
      %3009 = vmatpush1.msra.mxu0 %v2134
      %3010 = vmatprep.subr.mxu0 %v2132
      %3011 = vmatpush1.msra.mxu0 %v2131
      %3012 = vmatprep.subr.mxu0 %v2129
      %3013 = vmatpush1.msra.mxu0 %v2128
      %3014 = vmatprep.subr.mxu0 %v2126
      %3015 = vmatpush1.msra.mxu0 %v2125
      %3016 = vmatprep.subr.mxu0 %v2123
      %3017 = vmatpush1.msra.mxu0 %v2122
      %3018 = vmatprep.subr.mxu0 %v2120
      %3019 = vmatpush1.msra.mxu0 %v2119
      %3020 = vmatprep.subr.mxu0 %v2117
      %3021 = vmatpush1.msra.mxu0 %v2116
      %3022 = vmatprep.subr.mxu0 %v2114
      %3023 = vmatpush1.msra.mxu0 %v2113
      %3024 = vmatprep.subr.mxu0 %v2207
      %3025 = vmatpush2.msra.mxu0 %v2206
      %3026 = vmatprep.subr.mxu0 %v2204
      %3027 = vmatpush2.msra.mxu0 %v2203
      %3028 = vmatprep.subr.mxu0 %v2201
      %3029 = vmatpush2.msra.mxu0 %v2200
      %3030 = vmatprep.subr.mxu0 %v2198
      %3031 = vmatpush2.msra.mxu0 %v2197
      %3032 = vmatprep.subr.mxu0 %v2195
      %3033 = vmatpush2.msra.mxu0 %v2194
      %3034 = vmatprep.subr.mxu0 %v2192
      %3035 = vmatpush2.msra.mxu0 %v2191
      %3036 = vmatprep.subr.mxu0 %v2189
      %3037 = vmatpush2.msra.mxu0 %v2188
      %3038 = vmatprep.subr.mxu0 %v2186
      %3039 = vmatpush2.msra.mxu0 %v2185
      %3040 = vmatprep.subr.mxu0 %v2183
      %3041 = vmatpush2.msra.mxu0 %v2182
      %3042 = vmatprep.subr.mxu0 %v2180
      %3043 = vmatpush2.msra.mxu0 %v2179
      %3044 = vmatprep.subr.mxu0 %v2177
      %3045 = vmatpush2.msra.mxu0 %v2176
      %3046 = vmatprep.subr.mxu0 %v2174
      %3047 = vmatpush2.msra.mxu0 %v2173
      %3048 = vmatprep.subr.mxu0 %v2171
      %3049 = vmatpush2.msra.mxu0 %v2170
      %3050 = vmatprep.subr.mxu0 %v2168
      %3051 = vmatpush2.msra.mxu0 %v2167
      %3052 = vmatprep.subr.mxu0 %v2165
      %3053 = vmatpush2.msra.mxu0 %v2164
      %3054 = vmatprep.subr.mxu0 %v2162
      %3055 = vmatpush2.msra.mxu0 %v2161
      %3056 = vmatprep.mubr.f32.mxu0 %v2106
      %3057 = vmatmul.mubr.f32.gmra.mxu0 %v2105
      %v3058 = vpop.f32.mrf.mxu0
      %v3059 = vadd.f32 %v2828, %v3058
      %v3060 = vpop.f32.mrf.mxu0
      %v3061 = vadd.f32 %v2830, %v3060
      %3062 = vmatprep.mubr.f32.mxu0 %v2110
      %3063 = vmatmul.mubr.f32.gmra.mxu0 %v2109
      %v3064 = vpop.f32.mrf.mxu0
      %v3065 = vadd.f32 %v2834, %v3064
      %v3066 = vpop.f32.mrf.mxu0
      %v3067 = vadd.f32 %v2836, %v3066
      %3068 = vdwg.mxu0
      %3069 = vmatprep.subr.mxu0 %v2255
      %3070 = vmatpush1.msra.mxu0 %v2254
      %3071 = vmatprep.subr.mxu0 %v2252
      %3072 = vmatpush1.msra.mxu0 %v2251
      %3073 = vmatprep.subr.mxu0 %v2249
      %3074 = vmatpush1.msra.mxu0 %v2248
      %3075 = vmatprep.subr.mxu0 %v2246
      %3076 = vmatpush1.msra.mxu0 %v2245
      %3077 = vmatprep.subr.mxu0 %v2243
      %3078 = vmatpush1.msra.mxu0 %v2242
      %3079 = vmatprep.subr.mxu0 %v2240
      %3080 = vmatpush1.msra.mxu0 %v2239
      %3081 = vmatprep.subr.mxu0 %v2237
      %3082 = vmatpush1.msra.mxu0 %v2236
      %3083 = vmatprep.subr.mxu0 %v2234
      %3084 = vmatpush1.msra.mxu0 %v2233
      %3085 = vmatprep.subr.mxu0 %v2231
      %3086 = vmatpush1.msra.mxu0 %v2230
      %3087 = vmatprep.subr.mxu0 %v2228
      %3088 = vmatpush1.msra.mxu0 %v2227
      %3089 = vmatprep.subr.mxu0 %v2225
      %3090 = vmatpush1.msra.mxu0 %v2224
      %3091 = vmatprep.subr.mxu0 %v2222
      %3092 = vmatpush1.msra.mxu0 %v2221
      %3093 = vmatprep.subr.mxu0 %v2219
      %3094 = vmatpush1.msra.mxu0 %v2218
      %3095 = vmatprep.subr.mxu0 %v2216
      %3096 = vmatpush1.msra.mxu0 %v2215
      %3097 = vmatprep.subr.mxu0 %v2213
      %3098 = vmatpush1.msra.mxu0 %v2212
      %3099 = vmatprep.subr.mxu0 %v2210
      %3100 = vmatpush1.msra.mxu0 %v2209
      %3101 = vmatprep.subr.mxu0 0.0
      %3102 = vmatpush2.msra.mxu0 0.0
      %3103 = vmatprep.subr.mxu0 0.0
      %3104 = vmatpush2.msra.mxu0 0.0
      %3105 = vmatprep.subr.mxu0 0.0
      %3106 = vmatpush2.msra.mxu0 0.0
      %3107 = vmatprep.subr.mxu0 0.0
      %3108 = vmatpush2.msra.mxu0 0.0
      %3109 = vmatprep.subr.mxu0 %v2291
      %3110 = vmatpush2.msra.mxu0 %v2290
      %3111 = vmatprep.subr.mxu0 %v2288
      %3112 = vmatpush2.msra.mxu0 %v2287
      %3113 = vmatprep.subr.mxu0 %v2285
      %3114 = vmatpush2.msra.mxu0 %v2284
      %3115 = vmatprep.subr.mxu0 %v2282
      %3116 = vmatpush2.msra.mxu0 %v2281
      %3117 = vmatprep.subr.mxu0 %v2279
      %3118 = vmatpush2.msra.mxu0 %v2278
      %3119 = vmatprep.subr.mxu0 %v2276
      %3120 = vmatpush2.msra.mxu0 %v2275
      %3121 = vmatprep.subr.mxu0 %v2273
      %3122 = vmatpush2.msra.mxu0 %v2272
      %3123 = vmatprep.subr.mxu0 %v2270
      %3124 = vmatpush2.msra.mxu0 %v2269
      %3125 = vmatprep.subr.mxu0 %v2267
      %3126 = vmatpush2.msra.mxu0 %v2266
      %3127 = vmatprep.subr.mxu0 %v2264
      %3128 = vmatpush2.msra.mxu0 %v2263
      %3129 = vmatprep.subr.mxu0 %v2261
      %3130 = vmatpush2.msra.mxu0 %v2260
      %3131 = vmatprep.subr.mxu0 %v2258
      %3132 = vmatpush2.msra.mxu0 %v2257
      %3133 = vmatprep.mubr.f32.mxu0 %v2988
      %3134 = vmatmul.mubr.f32.gmra.mxu0 %v2107
      %v3135 = vpop.f32.mrf.mxu0
      %v3136 = vadd.f32 %v3059, %v3135
      %v3137 = vpop.f32.mrf.mxu0
      %v3138 = vadd.f32 %v3061, %v3137
      %3139 = vmatprep.mubr.f32.mxu0 %v2990
      %3140 = vmatmul.mubr.f32.gmra.mxu0 %v2111
      %v3141 = vpop.f32.mrf.mxu0
      %v3142 = vadd.f32 %v3065, %v3141
      %v3143 = vpop.f32.mrf.mxu0
      %v3144 = vadd.f32 %v3067, %v3143
      %3145 = vdwg.mxu0
      %3146 = vmatprep.subr.mxu0 0.0
      %3147 = vmatpush1.msra.mxu0 %v2160
      %3148 = vmatprep.subr.mxu0 0.0
      %3149 = vmatpush1.msra.mxu0 %v2157
      %3150 = vmatprep.subr.mxu0 0.0
      %3151 = vmatpush1.msra.mxu0 %v2154
      %3152 = vmatprep.subr.mxu0 0.0
      %3153 = vmatpush1.msra.mxu0 %v2151
      %3154 = vmatprep.subr.mxu0 0.0
      %3155 = vmatpush1.msra.mxu0 %v2148
      %3156 = vmatprep.subr.mxu0 0.0
      %3157 = vmatpush1.msra.mxu0 %v2145
      %3158 = vmatprep.subr.mxu0 0.0
      %3159 = vmatpush1.msra.mxu0 %v2142
      %3160 = vmatprep.subr.mxu0 0.0
      %3161 = vmatpush1.msra.mxu0 %v2139
      %3162 = vmatprep.subr.mxu0 0.0
      %3163 = vmatpush1.msra.mxu0 %v2136
      %3164 = vmatprep.subr.mxu0 0.0
      %3165 = vmatpush1.msra.mxu0 %v2133
      %3166 = vmatprep.subr.mxu0 0.0
      %3167 = vmatpush1.msra.mxu0 %v2130
      %3168 = vmatprep.subr.mxu0 0.0
      %3169 = vmatpush1.msra.mxu0 %v2127
      %3170 = vmatprep.subr.mxu0 0.0
      %3171 = vmatpush1.msra.mxu0 %v2124
      %3172 = vmatprep.subr.mxu0 0.0
      %3173 = vmatpush1.msra.mxu0 %v2121
      %3174 = vmatprep.subr.mxu0 0.0
      %3175 = vmatpush1.msra.mxu0 %v2118
      %3176 = vmatprep.subr.mxu0 0.0
      %3177 = vmatpush1.msra.mxu0 %v2115
      %3178 = vmatprep.subr.mxu0 0.0
      %3179 = vmatpush2.msra.mxu0 %v2208
      %3180 = vmatprep.subr.mxu0 0.0
      %3181 = vmatpush2.msra.mxu0 %v2205
      %3182 = vmatprep.subr.mxu0 0.0
      %3183 = vmatpush2.msra.mxu0 %v2202
      %3184 = vmatprep.subr.mxu0 0.0
      %3185 = vmatpush2.msra.mxu0 %v2199
      %3186 = vmatprep.subr.mxu0 0.0
      %3187 = vmatpush2.msra.mxu0 %v2196
      %3188 = vmatprep.subr.mxu0 0.0
      %3189 = vmatpush2.msra.mxu0 %v2193
      %3190 = vmatprep.subr.mxu0 0.0
      %3191 = vmatpush2.msra.mxu0 %v2190
      %3192 = vmatprep.subr.mxu0 0.0
      %3193 = vmatpush2.msra.mxu0 %v2187
      %3194 = vmatprep.subr.mxu0 0.0
      %3195 = vmatpush2.msra.mxu0 %v2184
      %3196 = vmatprep.subr.mxu0 0.0
      %3197 = vmatpush2.msra.mxu0 %v2181
      %3198 = vmatprep.subr.mxu0 0.0
      %3199 = vmatpush2.msra.mxu0 %v2178
      %3200 = vmatprep.subr.mxu0 0.0
      %3201 = vmatpush2.msra.mxu0 %v2175
      %3202 = vmatprep.subr.mxu0 0.0
      %3203 = vmatpush2.msra.mxu0 %v2172
      %3204 = vmatprep.subr.mxu0 0.0
      %3205 = vmatpush2.msra.mxu0 %v2169
      %3206 = vmatprep.subr.mxu0 0.0
      %3207 = vmatpush2.msra.mxu0 %v2166
      %3208 = vmatprep.subr.mxu0 0.0
      %3209 = vmatpush2.msra.mxu0 %v2163
      %3210 = vmatprep.mubr.f32.mxu0 %v2106
      %3211 = vmatmul.mubr.f32.gmra.mxu0 %v2105
      %v3212 = vpop.f32.mrf.mxu0
      %v3213 = vadd.f32 %v2980, %v3212
      %v3214 = vpop.f32.mrf.mxu0
      %3215 = vmatprep.mubr.f32.mxu0 %v2110
      %3216 = vmatmul.mubr.f32.gmra.mxu0 %v2109
      %v3217 = vpop.f32.mrf.mxu0
      %v3218 = vadd.f32 %v2985, %v3217
      %v3219 = vpop.f32.mrf.mxu0
      %3220 = vdwg.mxu0
      %3221 = vmatprep.subr.mxu0 0.0
      %3222 = vmatpush1.msra.mxu0 %v2256
      %3223 = vmatprep.subr.mxu0 0.0
      %3224 = vmatpush1.msra.mxu0 %v2253
      %3225 = vmatprep.subr.mxu0 0.0
      %3226 = vmatpush1.msra.mxu0 %v2250
      %3227 = vmatprep.subr.mxu0 0.0
      %3228 = vmatpush1.msra.mxu0 %v2247
      %3229 = vmatprep.subr.mxu0 0.0
      %3230 = vmatpush1.msra.mxu0 %v2244
      %3231 = vmatprep.subr.mxu0 0.0
      %3232 = vmatpush1.msra.mxu0 %v2241
      %3233 = vmatprep.subr.mxu0 0.0
      %3234 = vmatpush1.msra.mxu0 %v2238
      %3235 = vmatprep.subr.mxu0 0.0
      %3236 = vmatpush1.msra.mxu0 %v2235
      %3237 = vmatprep.subr.mxu0 0.0
      %3238 = vmatpush1.msra.mxu0 %v2232
      %3239 = vmatprep.subr.mxu0 0.0
      %3240 = vmatpush1.msra.mxu0 %v2229
      %3241 = vmatprep.subr.mxu0 0.0
      %3242 = vmatpush1.msra.mxu0 %v2226
      %3243 = vmatprep.subr.mxu0 0.0
      %3244 = vmatpush1.msra.mxu0 %v2223
      %3245 = vmatprep.subr.mxu0 0.0
      %3246 = vmatpush1.msra.mxu0 %v2220
      %3247 = vmatprep.subr.mxu0 0.0
      %3248 = vmatpush1.msra.mxu0 %v2217
      %3249 = vmatprep.subr.mxu0 0.0
      %3250 = vmatpush1.msra.mxu0 %v2214
      %3251 = vmatprep.subr.mxu0 0.0
      %3252 = vmatpush1.msra.mxu0 %v2211
      %3253 = vmatprep.subr.mxu0 0.0
      %3254 = vmatpush2.msra.mxu0 0.0
      %3255 = vmatprep.subr.mxu0 0.0
      %3256 = vmatpush2.msra.mxu0 0.0
      %3257 = vmatprep.subr.mxu0 0.0
      %3258 = vmatpush2.msra.mxu0 0.0
      %3259 = vmatprep.subr.mxu0 0.0
      %3260 = vmatpush2.msra.mxu0 0.0
      %3261 = vmatprep.subr.mxu0 0.0
      %3262 = vmatpush2.msra.mxu0 %v2292
      %3263 = vmatprep.subr.mxu0 0.0
      %3264 = vmatpush2.msra.mxu0 %v2289
      %3265 = vmatprep.subr.mxu0 0.0
      %3266 = vmatpush2.msra.mxu0 %v2286
      %3267 = vmatprep.subr.mxu0 0.0
      %3268 = vmatpush2.msra.mxu0 %v2283
      %3269 = vmatprep.subr.mxu0 0.0
      %3270 = vmatpush2.msra.mxu0 %v2280
      %3271 = vmatprep.subr.mxu0 0.0
      %3272 = vmatpush2.msra.mxu0 %v2277
      %3273 = vmatprep.subr.mxu0 0.0
      %3274 = vmatpush2.msra.mxu0 %v2274
      %3275 = vmatprep.subr.mxu0 0.0
      %3276 = vmatpush2.msra.mxu0 %v2271
      %3277 = vmatprep.subr.mxu0 0.0
      %3278 = vmatpush2.msra.mxu0 %v2268
      %3279 = vmatprep.subr.mxu0 0.0
      %3280 = vmatpush2.msra.mxu0 %v2265
      %3281 = vmatprep.subr.mxu0 0.0
      %3282 = vmatpush2.msra.mxu0 %v2262
      %3283 = vmatprep.subr.mxu0 0.0
      %3284 = vmatpush2.msra.mxu0 %v2259
      %3285 = vmatprep.mubr.f32.mxu0 %v2988
      %3286 = vmatmul.mubr.f32.gmra.mxu0 %v2107
      %v3287 = vpop.f32.mrf.mxu0
      %v3288 = vadd.f32 %v3213, %v3287
      %v3289 = vpop.f32.mrf.mxu0
      %3290 = vmatprep.mubr.f32.mxu0 %v2990
      %3291 = vmatmul.mubr.f32.gmra.mxu0 %v2111
      %v3292 = vpop.f32.mrf.mxu0
      %v3293 = vadd.f32 %v3218, %v3292
      %v3294 = vpop.f32.mrf.mxu0
      %3295 = vdwg.mxu0
      %s3296 = scalar_lea.vmem %s4, 1440
      %v3297 = vld [vmem:[%s3296] sm:$0xff]
      %v3298 = vld [vmem:[%s3296 + $0x8] sm:$0xff]
      %v3299 = vld [vmem:[%s3296 + $0x10] sm:$0xff]
      %v3300 = vld [vmem:[%s3296 + $0x18] sm:$0xff]
      %v3301 = vld [vmem:[%s3296 + $0x20] sm:$0xff]
      %v3302 = vld [vmem:[%s3296 + $0x28] sm:$0xff]
      %v3303 = vld [vmem:[%s3296 + $0x30] sm:$0xff]
      %v3304 = vld [vmem:[%s3296 + $0x38] sm:$0xff]
      %v3305 = vld [vmem:[%s3296 + $0x40] sm:$0xff]
      %v3306 = vld [vmem:[%s3296 + $0x48] sm:$0xff]
      %v3307 = vld [vmem:[%s3296 + $0x50] sm:$0xff]
      %v3308 = vld [vmem:[%s3296 + $0x58] sm:$0xff]
      %v3309 = vld [vmem:[%s3296 + $0x60] sm:$0xff]
      %v3310 = vld [vmem:[%s3296 + $0x68] sm:$0xff]
      %v3311 = vld [vmem:[%s3296 + $0x70] sm:$0xff]
      %v3312 = vld [vmem:[%s3296 + $0x78] sm:$0xff]
      %v3313 = vld [vmem:[%s3296 + $0x80] sm:$0xff]
      %v3314 = vld [vmem:[%s3296 + $0x88] sm:$0xff]
      %v3315 = vld [vmem:[%s3296 + $0x90] sm:$0xff]
      %v3316 = vld [vmem:[%s3296 + $0x98] sm:$0xff]
      %v3317 = vld [vmem:[%s3296 + $0xa0] sm:$0xff]
      %v3318 = vld [vmem:[%s3296 + $0xa8] sm:$0xff]
      %v3319 = vld [vmem:[%s3296 + $0xb0] sm:$0xff]
      %v3320 = vld [vmem:[%s3296 + $0xb8] sm:$0xff]
      %v3321 = vld [vmem:[%s3296 + $0xc0] sm:$0xff]
      %v3322 = vld [vmem:[%s3296 + $0xc8] sm:$0xff]
      %v3323 = vld [vmem:[%s3296 + $0xd0] sm:$0xff]
      %v3324 = vld [vmem:[%s3296 + $0xd8] sm:$0xff]
      %v3325 = vld [vmem:[%s3296 + $0xe0] sm:$0xff]
      %v3326 = vld [vmem:[%s3296 + $0xe8] sm:$0xff]
      %v3327 = vld [vmem:[%s3296 + $0xf0] sm:$0xff]
      %v3328 = vld [vmem:[%s3296 + $0xf8] sm:$0xff]
      %v3329 = vld [vmem:[%s3296 + $0x100] sm:$0xff]
      %v3330 = vld [vmem:[%s3296 + $0x108] sm:$0xff]
      %v3331 = vld [vmem:[%s3296 + $0x110] sm:$0xff]
      %v3332 = vld [vmem:[%s3296 + $0x118] sm:$0xff]
      %v3333 = vld [vmem:[%s3296 + $0x120] sm:$0xff]
      %v3334 = vld [vmem:[%s3296 + $0x128] sm:$0xff]
      %v3335 = vld [vmem:[%s3296 + $0x130] sm:$0xff]
      %v3336 = vld [vmem:[%s3296 + $0x138] sm:$0xff]
      %v3337 = vld [vmem:[%s3296 + $0x140] sm:$0xff]
      %v3338 = vld [vmem:[%s3296 + $0x148] sm:$0xff]
      %v3339 = vld [vmem:[%s3296 + $0x150] sm:$0xff]
      %v3340 = vld [vmem:[%s3296 + $0x158] sm:$0xff]
      %v3341 = vld [vmem:[%s3296 + $0x160] sm:$0xff]
      %v3342 = vld [vmem:[%s3296 + $0x168] sm:$0xff]
      %v3343 = vld [vmem:[%s3296 + $0x170] sm:$0xff]
      %v3344 = vld [vmem:[%s3296 + $0x178] sm:$0xff]
      %v3345 = vld [vmem:[%s3296 + $0x180] sm:$0xff]
      %v3346 = vld [vmem:[%s3296 + $0x188] sm:$0xff]
      %v3347 = vld [vmem:[%s3296 + $0x190] sm:$0xff]
      %v3348 = vld [vmem:[%s3296 + $0x198] sm:$0xff]
      %v3349 = vld [vmem:[%s3296 + $0x1a0] sm:$0xff]
      %v3350 = vld [vmem:[%s3296 + $0x1a8] sm:$0xff]
      %v3351 = vld [vmem:[%s3296 + $0x1b0] sm:$0xff]
      %v3352 = vld [vmem:[%s3296 + $0x1b8] sm:$0xff]
      %v3353 = vld [vmem:[%s3296 + $0x1c0] sm:$0xff]
      %v3354 = vld [vmem:[%s3296 + $0x1c8] sm:$0xff]
      %v3355 = vld [vmem:[%s3296 + $0x1d0] sm:$0xff]
      %v3356 = vld [vmem:[%s3296 + $0x1d8] sm:$0xff]
      %v3357 = vld [vmem:[%s3296 + $0x1e0] sm:$0xff]
      %v3358 = vld [vmem:[%s3296 + $0x1e8] sm:$0xff]
      %v3359 = vld [vmem:[%s3296 + $0x1f0] sm:$0xff]
      %v3360 = vld [vmem:[%s3296 + $0x1f8] sm:$0xff]
      %v3361 = vld [vmem:[%s3296 + $0x200] sm:$0xff]
      %v3362 = vld [vmem:[%s3296 + $0x208] sm:$0xff]
      %v3363 = vld [vmem:[%s3296 + $0x210] sm:$0xff]
      %v3364 = vld [vmem:[%s3296 + $0x218] sm:$0xff]
      %v3365 = vld [vmem:[%s3296 + $0x220] sm:$0xff]
      %v3366 = vld [vmem:[%s3296 + $0x228] sm:$0xff]
      %v3367 = vld [vmem:[%s3296 + $0x230] sm:$0xff]
      %v3368 = vld [vmem:[%s3296 + $0x238] sm:$0xff]
      %v3369 = vld [vmem:[%s3296 + $0x240] sm:$0xff]
      %v3370 = vld [vmem:[%s3296 + $0x248] sm:$0xff]
      %v3371 = vld [vmem:[%s3296 + $0x250] sm:$0xff]
      %v3372 = vld [vmem:[%s3296 + $0x258] sm:$0xff]
      %v3373 = vld [vmem:[%s3296 + $0x260] sm:$0xff]
      %v3374 = vld [vmem:[%s3296 + $0x268] sm:$0xff]
      %v3375 = vld [vmem:[%s3296 + $0x270] sm:$0xff]
      %v3376 = vld [vmem:[%s3296 + $0x278] sm:$0xff]
      %v3377 = vld [vmem:[%s3296 + $0x280] sm:$0xff]
      %v3378 = vld [vmem:[%s3296 + $0x288] sm:$0xff]
      %v3379 = vld [vmem:[%s3296 + $0x290] sm:$0xff]
      %v3380 = vld [vmem:[%s3296 + $0x298] sm:$0xff]
      %v3381 = vld [vmem:[%s3296 + $0x2a0] sm:$0xff]
      %v3382 = vld [vmem:[%s3296 + $0x2a8] sm:$0xff]
      %v3383 = vld [vmem:[%s3296 + $0x2b0] sm:$0xff]
      %v3384 = vld [vmem:[%s3296 + $0x2b8] sm:$0xff]
      %v3385 = vld [vmem:[%s3296 + $0x2c0] sm:$0xff]
      %v3386 = vld [vmem:[%s3296 + $0x2c8] sm:$0xff]
      %v3387 = vld [vmem:[%s3296 + $0x2d0] sm:$0xff]
      %v3388 = vld [vmem:[%s3296 + $0x2d8] sm:$0xff]
      %v3389 = vld [vmem:[%s3296 + $0x2e0] sm:$0xff]
      %v3390 = vld [vmem:[%s3296 + $0x2e8] sm:$0xff]
      %v3391 = vld [vmem:[%s3296 + $0x2f0] sm:$0xff]
      %v3392 = vld [vmem:[%s3296 + $0x2f8] sm:$0xff]
      %v3393 = vld [vmem:[%s3296 + $0x300] sm:$0xff]
      %v3394 = vld [vmem:[%s3296 + $0x308] sm:$0xff]
      %v3395 = vld [vmem:[%s3296 + $0x310] sm:$0xff]
      %v3396 = vld [vmem:[%s3296 + $0x318] sm:$0xff]
      %v3397 = vld [vmem:[%s3296 + $0x320] sm:$0xff]
      %v3398 = vld [vmem:[%s3296 + $0x328] sm:$0xff]
      %v3399 = vld [vmem:[%s3296 + $0x330] sm:$0xff]
      %v3400 = vld [vmem:[%s3296 + $0x338] sm:$0xff]
      %v3401 = vld [vmem:[%s3296 + $0x340] sm:$0xff]
      %v3402 = vld [vmem:[%s3296 + $0x348] sm:$0xff]
      %v3403 = vld [vmem:[%s3296 + $0x350] sm:$0xff]
      %v3404 = vld [vmem:[%s3296 + $0x358] sm:$0xff]
      %v3405 = vld [vmem:[%s3296 + $0x360] sm:$0xff]
      %v3406 = vld [vmem:[%s3296 + $0x368] sm:$0xff]
      %v3407 = vld [vmem:[%s3296 + $0x370] sm:$0xff]
      %v3408 = vld [vmem:[%s3296 + $0x378] sm:$0xff]
      %v3409 = vld [vmem:[%s3296 + $0x380] sm:$0xff]
      %v3410 = vld [vmem:[%s3296 + $0x388] sm:$0xff]
      %v3411 = vld [vmem:[%s3296 + $0x390] sm:$0xff]
      %v3412 = vld [vmem:[%s3296 + $0x398] sm:$0xff]
      %v3413 = vld [vmem:[%s3296 + $0x3a0] sm:$0xff]
      %v3414 = vld [vmem:[%s3296 + $0x3a8] sm:$0xff]
      %v3415 = vld [vmem:[%s3296 + $0x3b0] sm:$0xff]
      %v3416 = vld [vmem:[%s3296 + $0x3b8] sm:$0xff]
      %v3417 = vld [vmem:[%s3296 + $0x3c0] sm:$0xff]
      %v3418 = vld [vmem:[%s3296 + $0x3c8] sm:$0xff]
      %v3419 = vld [vmem:[%s3296 + $0x3d0] sm:$0xff]
      %v3420 = vld [vmem:[%s3296 + $0x3d8] sm:$0xff]
      %v3421 = vld [vmem:[%s3296 + $0x3e0] sm:$0xff]
      %v3422 = vld [vmem:[%s3296 + $0x3e8] sm:$0xff]
      %v3423 = vld [vmem:[%s3296 + $0x3f0] sm:$0xff]
      %v3424 = vld [vmem:[%s3296 + $0x3f8] sm:$0xff]
      %v3425 = vld [vmem:[%s3296 + $0x400] sm:$0xff]
      %v3426 = vld [vmem:[%s3296 + $0x408] sm:$0xff]
      %v3427 = vld [vmem:[%s3296 + $0x410] sm:$0xff]
      %v3428 = vld [vmem:[%s3296 + $0x418] sm:$0xff]
      %v3429 = vld [vmem:[%s3296 + $0x420] sm:$0xff]
      %v3430 = vld [vmem:[%s3296 + $0x428] sm:$0xff]
      %v3431 = vld [vmem:[%s3296 + $0x430] sm:$0xff]
      %v3432 = vld [vmem:[%s3296 + $0x438] sm:$0xff]
      %v3433 = vld [vmem:[%s3296 + $0x440] sm:$0xff]
      %v3434 = vld [vmem:[%s3296 + $0x448] sm:$0xff]
      %v3435 = vld [vmem:[%s3296 + $0x450] sm:$0xff]
      %v3436 = vld [vmem:[%s3296 + $0x458] sm:$0xff]
      %v3437 = vld [vmem:[%s3296 + $0x460] sm:$0xff]
      %v3438 = vld [vmem:[%s3296 + $0x468] sm:$0xff]
      %v3439 = vld [vmem:[%s3296 + $0x470] sm:$0xff]
      %v3440 = vld [vmem:[%s3296 + $0x478] sm:$0xff]
      %v3441 = vld [vmem:[%s3296 + $0x480] sm:$0xff]
      %v3442 = vld [vmem:[%s3296 + $0x488] sm:$0xff]
      %v3443 = vld [vmem:[%s3296 + $0x490] sm:$0xff]
      %v3444 = vld [vmem:[%s3296 + $0x498] sm:$0xff]
      %v3445 = vld [vmem:[%s3296 + $0x4a0] sm:$0xff]
      %v3446 = vld [vmem:[%s3296 + $0x4a8] sm:$0xff]
      %v3447 = vld [vmem:[%s3296 + $0x4b0] sm:$0xff]
      %v3448 = vld [vmem:[%s3296 + $0x4b8] sm:$0xff]
      %v3449 = vld [vmem:[%s3296 + $0x4c0] sm:$0xff]
      %v3450 = vld [vmem:[%s3296 + $0x4c8] sm:$0xff]
      %v3451 = vld [vmem:[%s3296 + $0x4d0] sm:$0xff]
      %v3452 = vld [vmem:[%s3296 + $0x4d8] sm:$0xff]
      %v3453 = vld [vmem:[%s3296 + $0x4e0] sm:$0xff]
      %v3454 = vld [vmem:[%s3296 + $0x4e8] sm:$0xff]
      %v3455 = vld [vmem:[%s3296 + $0x4f0] sm:$0xff]
      %v3456 = vld [vmem:[%s3296 + $0x4f8] sm:$0xff]
      %v3457 = vld [vmem:[%s3296 + $0x500] sm:$0xff]
      %v3458 = vld [vmem:[%s3296 + $0x508] sm:$0xff]
      %v3459 = vld [vmem:[%s3296 + $0x510] sm:$0xff]
      %v3460 = vld [vmem:[%s3296 + $0x518] sm:$0xff]
      %v3461 = vld [vmem:[%s3296 + $0x520] sm:$0xff]
      %v3462 = vld [vmem:[%s3296 + $0x528] sm:$0xff]
      %v3463 = vld [vmem:[%s3296 + $0x530] sm:$0xff]
      %v3464 = vld [vmem:[%s3296 + $0x538] sm:$0xff]
      %v3465 = vld [vmem:[%s3296 + $0x540] sm:$0xff]
      %v3466 = vld [vmem:[%s3296 + $0x548] sm:$0xff]
      %v3467 = vld [vmem:[%s3296 + $0x550] sm:$0xff]
      %v3468 = vld [vmem:[%s3296 + $0x558] sm:$0xff]
      %v3469 = vld [vmem:[%s3296 + $0x560] sm:$0xff]
      %v3470 = vld [vmem:[%s3296 + $0x568] sm:$0xff]
      %v3471 = vld [vmem:[%s3296 + $0x570] sm:$0xff]
      %v3472 = vld [vmem:[%s3296 + $0x578] sm:$0xff]
      %v3473 = vld [vmem:[%s3296 + $0x580] sm:$0xff]
      %v3474 = vld [vmem:[%s3296 + $0x588] sm:$0xff]
      %v3475 = vld [vmem:[%s3296 + $0x590] sm:$0xff]
      %v3476 = vld [vmem:[%s3296 + $0x598] sm:$0xff]
      %3477 = vmatprep.subr.mxu0 %v3343
      %3478 = vmatpush1.msra.mxu0 %v3342
      %3479 = vmatprep.subr.mxu0 %v3340
      %3480 = vmatpush1.msra.mxu0 %v3339
      %3481 = vmatprep.subr.mxu0 %v3337
      %3482 = vmatpush1.msra.mxu0 %v3336
      %3483 = vmatprep.subr.mxu0 %v3334
      %3484 = vmatpush1.msra.mxu0 %v3333
      %3485 = vmatprep.subr.mxu0 %v3331
      %3486 = vmatpush1.msra.mxu0 %v3330
      %3487 = vmatprep.subr.mxu0 %v3328
      %3488 = vmatpush1.msra.mxu0 %v3327
      %3489 = vmatprep.subr.mxu0 %v3325
      %3490 = vmatpush1.msra.mxu0 %v3324
      %3491 = vmatprep.subr.mxu0 %v3322
      %3492 = vmatpush1.msra.mxu0 %v3321
      %3493 = vmatprep.subr.mxu0 %v3319
      %3494 = vmatpush1.msra.mxu0 %v3318
      %3495 = vmatprep.subr.mxu0 %v3316
      %3496 = vmatpush1.msra.mxu0 %v3315
      %3497 = vmatprep.subr.mxu0 %v3313
      %3498 = vmatpush1.msra.mxu0 %v3312
      %3499 = vmatprep.subr.mxu0 %v3310
      %3500 = vmatpush1.msra.mxu0 %v3309
      %3501 = vmatprep.subr.mxu0 %v3307
      %3502 = vmatpush1.msra.mxu0 %v3306
      %3503 = vmatprep.subr.mxu0 %v3304
      %3504 = vmatpush1.msra.mxu0 %v3303
      %3505 = vmatprep.subr.mxu0 %v3301
      %3506 = vmatpush1.msra.mxu0 %v3300
      %3507 = vmatprep.subr.mxu0 %v3298
      %3508 = vmatpush1.msra.mxu0 %v3297
      %3509 = vmatprep.subr.mxu0 %v3391
      %3510 = vmatpush2.msra.mxu0 %v3390
      %3511 = vmatprep.subr.mxu0 %v3388
      %3512 = vmatpush2.msra.mxu0 %v3387
      %3513 = vmatprep.subr.mxu0 %v3385
      %3514 = vmatpush2.msra.mxu0 %v3384
      %3515 = vmatprep.subr.mxu0 %v3382
      %3516 = vmatpush2.msra.mxu0 %v3381
      %3517 = vmatprep.subr.mxu0 %v3379
      %3518 = vmatpush2.msra.mxu0 %v3378
      %3519 = vmatprep.subr.mxu0 %v3376
      %3520 = vmatpush2.msra.mxu0 %v3375
      %3521 = vmatprep.subr.mxu0 %v3373
      %3522 = vmatpush2.msra.mxu0 %v3372
      %3523 = vmatprep.subr.mxu0 %v3370
      %3524 = vmatpush2.msra.mxu0 %v3369
      %3525 = vmatprep.subr.mxu0 %v3367
      %3526 = vmatpush2.msra.mxu0 %v3366
      %3527 = vmatprep.subr.mxu0 %v3364
      %3528 = vmatpush2.msra.mxu0 %v3363
      %3529 = vmatprep.subr.mxu0 %v3361
      %3530 = vmatpush2.msra.mxu0 %v3360
      %3531 = vmatprep.subr.mxu0 %v3358
      %3532 = vmatpush2.msra.mxu0 %v3357
      %3533 = vmatprep.subr.mxu0 %v3355
      %3534 = vmatpush2.msra.mxu0 %v3354
      %3535 = vmatprep.subr.mxu0 %v3352
      %3536 = vmatpush2.msra.mxu0 %v3351
      %3537 = vmatprep.subr.mxu0 %v3349
      %3538 = vmatpush2.msra.mxu0 %v3348
      %3539 = vmatprep.subr.mxu0 %v3346
      %3540 = vmatpush2.msra.mxu0 %v3345
      %3541 = vmatprep.mubr.f32.mxu0 %v2667
      %3542 = vmatmul.mubr.f32.gmra.mxu0 %v2664
      %v3543 = vpop.f32.mrf.mxu0
      %v3544 = vadd.f32 0.0, %v3543
      %v3545 = vpop.f32.mrf.mxu0
      %v3546 = vadd.f32 0.0, %v3545
      %3547 = vmatprep.mubr.f32.mxu0 %v2666
      %3548 = vmatmul.mubr.f32.gmra.mxu0 %v2663
      %v3549 = vpop.f32.mrf.mxu0
      %v3550 = vadd.f32 0.0, %v3549
      %v3551 = vpop.f32.mrf.mxu0
      %v3552 = vadd.f32 0.0, %v3551
      %3553 = vdwg.mxu0
      %3554 = vmatprep.subr.mxu0 %v3439
      %3555 = vmatpush1.msra.mxu0 %v3438
      %3556 = vmatprep.subr.mxu0 %v3436
      %3557 = vmatpush1.msra.mxu0 %v3435
      %3558 = vmatprep.subr.mxu0 %v3433
      %3559 = vmatpush1.msra.mxu0 %v3432
      %3560 = vmatprep.subr.mxu0 %v3430
      %3561 = vmatpush1.msra.mxu0 %v3429
      %3562 = vmatprep.subr.mxu0 %v3427
      %3563 = vmatpush1.msra.mxu0 %v3426
      %3564 = vmatprep.subr.mxu0 %v3424
      %3565 = vmatpush1.msra.mxu0 %v3423
      %3566 = vmatprep.subr.mxu0 %v3421
      %3567 = vmatpush1.msra.mxu0 %v3420
      %3568 = vmatprep.subr.mxu0 %v3418
      %3569 = vmatpush1.msra.mxu0 %v3417
      %3570 = vmatprep.subr.mxu0 %v3415
      %3571 = vmatpush1.msra.mxu0 %v3414
      %3572 = vmatprep.subr.mxu0 %v3412
      %3573 = vmatpush1.msra.mxu0 %v3411
      %3574 = vmatprep.subr.mxu0 %v3409
      %3575 = vmatpush1.msra.mxu0 %v3408
      %3576 = vmatprep.subr.mxu0 %v3406
      %3577 = vmatpush1.msra.mxu0 %v3405
      %3578 = vmatprep.subr.mxu0 %v3403
      %3579 = vmatpush1.msra.mxu0 %v3402
      %3580 = vmatprep.subr.mxu0 %v3400
      %3581 = vmatpush1.msra.mxu0 %v3399
      %3582 = vmatprep.subr.mxu0 %v3397
      %3583 = vmatpush1.msra.mxu0 %v3396
      %3584 = vmatprep.subr.mxu0 %v3394
      %3585 = vmatpush1.msra.mxu0 %v3393
      %3586 = vmatprep.subr.mxu0 0.0
      %3587 = vmatpush2.msra.mxu0 0.0
      %3588 = vmatprep.subr.mxu0 0.0
      %3589 = vmatpush2.msra.mxu0 0.0
      %3590 = vmatprep.subr.mxu0 0.0
      %3591 = vmatpush2.msra.mxu0 0.0
      %3592 = vmatprep.subr.mxu0 0.0
      %3593 = vmatpush2.msra.mxu0 0.0
      %3594 = vmatprep.subr.mxu0 %v3475
      %3595 = vmatpush2.msra.mxu0 %v3474
      %3596 = vmatprep.subr.mxu0 %v3472
      %3597 = vmatpush2.msra.mxu0 %v3471
      %3598 = vmatprep.subr.mxu0 %v3469
      %3599 = vmatpush2.msra.mxu0 %v3468
      %3600 = vmatprep.subr.mxu0 %v3466
      %3601 = vmatpush2.msra.mxu0 %v3465
      %3602 = vmatprep.subr.mxu0 %v3463
      %3603 = vmatpush2.msra.mxu0 %v3462
      %3604 = vmatprep.subr.mxu0 %v3460
      %3605 = vmatpush2.msra.mxu0 %v3459
      %3606 = vmatprep.subr.mxu0 %v3457
      %3607 = vmatpush2.msra.mxu0 %v3456
      %3608 = vmatprep.subr.mxu0 %v3454
      %3609 = vmatpush2.msra.mxu0 %v3453
      %3610 = vmatprep.subr.mxu0 %v3451
      %3611 = vmatpush2.msra.mxu0 %v3450
      %3612 = vmatprep.subr.mxu0 %v3448
      %3613 = vmatpush2.msra.mxu0 %v3447
      %3614 = vmatprep.subr.mxu0 %v3445
      %3615 = vmatpush2.msra.mxu0 %v3444
      %3616 = vmatprep.subr.mxu0 %v3442
      %3617 = vmatpush2.msra.mxu0 %v3441
      %3618 = vmatprep.mubr.f32.mxu0 %v2680
      %3619 = vmatmul.mubr.f32.gmra.mxu0 %v2670
      %v3620 = vpop.f32.mrf.mxu0
      %v3621 = vadd.f32 %v3544, %v3620
      %v3622 = vpop.f32.mrf.mxu0
      %v3623 = vadd.f32 %v3546, %v3622
      %3624 = vmatprep.mubr.f32.mxu0 %v2682
      %3625 = vmatmul.mubr.f32.gmra.mxu0 %v2669
      %v3626 = vpop.f32.mrf.mxu0
      %v3627 = vadd.f32 %v3550, %v3626
      %v3628 = vpop.f32.mrf.mxu0
      %v3629 = vadd.f32 %v3552, %v3628
      %3630 = vdwg.mxu0
      %3631 = vmatprep.subr.mxu0 0.0
      %3632 = vmatpush1.msra.mxu0 %v3344
      %3633 = vmatprep.subr.mxu0 0.0
      %3634 = vmatpush1.msra.mxu0 %v3341
      %3635 = vmatprep.subr.mxu0 0.0
      %3636 = vmatpush1.msra.mxu0 %v3338
      %3637 = vmatprep.subr.mxu0 0.0
      %3638 = vmatpush1.msra.mxu0 %v3335
      %3639 = vmatprep.subr.mxu0 0.0
      %3640 = vmatpush1.msra.mxu0 %v3332
      %3641 = vmatprep.subr.mxu0 0.0
      %3642 = vmatpush1.msra.mxu0 %v3329
      %3643 = vmatprep.subr.mxu0 0.0
      %3644 = vmatpush1.msra.mxu0 %v3326
      %3645 = vmatprep.subr.mxu0 0.0
      %3646 = vmatpush1.msra.mxu0 %v3323
      %3647 = vmatprep.subr.mxu0 0.0
      %3648 = vmatpush1.msra.mxu0 %v3320
      %3649 = vmatprep.subr.mxu0 0.0
      %3650 = vmatpush1.msra.mxu0 %v3317
      %3651 = vmatprep.subr.mxu0 0.0
      %3652 = vmatpush1.msra.mxu0 %v3314
      %3653 = vmatprep.subr.mxu0 0.0
      %3654 = vmatpush1.msra.mxu0 %v3311
      %3655 = vmatprep.subr.mxu0 0.0
      %3656 = vmatpush1.msra.mxu0 %v3308
      %3657 = vmatprep.subr.mxu0 0.0
      %3658 = vmatpush1.msra.mxu0 %v3305
      %3659 = vmatprep.subr.mxu0 0.0
      %3660 = vmatpush1.msra.mxu0 %v3302
      %3661 = vmatprep.subr.mxu0 0.0
      %3662 = vmatpush1.msra.mxu0 %v3299
      %3663 = vmatprep.subr.mxu0 0.0
      %3664 = vmatpush2.msra.mxu0 %v3392
      %3665 = vmatprep.subr.mxu0 0.0
      %3666 = vmatpush2.msra.mxu0 %v3389
      %3667 = vmatprep.subr.mxu0 0.0
      %3668 = vmatpush2.msra.mxu0 %v3386
      %3669 = vmatprep.subr.mxu0 0.0
      %3670 = vmatpush2.msra.mxu0 %v3383
      %3671 = vmatprep.subr.mxu0 0.0
      %3672 = vmatpush2.msra.mxu0 %v3380
      %3673 = vmatprep.subr.mxu0 0.0
      %3674 = vmatpush2.msra.mxu0 %v3377
      %3675 = vmatprep.subr.mxu0 0.0
      %3676 = vmatpush2.msra.mxu0 %v3374
      %3677 = vmatprep.subr.mxu0 0.0
      %3678 = vmatpush2.msra.mxu0 %v3371
      %3679 = vmatprep.subr.mxu0 0.0
      %3680 = vmatpush2.msra.mxu0 %v3368
      %3681 = vmatprep.subr.mxu0 0.0
      %3682 = vmatpush2.msra.mxu0 %v3365
      %3683 = vmatprep.subr.mxu0 0.0
      %3684 = vmatpush2.msra.mxu0 %v3362
      %3685 = vmatprep.subr.mxu0 0.0
      %3686 = vmatpush2.msra.mxu0 %v3359
      %3687 = vmatprep.subr.mxu0 0.0
      %3688 = vmatpush2.msra.mxu0 %v3356
      %3689 = vmatprep.subr.mxu0 0.0
      %3690 = vmatpush2.msra.mxu0 %v3353
      %3691 = vmatprep.subr.mxu0 0.0
      %3692 = vmatpush2.msra.mxu0 %v3350
      %3693 = vmatprep.subr.mxu0 0.0
      %3694 = vmatpush2.msra.mxu0 %v3347
      %3695 = vmatprep.mubr.f32.mxu0 %v2667
      %3696 = vmatmul.mubr.f32.gmra.mxu0 %v2664
      %v3697 = vpop.f32.mrf.mxu0
      %v3698 = vadd.f32 0.0, %v3697
      %v3699 = vpop.f32.mrf.mxu0
      %3700 = vmatprep.mubr.f32.mxu0 %v2666
      %3701 = vmatmul.mubr.f32.gmra.mxu0 %v2663
      %v3702 = vpop.f32.mrf.mxu0
      %v3703 = vadd.f32 0.0, %v3702
      %v3704 = vpop.f32.mrf.mxu0
      %3705 = vdwg.mxu0
      %3706 = vmatprep.subr.mxu0 0.0
      %3707 = vmatpush1.msra.mxu0 %v3440
      %3708 = vmatprep.subr.mxu0 0.0
      %3709 = vmatpush1.msra.mxu0 %v3437
      %3710 = vmatprep.subr.mxu0 0.0
      %3711 = vmatpush1.msra.mxu0 %v3434
      %3712 = vmatprep.subr.mxu0 0.0
      %3713 = vmatpush1.msra.mxu0 %v3431
      %3714 = vmatprep.subr.mxu0 0.0
      %3715 = vmatpush1.msra.mxu0 %v3428
      %3716 = vmatprep.subr.mxu0 0.0
      %3717 = vmatpush1.msra.mxu0 %v3425
      %3718 = vmatprep.subr.mxu0 0.0
      %3719 = vmatpush1.msra.mxu0 %v3422
      %3720 = vmatprep.subr.mxu0 0.0
      %3721 = vmatpush1.msra.mxu0 %v3419
      %3722 = vmatprep.subr.mxu0 0.0
      %3723 = vmatpush1.msra.mxu0 %v3416
      %3724 = vmatprep.subr.mxu0 0.0
      %3725 = vmatpush1.msra.mxu0 %v3413
      %3726 = vmatprep.subr.mxu0 0.0
      %3727 = vmatpush1.msra.mxu0 %v3410
      %3728 = vmatprep.subr.mxu0 0.0
      %3729 = vmatpush1.msra.mxu0 %v3407
      %3730 = vmatprep.subr.mxu0 0.0
      %3731 = vmatpush1.msra.mxu0 %v3404
      %3732 = vmatprep.subr.mxu0 0.0
      %3733 = vmatpush1.msra.mxu0 %v3401
      %3734 = vmatprep.subr.mxu0 0.0
      %3735 = vmatpush1.msra.mxu0 %v3398
      %3736 = vmatprep.subr.mxu0 0.0
      %3737 = vmatpush1.msra.mxu0 %v3395
      %3738 = vmatprep.subr.mxu0 0.0
      %3739 = vmatpush2.msra.mxu0 0.0
      %3740 = vmatprep.subr.mxu0 0.0
      %3741 = vmatpush2.msra.mxu0 0.0
      %3742 = vmatprep.subr.mxu0 0.0
      %3743 = vmatpush2.msra.mxu0 0.0
      %3744 = vmatprep.subr.mxu0 0.0
      %3745 = vmatpush2.msra.mxu0 0.0
      %3746 = vmatprep.subr.mxu0 0.0
      %3747 = vmatpush2.msra.mxu0 %v3476
      %3748 = vmatprep.subr.mxu0 0.0
      %3749 = vmatpush2.msra.mxu0 %v3473
      %3750 = vmatprep.subr.mxu0 0.0
      %3751 = vmatpush2.msra.mxu0 %v3470
      %3752 = vmatprep.subr.mxu0 0.0
      %3753 = vmatpush2.msra.mxu0 %v3467
      %3754 = vmatprep.subr.mxu0 0.0
      %3755 = vmatpush2.msra.mxu0 %v3464
      %3756 = vmatprep.subr.mxu0 0.0
      %3757 = vmatpush2.msra.mxu0 %v3461
      %3758 = vmatprep.subr.mxu0 0.0
      %3759 = vmatpush2.msra.mxu0 %v3458
      %3760 = vmatprep.subr.mxu0 0.0
      %3761 = vmatpush2.msra.mxu0 %v3455
      %3762 = vmatprep.subr.mxu0 0.0
      %3763 = vmatpush2.msra.mxu0 %v3452
      %3764 = vmatprep.subr.mxu0 0.0
      %3765 = vmatpush2.msra.mxu0 %v3449
      %3766 = vmatprep.subr.mxu0 0.0
      %3767 = vmatpush2.msra.mxu0 %v3446
      %3768 = vmatprep.subr.mxu0 0.0
      %3769 = vmatpush2.msra.mxu0 %v3443
      %3770 = vmatprep.mubr.f32.mxu0 %v2680
      %3771 = vmatmul.mubr.f32.gmra.mxu0 %v2670
      %v3772 = vpop.f32.mrf.mxu0
      %v3773 = vadd.f32 %v3698, %v3772
      %v3774 = vpop.f32.mrf.mxu0
      %3775 = vmatprep.mubr.f32.mxu0 %v2682
      %3776 = vmatmul.mubr.f32.gmra.mxu0 %v2669
      %v3777 = vpop.f32.mrf.mxu0
      %v3778 = vadd.f32 %v3703, %v3777
      %v3779 = vpop.f32.mrf.mxu0
      %3780 = vdwg.mxu0
      %3781 = vmatprep.subr.mxu0 %v2339
      %3782 = vmatpush1.msra.mxu0 %v2338
      %3783 = vmatprep.subr.mxu0 %v2336
      %3784 = vmatpush1.msra.mxu0 %v2335
      %3785 = vmatprep.subr.mxu0 %v2333
      %3786 = vmatpush1.msra.mxu0 %v2332
      %3787 = vmatprep.subr.mxu0 %v2330
      %3788 = vmatpush1.msra.mxu0 %v2329
      %3789 = vmatprep.subr.mxu0 %v2327
      %3790 = vmatpush1.msra.mxu0 %v2326
      %3791 = vmatprep.subr.mxu0 %v2324
      %3792 = vmatpush1.msra.mxu0 %v2323
      %3793 = vmatprep.subr.mxu0 %v2321
      %3794 = vmatpush1.msra.mxu0 %v2320
      %3795 = vmatprep.subr.mxu0 %v2318
      %3796 = vmatpush1.msra.mxu0 %v2317
      %3797 = vmatprep.subr.mxu0 %v2315
      %3798 = vmatpush1.msra.mxu0 %v2314
      %3799 = vmatprep.subr.mxu0 %v2312
      %3800 = vmatpush1.msra.mxu0 %v2311
      %3801 = vmatprep.subr.mxu0 %v2309
      %3802 = vmatpush1.msra.mxu0 %v2308
      %3803 = vmatprep.subr.mxu0 %v2306
      %3804 = vmatpush1.msra.mxu0 %v2305
      %3805 = vmatprep.subr.mxu0 %v2303
      %3806 = vmatpush1.msra.mxu0 %v2302
      %3807 = vmatprep.subr.mxu0 %v2300
      %3808 = vmatpush1.msra.mxu0 %v2299
      %3809 = vmatprep.subr.mxu0 %v2297
      %3810 = vmatpush1.msra.mxu0 %v2296
      %3811 = vmatprep.subr.mxu0 %v2294
      %3812 = vmatpush1.msra.mxu0 %v2293
      %3813 = vmatprep.subr.mxu0 %v2387
      %3814 = vmatpush2.msra.mxu0 %v2386
      %3815 = vmatprep.subr.mxu0 %v2384
      %3816 = vmatpush2.msra.mxu0 %v2383
      %3817 = vmatprep.subr.mxu0 %v2381
      %3818 = vmatpush2.msra.mxu0 %v2380
      %3819 = vmatprep.subr.mxu0 %v2378
      %3820 = vmatpush2.msra.mxu0 %v2377
      %3821 = vmatprep.subr.mxu0 %v2375
      %3822 = vmatpush2.msra.mxu0 %v2374
      %3823 = vmatprep.subr.mxu0 %v2372
      %3824 = vmatpush2.msra.mxu0 %v2371
      %3825 = vmatprep.subr.mxu0 %v2369
      %3826 = vmatpush2.msra.mxu0 %v2368
      %3827 = vmatprep.subr.mxu0 %v2366
      %3828 = vmatpush2.msra.mxu0 %v2365
      %3829 = vmatprep.subr.mxu0 %v2363
      %3830 = vmatpush2.msra.mxu0 %v2362
      %3831 = vmatprep.subr.mxu0 %v2360
      %3832 = vmatpush2.msra.mxu0 %v2359
      %3833 = vmatprep.subr.mxu0 %v2357
      %3834 = vmatpush2.msra.mxu0 %v2356
      %3835 = vmatprep.subr.mxu0 %v2354
      %3836 = vmatpush2.msra.mxu0 %v2353
      %3837 = vmatprep.subr.mxu0 %v2351
      %3838 = vmatpush2.msra.mxu0 %v2350
      %3839 = vmatprep.subr.mxu0 %v2348
      %3840 = vmatpush2.msra.mxu0 %v2347
      %3841 = vmatprep.subr.mxu0 %v2345
      %3842 = vmatpush2.msra.mxu0 %v2344
      %3843 = vmatprep.subr.mxu0 %v2342
      %3844 = vmatpush2.msra.mxu0 %v2341
      %3845 = vmatprep.mubr.f32.mxu0 %v2106
      %3846 = vmatmul.mubr.f32.gmra.mxu0 %v2105
      %v3847 = vpop.f32.mrf.mxu0
      %v3848 = vadd.f32 %v3621, %v3847
      %v3849 = vpop.f32.mrf.mxu0
      %v3850 = vadd.f32 %v3623, %v3849
      %3851 = vmatprep.mubr.f32.mxu0 %v2110
      %3852 = vmatmul.mubr.f32.gmra.mxu0 %v2109
      %v3853 = vpop.f32.mrf.mxu0
      %v3854 = vadd.f32 %v3627, %v3853
      %v3855 = vpop.f32.mrf.mxu0
      %v3856 = vadd.f32 %v3629, %v3855
      %3857 = vdwg.mxu0
      %3858 = vmatprep.subr.mxu0 %v2435
      %3859 = vmatpush1.msra.mxu0 %v2434
      %3860 = vmatprep.subr.mxu0 %v2432
      %3861 = vmatpush1.msra.mxu0 %v2431
      %3862 = vmatprep.subr.mxu0 %v2429
      %3863 = vmatpush1.msra.mxu0 %v2428
      %3864 = vmatprep.subr.mxu0 %v2426
      %3865 = vmatpush1.msra.mxu0 %v2425
      %3866 = vmatprep.subr.mxu0 %v2423
      %3867 = vmatpush1.msra.mxu0 %v2422
      %3868 = vmatprep.subr.mxu0 %v2420
      %3869 = vmatpush1.msra.mxu0 %v2419
      %3870 = vmatprep.subr.mxu0 %v2417
      %3871 = vmatpush1.msra.mxu0 %v2416
      %3872 = vmatprep.subr.mxu0 %v2414
      %3873 = vmatpush1.msra.mxu0 %v2413
      %3874 = vmatprep.subr.mxu0 %v2411
      %3875 = vmatpush1.msra.mxu0 %v2410
      %3876 = vmatprep.subr.mxu0 %v2408
      %3877 = vmatpush1.msra.mxu0 %v2407
      %3878 = vmatprep.subr.mxu0 %v2405
      %3879 = vmatpush1.msra.mxu0 %v2404
      %3880 = vmatprep.subr.mxu0 %v2402
      %3881 = vmatpush1.msra.mxu0 %v2401
      %3882 = vmatprep.subr.mxu0 %v2399
      %3883 = vmatpush1.msra.mxu0 %v2398
      %3884 = vmatprep.subr.mxu0 %v2396
      %3885 = vmatpush1.msra.mxu0 %v2395
      %3886 = vmatprep.subr.mxu0 %v2393
      %3887 = vmatpush1.msra.mxu0 %v2392
      %3888 = vmatprep.subr.mxu0 %v2390
      %3889 = vmatpush1.msra.mxu0 %v2389
      %3890 = vmatprep.subr.mxu0 0.0
      %3891 = vmatpush2.msra.mxu0 0.0
      %3892 = vmatprep.subr.mxu0 0.0
      %3893 = vmatpush2.msra.mxu0 0.0
      %3894 = vmatprep.subr.mxu0 0.0
      %3895 = vmatpush2.msra.mxu0 0.0
      %3896 = vmatprep.subr.mxu0 0.0
      %3897 = vmatpush2.msra.mxu0 0.0
      %3898 = vmatprep.subr.mxu0 %v2471
      %3899 = vmatpush2.msra.mxu0 %v2470
      %3900 = vmatprep.subr.mxu0 %v2468
      %3901 = vmatpush2.msra.mxu0 %v2467
      %3902 = vmatprep.subr.mxu0 %v2465
      %3903 = vmatpush2.msra.mxu0 %v2464
      %3904 = vmatprep.subr.mxu0 %v2462
      %3905 = vmatpush2.msra.mxu0 %v2461
      %3906 = vmatprep.subr.mxu0 %v2459
      %3907 = vmatpush2.msra.mxu0 %v2458
      %3908 = vmatprep.subr.mxu0 %v2456
      %3909 = vmatpush2.msra.mxu0 %v2455
      %3910 = vmatprep.subr.mxu0 %v2453
      %3911 = vmatpush2.msra.mxu0 %v2452
      %3912 = vmatprep.subr.mxu0 %v2450
      %3913 = vmatpush2.msra.mxu0 %v2449
      %3914 = vmatprep.subr.mxu0 %v2447
      %3915 = vmatpush2.msra.mxu0 %v2446
      %3916 = vmatprep.subr.mxu0 %v2444
      %3917 = vmatpush2.msra.mxu0 %v2443
      %3918 = vmatprep.subr.mxu0 %v2441
      %3919 = vmatpush2.msra.mxu0 %v2440
      %3920 = vmatprep.subr.mxu0 %v2438
      %3921 = vmatpush2.msra.mxu0 %v2437
      %3922 = vmatprep.mubr.f32.mxu0 %v2988
      %3923 = vmatmul.mubr.f32.gmra.mxu0 %v2107
      %v3924 = vpop.f32.mrf.mxu0
      %v3925 = vadd.f32 %v3848, %v3924
      %v3926 = vpop.f32.mrf.mxu0
      %v3927 = vadd.f32 %v3850, %v3926
      %3928 = vmatprep.mubr.f32.mxu0 %v2990
      %3929 = vmatmul.mubr.f32.gmra.mxu0 %v2111
      %v3930 = vpop.f32.mrf.mxu0
      %v3931 = vadd.f32 %v3854, %v3930
      %v3932 = vpop.f32.mrf.mxu0
      %v3933 = vadd.f32 %v3856, %v3932
      %3934 = vdwg.mxu0
      %3935 = vmatprep.subr.mxu0 0.0
      %3936 = vmatpush1.msra.mxu0 %v2340
      %3937 = vmatprep.subr.mxu0 0.0
      %3938 = vmatpush1.msra.mxu0 %v2337
      %3939 = vmatprep.subr.mxu0 0.0
      %3940 = vmatpush1.msra.mxu0 %v2334
      %3941 = vmatprep.subr.mxu0 0.0
      %3942 = vmatpush1.msra.mxu0 %v2331
      %3943 = vmatprep.subr.mxu0 0.0
      %3944 = vmatpush1.msra.mxu0 %v2328
      %3945 = vmatprep.subr.mxu0 0.0
      %3946 = vmatpush1.msra.mxu0 %v2325
      %3947 = vmatprep.subr.mxu0 0.0
      %3948 = vmatpush1.msra.mxu0 %v2322
      %3949 = vmatprep.subr.mxu0 0.0
      %3950 = vmatpush1.msra.mxu0 %v2319
      %3951 = vmatprep.subr.mxu0 0.0
      %3952 = vmatpush1.msra.mxu0 %v2316
      %3953 = vmatprep.subr.mxu0 0.0
      %3954 = vmatpush1.msra.mxu0 %v2313
      %3955 = vmatprep.subr.mxu0 0.0
      %3956 = vmatpush1.msra.mxu0 %v2310
      %3957 = vmatprep.subr.mxu0 0.0
      %3958 = vmatpush1.msra.mxu0 %v2307
      %3959 = vmatprep.subr.mxu0 0.0
      %3960 = vmatpush1.msra.mxu0 %v2304
      %3961 = vmatprep.subr.mxu0 0.0
      %3962 = vmatpush1.msra.mxu0 %v2301
      %3963 = vmatprep.subr.mxu0 0.0
      %3964 = vmatpush1.msra.mxu0 %v2298
      %3965 = vmatprep.subr.mxu0 0.0
      %3966 = vmatpush1.msra.mxu0 %v2295
      %3967 = vmatprep.subr.mxu0 0.0
      %3968 = vmatpush2.msra.mxu0 %v2388
      %3969 = vmatprep.subr.mxu0 0.0
      %3970 = vmatpush2.msra.mxu0 %v2385
      %3971 = vmatprep.subr.mxu0 0.0
      %3972 = vmatpush2.msra.mxu0 %v2382
      %3973 = vmatprep.subr.mxu0 0.0
      %3974 = vmatpush2.msra.mxu0 %v2379
      %3975 = vmatprep.subr.mxu0 0.0
      %3976 = vmatpush2.msra.mxu0 %v2376
      %3977 = vmatprep.subr.mxu0 0.0
      %3978 = vmatpush2.msra.mxu0 %v2373
      %3979 = vmatprep.subr.mxu0 0.0
      %3980 = vmatpush2.msra.mxu0 %v2370
      %3981 = vmatprep.subr.mxu0 0.0
      %3982 = vmatpush2.msra.mxu0 %v2367
      %3983 = vmatprep.subr.mxu0 0.0
      %3984 = vmatpush2.msra.mxu0 %v2364
      %3985 = vmatprep.subr.mxu0 0.0
      %3986 = vmatpush2.msra.mxu0 %v2361
      %3987 = vmatprep.subr.mxu0 0.0
      %3988 = vmatpush2.msra.mxu0 %v2358
      %3989 = vmatprep.subr.mxu0 0.0
      %3990 = vmatpush2.msra.mxu0 %v2355
      %3991 = vmatprep.subr.mxu0 0.0
      %3992 = vmatpush2.msra.mxu0 %v2352
      %3993 = vmatprep.subr.mxu0 0.0
      %3994 = vmatpush2.msra.mxu0 %v2349
      %3995 = vmatprep.subr.mxu0 0.0
      %3996 = vmatpush2.msra.mxu0 %v2346
      %3997 = vmatprep.subr.mxu0 0.0
      %3998 = vmatpush2.msra.mxu0 %v2343
      %3999 = vmatprep.mubr.f32.mxu0 %v2106
      %4000 = vmatmul.mubr.f32.gmra.mxu0 %v2105
      %v4001 = vpop.f32.mrf.mxu0
      %v4002 = vadd.f32 %v3773, %v4001
      %v4003 = vpop.f32.mrf.mxu0
      %4004 = vmatprep.mubr.f32.mxu0 %v2110
      %4005 = vmatmul.mubr.f32.gmra.mxu0 %v2109
      %v4006 = vpop.f32.mrf.mxu0
      %v4007 = vadd.f32 %v3778, %v4006
      %v4008 = vpop.f32.mrf.mxu0
      %4009 = vdwg.mxu0
      %4010 = vmatprep.subr.mxu0 0.0
      %4011 = vmatpush1.msra.mxu0 %v2436
      %4012 = vmatprep.subr.mxu0 0.0
      %4013 = vmatpush1.msra.mxu0 %v2433
      %4014 = vmatprep.subr.mxu0 0.0
      %4015 = vmatpush1.msra.mxu0 %v2430
      %4016 = vmatprep.subr.mxu0 0.0
      %4017 = vmatpush1.msra.mxu0 %v2427
      %4018 = vmatprep.subr.mxu0 0.0
      %4019 = vmatpush1.msra.mxu0 %v2424
      %4020 = vmatprep.subr.mxu0 0.0
      %4021 = vmatpush1.msra.mxu0 %v2421
      %4022 = vmatprep.subr.mxu0 0.0
      %4023 = vmatpush1.msra.mxu0 %v2418
      %4024 = vmatprep.subr.mxu0 0.0
      %4025 = vmatpush1.msra.mxu0 %v2415
      %4026 = vmatprep.subr.mxu0 0.0
      %4027 = vmatpush1.msra.mxu0 %v2412
      %4028 = vmatprep.subr.mxu0 0.0
      %4029 = vmatpush1.msra.mxu0 %v2409
      %4030 = vmatprep.subr.mxu0 0.0
      %4031 = vmatpush1.msra.mxu0 %v2406
      %4032 = vmatprep.subr.mxu0 0.0
      %4033 = vmatpush1.msra.mxu0 %v2403
      %4034 = vmatprep.subr.mxu0 0.0
      %4035 = vmatpush1.msra.mxu0 %v2400
      %4036 = vmatprep.subr.mxu0 0.0
      %4037 = vmatpush1.msra.mxu0 %v2397
      %4038 = vmatprep.subr.mxu0 0.0
      %4039 = vmatpush1.msra.mxu0 %v2394
      %4040 = vmatprep.subr.mxu0 0.0
      %4041 = vmatpush1.msra.mxu0 %v2391
      %4042 = vmatprep.subr.mxu0 0.0
      %4043 = vmatpush2.msra.mxu0 0.0
      %4044 = vmatprep.subr.mxu0 0.0
      %4045 = vmatpush2.msra.mxu0 0.0
      %4046 = vmatprep.subr.mxu0 0.0
      %4047 = vmatpush2.msra.mxu0 0.0
      %4048 = vmatprep.subr.mxu0 0.0
      %4049 = vmatpush2.msra.mxu0 0.0
      %4050 = vmatprep.subr.mxu0 0.0
      %4051 = vmatpush2.msra.mxu0 %v2472
      %4052 = vmatprep.subr.mxu0 0.0
      %4053 = vmatpush2.msra.mxu0 %v2469
      %4054 = vmatprep.subr.mxu0 0.0
      %4055 = vmatpush2.msra.mxu0 %v2466
      %4056 = vmatprep.subr.mxu0 0.0
      %4057 = vmatpush2.msra.mxu0 %v2463
      %4058 = vmatprep.subr.mxu0 0.0
      %4059 = vmatpush2.msra.mxu0 %v2460
      %4060 = vmatprep.subr.mxu0 0.0
      %4061 = vmatpush2.msra.mxu0 %v2457
      %4062 = vmatprep.subr.mxu0 0.0
      %4063 = vmatpush2.msra.mxu0 %v2454
      %4064 = vmatprep.subr.mxu0 0.0
      %4065 = vmatpush2.msra.mxu0 %v2451
      %4066 = vmatprep.subr.mxu0 0.0
      %4067 = vmatpush2.msra.mxu0 %v2448
      %4068 = vmatprep.subr.mxu0 0.0
      %4069 = vmatpush2.msra.mxu0 %v2445
      %4070 = vmatprep.subr.mxu0 0.0
      %4071 = vmatpush2.msra.mxu0 %v2442
      %4072 = vmatprep.subr.mxu0 0.0
      %4073 = vmatpush2.msra.mxu0 %v2439
      %4074 = vmatprep.mubr.f32.mxu0 %v2988
      %4075 = vmatmul.mubr.f32.gmra.mxu0 %v2107
      %v4076 = vpop.f32.mrf.mxu0
      %v4077 = vadd.f32 %v4002, %v4076
      %v4078 = vpop.f32.mrf.mxu0
      %4079 = vmatprep.mubr.f32.mxu0 %v2990
      %4080 = vmatmul.mubr.f32.gmra.mxu0 %v2111
      %v4081 = vpop.f32.mrf.mxu0
      %v4082 = vadd.f32 %v4007, %v4081
      %v4083 = vpop.f32.mrf.mxu0
      %4084 = vdwg.mxu0
      %s4085 = scalar_lea.vmem %s3, 2880
      %v4086 = vld [vmem:[%s4085] sm:$0xff]
      %v4087 = vld [vmem:[%s4085 + $0x8] sm:$0xff]
      %v4088 = vld [vmem:[%s4085 + $0x10] sm:$0xff]
      %v4089 = vld [vmem:[%s4085 + $0x18] sm:$0xff]
      %v4090 = vld [vmem:[%s4085 + $0x20] sm:$0xff]
      %v4091 = vld [vmem:[%s4085 + $0x28] sm:$0xff]
      %v4092 = vld [vmem:[%s4085 + $0x30] sm:$0xff]
      %v4093 = vld [vmem:[%s4085 + $0x38] sm:$0xff]
      %v4094 = vld [vmem:[%s4085 + $0x40] sm:$0xff]
      %v4095 = vld [vmem:[%s4085 + $0x48] sm:$0xff]
      %v4096 = vld [vmem:[%s4085 + $0x50] sm:$0xff]
      %v4097 = vld [vmem:[%s4085 + $0x58] sm:$0xff]
      %v4098 = vld [vmem:[%s4085 + $0x60] sm:$0xff]
      %v4099 = vld [vmem:[%s4085 + $0x68] sm:$0xff]
      %v4100 = vld [vmem:[%s4085 + $0x70] sm:$0xff]
      %v4101 = vld [vmem:[%s4085 + $0x78] sm:$0xff]
      %v4102 = vld [vmem:[%s4085 + $0x80] sm:$0xff]
      %v4103 = vld [vmem:[%s4085 + $0x88] sm:$0xff]
      %v4104 = vld [vmem:[%s4085 + $0x90] sm:$0xff]
      %v4105 = vld [vmem:[%s4085 + $0x98] sm:$0xff]
      %v4106 = vld [vmem:[%s4085 + $0xa0] sm:$0xff]
      %v4107 = vld [vmem:[%s4085 + $0xa8] sm:$0xff]
      %v4108 = vld [vmem:[%s4085 + $0xb0] sm:$0xff]
      %v4109 = vld [vmem:[%s4085 + $0xb8] sm:$0xff]
      %v4110 = vld [vmem:[%s4085 + $0xc0] sm:$0xff]
      %v4111 = vld [vmem:[%s4085 + $0xc8] sm:$0xff]
      %v4112 = vld [vmem:[%s4085 + $0xd0] sm:$0xff]
      %v4113 = vld [vmem:[%s4085 + $0xd8] sm:$0xff]
      %v4114 = vld [vmem:[%s4085 + $0xe0] sm:$0xff]
      %v4115 = vld [vmem:[%s4085 + $0xe8] sm:$0xff]
      %v4116 = vld [vmem:[%s4085 + $0xf0] sm:$0xff]
      %v4117 = vld [vmem:[%s4085 + $0xf8] sm:$0xff]
      %v4118 = vld [vmem:[%s4085 + $0x100] sm:$0xff]
      %v4119 = vld [vmem:[%s4085 + $0x108] sm:$0xff]
      %v4120 = vld [vmem:[%s4085 + $0x110] sm:$0xff]
      %v4121 = vld [vmem:[%s4085 + $0x118] sm:$0xff]
      %v4122 = vld [vmem:[%s4085 + $0x120] sm:$0xff]
      %v4123 = vld [vmem:[%s4085 + $0x128] sm:$0xff]
      %v4124 = vld [vmem:[%s4085 + $0x130] sm:$0xff]
      %v4125 = vld [vmem:[%s4085 + $0x138] sm:$0xff]
      %v4126 = vld [vmem:[%s4085 + $0x140] sm:$0xff]
      %v4127 = vld [vmem:[%s4085 + $0x148] sm:$0xff]
      %v4128 = vld [vmem:[%s4085 + $0x150] sm:$0xff]
      %v4129 = vld [vmem:[%s4085 + $0x158] sm:$0xff]
      %v4130 = vld [vmem:[%s4085 + $0x160] sm:$0xff]
      %v4131 = vld [vmem:[%s4085 + $0x168] sm:$0xff]
      %v4132 = vld [vmem:[%s4085 + $0x170] sm:$0xff]
      %v4133 = vld [vmem:[%s4085 + $0x178] sm:$0xff]
      %v4134 = vld [vmem:[%s4085 + $0x180] sm:$0xff]
      %v4135 = vld [vmem:[%s4085 + $0x188] sm:$0xff]
      %v4136 = vld [vmem:[%s4085 + $0x190] sm:$0xff]
      %v4137 = vld [vmem:[%s4085 + $0x198] sm:$0xff]
      %v4138 = vld [vmem:[%s4085 + $0x1a0] sm:$0xff]
      %v4139 = vld [vmem:[%s4085 + $0x1a8] sm:$0xff]
      %v4140 = vld [vmem:[%s4085 + $0x1b0] sm:$0xff]
      %v4141 = vld [vmem:[%s4085 + $0x1b8] sm:$0xff]
      %v4142 = vld [vmem:[%s4085 + $0x1c0] sm:$0xff]
      %v4143 = vld [vmem:[%s4085 + $0x1c8] sm:$0xff]
      %v4144 = vld [vmem:[%s4085 + $0x1d0] sm:$0xff]
      %v4145 = vld [vmem:[%s4085 + $0x1d8] sm:$0xff]
      %v4146 = vld [vmem:[%s4085 + $0x1e0] sm:$0xff]
      %v4147 = vld [vmem:[%s4085 + $0x1e8] sm:$0xff]
      %v4148 = vld [vmem:[%s4085 + $0x1f0] sm:$0xff]
      %v4149 = vld [vmem:[%s4085 + $0x1f8] sm:$0xff]
      %v4150 = vld [vmem:[%s4085 + $0x200] sm:$0xff]
      %v4151 = vld [vmem:[%s4085 + $0x208] sm:$0xff]
      %v4152 = vld [vmem:[%s4085 + $0x210] sm:$0xff]
      %v4153 = vld [vmem:[%s4085 + $0x218] sm:$0xff]
      %v4154 = vld [vmem:[%s4085 + $0x220] sm:$0xff]
      %v4155 = vld [vmem:[%s4085 + $0x228] sm:$0xff]
      %v4156 = vld [vmem:[%s4085 + $0x230] sm:$0xff]
      %v4157 = vld [vmem:[%s4085 + $0x238] sm:$0xff]
      %v4158 = vld [vmem:[%s4085 + $0x240] sm:$0xff]
      %v4159 = vld [vmem:[%s4085 + $0x248] sm:$0xff]
      %v4160 = vld [vmem:[%s4085 + $0x250] sm:$0xff]
      %v4161 = vld [vmem:[%s4085 + $0x258] sm:$0xff]
      %v4162 = vld [vmem:[%s4085 + $0x260] sm:$0xff]
      %v4163 = vld [vmem:[%s4085 + $0x268] sm:$0xff]
      %v4164 = vld [vmem:[%s4085 + $0x270] sm:$0xff]
      %v4165 = vld [vmem:[%s4085 + $0x278] sm:$0xff]
      %v4166 = vld [vmem:[%s4085 + $0x280] sm:$0xff]
      %v4167 = vld [vmem:[%s4085 + $0x288] sm:$0xff]
      %v4168 = vld [vmem:[%s4085 + $0x290] sm:$0xff]
      %v4169 = vld [vmem:[%s4085 + $0x298] sm:$0xff]
      %v4170 = vld [vmem:[%s4085 + $0x2a0] sm:$0xff]
      %v4171 = vld [vmem:[%s4085 + $0x2a8] sm:$0xff]
      %v4172 = vld [vmem:[%s4085 + $0x2b0] sm:$0xff]
      %v4173 = vld [vmem:[%s4085 + $0x2b8] sm:$0xff]
      %v4174 = vld [vmem:[%s4085 + $0x2c0] sm:$0xff]
      %v4175 = vld [vmem:[%s4085 + $0x2c8] sm:$0xff]
      %v4176 = vld [vmem:[%s4085 + $0x2d0] sm:$0xff]
      %v4177 = vld [vmem:[%s4085 + $0x2d8] sm:$0xff]
      %v4178 = vld [vmem:[%s4085 + $0x2e0] sm:$0xff]
      %v4179 = vld [vmem:[%s4085 + $0x2e8] sm:$0xff]
      %v4180 = vld [vmem:[%s4085 + $0x2f0] sm:$0xff]
      %v4181 = vld [vmem:[%s4085 + $0x2f8] sm:$0xff]
      %v4182 = vld [vmem:[%s4085 + $0x300] sm:$0xff]
      %v4183 = vld [vmem:[%s4085 + $0x308] sm:$0xff]
      %v4184 = vld [vmem:[%s4085 + $0x310] sm:$0xff]
      %v4185 = vld [vmem:[%s4085 + $0x318] sm:$0xff]
      %v4186 = vld [vmem:[%s4085 + $0x320] sm:$0xff]
      %v4187 = vld [vmem:[%s4085 + $0x328] sm:$0xff]
      %v4188 = vld [vmem:[%s4085 + $0x330] sm:$0xff]
      %v4189 = vld [vmem:[%s4085 + $0x338] sm:$0xff]
      %v4190 = vld [vmem:[%s4085 + $0x340] sm:$0xff]
      %v4191 = vld [vmem:[%s4085 + $0x348] sm:$0xff]
      %v4192 = vld [vmem:[%s4085 + $0x350] sm:$0xff]
      %v4193 = vld [vmem:[%s4085 + $0x358] sm:$0xff]
      %v4194 = vld [vmem:[%s4085 + $0x360] sm:$0xff]
      %v4195 = vld [vmem:[%s4085 + $0x368] sm:$0xff]
      %v4196 = vld [vmem:[%s4085 + $0x370] sm:$0xff]
      %v4197 = vld [vmem:[%s4085 + $0x378] sm:$0xff]
      %v4198 = vld [vmem:[%s4085 + $0x380] sm:$0xff]
      %v4199 = vld [vmem:[%s4085 + $0x388] sm:$0xff]
      %v4200 = vld [vmem:[%s4085 + $0x390] sm:$0xff]
      %v4201 = vld [vmem:[%s4085 + $0x398] sm:$0xff]
      %v4202 = vld [vmem:[%s4085 + $0x3a0] sm:$0xff]
      %v4203 = vld [vmem:[%s4085 + $0x3a8] sm:$0xff]
      %v4204 = vld [vmem:[%s4085 + $0x3b0] sm:$0xff]
      %v4205 = vld [vmem:[%s4085 + $0x3b8] sm:$0xff]
      %v4206 = vld [vmem:[%s4085 + $0x3c0] sm:$0xff]
      %v4207 = vld [vmem:[%s4085 + $0x3c8] sm:$0xff]
      %v4208 = vld [vmem:[%s4085 + $0x3d0] sm:$0xff]
      %v4209 = vld [vmem:[%s4085 + $0x3d8] sm:$0xff]
      %v4210 = vld [vmem:[%s4085 + $0x3e0] sm:$0xff]
      %v4211 = vld [vmem:[%s4085 + $0x3e8] sm:$0xff]
      %v4212 = vld [vmem:[%s4085 + $0x3f0] sm:$0xff]
      %v4213 = vld [vmem:[%s4085 + $0x3f8] sm:$0xff]
      %v4214 = vld [vmem:[%s4085 + $0x400] sm:$0xff]
      %v4215 = vld [vmem:[%s4085 + $0x408] sm:$0xff]
      %v4216 = vld [vmem:[%s4085 + $0x410] sm:$0xff]
      %v4217 = vld [vmem:[%s4085 + $0x418] sm:$0xff]
      %v4218 = vld [vmem:[%s4085 + $0x420] sm:$0xff]
      %v4219 = vld [vmem:[%s4085 + $0x428] sm:$0xff]
      %v4220 = vld [vmem:[%s4085 + $0x430] sm:$0xff]
      %v4221 = vld [vmem:[%s4085 + $0x438] sm:$0xff]
      %v4222 = vld [vmem:[%s4085 + $0x440] sm:$0xff]
      %v4223 = vld [vmem:[%s4085 + $0x448] sm:$0xff]
      %v4224 = vld [vmem:[%s4085 + $0x450] sm:$0xff]
      %v4225 = vld [vmem:[%s4085 + $0x458] sm:$0xff]
      %v4226 = vld [vmem:[%s4085 + $0x460] sm:$0xff]
      %v4227 = vld [vmem:[%s4085 + $0x468] sm:$0xff]
      %v4228 = vld [vmem:[%s4085 + $0x470] sm:$0xff]
      %v4229 = vld [vmem:[%s4085 + $0x478] sm:$0xff]
      %v4230 = vld [vmem:[%s4085 + $0x480] sm:$0xff]
      %v4231 = vld [vmem:[%s4085 + $0x488] sm:$0xff]
      %v4232 = vld [vmem:[%s4085 + $0x490] sm:$0xff]
      %v4233 = vld [vmem:[%s4085 + $0x498] sm:$0xff]
      %v4234 = vld [vmem:[%s4085 + $0x4a0] sm:$0xff]
      %v4235 = vld [vmem:[%s4085 + $0x4a8] sm:$0xff]
      %v4236 = vld [vmem:[%s4085 + $0x4b0] sm:$0xff]
      %v4237 = vld [vmem:[%s4085 + $0x4b8] sm:$0xff]
      %v4238 = vld [vmem:[%s4085 + $0x4c0] sm:$0xff]
      %v4239 = vld [vmem:[%s4085 + $0x4c8] sm:$0xff]
      %v4240 = vld [vmem:[%s4085 + $0x4d0] sm:$0xff]
      %v4241 = vld [vmem:[%s4085 + $0x4d8] sm:$0xff]
      %v4242 = vld [vmem:[%s4085 + $0x4e0] sm:$0xff]
      %v4243 = vld [vmem:[%s4085 + $0x4e8] sm:$0xff]
      %v4244 = vld [vmem:[%s4085 + $0x4f0] sm:$0xff]
      %v4245 = vld [vmem:[%s4085 + $0x4f8] sm:$0xff]
      %v4246 = vld [vmem:[%s4085 + $0x500] sm:$0xff]
      %v4247 = vld [vmem:[%s4085 + $0x508] sm:$0xff]
      %v4248 = vld [vmem:[%s4085 + $0x510] sm:$0xff]
      %v4249 = vld [vmem:[%s4085 + $0x518] sm:$0xff]
      %v4250 = vld [vmem:[%s4085 + $0x520] sm:$0xff]
      %v4251 = vld [vmem:[%s4085 + $0x528] sm:$0xff]
      %v4252 = vld [vmem:[%s4085 + $0x530] sm:$0xff]
      %v4253 = vld [vmem:[%s4085 + $0x538] sm:$0xff]
      %v4254 = vld [vmem:[%s4085 + $0x540] sm:$0xff]
      %v4255 = vld [vmem:[%s4085 + $0x548] sm:$0xff]
      %v4256 = vld [vmem:[%s4085 + $0x550] sm:$0xff]
      %v4257 = vld [vmem:[%s4085 + $0x558] sm:$0xff]
      %v4258 = vld [vmem:[%s4085 + $0x560] sm:$0xff]
      %v4259 = vld [vmem:[%s4085 + $0x568] sm:$0xff]
      %v4260 = vld [vmem:[%s4085 + $0x570] sm:$0xff]
      %v4261 = vld [vmem:[%s4085 + $0x578] sm:$0xff]
      %v4262 = vld [vmem:[%s4085 + $0x580] sm:$0xff]
      %v4263 = vld [vmem:[%s4085 + $0x588] sm:$0xff]
      %v4264 = vld [vmem:[%s4085 + $0x590] sm:$0xff]
      %v4265 = vld [vmem:[%s4085 + $0x598] sm:$0xff]
      %v4266 = vrot.slane %v2105, 2
      %v4267 = vrot.slane %v2109, 2
      %v4268 = vsel %vm1373, %v4266, %v4267
      %v4269 = vrot.slane %v2106, 2
      %v4270 = vrot.slane %v2110, 2
      %v4271 = vsel %vm1373, %v4269, %v4270
      %v4272 = vrot.slane %v2107, 2
      %v4273 = vrot.slane %v2111, 2
      %v4274 = vsel %vm1373, %v4272, %v4273
      %v4275 = vrot.slane %v2108, 2
      %v4276 = vrot.slane %v2112, 2
      %v4277 = vsel %vm1373, %v4275, %v4276
      %v4284 = vsel %vm546, %v4277, 0
      %v4286 = vsel %vm546, %v4276, 0
      %4288 = vmatprep.subr.mxu0 %v4132
      %4289 = vmatpush1.msra.mxu0 %v4131
      %4290 = vmatprep.subr.mxu0 %v4129
      %4291 = vmatpush1.msra.mxu0 %v4128
      %4292 = vmatprep.subr.mxu0 %v4126
      %4293 = vmatpush1.msra.mxu0 %v4125
      %4294 = vmatprep.subr.mxu0 %v4123
      %4295 = vmatpush1.msra.mxu0 %v4122
      %4296 = vmatprep.subr.mxu0 %v4120
      %4297 = vmatpush1.msra.mxu0 %v4119
      %4298 = vmatprep.subr.mxu0 %v4117
      %4299 = vmatpush1.msra.mxu0 %v4116
      %4300 = vmatprep.subr.mxu0 %v4114
      %4301 = vmatpush1.msra.mxu0 %v4113
      %4302 = vmatprep.subr.mxu0 %v4111
      %4303 = vmatpush1.msra.mxu0 %v4110
      %4304 = vmatprep.subr.mxu0 %v4108
      %4305 = vmatpush1.msra.mxu0 %v4107
      %4306 = vmatprep.subr.mxu0 %v4105
      %4307 = vmatpush1.msra.mxu0 %v4104
      %4308 = vmatprep.subr.mxu0 %v4102
      %4309 = vmatpush1.msra.mxu0 %v4101
      %4310 = vmatprep.subr.mxu0 %v4099
      %4311 = vmatpush1.msra.mxu0 %v4098
      %4312 = vmatprep.subr.mxu0 %v4096
      %4313 = vmatpush1.msra.mxu0 %v4095
      %4314 = vmatprep.subr.mxu0 %v4093
      %4315 = vmatpush1.msra.mxu0 %v4092
      %4316 = vmatprep.subr.mxu0 %v4090
      %4317 = vmatpush1.msra.mxu0 %v4089
      %4318 = vmatprep.subr.mxu0 %v4087
      %4319 = vmatpush1.msra.mxu0 %v4086
      %4320 = vmatprep.subr.mxu0 %v4180
      %4321 = vmatpush2.msra.mxu0 %v4179
      %4322 = vmatprep.subr.mxu0 %v4177
      %4323 = vmatpush2.msra.mxu0 %v4176
      %4324 = vmatprep.subr.mxu0 %v4174
      %4325 = vmatpush2.msra.mxu0 %v4173
      %4326 = vmatprep.subr.mxu0 %v4171
      %4327 = vmatpush2.msra.mxu0 %v4170
      %4328 = vmatprep.subr.mxu0 %v4168
      %4329 = vmatpush2.msra.mxu0 %v4167
      %4330 = vmatprep.subr.mxu0 %v4165
      %4331 = vmatpush2.msra.mxu0 %v4164
      %4332 = vmatprep.subr.mxu0 %v4162
      %4333 = vmatpush2.msra.mxu0 %v4161
      %4334 = vmatprep.subr.mxu0 %v4159
      %4335 = vmatpush2.msra.mxu0 %v4158
      %4336 = vmatprep.subr.mxu0 %v4156
      %4337 = vmatpush2.msra.mxu0 %v4155
      %4338 = vmatprep.subr.mxu0 %v4153
      %4339 = vmatpush2.msra.mxu0 %v4152
      %4340 = vmatprep.subr.mxu0 %v4150
      %4341 = vmatpush2.msra.mxu0 %v4149
      %4342 = vmatprep.subr.mxu0 %v4147
      %4343 = vmatpush2.msra.mxu0 %v4146
      %4344 = vmatprep.subr.mxu0 %v4144
      %4345 = vmatpush2.msra.mxu0 %v4143
      %4346 = vmatprep.subr.mxu0 %v4141
      %4347 = vmatpush2.msra.mxu0 %v4140
      %4348 = vmatprep.subr.mxu0 %v4138
      %4349 = vmatpush2.msra.mxu0 %v4137
      %4350 = vmatprep.subr.mxu0 %v4135
      %4351 = vmatpush2.msra.mxu0 %v4134
      %4352 = vmatprep.mubr.f32.mxu0 %v4271
      %4353 = vmatmul.mubr.f32.gmra.mxu0 %v4268
      %v4354 = vpop.f32.mrf.mxu0
      %v4355 = vadd.f32 0.0, %v4354
      %v4356 = vpop.f32.mrf.mxu0
      %v4357 = vadd.f32 0.0, %v4356
      %4358 = vmatprep.mubr.f32.mxu0 %v4270
      %4359 = vmatmul.mubr.f32.gmra.mxu0 %v4267
      %v4360 = vpop.f32.mrf.mxu0
      %v4361 = vadd.f32 0.0, %v4360
      %v4362 = vpop.f32.mrf.mxu0
      %v4363 = vadd.f32 0.0, %v4362
      %4364 = vdwg.mxu0
      %4365 = vmatprep.subr.mxu0 %v4228
      %4366 = vmatpush1.msra.mxu0 %v4227
      %4367 = vmatprep.subr.mxu0 %v4225
      %4368 = vmatpush1.msra.mxu0 %v4224
      %4369 = vmatprep.subr.mxu0 %v4222
      %4370 = vmatpush1.msra.mxu0 %v4221
      %4371 = vmatprep.subr.mxu0 %v4219
      %4372 = vmatpush1.msra.mxu0 %v4218
      %4373 = vmatprep.subr.mxu0 %v4216
      %4374 = vmatpush1.msra.mxu0 %v4215
      %4375 = vmatprep.subr.mxu0 %v4213
      %4376 = vmatpush1.msra.mxu0 %v4212
      %4377 = vmatprep.subr.mxu0 %v4210
      %4378 = vmatpush1.msra.mxu0 %v4209
      %4379 = vmatprep.subr.mxu0 %v4207
      %4380 = vmatpush1.msra.mxu0 %v4206
      %4381 = vmatprep.subr.mxu0 %v4204
      %4382 = vmatpush1.msra.mxu0 %v4203
      %4383 = vmatprep.subr.mxu0 %v4201
      %4384 = vmatpush1.msra.mxu0 %v4200
      %4385 = vmatprep.subr.mxu0 %v4198
      %4386 = vmatpush1.msra.mxu0 %v4197
      %4387 = vmatprep.subr.mxu0 %v4195
      %4388 = vmatpush1.msra.mxu0 %v4194
      %4389 = vmatprep.subr.mxu0 %v4192
      %4390 = vmatpush1.msra.mxu0 %v4191
      %4391 = vmatprep.subr.mxu0 %v4189
      %4392 = vmatpush1.msra.mxu0 %v4188
      %4393 = vmatprep.subr.mxu0 %v4186
      %4394 = vmatpush1.msra.mxu0 %v4185
      %4395 = vmatprep.subr.mxu0 %v4183
      %4396 = vmatpush1.msra.mxu0 %v4182
      %4397 = vmatprep.subr.mxu0 0.0
      %4398 = vmatpush2.msra.mxu0 0.0
      %4399 = vmatprep.subr.mxu0 0.0
      %4400 = vmatpush2.msra.mxu0 0.0
      %4401 = vmatprep.subr.mxu0 0.0
      %4402 = vmatpush2.msra.mxu0 0.0
      %4403 = vmatprep.subr.mxu0 0.0
      %4404 = vmatpush2.msra.mxu0 0.0
      %4405 = vmatprep.subr.mxu0 %v4264
      %4406 = vmatpush2.msra.mxu0 %v4263
      %4407 = vmatprep.subr.mxu0 %v4261
      %4408 = vmatpush2.msra.mxu0 %v4260
      %4409 = vmatprep.subr.mxu0 %v4258
      %4410 = vmatpush2.msra.mxu0 %v4257
      %4411 = vmatprep.subr.mxu0 %v4255
      %4412 = vmatpush2.msra.mxu0 %v4254
      %4413 = vmatprep.subr.mxu0 %v4252
      %4414 = vmatpush2.msra.mxu0 %v4251
      %4415 = vmatprep.subr.mxu0 %v4249
      %4416 = vmatpush2.msra.mxu0 %v4248
      %4417 = vmatprep.subr.mxu0 %v4246
      %4418 = vmatpush2.msra.mxu0 %v4245
      %4419 = vmatprep.subr.mxu0 %v4243
      %4420 = vmatpush2.msra.mxu0 %v4242
      %4421 = vmatprep.subr.mxu0 %v4240
      %4422 = vmatpush2.msra.mxu0 %v4239
      %4423 = vmatprep.subr.mxu0 %v4237
      %4424 = vmatpush2.msra.mxu0 %v4236
      %4425 = vmatprep.subr.mxu0 %v4234
      %4426 = vmatpush2.msra.mxu0 %v4233
      %4427 = vmatprep.subr.mxu0 %v4231
      %4428 = vmatpush2.msra.mxu0 %v4230
      %4429 = vmatprep.mubr.f32.mxu0 %v4284
      %4430 = vmatmul.mubr.f32.gmra.mxu0 %v4274
      %v4431 = vpop.f32.mrf.mxu0
      %v4432 = vadd.f32 %v4355, %v4431
      %v4433 = vpop.f32.mrf.mxu0
      %v4434 = vadd.f32 %v4357, %v4433
      %4435 = vmatprep.mubr.f32.mxu0 %v4286
      %4436 = vmatmul.mubr.f32.gmra.mxu0 %v4273
      %v4437 = vpop.f32.mrf.mxu0
      %v4438 = vadd.f32 %v4361, %v4437
      %v4439 = vpop.f32.mrf.mxu0
      %v4440 = vadd.f32 %v4363, %v4439
      %4441 = vdwg.mxu0
      %4442 = vmatprep.subr.mxu0 0.0
      %4443 = vmatpush1.msra.mxu0 %v4133
      %4444 = vmatprep.subr.mxu0 0.0
      %4445 = vmatpush1.msra.mxu0 %v4130
      %4446 = vmatprep.subr.mxu0 0.0
      %4447 = vmatpush1.msra.mxu0 %v4127
      %4448 = vmatprep.subr.mxu0 0.0
      %4449 = vmatpush1.msra.mxu0 %v4124
      %4450 = vmatprep.subr.mxu0 0.0
      %4451 = vmatpush1.msra.mxu0 %v4121
      %4452 = vmatprep.subr.mxu0 0.0
      %4453 = vmatpush1.msra.mxu0 %v4118
      %4454 = vmatprep.subr.mxu0 0.0
      %4455 = vmatpush1.msra.mxu0 %v4115
      %4456 = vmatprep.subr.mxu0 0.0
      %4457 = vmatpush1.msra.mxu0 %v4112
      %4458 = vmatprep.subr.mxu0 0.0
      %4459 = vmatpush1.msra.mxu0 %v4109
      %4460 = vmatprep.subr.mxu0 0.0
      %4461 = vmatpush1.msra.mxu0 %v4106
      %4462 = vmatprep.subr.mxu0 0.0
      %4463 = vmatpush1.msra.mxu0 %v4103
      %4464 = vmatprep.subr.mxu0 0.0
      %4465 = vmatpush1.msra.mxu0 %v4100
      %4466 = vmatprep.subr.mxu0 0.0
      %4467 = vmatpush1.msra.mxu0 %v4097
      %4468 = vmatprep.subr.mxu0 0.0
      %4469 = vmatpush1.msra.mxu0 %v4094
      %4470 = vmatprep.subr.mxu0 0.0
      %4471 = vmatpush1.msra.mxu0 %v4091
      %4472 = vmatprep.subr.mxu0 0.0
      %4473 = vmatpush1.msra.mxu0 %v4088
      %4474 = vmatprep.subr.mxu0 0.0
      %4475 = vmatpush2.msra.mxu0 %v4181
      %4476 = vmatprep.subr.mxu0 0.0
      %4477 = vmatpush2.msra.mxu0 %v4178
      %4478 = vmatprep.subr.mxu0 0.0
      %4479 = vmatpush2.msra.mxu0 %v4175
      %4480 = vmatprep.subr.mxu0 0.0
      %4481 = vmatpush2.msra.mxu0 %v4172
      %4482 = vmatprep.subr.mxu0 0.0
      %4483 = vmatpush2.msra.mxu0 %v4169
      %4484 = vmatprep.subr.mxu0 0.0
      %4485 = vmatpush2.msra.mxu0 %v4166
      %4486 = vmatprep.subr.mxu0 0.0
      %4487 = vmatpush2.msra.mxu0 %v4163
      %4488 = vmatprep.subr.mxu0 0.0
      %4489 = vmatpush2.msra.mxu0 %v4160
      %4490 = vmatprep.subr.mxu0 0.0
      %4491 = vmatpush2.msra.mxu0 %v4157
      %4492 = vmatprep.subr.mxu0 0.0
      %4493 = vmatpush2.msra.mxu0 %v4154
      %4494 = vmatprep.subr.mxu0 0.0
      %4495 = vmatpush2.msra.mxu0 %v4151
      %4496 = vmatprep.subr.mxu0 0.0
      %4497 = vmatpush2.msra.mxu0 %v4148
      %4498 = vmatprep.subr.mxu0 0.0
      %4499 = vmatpush2.msra.mxu0 %v4145
      %4500 = vmatprep.subr.mxu0 0.0
      %4501 = vmatpush2.msra.mxu0 %v4142
      %4502 = vmatprep.subr.mxu0 0.0
      %4503 = vmatpush2.msra.mxu0 %v4139
      %4504 = vmatprep.subr.mxu0 0.0
      %4505 = vmatpush2.msra.mxu0 %v4136
      %4506 = vmatprep.mubr.f32.mxu0 %v4271
      %4507 = vmatmul.mubr.f32.gmra.mxu0 %v4268
      %v4508 = vpop.f32.mrf.mxu0
      %v4509 = vadd.f32 0.0, %v4508
      %v4510 = vpop.f32.mrf.mxu0
      %4511 = vmatprep.mubr.f32.mxu0 %v4270
      %4512 = vmatmul.mubr.f32.gmra.mxu0 %v4267
      %v4513 = vpop.f32.mrf.mxu0
      %v4514 = vadd.f32 0.0, %v4513
      %v4515 = vpop.f32.mrf.mxu0
      %4516 = vdwg.mxu0
      %4517 = vmatprep.subr.mxu0 0.0
      %4518 = vmatpush1.msra.mxu0 %v4229
      %4519 = vmatprep.subr.mxu0 0.0
      %4520 = vmatpush1.msra.mxu0 %v4226
      %4521 = vmatprep.subr.mxu0 0.0
      %4522 = vmatpush1.msra.mxu0 %v4223
      %4523 = vmatprep.subr.mxu0 0.0
      %4524 = vmatpush1.msra.mxu0 %v4220
      %4525 = vmatprep.subr.mxu0 0.0
      %4526 = vmatpush1.msra.mxu0 %v4217
      %4527 = vmatprep.subr.mxu0 0.0
      %4528 = vmatpush1.msra.mxu0 %v4214
      %4529 = vmatprep.subr.mxu0 0.0
      %4530 = vmatpush1.msra.mxu0 %v4211
      %4531 = vmatprep.subr.mxu0 0.0
      %4532 = vmatpush1.msra.mxu0 %v4208
      %4533 = vmatprep.subr.mxu0 0.0
      %4534 = vmatpush1.msra.mxu0 %v4205
      %4535 = vmatprep.subr.mxu0 0.0
      %4536 = vmatpush1.msra.mxu0 %v4202
      %4537 = vmatprep.subr.mxu0 0.0
      %4538 = vmatpush1.msra.mxu0 %v4199
      %4539 = vmatprep.subr.mxu0 0.0
      %4540 = vmatpush1.msra.mxu0 %v4196
      %4541 = vmatprep.subr.mxu0 0.0
      %4542 = vmatpush1.msra.mxu0 %v4193
      %4543 = vmatprep.subr.mxu0 0.0
      %4544 = vmatpush1.msra.mxu0 %v4190
      %4545 = vmatprep.subr.mxu0 0.0
      %4546 = vmatpush1.msra.mxu0 %v4187
      %4547 = vmatprep.subr.mxu0 0.0
      %4548 = vmatpush1.msra.mxu0 %v4184
      %4549 = vmatprep.subr.mxu0 0.0
      %4550 = vmatpush2.msra.mxu0 0.0
      %4551 = vmatprep.subr.mxu0 0.0
      %4552 = vmatpush2.msra.mxu0 0.0
      %4553 = vmatprep.subr.mxu0 0.0
      %4554 = vmatpush2.msra.mxu0 0.0
      %4555 = vmatprep.subr.mxu0 0.0
      %4556 = vmatpush2.msra.mxu0 0.0
      %4557 = vmatprep.subr.mxu0 0.0
      %4558 = vmatpush2.msra.mxu0 %v4265
      %4559 = vmatprep.subr.mxu0 0.0
      %4560 = vmatpush2.msra.mxu0 %v4262
      %4561 = vmatprep.subr.mxu0 0.0
      %4562 = vmatpush2.msra.mxu0 %v4259
      %4563 = vmatprep.subr.mxu0 0.0
      %4564 = vmatpush2.msra.mxu0 %v4256
      %4565 = vmatprep.subr.mxu0 0.0
      %4566 = vmatpush2.msra.mxu0 %v4253
      %4567 = vmatprep.subr.mxu0 0.0
      %4568 = vmatpush2.msra.mxu0 %v4250
      %4569 = vmatprep.subr.mxu0 0.0
      %4570 = vmatpush2.msra.mxu0 %v4247
      %4571 = vmatprep.subr.mxu0 0.0
      %4572 = vmatpush2.msra.mxu0 %v4244
      %4573 = vmatprep.subr.mxu0 0.0
      %4574 = vmatpush2.msra.mxu0 %v4241
      %4575 = vmatprep.subr.mxu0 0.0
      %4576 = vmatpush2.msra.mxu0 %v4238
      %4577 = vmatprep.subr.mxu0 0.0
      %4578 = vmatpush2.msra.mxu0 %v4235
      %4579 = vmatprep.subr.mxu0 0.0
      %4580 = vmatpush2.msra.mxu0 %v4232
      %4581 = vmatprep.mubr.f32.mxu0 %v4284
      %4582 = vmatmul.mubr.f32.gmra.mxu0 %v4274
      %v4583 = vpop.f32.mrf.mxu0
      %v4584 = vadd.f32 %v4509, %v4583
      %v4585 = vpop.f32.mrf.mxu0
      %4586 = vmatprep.mubr.f32.mxu0 %v4286
      %4587 = vmatmul.mubr.f32.gmra.mxu0 %v4273
      %v4588 = vpop.f32.mrf.mxu0
      %v4589 = vadd.f32 %v4514, %v4588
      %v4590 = vpop.f32.mrf.mxu0
      %4591 = vdwg.mxu0
      %v4592 = vadd.f32 %v3136, %v4432
      %v4593 = vadd.f32 %v3138, %v4434
      %v4594 = vadd.f32 %v3288, %v4584
      %v4595 = vadd.f32 %v3142, %v4438
      %v4596 = vadd.f32 %v3144, %v4440
      %v4597 = vadd.f32 %v3293, %v4589
      %s4598 = scalar_lea.vmem %s4, 2880
      %v4599 = vld [vmem:[%s4598] sm:$0xff]
      %v4600 = vld [vmem:[%s4598 + $0x8] sm:$0xff]
      %v4601 = vld [vmem:[%s4598 + $0x10] sm:$0xff]
      %v4602 = vld [vmem:[%s4598 + $0x18] sm:$0xff]
      %v4603 = vld [vmem:[%s4598 + $0x20] sm:$0xff]
      %v4604 = vld [vmem:[%s4598 + $0x28] sm:$0xff]
      %v4605 = vld [vmem:[%s4598 + $0x30] sm:$0xff]
      %v4606 = vld [vmem:[%s4598 + $0x38] sm:$0xff]
      %v4607 = vld [vmem:[%s4598 + $0x40] sm:$0xff]
      %v4608 = vld [vmem:[%s4598 + $0x48] sm:$0xff]
      %v4609 = vld [vmem:[%s4598 + $0x50] sm:$0xff]
      %v4610 = vld [vmem:[%s4598 + $0x58] sm:$0xff]
      %v4611 = vld [vmem:[%s4598 + $0x60] sm:$0xff]
      %v4612 = vld [vmem:[%s4598 + $0x68] sm:$0xff]
      %v4613 = vld [vmem:[%s4598 + $0x70] sm:$0xff]
      %v4614 = vld [vmem:[%s4598 + $0x78] sm:$0xff]
      %v4615 = vld [vmem:[%s4598 + $0x80] sm:$0xff]
      %v4616 = vld [vmem:[%s4598 + $0x88] sm:$0xff]
      %v4617 = vld [vmem:[%s4598 + $0x90] sm:$0xff]
      %v4618 = vld [vmem:[%s4598 + $0x98] sm:$0xff]
      %v4619 = vld [vmem:[%s4598 + $0xa0] sm:$0xff]
      %v4620 = vld [vmem:[%s4598 + $0xa8] sm:$0xff]
      %v4621 = vld [vmem:[%s4598 + $0xb0] sm:$0xff]
      %v4622 = vld [vmem:[%s4598 + $0xb8] sm:$0xff]
      %v4623 = vld [vmem:[%s4598 + $0xc0] sm:$0xff]
      %v4624 = vld [vmem:[%s4598 + $0xc8] sm:$0xff]
      %v4625 = vld [vmem:[%s4598 + $0xd0] sm:$0xff]
      %v4626 = vld [vmem:[%s4598 + $0xd8] sm:$0xff]
      %v4627 = vld [vmem:[%s4598 + $0xe0] sm:$0xff]
      %v4628 = vld [vmem:[%s4598 + $0xe8] sm:$0xff]
      %v4629 = vld [vmem:[%s4598 + $0xf0] sm:$0xff]
      %v4630 = vld [vmem:[%s4598 + $0xf8] sm:$0xff]
      %v4631 = vld [vmem:[%s4598 + $0x100] sm:$0xff]
      %v4632 = vld [vmem:[%s4598 + $0x108] sm:$0xff]
      %v4633 = vld [vmem:[%s4598 + $0x110] sm:$0xff]
      %v4634 = vld [vmem:[%s4598 + $0x118] sm:$0xff]
      %v4635 = vld [vmem:[%s4598 + $0x120] sm:$0xff]
      %v4636 = vld [vmem:[%s4598 + $0x128] sm:$0xff]
      %v4637 = vld [vmem:[%s4598 + $0x130] sm:$0xff]
      %v4638 = vld [vmem:[%s4598 + $0x138] sm:$0xff]
      %v4639 = vld [vmem:[%s4598 + $0x140] sm:$0xff]
      %v4640 = vld [vmem:[%s4598 + $0x148] sm:$0xff]
      %v4641 = vld [vmem:[%s4598 + $0x150] sm:$0xff]
      %v4642 = vld [vmem:[%s4598 + $0x158] sm:$0xff]
      %v4643 = vld [vmem:[%s4598 + $0x160] sm:$0xff]
      %v4644 = vld [vmem:[%s4598 + $0x168] sm:$0xff]
      %v4645 = vld [vmem:[%s4598 + $0x170] sm:$0xff]
      %v4646 = vld [vmem:[%s4598 + $0x178] sm:$0xff]
      %v4647 = vld [vmem:[%s4598 + $0x180] sm:$0xff]
      %v4648 = vld [vmem:[%s4598 + $0x188] sm:$0xff]
      %v4649 = vld [vmem:[%s4598 + $0x190] sm:$0xff]
      %v4650 = vld [vmem:[%s4598 + $0x198] sm:$0xff]
      %v4651 = vld [vmem:[%s4598 + $0x1a0] sm:$0xff]
      %v4652 = vld [vmem:[%s4598 + $0x1a8] sm:$0xff]
      %v4653 = vld [vmem:[%s4598 + $0x1b0] sm:$0xff]
      %v4654 = vld [vmem:[%s4598 + $0x1b8] sm:$0xff]
      %v4655 = vld [vmem:[%s4598 + $0x1c0] sm:$0xff]
      %v4656 = vld [vmem:[%s4598 + $0x1c8] sm:$0xff]
      %v4657 = vld [vmem:[%s4598 + $0x1d0] sm:$0xff]
      %v4658 = vld [vmem:[%s4598 + $0x1d8] sm:$0xff]
      %v4659 = vld [vmem:[%s4598 + $0x1e0] sm:$0xff]
      %v4660 = vld [vmem:[%s4598 + $0x1e8] sm:$0xff]
      %v4661 = vld [vmem:[%s4598 + $0x1f0] sm:$0xff]
      %v4662 = vld [vmem:[%s4598 + $0x1f8] sm:$0xff]
      %v4663 = vld [vmem:[%s4598 + $0x200] sm:$0xff]
      %v4664 = vld [vmem:[%s4598 + $0x208] sm:$0xff]
      %v4665 = vld [vmem:[%s4598 + $0x210] sm:$0xff]
      %v4666 = vld [vmem:[%s4598 + $0x218] sm:$0xff]
      %v4667 = vld [vmem:[%s4598 + $0x220] sm:$0xff]
      %v4668 = vld [vmem:[%s4598 + $0x228] sm:$0xff]
      %v4669 = vld [vmem:[%s4598 + $0x230] sm:$0xff]
      %v4670 = vld [vmem:[%s4598 + $0x238] sm:$0xff]
      %v4671 = vld [vmem:[%s4598 + $0x240] sm:$0xff]
      %v4672 = vld [vmem:[%s4598 + $0x248] sm:$0xff]
      %v4673 = vld [vmem:[%s4598 + $0x250] sm:$0xff]
      %v4674 = vld [vmem:[%s4598 + $0x258] sm:$0xff]
      %v4675 = vld [vmem:[%s4598 + $0x260] sm:$0xff]
      %v4676 = vld [vmem:[%s4598 + $0x268] sm:$0xff]
      %v4677 = vld [vmem:[%s4598 + $0x270] sm:$0xff]
      %v4678 = vld [vmem:[%s4598 + $0x278] sm:$0xff]
      %v4679 = vld [vmem:[%s4598 + $0x280] sm:$0xff]
      %v4680 = vld [vmem:[%s4598 + $0x288] sm:$0xff]
      %v4681 = vld [vmem:[%s4598 + $0x290] sm:$0xff]
      %v4682 = vld [vmem:[%s4598 + $0x298] sm:$0xff]
      %v4683 = vld [vmem:[%s4598 + $0x2a0] sm:$0xff]
      %v4684 = vld [vmem:[%s4598 + $0x2a8] sm:$0xff]
      %v4685 = vld [vmem:[%s4598 + $0x2b0] sm:$0xff]
      %v4686 = vld [vmem:[%s4598 + $0x2b8] sm:$0xff]
      %v4687 = vld [vmem:[%s4598 + $0x2c0] sm:$0xff]
      %v4688 = vld [vmem:[%s4598 + $0x2c8] sm:$0xff]
      %v4689 = vld [vmem:[%s4598 + $0x2d0] sm:$0xff]
      %v4690 = vld [vmem:[%s4598 + $0x2d8] sm:$0xff]
      %v4691 = vld [vmem:[%s4598 + $0x2e0] sm:$0xff]
      %v4692 = vld [vmem:[%s4598 + $0x2e8] sm:$0xff]
      %v4693 = vld [vmem:[%s4598 + $0x2f0] sm:$0xff]
      %v4694 = vld [vmem:[%s4598 + $0x2f8] sm:$0xff]
      %v4695 = vld [vmem:[%s4598 + $0x300] sm:$0xff]
      %v4696 = vld [vmem:[%s4598 + $0x308] sm:$0xff]
      %v4697 = vld [vmem:[%s4598 + $0x310] sm:$0xff]
      %v4698 = vld [vmem:[%s4598 + $0x318] sm:$0xff]
      %v4699 = vld [vmem:[%s4598 + $0x320] sm:$0xff]
      %v4700 = vld [vmem:[%s4598 + $0x328] sm:$0xff]
      %v4701 = vld [vmem:[%s4598 + $0x330] sm:$0xff]
      %v4702 = vld [vmem:[%s4598 + $0x338] sm:$0xff]
      %v4703 = vld [vmem:[%s4598 + $0x340] sm:$0xff]
      %v4704 = vld [vmem:[%s4598 + $0x348] sm:$0xff]
      %v4705 = vld [vmem:[%s4598 + $0x350] sm:$0xff]
      %v4706 = vld [vmem:[%s4598 + $0x358] sm:$0xff]
      %v4707 = vld [vmem:[%s4598 + $0x360] sm:$0xff]
      %v4708 = vld [vmem:[%s4598 + $0x368] sm:$0xff]
      %v4709 = vld [vmem:[%s4598 + $0x370] sm:$0xff]
      %v4710 = vld [vmem:[%s4598 + $0x378] sm:$0xff]
      %v4711 = vld [vmem:[%s4598 + $0x380] sm:$0xff]
      %v4712 = vld [vmem:[%s4598 + $0x388] sm:$0xff]
      %v4713 = vld [vmem:[%s4598 + $0x390] sm:$0xff]
      %v4714 = vld [vmem:[%s4598 + $0x398] sm:$0xff]
      %v4715 = vld [vmem:[%s4598 + $0x3a0] sm:$0xff]
      %v4716 = vld [vmem:[%s4598 + $0x3a8] sm:$0xff]
      %v4717 = vld [vmem:[%s4598 + $0x3b0] sm:$0xff]
      %v4718 = vld [vmem:[%s4598 + $0x3b8] sm:$0xff]
      %v4719 = vld [vmem:[%s4598 + $0x3c0] sm:$0xff]
      %v4720 = vld [vmem:[%s4598 + $0x3c8] sm:$0xff]
      %v4721 = vld [vmem:[%s4598 + $0x3d0] sm:$0xff]
      %v4722 = vld [vmem:[%s4598 + $0x3d8] sm:$0xff]
      %v4723 = vld [vmem:[%s4598 + $0x3e0] sm:$0xff]
      %v4724 = vld [vmem:[%s4598 + $0x3e8] sm:$0xff]
      %v4725 = vld [vmem:[%s4598 + $0x3f0] sm:$0xff]
      %v4726 = vld [vmem:[%s4598 + $0x3f8] sm:$0xff]
      %v4727 = vld [vmem:[%s4598 + $0x400] sm:$0xff]
      %v4728 = vld [vmem:[%s4598 + $0x408] sm:$0xff]
      %v4729 = vld [vmem:[%s4598 + $0x410] sm:$0xff]
      %v4730 = vld [vmem:[%s4598 + $0x418] sm:$0xff]
      %v4731 = vld [vmem:[%s4598 + $0x420] sm:$0xff]
      %v4732 = vld [vmem:[%s4598 + $0x428] sm:$0xff]
      %v4733 = vld [vmem:[%s4598 + $0x430] sm:$0xff]
      %v4734 = vld [vmem:[%s4598 + $0x438] sm:$0xff]
      %v4735 = vld [vmem:[%s4598 + $0x440] sm:$0xff]
      %v4736 = vld [vmem:[%s4598 + $0x448] sm:$0xff]
      %v4737 = vld [vmem:[%s4598 + $0x450] sm:$0xff]
      %v4738 = vld [vmem:[%s4598 + $0x458] sm:$0xff]
      %v4739 = vld [vmem:[%s4598 + $0x460] sm:$0xff]
      %v4740 = vld [vmem:[%s4598 + $0x468] sm:$0xff]
      %v4741 = vld [vmem:[%s4598 + $0x470] sm:$0xff]
      %v4742 = vld [vmem:[%s4598 + $0x478] sm:$0xff]
      %v4743 = vld [vmem:[%s4598 + $0x480] sm:$0xff]
      %v4744 = vld [vmem:[%s4598 + $0x488] sm:$0xff]
      %v4745 = vld [vmem:[%s4598 + $0x490] sm:$0xff]
      %v4746 = vld [vmem:[%s4598 + $0x498] sm:$0xff]
      %v4747 = vld [vmem:[%s4598 + $0x4a0] sm:$0xff]
      %v4748 = vld [vmem:[%s4598 + $0x4a8] sm:$0xff]
      %v4749 = vld [vmem:[%s4598 + $0x4b0] sm:$0xff]
      %v4750 = vld [vmem:[%s4598 + $0x4b8] sm:$0xff]
      %v4751 = vld [vmem:[%s4598 + $0x4c0] sm:$0xff]
      %v4752 = vld [vmem:[%s4598 + $0x4c8] sm:$0xff]
      %v4753 = vld [vmem:[%s4598 + $0x4d0] sm:$0xff]
      %v4754 = vld [vmem:[%s4598 + $0x4d8] sm:$0xff]
      %v4755 = vld [vmem:[%s4598 + $0x4e0] sm:$0xff]
      %v4756 = vld [vmem:[%s4598 + $0x4e8] sm:$0xff]
      %v4757 = vld [vmem:[%s4598 + $0x4f0] sm:$0xff]
      %v4758 = vld [vmem:[%s4598 + $0x4f8] sm:$0xff]
      %v4759 = vld [vmem:[%s4598 + $0x500] sm:$0xff]
      %v4760 = vld [vmem:[%s4598 + $0x508] sm:$0xff]
      %v4761 = vld [vmem:[%s4598 + $0x510] sm:$0xff]
      %v4762 = vld [vmem:[%s4598 + $0x518] sm:$0xff]
      %v4763 = vld [vmem:[%s4598 + $0x520] sm:$0xff]
      %v4764 = vld [vmem:[%s4598 + $0x528] sm:$0xff]
      %v4765 = vld [vmem:[%s4598 + $0x530] sm:$0xff]
      %v4766 = vld [vmem:[%s4598 + $0x538] sm:$0xff]
      %v4767 = vld [vmem:[%s4598 + $0x540] sm:$0xff]
      %v4768 = vld [vmem:[%s4598 + $0x548] sm:$0xff]
      %v4769 = vld [vmem:[%s4598 + $0x550] sm:$0xff]
      %v4770 = vld [vmem:[%s4598 + $0x558] sm:$0xff]
      %v4771 = vld [vmem:[%s4598 + $0x560] sm:$0xff]
      %v4772 = vld [vmem:[%s4598 + $0x568] sm:$0xff]
      %v4773 = vld [vmem:[%s4598 + $0x570] sm:$0xff]
      %v4774 = vld [vmem:[%s4598 + $0x578] sm:$0xff]
      %v4775 = vld [vmem:[%s4598 + $0x580] sm:$0xff]
      %v4776 = vld [vmem:[%s4598 + $0x588] sm:$0xff]
      %v4777 = vld [vmem:[%s4598 + $0x590] sm:$0xff]
      %v4778 = vld [vmem:[%s4598 + $0x598] sm:$0xff]
      %4779 = vmatprep.subr.mxu0 %v4645
      %4780 = vmatpush1.msra.mxu0 %v4644
      %4781 = vmatprep.subr.mxu0 %v4642
      %4782 = vmatpush1.msra.mxu0 %v4641
      %4783 = vmatprep.subr.mxu0 %v4639
      %4784 = vmatpush1.msra.mxu0 %v4638
      %4785 = vmatprep.subr.mxu0 %v4636
      %4786 = vmatpush1.msra.mxu0 %v4635
      %4787 = vmatprep.subr.mxu0 %v4633
      %4788 = vmatpush1.msra.mxu0 %v4632
      %4789 = vmatprep.subr.mxu0 %v4630
      %4790 = vmatpush1.msra.mxu0 %v4629
      %4791 = vmatprep.subr.mxu0 %v4627
      %4792 = vmatpush1.msra.mxu0 %v4626
      %4793 = vmatprep.subr.mxu0 %v4624
      %4794 = vmatpush1.msra.mxu0 %v4623
      %4795 = vmatprep.subr.mxu0 %v4621
      %4796 = vmatpush1.msra.mxu0 %v4620
      %4797 = vmatprep.subr.mxu0 %v4618
      %4798 = vmatpush1.msra.mxu0 %v4617
      %4799 = vmatprep.subr.mxu0 %v4615
      %4800 = vmatpush1.msra.mxu0 %v4614
      %4801 = vmatprep.subr.mxu0 %v4612
      %4802 = vmatpush1.msra.mxu0 %v4611
      %4803 = vmatprep.subr.mxu0 %v4609
      %4804 = vmatpush1.msra.mxu0 %v4608
      %4805 = vmatprep.subr.mxu0 %v4606
      %4806 = vmatpush1.msra.mxu0 %v4605
      %4807 = vmatprep.subr.mxu0 %v4603
      %4808 = vmatpush1.msra.mxu0 %v4602
      %4809 = vmatprep.subr.mxu0 %v4600
      %4810 = vmatpush1.msra.mxu0 %v4599
      %4811 = vmatprep.subr.mxu0 %v4693
      %4812 = vmatpush2.msra.mxu0 %v4692
      %4813 = vmatprep.subr.mxu0 %v4690
      %4814 = vmatpush2.msra.mxu0 %v4689
      %4815 = vmatprep.subr.mxu0 %v4687
      %4816 = vmatpush2.msra.mxu0 %v4686
      %4817 = vmatprep.subr.mxu0 %v4684
      %4818 = vmatpush2.msra.mxu0 %v4683
      %4819 = vmatprep.subr.mxu0 %v4681
      %4820 = vmatpush2.msra.mxu0 %v4680
      %4821 = vmatprep.subr.mxu0 %v4678
      %4822 = vmatpush2.msra.mxu0 %v4677
      %4823 = vmatprep.subr.mxu0 %v4675
      %4824 = vmatpush2.msra.mxu0 %v4674
      %4825 = vmatprep.subr.mxu0 %v4672
      %4826 = vmatpush2.msra.mxu0 %v4671
      %4827 = vmatprep.subr.mxu0 %v4669
      %4828 = vmatpush2.msra.mxu0 %v4668
      %4829 = vmatprep.subr.mxu0 %v4666
      %4830 = vmatpush2.msra.mxu0 %v4665
      %4831 = vmatprep.subr.mxu0 %v4663
      %4832 = vmatpush2.msra.mxu0 %v4662
      %4833 = vmatprep.subr.mxu0 %v4660
      %4834 = vmatpush2.msra.mxu0 %v4659
      %4835 = vmatprep.subr.mxu0 %v4657
      %4836 = vmatpush2.msra.mxu0 %v4656
      %4837 = vmatprep.subr.mxu0 %v4654
      %4838 = vmatpush2.msra.mxu0 %v4653
      %4839 = vmatprep.subr.mxu0 %v4651
      %4840 = vmatpush2.msra.mxu0 %v4650
      %4841 = vmatprep.subr.mxu0 %v4648
      %4842 = vmatpush2.msra.mxu0 %v4647
      %4843 = vmatprep.mubr.f32.mxu0 %v4271
      %4844 = vmatmul.mubr.f32.gmra.mxu0 %v4268
      %v4845 = vpop.f32.mrf.mxu0
      %v4846 = vadd.f32 0.0, %v4845
      %v4847 = vpop.f32.mrf.mxu0
      %v4848 = vadd.f32 0.0, %v4847
      %4849 = vmatprep.mubr.f32.mxu0 %v4270
      %4850 = vmatmul.mubr.f32.gmra.mxu0 %v4267
      %v4851 = vpop.f32.mrf.mxu0
      %v4852 = vadd.f32 0.0, %v4851
      %v4853 = vpop.f32.mrf.mxu0
      %v4854 = vadd.f32 0.0, %v4853
      %4855 = vdwg.mxu0
      %4856 = vmatprep.subr.mxu0 %v4741
      %4857 = vmatpush1.msra.mxu0 %v4740
      %4858 = vmatprep.subr.mxu0 %v4738
      %4859 = vmatpush1.msra.mxu0 %v4737
      %4860 = vmatprep.subr.mxu0 %v4735
      %4861 = vmatpush1.msra.mxu0 %v4734
      %4862 = vmatprep.subr.mxu0 %v4732
      %4863 = vmatpush1.msra.mxu0 %v4731
      %4864 = vmatprep.subr.mxu0 %v4729
      %4865 = vmatpush1.msra.mxu0 %v4728
      %4866 = vmatprep.subr.mxu0 %v4726
      %4867 = vmatpush1.msra.mxu0 %v4725
      %4868 = vmatprep.subr.mxu0 %v4723
      %4869 = vmatpush1.msra.mxu0 %v4722
      %4870 = vmatprep.subr.mxu0 %v4720
      %4871 = vmatpush1.msra.mxu0 %v4719
      %4872 = vmatprep.subr.mxu0 %v4717
      %4873 = vmatpush1.msra.mxu0 %v4716
      %4874 = vmatprep.subr.mxu0 %v4714
      %4875 = vmatpush1.msra.mxu0 %v4713
      %4876 = vmatprep.subr.mxu0 %v4711
      %4877 = vmatpush1.msra.mxu0 %v4710
      %4878 = vmatprep.subr.mxu0 %v4708
      %4879 = vmatpush1.msra.mxu0 %v4707
      %4880 = vmatprep.subr.mxu0 %v4705
      %4881 = vmatpush1.msra.mxu0 %v4704
      %4882 = vmatprep.subr.mxu0 %v4702
      %4883 = vmatpush1.msra.mxu0 %v4701
      %4884 = vmatprep.subr.mxu0 %v4699
      %4885 = vmatpush1.msra.mxu0 %v4698
      %4886 = vmatprep.subr.mxu0 %v4696
      %4887 = vmatpush1.msra.mxu0 %v4695
      %4888 = vmatprep.subr.mxu0 0.0
      %4889 = vmatpush2.msra.mxu0 0.0
      %4890 = vmatprep.subr.mxu0 0.0
      %4891 = vmatpush2.msra.mxu0 0.0
      %4892 = vmatprep.subr.mxu0 0.0
      %4893 = vmatpush2.msra.mxu0 0.0
      %4894 = vmatprep.subr.mxu0 0.0
      %4895 = vmatpush2.msra.mxu0 0.0
      %4896 = vmatprep.subr.mxu0 %v4777
      %4897 = vmatpush2.msra.mxu0 %v4776
      %4898 = vmatprep.subr.mxu0 %v4774
      %4899 = vmatpush2.msra.mxu0 %v4773
      %4900 = vmatprep.subr.mxu0 %v4771
      %4901 = vmatpush2.msra.mxu0 %v4770
      %4902 = vmatprep.subr.mxu0 %v4768
      %4903 = vmatpush2.msra.mxu0 %v4767
      %4904 = vmatprep.subr.mxu0 %v4765
      %4905 = vmatpush2.msra.mxu0 %v4764
      %4906 = vmatprep.subr.mxu0 %v4762
      %4907 = vmatpush2.msra.mxu0 %v4761
      %4908 = vmatprep.subr.mxu0 %v4759
      %4909 = vmatpush2.msra.mxu0 %v4758
      %4910 = vmatprep.subr.mxu0 %v4756
      %4911 = vmatpush2.msra.mxu0 %v4755
      %4912 = vmatprep.subr.mxu0 %v4753
      %4913 = vmatpush2.msra.mxu0 %v4752
      %4914 = vmatprep.subr.mxu0 %v4750
      %4915 = vmatpush2.msra.mxu0 %v4749
      %4916 = vmatprep.subr.mxu0 %v4747
      %4917 = vmatpush2.msra.mxu0 %v4746
      %4918 = vmatprep.subr.mxu0 %v4744
      %4919 = vmatpush2.msra.mxu0 %v4743
      %4920 = vmatprep.mubr.f32.mxu0 %v4284
      %4921 = vmatmul.mubr.f32.gmra.mxu0 %v4274
      %v4922 = vpop.f32.mrf.mxu0
      %v4923 = vadd.f32 %v4846, %v4922
      %v4924 = vpop.f32.mrf.mxu0
      %v4925 = vadd.f32 %v4848, %v4924
      %4926 = vmatprep.mubr.f32.mxu0 %v4286
      %4927 = vmatmul.mubr.f32.gmra.mxu0 %v4273
      %v4928 = vpop.f32.mrf.mxu0
      %v4929 = vadd.f32 %v4852, %v4928
      %v4930 = vpop.f32.mrf.mxu0
      %v4931 = vadd.f32 %v4854, %v4930
      %4932 = vdwg.mxu0
      %4933 = vmatprep.subr.mxu0 0.0
      %4934 = vmatpush1.msra.mxu0 %v4646
      %4935 = vmatprep.subr.mxu0 0.0
      %4936 = vmatpush1.msra.mxu0 %v4643
      %4937 = vmatprep.subr.mxu0 0.0
      %4938 = vmatpush1.msra.mxu0 %v4640
      %4939 = vmatprep.subr.mxu0 0.0
      %4940 = vmatpush1.msra.mxu0 %v4637
      %4941 = vmatprep.subr.mxu0 0.0
      %4942 = vmatpush1.msra.mxu0 %v4634
      %4943 = vmatprep.subr.mxu0 0.0
      %4944 = vmatpush1.msra.mxu0 %v4631
      %4945 = vmatprep.subr.mxu0 0.0
      %4946 = vmatpush1.msra.mxu0 %v4628
      %4947 = vmatprep.subr.mxu0 0.0
      %4948 = vmatpush1.msra.mxu0 %v4625
      %4949 = vmatprep.subr.mxu0 0.0
      %4950 = vmatpush1.msra.mxu0 %v4622
      %4951 = vmatprep.subr.mxu0 0.0
      %4952 = vmatpush1.msra.mxu0 %v4619
      %4953 = vmatprep.subr.mxu0 0.0
      %4954 = vmatpush1.msra.mxu0 %v4616
      %4955 = vmatprep.subr.mxu0 0.0
      %4956 = vmatpush1.msra.mxu0 %v4613
      %4957 = vmatprep.subr.mxu0 0.0
      %4958 = vmatpush1.msra.mxu0 %v4610
      %4959 = vmatprep.subr.mxu0 0.0
      %4960 = vmatpush1.msra.mxu0 %v4607
      %4961 = vmatprep.subr.mxu0 0.0
      %4962 = vmatpush1.msra.mxu0 %v4604
      %4963 = vmatprep.subr.mxu0 0.0
      %4964 = vmatpush1.msra.mxu0 %v4601
      %4965 = vmatprep.subr.mxu0 0.0
      %4966 = vmatpush2.msra.mxu0 %v4694
      %4967 = vmatprep.subr.mxu0 0.0
      %4968 = vmatpush2.msra.mxu0 %v4691
      %4969 = vmatprep.subr.mxu0 0.0
      %4970 = vmatpush2.msra.mxu0 %v4688
      %4971 = vmatprep.subr.mxu0 0.0
      %4972 = vmatpush2.msra.mxu0 %v4685
      %4973 = vmatprep.subr.mxu0 0.0
      %4974 = vmatpush2.msra.mxu0 %v4682
      %4975 = vmatprep.subr.mxu0 0.0
      %4976 = vmatpush2.msra.mxu0 %v4679
      %4977 = vmatprep.subr.mxu0 0.0
      %4978 = vmatpush2.msra.mxu0 %v4676
      %4979 = vmatprep.subr.mxu0 0.0
      %4980 = vmatpush2.msra.mxu0 %v4673
      %4981 = vmatprep.subr.mxu0 0.0
      %4982 = vmatpush2.msra.mxu0 %v4670
      %4983 = vmatprep.subr.mxu0 0.0
      %4984 = vmatpush2.msra.mxu0 %v4667
      %4985 = vmatprep.subr.mxu0 0.0
      %4986 = vmatpush2.msra.mxu0 %v4664
      %4987 = vmatprep.subr.mxu0 0.0
      %4988 = vmatpush2.msra.mxu0 %v4661
      %4989 = vmatprep.subr.mxu0 0.0
      %4990 = vmatpush2.msra.mxu0 %v4658
      %4991 = vmatprep.subr.mxu0 0.0
      %4992 = vmatpush2.msra.mxu0 %v4655
      %4993 = vmatprep.subr.mxu0 0.0
      %4994 = vmatpush2.msra.mxu0 %v4652
      %4995 = vmatprep.subr.mxu0 0.0
      %4996 = vmatpush2.msra.mxu0 %v4649
      %4997 = vmatprep.mubr.f32.mxu0 %v4271
      %4998 = vmatmul.mubr.f32.gmra.mxu0 %v4268
      %v4999 = vpop.f32.mrf.mxu0
      %v5000 = vadd.f32 0.0, %v4999
      %v5001 = vpop.f32.mrf.mxu0
      %5002 = vmatprep.mubr.f32.mxu0 %v4270
      %5003 = vmatmul.mubr.f32.gmra.mxu0 %v4267
      %v5004 = vpop.f32.mrf.mxu0
      %v5005 = vadd.f32 0.0, %v5004
      %v5006 = vpop.f32.mrf.mxu0
      %5007 = vdwg.mxu0
      %5008 = vmatprep.subr.mxu0 0.0
      %5009 = vmatpush1.msra.mxu0 %v4742
      %5010 = vmatprep.subr.mxu0 0.0
      %5011 = vmatpush1.msra.mxu0 %v4739
      %5012 = vmatprep.subr.mxu0 0.0
      %5013 = vmatpush1.msra.mxu0 %v4736
      %5014 = vmatprep.subr.mxu0 0.0
      %5015 = vmatpush1.msra.mxu0 %v4733
      %5016 = vmatprep.subr.mxu0 0.0
      %5017 = vmatpush1.msra.mxu0 %v4730
      %5018 = vmatprep.subr.mxu0 0.0
      %5019 = vmatpush1.msra.mxu0 %v4727
      %5020 = vmatprep.subr.mxu0 0.0
      %5021 = vmatpush1.msra.mxu0 %v4724
      %5022 = vmatprep.subr.mxu0 0.0
      %5023 = vmatpush1.msra.mxu0 %v4721
      %5024 = vmatprep.subr.mxu0 0.0
      %5025 = vmatpush1.msra.mxu0 %v4718
      %5026 = vmatprep.subr.mxu0 0.0
      %5027 = vmatpush1.msra.mxu0 %v4715
      %5028 = vmatprep.subr.mxu0 0.0
      %5029 = vmatpush1.msra.mxu0 %v4712
      %5030 = vmatprep.subr.mxu0 0.0
      %5031 = vmatpush1.msra.mxu0 %v4709
      %5032 = vmatprep.subr.mxu0 0.0
      %5033 = vmatpush1.msra.mxu0 %v4706
      %5034 = vmatprep.subr.mxu0 0.0
      %5035 = vmatpush1.msra.mxu0 %v4703
      %5036 = vmatprep.subr.mxu0 0.0
      %5037 = vmatpush1.msra.mxu0 %v4700
      %5038 = vmatprep.subr.mxu0 0.0
      %5039 = vmatpush1.msra.mxu0 %v4697
      %5040 = vmatprep.subr.mxu0 0.0
      %5041 = vmatpush2.msra.mxu0 0.0
      %5042 = vmatprep.subr.mxu0 0.0
      %5043 = vmatpush2.msra.mxu0 0.0
      %5044 = vmatprep.subr.mxu0 0.0
      %5045 = vmatpush2.msra.mxu0 0.0
      %5046 = vmatprep.subr.mxu0 0.0
      %5047 = vmatpush2.msra.mxu0 0.0
      %5048 = vmatprep.subr.mxu0 0.0
      %5049 = vmatpush2.msra.mxu0 %v4778
      %5050 = vmatprep.subr.mxu0 0.0
      %5051 = vmatpush2.msra.mxu0 %v4775
      %5052 = vmatprep.subr.mxu0 0.0
      %5053 = vmatpush2.msra.mxu0 %v4772
      %5054 = vmatprep.subr.mxu0 0.0
      %5055 = vmatpush2.msra.mxu0 %v4769
      %5056 = vmatprep.subr.mxu0 0.0
      %5057 = vmatpush2.msra.mxu0 %v4766
      %5058 = vmatprep.subr.mxu0 0.0
      %5059 = vmatpush2.msra.mxu0 %v4763
      %5060 = vmatprep.subr.mxu0 0.0
      %5061 = vmatpush2.msra.mxu0 %v4760
      %5062 = vmatprep.subr.mxu0 0.0
      %5063 = vmatpush2.msra.mxu0 %v4757
      %5064 = vmatprep.subr.mxu0 0.0
      %5065 = vmatpush2.msra.mxu0 %v4754
      %5066 = vmatprep.subr.mxu0 0.0
      %5067 = vmatpush2.msra.mxu0 %v4751
      %5068 = vmatprep.subr.mxu0 0.0
      %5069 = vmatpush2.msra.mxu0 %v4748
      %5070 = vmatprep.subr.mxu0 0.0
      %5071 = vmatpush2.msra.mxu0 %v4745
      %5072 = vmatprep.mubr.f32.mxu0 %v4284
      %5073 = vmatmul.mubr.f32.gmra.mxu0 %v4274
      %v5074 = vpop.f32.mrf.mxu0
      %v5075 = vadd.f32 %v5000, %v5074
      %v5076 = vpop.f32.mrf.mxu0
      %5077 = vmatprep.mubr.f32.mxu0 %v4286
      %5078 = vmatmul.mubr.f32.gmra.mxu0 %v4273
      %v5079 = vpop.f32.mrf.mxu0
      %v5080 = vadd.f32 %v5005, %v5079
      %v5081 = vpop.f32.mrf.mxu0
      %5082 = vdwg.mxu0
      %v5083 = vadd.f32 %v3925, %v4923
      %v5084 = vadd.f32 %v3927, %v4925
      %v5085 = vadd.f32 %v4077, %v5075
      %v5086 = vadd.f32 %v3931, %v4929
      %v5087 = vadd.f32 %v3933, %v4931
      %v5088 = vadd.f32 %v4082, %v5080
      %s5089 = scalar_lea.vmem %s3, 4320
      %v5090 = vld [vmem:[%s5089] sm:$0xff]
      %v5091 = vld [vmem:[%s5089 + $0x8] sm:$0xff]
      %v5092 = vld [vmem:[%s5089 + $0x10] sm:$0xff]
      %v5093 = vld [vmem:[%s5089 + $0x18] sm:$0xff]
      %v5094 = vld [vmem:[%s5089 + $0x20] sm:$0xff]
      %v5095 = vld [vmem:[%s5089 + $0x28] sm:$0xff]
      %v5096 = vld [vmem:[%s5089 + $0x30] sm:$0xff]
      %v5097 = vld [vmem:[%s5089 + $0x38] sm:$0xff]
      %v5098 = vld [vmem:[%s5089 + $0x40] sm:$0xff]
      %v5099 = vld [vmem:[%s5089 + $0x48] sm:$0xff]
      %v5100 = vld [vmem:[%s5089 + $0x50] sm:$0xff]
      %v5101 = vld [vmem:[%s5089 + $0x58] sm:$0xff]
      %v5102 = vld [vmem:[%s5089 + $0x60] sm:$0xff]
      %v5103 = vld [vmem:[%s5089 + $0x68] sm:$0xff]
      %v5104 = vld [vmem:[%s5089 + $0x70] sm:$0xff]
      %v5105 = vld [vmem:[%s5089 + $0x78] sm:$0xff]
      %v5106 = vld [vmem:[%s5089 + $0x80] sm:$0xff]
      %v5107 = vld [vmem:[%s5089 + $0x88] sm:$0xff]
      %v5108 = vld [vmem:[%s5089 + $0x90] sm:$0xff]
      %v5109 = vld [vmem:[%s5089 + $0x98] sm:$0xff]
      %v5110 = vld [vmem:[%s5089 + $0xa0] sm:$0xff]
      %v5111 = vld [vmem:[%s5089 + $0xa8] sm:$0xff]
      %v5112 = vld [vmem:[%s5089 + $0xb0] sm:$0xff]
      %v5113 = vld [vmem:[%s5089 + $0xb8] sm:$0xff]
      %v5114 = vld [vmem:[%s5089 + $0xc0] sm:$0xff]
      %v5115 = vld [vmem:[%s5089 + $0xc8] sm:$0xff]
      %v5116 = vld [vmem:[%s5089 + $0xd0] sm:$0xff]
      %v5117 = vld [vmem:[%s5089 + $0xd8] sm:$0xff]
      %v5118 = vld [vmem:[%s5089 + $0xe0] sm:$0xff]
      %v5119 = vld [vmem:[%s5089 + $0xe8] sm:$0xff]
      %v5120 = vld [vmem:[%s5089 + $0xf0] sm:$0xff]
      %v5121 = vld [vmem:[%s5089 + $0xf8] sm:$0xff]
      %v5122 = vld [vmem:[%s5089 + $0x100] sm:$0xff]
      %v5123 = vld [vmem:[%s5089 + $0x108] sm:$0xff]
      %v5124 = vld [vmem:[%s5089 + $0x110] sm:$0xff]
      %v5125 = vld [vmem:[%s5089 + $0x118] sm:$0xff]
      %v5126 = vld [vmem:[%s5089 + $0x120] sm:$0xff]
      %v5127 = vld [vmem:[%s5089 + $0x128] sm:$0xff]
      %v5128 = vld [vmem:[%s5089 + $0x130] sm:$0xff]
      %v5129 = vld [vmem:[%s5089 + $0x138] sm:$0xff]
      %v5130 = vld [vmem:[%s5089 + $0x140] sm:$0xff]
      %v5131 = vld [vmem:[%s5089 + $0x148] sm:$0xff]
      %v5132 = vld [vmem:[%s5089 + $0x150] sm:$0xff]
      %v5133 = vld [vmem:[%s5089 + $0x158] sm:$0xff]
      %v5134 = vld [vmem:[%s5089 + $0x160] sm:$0xff]
      %v5135 = vld [vmem:[%s5089 + $0x168] sm:$0xff]
      %v5136 = vld [vmem:[%s5089 + $0x170] sm:$0xff]
      %v5137 = vld [vmem:[%s5089 + $0x178] sm:$0xff]
      %v5138 = vld [vmem:[%s5089 + $0x180] sm:$0xff]
      %v5139 = vld [vmem:[%s5089 + $0x188] sm:$0xff]
      %v5140 = vld [vmem:[%s5089 + $0x190] sm:$0xff]
      %v5141 = vld [vmem:[%s5089 + $0x198] sm:$0xff]
      %v5142 = vld [vmem:[%s5089 + $0x1a0] sm:$0xff]
      %v5143 = vld [vmem:[%s5089 + $0x1a8] sm:$0xff]
      %v5144 = vld [vmem:[%s5089 + $0x1b0] sm:$0xff]
      %v5145 = vld [vmem:[%s5089 + $0x1b8] sm:$0xff]
      %v5146 = vld [vmem:[%s5089 + $0x1c0] sm:$0xff]
      %v5147 = vld [vmem:[%s5089 + $0x1c8] sm:$0xff]
      %v5148 = vld [vmem:[%s5089 + $0x1d0] sm:$0xff]
      %v5149 = vld [vmem:[%s5089 + $0x1d8] sm:$0xff]
      %v5150 = vld [vmem:[%s5089 + $0x1e0] sm:$0xff]
      %v5151 = vld [vmem:[%s5089 + $0x1e8] sm:$0xff]
      %v5152 = vld [vmem:[%s5089 + $0x1f0] sm:$0xff]
      %v5153 = vld [vmem:[%s5089 + $0x1f8] sm:$0xff]
      %v5154 = vld [vmem:[%s5089 + $0x200] sm:$0xff]
      %v5155 = vld [vmem:[%s5089 + $0x208] sm:$0xff]
      %v5156 = vld [vmem:[%s5089 + $0x210] sm:$0xff]
      %v5157 = vld [vmem:[%s5089 + $0x218] sm:$0xff]
      %v5158 = vld [vmem:[%s5089 + $0x220] sm:$0xff]
      %v5159 = vld [vmem:[%s5089 + $0x228] sm:$0xff]
      %v5160 = vld [vmem:[%s5089 + $0x230] sm:$0xff]
      %v5161 = vld [vmem:[%s5089 + $0x238] sm:$0xff]
      %v5162 = vld [vmem:[%s5089 + $0x240] sm:$0xff]
      %v5163 = vld [vmem:[%s5089 + $0x248] sm:$0xff]
      %v5164 = vld [vmem:[%s5089 + $0x250] sm:$0xff]
      %v5165 = vld [vmem:[%s5089 + $0x258] sm:$0xff]
      %v5166 = vld [vmem:[%s5089 + $0x260] sm:$0xff]
      %v5167 = vld [vmem:[%s5089 + $0x268] sm:$0xff]
      %v5168 = vld [vmem:[%s5089 + $0x270] sm:$0xff]
      %v5169 = vld [vmem:[%s5089 + $0x278] sm:$0xff]
      %v5170 = vld [vmem:[%s5089 + $0x280] sm:$0xff]
      %v5171 = vld [vmem:[%s5089 + $0x288] sm:$0xff]
      %v5172 = vld [vmem:[%s5089 + $0x290] sm:$0xff]
      %v5173 = vld [vmem:[%s5089 + $0x298] sm:$0xff]
      %v5174 = vld [vmem:[%s5089 + $0x2a0] sm:$0xff]
      %v5175 = vld [vmem:[%s5089 + $0x2a8] sm:$0xff]
      %v5176 = vld [vmem:[%s5089 + $0x2b0] sm:$0xff]
      %v5177 = vld [vmem:[%s5089 + $0x2b8] sm:$0xff]
      %v5178 = vld [vmem:[%s5089 + $0x2c0] sm:$0xff]
      %v5179 = vld [vmem:[%s5089 + $0x2c8] sm:$0xff]
      %v5180 = vld [vmem:[%s5089 + $0x2d0] sm:$0xff]
      %v5181 = vld [vmem:[%s5089 + $0x2d8] sm:$0xff]
      %v5182 = vld [vmem:[%s5089 + $0x2e0] sm:$0xff]
      %v5183 = vld [vmem:[%s5089 + $0x2e8] sm:$0xff]
      %v5184 = vld [vmem:[%s5089 + $0x2f0] sm:$0xff]
      %v5185 = vld [vmem:[%s5089 + $0x2f8] sm:$0xff]
      %v5186 = vld [vmem:[%s5089 + $0x300] sm:$0xff]
      %v5187 = vld [vmem:[%s5089 + $0x308] sm:$0xff]
      %v5188 = vld [vmem:[%s5089 + $0x310] sm:$0xff]
      %v5189 = vld [vmem:[%s5089 + $0x318] sm:$0xff]
      %v5190 = vld [vmem:[%s5089 + $0x320] sm:$0xff]
      %v5191 = vld [vmem:[%s5089 + $0x328] sm:$0xff]
      %v5192 = vld [vmem:[%s5089 + $0x330] sm:$0xff]
      %v5193 = vld [vmem:[%s5089 + $0x338] sm:$0xff]
      %v5194 = vld [vmem:[%s5089 + $0x340] sm:$0xff]
      %v5195 = vld [vmem:[%s5089 + $0x348] sm:$0xff]
      %v5196 = vld [vmem:[%s5089 + $0x350] sm:$0xff]
      %v5197 = vld [vmem:[%s5089 + $0x358] sm:$0xff]
      %v5198 = vld [vmem:[%s5089 + $0x360] sm:$0xff]
      %v5199 = vld [vmem:[%s5089 + $0x368] sm:$0xff]
      %v5200 = vld [vmem:[%s5089 + $0x370] sm:$0xff]
      %v5201 = vld [vmem:[%s5089 + $0x378] sm:$0xff]
      %v5202 = vld [vmem:[%s5089 + $0x380] sm:$0xff]
      %v5203 = vld [vmem:[%s5089 + $0x388] sm:$0xff]
      %v5204 = vld [vmem:[%s5089 + $0x390] sm:$0xff]
      %v5205 = vld [vmem:[%s5089 + $0x398] sm:$0xff]
      %v5206 = vld [vmem:[%s5089 + $0x3a0] sm:$0xff]
      %v5207 = vld [vmem:[%s5089 + $0x3a8] sm:$0xff]
      %v5208 = vld [vmem:[%s5089 + $0x3b0] sm:$0xff]
      %v5209 = vld [vmem:[%s5089 + $0x3b8] sm:$0xff]
      %v5210 = vld [vmem:[%s5089 + $0x3c0] sm:$0xff]
      %v5211 = vld [vmem:[%s5089 + $0x3c8] sm:$0xff]
      %v5212 = vld [vmem:[%s5089 + $0x3d0] sm:$0xff]
      %v5213 = vld [vmem:[%s5089 + $0x3d8] sm:$0xff]
      %v5214 = vld [vmem:[%s5089 + $0x3e0] sm:$0xff]
      %v5215 = vld [vmem:[%s5089 + $0x3e8] sm:$0xff]
      %v5216 = vld [vmem:[%s5089 + $0x3f0] sm:$0xff]
      %v5217 = vld [vmem:[%s5089 + $0x3f8] sm:$0xff]
      %v5218 = vld [vmem:[%s5089 + $0x400] sm:$0xff]
      %v5219 = vld [vmem:[%s5089 + $0x408] sm:$0xff]
      %v5220 = vld [vmem:[%s5089 + $0x410] sm:$0xff]
      %v5221 = vld [vmem:[%s5089 + $0x418] sm:$0xff]
      %v5222 = vld [vmem:[%s5089 + $0x420] sm:$0xff]
      %v5223 = vld [vmem:[%s5089 + $0x428] sm:$0xff]
      %v5224 = vld [vmem:[%s5089 + $0x430] sm:$0xff]
      %v5225 = vld [vmem:[%s5089 + $0x438] sm:$0xff]
      %v5226 = vld [vmem:[%s5089 + $0x440] sm:$0xff]
      %v5227 = vld [vmem:[%s5089 + $0x448] sm:$0xff]
      %v5228 = vld [vmem:[%s5089 + $0x450] sm:$0xff]
      %v5229 = vld [vmem:[%s5089 + $0x458] sm:$0xff]
      %v5230 = vld [vmem:[%s5089 + $0x460] sm:$0xff]
      %v5231 = vld [vmem:[%s5089 + $0x468] sm:$0xff]
      %v5232 = vld [vmem:[%s5089 + $0x470] sm:$0xff]
      %v5233 = vld [vmem:[%s5089 + $0x478] sm:$0xff]
      %v5234 = vld [vmem:[%s5089 + $0x480] sm:$0xff]
      %v5235 = vld [vmem:[%s5089 + $0x488] sm:$0xff]
      %v5236 = vld [vmem:[%s5089 + $0x490] sm:$0xff]
      %v5237 = vld [vmem:[%s5089 + $0x498] sm:$0xff]
      %v5238 = vld [vmem:[%s5089 + $0x4a0] sm:$0xff]
      %v5239 = vld [vmem:[%s5089 + $0x4a8] sm:$0xff]
      %v5240 = vld [vmem:[%s5089 + $0x4b0] sm:$0xff]
      %v5241 = vld [vmem:[%s5089 + $0x4b8] sm:$0xff]
      %v5242 = vld [vmem:[%s5089 + $0x4c0] sm:$0xff]
      %v5243 = vld [vmem:[%s5089 + $0x4c8] sm:$0xff]
      %v5244 = vld [vmem:[%s5089 + $0x4d0] sm:$0xff]
      %v5245 = vld [vmem:[%s5089 + $0x4d8] sm:$0xff]
      %v5246 = vld [vmem:[%s5089 + $0x4e0] sm:$0xff]
      %v5247 = vld [vmem:[%s5089 + $0x4e8] sm:$0xff]
      %v5248 = vld [vmem:[%s5089 + $0x4f0] sm:$0xff]
      %v5249 = vld [vmem:[%s5089 + $0x4f8] sm:$0xff]
      %v5250 = vld [vmem:[%s5089 + $0x500] sm:$0xff]
      %v5251 = vld [vmem:[%s5089 + $0x508] sm:$0xff]
      %v5252 = vld [vmem:[%s5089 + $0x510] sm:$0xff]
      %v5253 = vld [vmem:[%s5089 + $0x518] sm:$0xff]
      %v5254 = vld [vmem:[%s5089 + $0x520] sm:$0xff]
      %v5255 = vld [vmem:[%s5089 + $0x528] sm:$0xff]
      %v5256 = vld [vmem:[%s5089 + $0x530] sm:$0xff]
      %v5257 = vld [vmem:[%s5089 + $0x538] sm:$0xff]
      %v5258 = vld [vmem:[%s5089 + $0x540] sm:$0xff]
      %v5259 = vld [vmem:[%s5089 + $0x548] sm:$0xff]
      %v5260 = vld [vmem:[%s5089 + $0x550] sm:$0xff]
      %v5261 = vld [vmem:[%s5089 + $0x558] sm:$0xff]
      %v5262 = vld [vmem:[%s5089 + $0x560] sm:$0xff]
      %v5263 = vld [vmem:[%s5089 + $0x568] sm:$0xff]
      %v5264 = vld [vmem:[%s5089 + $0x570] sm:$0xff]
      %v5265 = vld [vmem:[%s5089 + $0x578] sm:$0xff]
      %v5266 = vld [vmem:[%s5089 + $0x580] sm:$0xff]
      %v5267 = vld [vmem:[%s5089 + $0x588] sm:$0xff]
      %v5268 = vld [vmem:[%s5089 + $0x590] sm:$0xff]
      %v5269 = vld [vmem:[%s5089 + $0x598] sm:$0xff]
      %v5270 = vrot.slane %v2105, 3
      %v5271 = vrot.slane %v2109, 3
      %v5272 = vsel %vm2046, %v5270, %v5271
      %v5273 = vrot.slane %v2106, 3
      %v5274 = vrot.slane %v2110, 3
      %v5275 = vsel %vm2046, %v5273, %v5274
      %v5276 = vrot.slane %v2107, 3
      %v5277 = vrot.slane %v2111, 3
      %v5278 = vsel %vm2046, %v5276, %v5277
      %v5279 = vrot.slane %v2108, 3
      %v5280 = vrot.slane %v2112, 3
      %v5281 = vsel %vm2046, %v5279, %v5280
      %v5288 = vsel %vm546, %v5281, 0
      %v5290 = vsel %vm546, %v5280, 0
      %5292 = vmatprep.subr.mxu0 %v5136
      %5293 = vmatpush1.msra.mxu0 %v5135
      %5294 = vmatprep.subr.mxu0 %v5133
      %5295 = vmatpush1.msra.mxu0 %v5132
      %5296 = vmatprep.subr.mxu0 %v5130
      %5297 = vmatpush1.msra.mxu0 %v5129
      %5298 = vmatprep.subr.mxu0 %v5127
      %5299 = vmatpush1.msra.mxu0 %v5126
      %5300 = vmatprep.subr.mxu0 %v5124
      %5301 = vmatpush1.msra.mxu0 %v5123
      %5302 = vmatprep.subr.mxu0 %v5121
      %5303 = vmatpush1.msra.mxu0 %v5120
      %5304 = vmatprep.subr.mxu0 %v5118
      %5305 = vmatpush1.msra.mxu0 %v5117
      %5306 = vmatprep.subr.mxu0 %v5115
      %5307 = vmatpush1.msra.mxu0 %v5114
      %5308 = vmatprep.subr.mxu0 %v5112
      %5309 = vmatpush1.msra.mxu0 %v5111
      %5310 = vmatprep.subr.mxu0 %v5109
      %5311 = vmatpush1.msra.mxu0 %v5108
      %5312 = vmatprep.subr.mxu0 %v5106
      %5313 = vmatpush1.msra.mxu0 %v5105
      %5314 = vmatprep.subr.mxu0 %v5103
      %5315 = vmatpush1.msra.mxu0 %v5102
      %5316 = vmatprep.subr.mxu0 %v5100
      %5317 = vmatpush1.msra.mxu0 %v5099
      %5318 = vmatprep.subr.mxu0 %v5097
      %5319 = vmatpush1.msra.mxu0 %v5096
      %5320 = vmatprep.subr.mxu0 %v5094
      %5321 = vmatpush1.msra.mxu0 %v5093
      %5322 = vmatprep.subr.mxu0 %v5091
      %5323 = vmatpush1.msra.mxu0 %v5090
      %5324 = vmatprep.subr.mxu0 %v5184
      %5325 = vmatpush2.msra.mxu0 %v5183
      %5326 = vmatprep.subr.mxu0 %v5181
      %5327 = vmatpush2.msra.mxu0 %v5180
      %5328 = vmatprep.subr.mxu0 %v5178
      %5329 = vmatpush2.msra.mxu0 %v5177
      %5330 = vmatprep.subr.mxu0 %v5175
      %5331 = vmatpush2.msra.mxu0 %v5174
      %5332 = vmatprep.subr.mxu0 %v5172
      %5333 = vmatpush2.msra.mxu0 %v5171
      %5334 = vmatprep.subr.mxu0 %v5169
      %5335 = vmatpush2.msra.mxu0 %v5168
      %5336 = vmatprep.subr.mxu0 %v5166
      %5337 = vmatpush2.msra.mxu0 %v5165
      %5338 = vmatprep.subr.mxu0 %v5163
      %5339 = vmatpush2.msra.mxu0 %v5162
      %5340 = vmatprep.subr.mxu0 %v5160
      %5341 = vmatpush2.msra.mxu0 %v5159
      %5342 = vmatprep.subr.mxu0 %v5157
      %5343 = vmatpush2.msra.mxu0 %v5156
      %5344 = vmatprep.subr.mxu0 %v5154
      %5345 = vmatpush2.msra.mxu0 %v5153
      %5346 = vmatprep.subr.mxu0 %v5151
      %5347 = vmatpush2.msra.mxu0 %v5150
      %5348 = vmatprep.subr.mxu0 %v5148
      %5349 = vmatpush2.msra.mxu0 %v5147
      %5350 = vmatprep.subr.mxu0 %v5145
      %5351 = vmatpush2.msra.mxu0 %v5144
      %5352 = vmatprep.subr.mxu0 %v5142
      %5353 = vmatpush2.msra.mxu0 %v5141
      %5354 = vmatprep.subr.mxu0 %v5139
      %5355 = vmatpush2.msra.mxu0 %v5138
      %5356 = vmatprep.mubr.f32.mxu0 %v5275
      %5357 = vmatmul.mubr.f32.gmra.mxu0 %v5272
      %v5358 = vpop.f32.mrf.mxu0
      %v5359 = vadd.f32 0.0, %v5358
      %v5360 = vpop.f32.mrf.mxu0
      %v5361 = vadd.f32 0.0, %v5360
      %5362 = vmatprep.mubr.f32.mxu0 %v5274
      %5363 = vmatmul.mubr.f32.gmra.mxu0 %v5271
      %v5364 = vpop.f32.mrf.mxu0
      %v5365 = vadd.f32 0.0, %v5364
      %v5366 = vpop.f32.mrf.mxu0
      %v5367 = vadd.f32 0.0, %v5366
      %5368 = vdwg.mxu0
      %5369 = vmatprep.subr.mxu0 %v5232
      %5370 = vmatpush1.msra.mxu0 %v5231
      %5371 = vmatprep.subr.mxu0 %v5229
      %5372 = vmatpush1.msra.mxu0 %v5228
      %5373 = vmatprep.subr.mxu0 %v5226
      %5374 = vmatpush1.msra.mxu0 %v5225
      %5375 = vmatprep.subr.mxu0 %v5223
      %5376 = vmatpush1.msra.mxu0 %v5222
      %5377 = vmatprep.subr.mxu0 %v5220
      %5378 = vmatpush1.msra.mxu0 %v5219
      %5379 = vmatprep.subr.mxu0 %v5217
      %5380 = vmatpush1.msra.mxu0 %v5216
      %5381 = vmatprep.subr.mxu0 %v5214
      %5382 = vmatpush1.msra.mxu0 %v5213
      %5383 = vmatprep.subr.mxu0 %v5211
      %5384 = vmatpush1.msra.mxu0 %v5210
      %5385 = vmatprep.subr.mxu0 %v5208
      %5386 = vmatpush1.msra.mxu0 %v5207
      %5387 = vmatprep.subr.mxu0 %v5205
      %5388 = vmatpush1.msra.mxu0 %v5204
      %5389 = vmatprep.subr.mxu0 %v5202
      %5390 = vmatpush1.msra.mxu0 %v5201
      %5391 = vmatprep.subr.mxu0 %v5199
      %5392 = vmatpush1.msra.mxu0 %v5198
      %5393 = vmatprep.subr.mxu0 %v5196
      %5394 = vmatpush1.msra.mxu0 %v5195
      %5395 = vmatprep.subr.mxu0 %v5193
      %5396 = vmatpush1.msra.mxu0 %v5192
      %5397 = vmatprep.subr.mxu0 %v5190
      %5398 = vmatpush1.msra.mxu0 %v5189
      %5399 = vmatprep.subr.mxu0 %v5187
      %5400 = vmatpush1.msra.mxu0 %v5186
      %5401 = vmatprep.subr.mxu0 0.0
      %5402 = vmatpush2.msra.mxu0 0.0
      %5403 = vmatprep.subr.mxu0 0.0
      %5404 = vmatpush2.msra.mxu0 0.0
      %5405 = vmatprep.subr.mxu0 0.0
      %5406 = vmatpush2.msra.mxu0 0.0
      %5407 = vmatprep.subr.mxu0 0.0
      %5408 = vmatpush2.msra.mxu0 0.0
      %5409 = vmatprep.subr.mxu0 %v5268
      %5410 = vmatpush2.msra.mxu0 %v5267
      %5411 = vmatprep.subr.mxu0 %v5265
      %5412 = vmatpush2.msra.mxu0 %v5264
      %5413 = vmatprep.subr.mxu0 %v5262
      %5414 = vmatpush2.msra.mxu0 %v5261
      %5415 = vmatprep.subr.mxu0 %v5259
      %5416 = vmatpush2.msra.mxu0 %v5258
      %5417 = vmatprep.subr.mxu0 %v5256
      %5418 = vmatpush2.msra.mxu0 %v5255
      %5419 = vmatprep.subr.mxu0 %v5253
      %5420 = vmatpush2.msra.mxu0 %v5252
      %5421 = vmatprep.subr.mxu0 %v5250
      %5422 = vmatpush2.msra.mxu0 %v5249
      %5423 = vmatprep.subr.mxu0 %v5247
      %5424 = vmatpush2.msra.mxu0 %v5246
      %5425 = vmatprep.subr.mxu0 %v5244
      %5426 = vmatpush2.msra.mxu0 %v5243
      %5427 = vmatprep.subr.mxu0 %v5241
      %5428 = vmatpush2.msra.mxu0 %v5240
      %5429 = vmatprep.subr.mxu0 %v5238
      %5430 = vmatpush2.msra.mxu0 %v5237
      %5431 = vmatprep.subr.mxu0 %v5235
      %5432 = vmatpush2.msra.mxu0 %v5234
      %5433 = vmatprep.mubr.f32.mxu0 %v5288
      %5434 = vmatmul.mubr.f32.gmra.mxu0 %v5278
      %v5435 = vpop.f32.mrf.mxu0
      %v5436 = vadd.f32 %v5359, %v5435
      %v5437 = vpop.f32.mrf.mxu0
      %v5438 = vadd.f32 %v5361, %v5437
      %5439 = vmatprep.mubr.f32.mxu0 %v5290
      %5440 = vmatmul.mubr.f32.gmra.mxu0 %v5277
      %v5441 = vpop.f32.mrf.mxu0
      %v5442 = vadd.f32 %v5365, %v5441
      %v5443 = vpop.f32.mrf.mxu0
      %v5444 = vadd.f32 %v5367, %v5443
      %5445 = vdwg.mxu0
      %5446 = vmatprep.subr.mxu0 0.0
      %5447 = vmatpush1.msra.mxu0 %v5137
      %5448 = vmatprep.subr.mxu0 0.0
      %5449 = vmatpush1.msra.mxu0 %v5134
      %5450 = vmatprep.subr.mxu0 0.0
      %5451 = vmatpush1.msra.mxu0 %v5131
      %5452 = vmatprep.subr.mxu0 0.0
      %5453 = vmatpush1.msra.mxu0 %v5128
      %5454 = vmatprep.subr.mxu0 0.0
      %5455 = vmatpush1.msra.mxu0 %v5125
      %5456 = vmatprep.subr.mxu0 0.0
      %5457 = vmatpush1.msra.mxu0 %v5122
      %5458 = vmatprep.subr.mxu0 0.0
      %5459 = vmatpush1.msra.mxu0 %v5119
      %5460 = vmatprep.subr.mxu0 0.0
      %5461 = vmatpush1.msra.mxu0 %v5116
      %5462 = vmatprep.subr.mxu0 0.0
      %5463 = vmatpush1.msra.mxu0 %v5113
      %5464 = vmatprep.subr.mxu0 0.0
      %5465 = vmatpush1.msra.mxu0 %v5110
      %5466 = vmatprep.subr.mxu0 0.0
      %5467 = vmatpush1.msra.mxu0 %v5107
      %5468 = vmatprep.subr.mxu0 0.0
      %5469 = vmatpush1.msra.mxu0 %v5104
      %5470 = vmatprep.subr.mxu0 0.0
      %5471 = vmatpush1.msra.mxu0 %v5101
      %5472 = vmatprep.subr.mxu0 0.0
      %5473 = vmatpush1.msra.mxu0 %v5098
      %5474 = vmatprep.subr.mxu0 0.0
      %5475 = vmatpush1.msra.mxu0 %v5095
      %5476 = vmatprep.subr.mxu0 0.0
      %5477 = vmatpush1.msra.mxu0 %v5092
      %5478 = vmatprep.subr.mxu0 0.0
      %5479 = vmatpush2.msra.mxu0 %v5185
      %5480 = vmatprep.subr.mxu0 0.0
      %5481 = vmatpush2.msra.mxu0 %v5182
      %5482 = vmatprep.subr.mxu0 0.0
      %5483 = vmatpush2.msra.mxu0 %v5179
      %5484 = vmatprep.subr.mxu0 0.0
      %5485 = vmatpush2.msra.mxu0 %v5176
      %5486 = vmatprep.subr.mxu0 0.0
      %5487 = vmatpush2.msra.mxu0 %v5173
      %5488 = vmatprep.subr.mxu0 0.0
      %5489 = vmatpush2.msra.mxu0 %v5170
      %5490 = vmatprep.subr.mxu0 0.0
      %5491 = vmatpush2.msra.mxu0 %v5167
      %5492 = vmatprep.subr.mxu0 0.0
      %5493 = vmatpush2.msra.mxu0 %v5164
      %5494 = vmatprep.subr.mxu0 0.0
      %5495 = vmatpush2.msra.mxu0 %v5161
      %5496 = vmatprep.subr.mxu0 0.0
      %5497 = vmatpush2.msra.mxu0 %v5158
      %5498 = vmatprep.subr.mxu0 0.0
      %5499 = vmatpush2.msra.mxu0 %v5155
      %5500 = vmatprep.subr.mxu0 0.0
      %5501 = vmatpush2.msra.mxu0 %v5152
      %5502 = vmatprep.subr.mxu0 0.0
      %5503 = vmatpush2.msra.mxu0 %v5149
      %5504 = vmatprep.subr.mxu0 0.0
      %5505 = vmatpush2.msra.mxu0 %v5146
      %5506 = vmatprep.subr.mxu0 0.0
      %5507 = vmatpush2.msra.mxu0 %v5143
      %5508 = vmatprep.subr.mxu0 0.0
      %5509 = vmatpush2.msra.mxu0 %v5140
      %5510 = vmatprep.mubr.f32.mxu0 %v5275
      %5511 = vmatmul.mubr.f32.gmra.mxu0 %v5272
      %v5512 = vpop.f32.mrf.mxu0
      %v5513 = vadd.f32 0.0, %v5512
      %v5514 = vpop.f32.mrf.mxu0
      %5515 = vmatprep.mubr.f32.mxu0 %v5274
      %5516 = vmatmul.mubr.f32.gmra.mxu0 %v5271
      %v5517 = vpop.f32.mrf.mxu0
      %v5518 = vadd.f32 0.0, %v5517
      %v5519 = vpop.f32.mrf.mxu0
      %5520 = vdwg.mxu0
      %5521 = vmatprep.subr.mxu0 0.0
      %5522 = vmatpush1.msra.mxu0 %v5233
      %5523 = vmatprep.subr.mxu0 0.0
      %5524 = vmatpush1.msra.mxu0 %v5230
      %5525 = vmatprep.subr.mxu0 0.0
      %5526 = vmatpush1.msra.mxu0 %v5227
      %5527 = vmatprep.subr.mxu0 0.0
      %5528 = vmatpush1.msra.mxu0 %v5224
      %5529 = vmatprep.subr.mxu0 0.0
      %5530 = vmatpush1.msra.mxu0 %v5221
      %5531 = vmatprep.subr.mxu0 0.0
      %5532 = vmatpush1.msra.mxu0 %v5218
      %5533 = vmatprep.subr.mxu0 0.0
      %5534 = vmatpush1.msra.mxu0 %v5215
      %5535 = vmatprep.subr.mxu0 0.0
      %5536 = vmatpush1.msra.mxu0 %v5212
      %5537 = vmatprep.subr.mxu0 0.0
      %5538 = vmatpush1.msra.mxu0 %v5209
      %5539 = vmatprep.subr.mxu0 0.0
      %5540 = vmatpush1.msra.mxu0 %v5206
      %5541 = vmatprep.subr.mxu0 0.0
      %5542 = vmatpush1.msra.mxu0 %v5203
      %5543 = vmatprep.subr.mxu0 0.0
      %5544 = vmatpush1.msra.mxu0 %v5200
      %5545 = vmatprep.subr.mxu0 0.0
      %5546 = vmatpush1.msra.mxu0 %v5197
      %5547 = vmatprep.subr.mxu0 0.0
      %5548 = vmatpush1.msra.mxu0 %v5194
      %5549 = vmatprep.subr.mxu0 0.0
      %5550 = vmatpush1.msra.mxu0 %v5191
      %5551 = vmatprep.subr.mxu0 0.0
      %5552 = vmatpush1.msra.mxu0 %v5188
      %5553 = vmatprep.subr.mxu0 0.0
      %5554 = vmatpush2.msra.mxu0 0.0
      %5555 = vmatprep.subr.mxu0 0.0
      %5556 = vmatpush2.msra.mxu0 0.0
      %5557 = vmatprep.subr.mxu0 0.0
      %5558 = vmatpush2.msra.mxu0 0.0
      %5559 = vmatprep.subr.mxu0 0.0
      %5560 = vmatpush2.msra.mxu0 0.0
      %5561 = vmatprep.subr.mxu0 0.0
      %5562 = vmatpush2.msra.mxu0 %v5269
      %5563 = vmatprep.subr.mxu0 0.0
      %5564 = vmatpush2.msra.mxu0 %v5266
      %5565 = vmatprep.subr.mxu0 0.0
      %5566 = vmatpush2.msra.mxu0 %v5263
      %5567 = vmatprep.subr.mxu0 0.0
      %5568 = vmatpush2.msra.mxu0 %v5260
      %5569 = vmatprep.subr.mxu0 0.0
      %5570 = vmatpush2.msra.mxu0 %v5257
      %5571 = vmatprep.subr.mxu0 0.0
      %5572 = vmatpush2.msra.mxu0 %v5254
      %5573 = vmatprep.subr.mxu0 0.0
      %5574 = vmatpush2.msra.mxu0 %v5251
      %5575 = vmatprep.subr.mxu0 0.0
      %5576 = vmatpush2.msra.mxu0 %v5248
      %5577 = vmatprep.subr.mxu0 0.0
      %5578 = vmatpush2.msra.mxu0 %v5245
      %5579 = vmatprep.subr.mxu0 0.0
      %5580 = vmatpush2.msra.mxu0 %v5242
      %5581 = vmatprep.subr.mxu0 0.0
      %5582 = vmatpush2.msra.mxu0 %v5239
      %5583 = vmatprep.subr.mxu0 0.0
      %5584 = vmatpush2.msra.mxu0 %v5236
      %5585 = vmatprep.mubr.f32.mxu0 %v5288
      %5586 = vmatmul.mubr.f32.gmra.mxu0 %v5278
      %v5587 = vpop.f32.mrf.mxu0
      %v5588 = vadd.f32 %v5513, %v5587
      %v5589 = vpop.f32.mrf.mxu0
      %5590 = vmatprep.mubr.f32.mxu0 %v5290
      %5591 = vmatmul.mubr.f32.gmra.mxu0 %v5277
      %v5592 = vpop.f32.mrf.mxu0
      %v5593 = vadd.f32 %v5518, %v5592
      %v5594 = vpop.f32.mrf.mxu0
      %5595 = vdwg.mxu0
      %v5596 = vadd.f32 %v4592, %v5436
      %v5597 = vadd.f32 %v4593, %v5438
      %v5598 = vadd.f32 %v4594, %v5588
      %v5599 = vadd.f32 %v4595, %v5442
      %v5600 = vadd.f32 %v4596, %v5444
      %v5601 = vadd.f32 %v4597, %v5593
      %s5602 = scalar_lea.vmem %s4, 4320
      %v5603 = vld [vmem:[%s5602] sm:$0xff]
      %v5604 = vld [vmem:[%s5602 + $0x8] sm:$0xff]
      %v5605 = vld [vmem:[%s5602 + $0x10] sm:$0xff]
      %v5606 = vld [vmem:[%s5602 + $0x18] sm:$0xff]
      %v5607 = vld [vmem:[%s5602 + $0x20] sm:$0xff]
      %v5608 = vld [vmem:[%s5602 + $0x28] sm:$0xff]
      %v5609 = vld [vmem:[%s5602 + $0x30] sm:$0xff]
      %v5610 = vld [vmem:[%s5602 + $0x38] sm:$0xff]
      %v5611 = vld [vmem:[%s5602 + $0x40] sm:$0xff]
      %v5612 = vld [vmem:[%s5602 + $0x48] sm:$0xff]
      %v5613 = vld [vmem:[%s5602 + $0x50] sm:$0xff]
      %v5614 = vld [vmem:[%s5602 + $0x58] sm:$0xff]
      %v5615 = vld [vmem:[%s5602 + $0x60] sm:$0xff]
      %v5616 = vld [vmem:[%s5602 + $0x68] sm:$0xff]
      %v5617 = vld [vmem:[%s5602 + $0x70] sm:$0xff]
      %v5618 = vld [vmem:[%s5602 + $0x78] sm:$0xff]
      %v5619 = vld [vmem:[%s5602 + $0x80] sm:$0xff]
      %v5620 = vld [vmem:[%s5602 + $0x88] sm:$0xff]
      %v5621 = vld [vmem:[%s5602 + $0x90] sm:$0xff]
      %v5622 = vld [vmem:[%s5602 + $0x98] sm:$0xff]
      %v5623 = vld [vmem:[%s5602 + $0xa0] sm:$0xff]
      %v5624 = vld [vmem:[%s5602 + $0xa8] sm:$0xff]
      %v5625 = vld [vmem:[%s5602 + $0xb0] sm:$0xff]
      %v5626 = vld [vmem:[%s5602 + $0xb8] sm:$0xff]
      %v5627 = vld [vmem:[%s5602 + $0xc0] sm:$0xff]
      %v5628 = vld [vmem:[%s5602 + $0xc8] sm:$0xff]
      %v5629 = vld [vmem:[%s5602 + $0xd0] sm:$0xff]
      %v5630 = vld [vmem:[%s5602 + $0xd8] sm:$0xff]
      %v5631 = vld [vmem:[%s5602 + $0xe0] sm:$0xff]
      %v5632 = vld [vmem:[%s5602 + $0xe8] sm:$0xff]
      %v5633 = vld [vmem:[%s5602 + $0xf0] sm:$0xff]
      %v5634 = vld [vmem:[%s5602 + $0xf8] sm:$0xff]
      %v5635 = vld [vmem:[%s5602 + $0x100] sm:$0xff]
      %v5636 = vld [vmem:[%s5602 + $0x108] sm:$0xff]
      %v5637 = vld [vmem:[%s5602 + $0x110] sm:$0xff]
      %v5638 = vld [vmem:[%s5602 + $0x118] sm:$0xff]
      %v5639 = vld [vmem:[%s5602 + $0x120] sm:$0xff]
      %v5640 = vld [vmem:[%s5602 + $0x128] sm:$0xff]
      %v5641 = vld [vmem:[%s5602 + $0x130] sm:$0xff]
      %v5642 = vld [vmem:[%s5602 + $0x138] sm:$0xff]
      %v5643 = vld [vmem:[%s5602 + $0x140] sm:$0xff]
      %v5644 = vld [vmem:[%s5602 + $0x148] sm:$0xff]
      %v5645 = vld [vmem:[%s5602 + $0x150] sm:$0xff]
      %v5646 = vld [vmem:[%s5602 + $0x158] sm:$0xff]
      %v5647 = vld [vmem:[%s5602 + $0x160] sm:$0xff]
      %v5648 = vld [vmem:[%s5602 + $0x168] sm:$0xff]
      %v5649 = vld [vmem:[%s5602 + $0x170] sm:$0xff]
      %v5650 = vld [vmem:[%s5602 + $0x178] sm:$0xff]
      %v5651 = vld [vmem:[%s5602 + $0x180] sm:$0xff]
      %v5652 = vld [vmem:[%s5602 + $0x188] sm:$0xff]
      %v5653 = vld [vmem:[%s5602 + $0x190] sm:$0xff]
      %v5654 = vld [vmem:[%s5602 + $0x198] sm:$0xff]
      %v5655 = vld [vmem:[%s5602 + $0x1a0] sm:$0xff]
      %v5656 = vld [vmem:[%s5602 + $0x1a8] sm:$0xff]
      %v5657 = vld [vmem:[%s5602 + $0x1b0] sm:$0xff]
      %v5658 = vld [vmem:[%s5602 + $0x1b8] sm:$0xff]
      %v5659 = vld [vmem:[%s5602 + $0x1c0] sm:$0xff]
      %v5660 = vld [vmem:[%s5602 + $0x1c8] sm:$0xff]
      %v5661 = vld [vmem:[%s5602 + $0x1d0] sm:$0xff]
      %v5662 = vld [vmem:[%s5602 + $0x1d8] sm:$0xff]
      %v5663 = vld [vmem:[%s5602 + $0x1e0] sm:$0xff]
      %v5664 = vld [vmem:[%s5602 + $0x1e8] sm:$0xff]
      %v5665 = vld [vmem:[%s5602 + $0x1f0] sm:$0xff]
      %v5666 = vld [vmem:[%s5602 + $0x1f8] sm:$0xff]
      %v5667 = vld [vmem:[%s5602 + $0x200] sm:$0xff]
      %v5668 = vld [vmem:[%s5602 + $0x208] sm:$0xff]
      %v5669 = vld [vmem:[%s5602 + $0x210] sm:$0xff]
      %v5670 = vld [vmem:[%s5602 + $0x218] sm:$0xff]
      %v5671 = vld [vmem:[%s5602 + $0x220] sm:$0xff]
      %v5672 = vld [vmem:[%s5602 + $0x228] sm:$0xff]
      %v5673 = vld [vmem:[%s5602 + $0x230] sm:$0xff]
      %v5674 = vld [vmem:[%s5602 + $0x238] sm:$0xff]
      %v5675 = vld [vmem:[%s5602 + $0x240] sm:$0xff]
      %v5676 = vld [vmem:[%s5602 + $0x248] sm:$0xff]
      %v5677 = vld [vmem:[%s5602 + $0x250] sm:$0xff]
      %v5678 = vld [vmem:[%s5602 + $0x258] sm:$0xff]
      %v5679 = vld [vmem:[%s5602 + $0x260] sm:$0xff]
      %v5680 = vld [vmem:[%s5602 + $0x268] sm:$0xff]
      %v5681 = vld [vmem:[%s5602 + $0x270] sm:$0xff]
      %v5682 = vld [vmem:[%s5602 + $0x278] sm:$0xff]
      %v5683 = vld [vmem:[%s5602 + $0x280] sm:$0xff]
      %v5684 = vld [vmem:[%s5602 + $0x288] sm:$0xff]
      %v5685 = vld [vmem:[%s5602 + $0x290] sm:$0xff]
      %v5686 = vld [vmem:[%s5602 + $0x298] sm:$0xff]
      %v5687 = vld [vmem:[%s5602 + $0x2a0] sm:$0xff]
      %v5688 = vld [vmem:[%s5602 + $0x2a8] sm:$0xff]
      %v5689 = vld [vmem:[%s5602 + $0x2b0] sm:$0xff]
      %v5690 = vld [vmem:[%s5602 + $0x2b8] sm:$0xff]
      %v5691 = vld [vmem:[%s5602 + $0x2c0] sm:$0xff]
      %v5692 = vld [vmem:[%s5602 + $0x2c8] sm:$0xff]
      %v5693 = vld [vmem:[%s5602 + $0x2d0] sm:$0xff]
      %v5694 = vld [vmem:[%s5602 + $0x2d8] sm:$0xff]
      %v5695 = vld [vmem:[%s5602 + $0x2e0] sm:$0xff]
      %v5696 = vld [vmem:[%s5602 + $0x2e8] sm:$0xff]
      %v5697 = vld [vmem:[%s5602 + $0x2f0] sm:$0xff]
      %v5698 = vld [vmem:[%s5602 + $0x2f8] sm:$0xff]
      %v5699 = vld [vmem:[%s5602 + $0x300] sm:$0xff]
      %v5700 = vld [vmem:[%s5602 + $0x308] sm:$0xff]
      %v5701 = vld [vmem:[%s5602 + $0x310] sm:$0xff]
      %v5702 = vld [vmem:[%s5602 + $0x318] sm:$0xff]
      %v5703 = vld [vmem:[%s5602 + $0x320] sm:$0xff]
      %v5704 = vld [vmem:[%s5602 + $0x328] sm:$0xff]
      %v5705 = vld [vmem:[%s5602 + $0x330] sm:$0xff]
      %v5706 = vld [vmem:[%s5602 + $0x338] sm:$0xff]
      %v5707 = vld [vmem:[%s5602 + $0x340] sm:$0xff]
      %v5708 = vld [vmem:[%s5602 + $0x348] sm:$0xff]
      %v5709 = vld [vmem:[%s5602 + $0x350] sm:$0xff]
      %v5710 = vld [vmem:[%s5602 + $0x358] sm:$0xff]
      %v5711 = vld [vmem:[%s5602 + $0x360] sm:$0xff]
      %v5712 = vld [vmem:[%s5602 + $0x368] sm:$0xff]
      %v5713 = vld [vmem:[%s5602 + $0x370] sm:$0xff]
      %v5714 = vld [vmem:[%s5602 + $0x378] sm:$0xff]
      %v5715 = vld [vmem:[%s5602 + $0x380] sm:$0xff]
      %v5716 = vld [vmem:[%s5602 + $0x388] sm:$0xff]
      %v5717 = vld [vmem:[%s5602 + $0x390] sm:$0xff]
      %v5718 = vld [vmem:[%s5602 + $0x398] sm:$0xff]
      %v5719 = vld [vmem:[%s5602 + $0x3a0] sm:$0xff]
      %v5720 = vld [vmem:[%s5602 + $0x3a8] sm:$0xff]
      %v5721 = vld [vmem:[%s5602 + $0x3b0] sm:$0xff]
      %v5722 = vld [vmem:[%s5602 + $0x3b8] sm:$0xff]
      %v5723 = vld [vmem:[%s5602 + $0x3c0] sm:$0xff]
      %v5724 = vld [vmem:[%s5602 + $0x3c8] sm:$0xff]
      %v5725 = vld [vmem:[%s5602 + $0x3d0] sm:$0xff]
      %v5726 = vld [vmem:[%s5602 + $0x3d8] sm:$0xff]
      %v5727 = vld [vmem:[%s5602 + $0x3e0] sm:$0xff]
      %v5728 = vld [vmem:[%s5602 + $0x3e8] sm:$0xff]
      %v5729 = vld [vmem:[%s5602 + $0x3f0] sm:$0xff]
      %v5730 = vld [vmem:[%s5602 + $0x3f8] sm:$0xff]
      %v5731 = vld [vmem:[%s5602 + $0x400] sm:$0xff]
      %v5732 = vld [vmem:[%s5602 + $0x408] sm:$0xff]
      %v5733 = vld [vmem:[%s5602 + $0x410] sm:$0xff]
      %v5734 = vld [vmem:[%s5602 + $0x418] sm:$0xff]
      %v5735 = vld [vmem:[%s5602 + $0x420] sm:$0xff]
      %v5736 = vld [vmem:[%s5602 + $0x428] sm:$0xff]
      %v5737 = vld [vmem:[%s5602 + $0x430] sm:$0xff]
      %v5738 = vld [vmem:[%s5602 + $0x438] sm:$0xff]
      %v5739 = vld [vmem:[%s5602 + $0x440] sm:$0xff]
      %v5740 = vld [vmem:[%s5602 + $0x448] sm:$0xff]
      %v5741 = vld [vmem:[%s5602 + $0x450] sm:$0xff]
      %v5742 = vld [vmem:[%s5602 + $0x458] sm:$0xff]
      %v5743 = vld [vmem:[%s5602 + $0x460] sm:$0xff]
      %v5744 = vld [vmem:[%s5602 + $0x468] sm:$0xff]
      %v5745 = vld [vmem:[%s5602 + $0x470] sm:$0xff]
      %v5746 = vld [vmem:[%s5602 + $0x478] sm:$0xff]
      %v5747 = vld [vmem:[%s5602 + $0x480] sm:$0xff]
      %v5748 = vld [vmem:[%s5602 + $0x488] sm:$0xff]
      %v5749 = vld [vmem:[%s5602 + $0x490] sm:$0xff]
      %v5750 = vld [vmem:[%s5602 + $0x498] sm:$0xff]
      %v5751 = vld [vmem:[%s5602 + $0x4a0] sm:$0xff]
      %v5752 = vld [vmem:[%s5602 + $0x4a8] sm:$0xff]
      %v5753 = vld [vmem:[%s5602 + $0x4b0] sm:$0xff]
      %v5754 = vld [vmem:[%s5602 + $0x4b8] sm:$0xff]
      %v5755 = vld [vmem:[%s5602 + $0x4c0] sm:$0xff]
      %v5756 = vld [vmem:[%s5602 + $0x4c8] sm:$0xff]
      %v5757 = vld [vmem:[%s5602 + $0x4d0] sm:$0xff]
      %v5758 = vld [vmem:[%s5602 + $0x4d8] sm:$0xff]
      %v5759 = vld [vmem:[%s5602 + $0x4e0] sm:$0xff]
      %v5760 = vld [vmem:[%s5602 + $0x4e8] sm:$0xff]
      %v5761 = vld [vmem:[%s5602 + $0x4f0] sm:$0xff]
      %v5762 = vld [vmem:[%s5602 + $0x4f8] sm:$0xff]
      %v5763 = vld [vmem:[%s5602 + $0x500] sm:$0xff]
      %v5764 = vld [vmem:[%s5602 + $0x508] sm:$0xff]
      %v5765 = vld [vmem:[%s5602 + $0x510] sm:$0xff]
      %v5766 = vld [vmem:[%s5602 + $0x518] sm:$0xff]
      %v5767 = vld [vmem:[%s5602 + $0x520] sm:$0xff]
      %v5768 = vld [vmem:[%s5602 + $0x528] sm:$0xff]
      %v5769 = vld [vmem:[%s5602 + $0x530] sm:$0xff]
      %v5770 = vld [vmem:[%s5602 + $0x538] sm:$0xff]
      %v5771 = vld [vmem:[%s5602 + $0x540] sm:$0xff]
      %v5772 = vld [vmem:[%s5602 + $0x548] sm:$0xff]
      %v5773 = vld [vmem:[%s5602 + $0x550] sm:$0xff]
      %v5774 = vld [vmem:[%s5602 + $0x558] sm:$0xff]
      %v5775 = vld [vmem:[%s5602 + $0x560] sm:$0xff]
      %v5776 = vld [vmem:[%s5602 + $0x568] sm:$0xff]
      %v5777 = vld [vmem:[%s5602 + $0x570] sm:$0xff]
      %v5778 = vld [vmem:[%s5602 + $0x578] sm:$0xff]
      %v5779 = vld [vmem:[%s5602 + $0x580] sm:$0xff]
      %v5780 = vld [vmem:[%s5602 + $0x588] sm:$0xff]
      %v5781 = vld [vmem:[%s5602 + $0x590] sm:$0xff]
      %v5782 = vld [vmem:[%s5602 + $0x598] sm:$0xff]
      %5783 = vmatprep.subr.mxu0 %v5649
      %5784 = vmatpush1.msra.mxu0 %v5648
      %5785 = vmatprep.subr.mxu0 %v5646
      %5786 = vmatpush1.msra.mxu0 %v5645
      %5787 = vmatprep.subr.mxu0 %v5643
      %5788 = vmatpush1.msra.mxu0 %v5642
      %5789 = vmatprep.subr.mxu0 %v5640
      %5790 = vmatpush1.msra.mxu0 %v5639
      %5791 = vmatprep.subr.mxu0 %v5637
      %5792 = vmatpush1.msra.mxu0 %v5636
      %5793 = vmatprep.subr.mxu0 %v5634
      %5794 = vmatpush1.msra.mxu0 %v5633
      %5795 = vmatprep.subr.mxu0 %v5631
      %5796 = vmatpush1.msra.mxu0 %v5630
      %5797 = vmatprep.subr.mxu0 %v5628
      %5798 = vmatpush1.msra.mxu0 %v5627
      %5799 = vmatprep.subr.mxu0 %v5625
      %5800 = vmatpush1.msra.mxu0 %v5624
      %5801 = vmatprep.subr.mxu0 %v5622
      %5802 = vmatpush1.msra.mxu0 %v5621
      %5803 = vmatprep.subr.mxu0 %v5619
      %5804 = vmatpush1.msra.mxu0 %v5618
      %5805 = vmatprep.subr.mxu0 %v5616
      %5806 = vmatpush1.msra.mxu0 %v5615
      %5807 = vmatprep.subr.mxu0 %v5613
      %5808 = vmatpush1.msra.mxu0 %v5612
      %5809 = vmatprep.subr.mxu0 %v5610
      %5810 = vmatpush1.msra.mxu0 %v5609
      %5811 = vmatprep.subr.mxu0 %v5607
      %5812 = vmatpush1.msra.mxu0 %v5606
      %5813 = vmatprep.subr.mxu0 %v5604
      %5814 = vmatpush1.msra.mxu0 %v5603
      %5815 = vmatprep.subr.mxu0 %v5697
      %5816 = vmatpush2.msra.mxu0 %v5696
      %5817 = vmatprep.subr.mxu0 %v5694
      %5818 = vmatpush2.msra.mxu0 %v5693
      %5819 = vmatprep.subr.mxu0 %v5691
      %5820 = vmatpush2.msra.mxu0 %v5690
      %5821 = vmatprep.subr.mxu0 %v5688
      %5822 = vmatpush2.msra.mxu0 %v5687
      %5823 = vmatprep.subr.mxu0 %v5685
      %5824 = vmatpush2.msra.mxu0 %v5684
      %5825 = vmatprep.subr.mxu0 %v5682
      %5826 = vmatpush2.msra.mxu0 %v5681
      %5827 = vmatprep.subr.mxu0 %v5679
      %5828 = vmatpush2.msra.mxu0 %v5678
      %5829 = vmatprep.subr.mxu0 %v5676
      %5830 = vmatpush2.msra.mxu0 %v5675
      %5831 = vmatprep.subr.mxu0 %v5673
      %5832 = vmatpush2.msra.mxu0 %v5672
      %5833 = vmatprep.subr.mxu0 %v5670
      %5834 = vmatpush2.msra.mxu0 %v5669
      %5835 = vmatprep.subr.mxu0 %v5667
      %5836 = vmatpush2.msra.mxu0 %v5666
      %5837 = vmatprep.subr.mxu0 %v5664
      %5838 = vmatpush2.msra.mxu0 %v5663
      %5839 = vmatprep.subr.mxu0 %v5661
      %5840 = vmatpush2.msra.mxu0 %v5660
      %5841 = vmatprep.subr.mxu0 %v5658
      %5842 = vmatpush2.msra.mxu0 %v5657
      %5843 = vmatprep.subr.mxu0 %v5655
      %5844 = vmatpush2.msra.mxu0 %v5654
      %5845 = vmatprep.subr.mxu0 %v5652
      %5846 = vmatpush2.msra.mxu0 %v5651
      %5847 = vmatprep.mubr.f32.mxu0 %v5275
      %5848 = vmatmul.mubr.f32.gmra.mxu0 %v5272
      %v5849 = vpop.f32.mrf.mxu0
      %v5850 = vadd.f32 0.0, %v5849
      %v5851 = vpop.f32.mrf.mxu0
      %v5852 = vadd.f32 0.0, %v5851
      %5853 = vmatprep.mubr.f32.mxu0 %v5274
      %5854 = vmatmul.mubr.f32.gmra.mxu0 %v5271
      %v5855 = vpop.f32.mrf.mxu0
      %v5856 = vadd.f32 0.0, %v5855
      %v5857 = vpop.f32.mrf.mxu0
      %v5858 = vadd.f32 0.0, %v5857
      %5859 = vdwg.mxu0
      %5860 = vmatprep.subr.mxu0 %v5745
      %5861 = vmatpush1.msra.mxu0 %v5744
      %5862 = vmatprep.subr.mxu0 %v5742
      %5863 = vmatpush1.msra.mxu0 %v5741
      %5864 = vmatprep.subr.mxu0 %v5739
      %5865 = vmatpush1.msra.mxu0 %v5738
      %5866 = vmatprep.subr.mxu0 %v5736
      %5867 = vmatpush1.msra.mxu0 %v5735
      %5868 = vmatprep.subr.mxu0 %v5733
      %5869 = vmatpush1.msra.mxu0 %v5732
      %5870 = vmatprep.subr.mxu0 %v5730
      %5871 = vmatpush1.msra.mxu0 %v5729
      %5872 = vmatprep.subr.mxu0 %v5727
      %5873 = vmatpush1.msra.mxu0 %v5726
      %5874 = vmatprep.subr.mxu0 %v5724
      %5875 = vmatpush1.msra.mxu0 %v5723
      %5876 = vmatprep.subr.mxu0 %v5721
      %5877 = vmatpush1.msra.mxu0 %v5720
      %5878 = vmatprep.subr.mxu0 %v5718
      %5879 = vmatpush1.msra.mxu0 %v5717
      %5880 = vmatprep.subr.mxu0 %v5715
      %5881 = vmatpush1.msra.mxu0 %v5714
      %5882 = vmatprep.subr.mxu0 %v5712
      %5883 = vmatpush1.msra.mxu0 %v5711
      %5884 = vmatprep.subr.mxu0 %v5709
      %5885 = vmatpush1.msra.mxu0 %v5708
      %5886 = vmatprep.subr.mxu0 %v5706
      %5887 = vmatpush1.msra.mxu0 %v5705
      %5888 = vmatprep.subr.mxu0 %v5703
      %5889 = vmatpush1.msra.mxu0 %v5702
      %5890 = vmatprep.subr.mxu0 %v5700
      %5891 = vmatpush1.msra.mxu0 %v5699
      %5892 = vmatprep.subr.mxu0 0.0
      %5893 = vmatpush2.msra.mxu0 0.0
      %5894 = vmatprep.subr.mxu0 0.0
      %5895 = vmatpush2.msra.mxu0 0.0
      %5896 = vmatprep.subr.mxu0 0.0
      %5897 = vmatpush2.msra.mxu0 0.0
      %5898 = vmatprep.subr.mxu0 0.0
      %5899 = vmatpush2.msra.mxu0 0.0
      %5900 = vmatprep.subr.mxu0 %v5781
      %5901 = vmatpush2.msra.mxu0 %v5780
      %5902 = vmatprep.subr.mxu0 %v5778
      %5903 = vmatpush2.msra.mxu0 %v5777
      %5904 = vmatprep.subr.mxu0 %v5775
      %5905 = vmatpush2.msra.mxu0 %v5774
      %5906 = vmatprep.subr.mxu0 %v5772
      %5907 = vmatpush2.msra.mxu0 %v5771
      %5908 = vmatprep.subr.mxu0 %v5769
      %5909 = vmatpush2.msra.mxu0 %v5768
      %5910 = vmatprep.subr.mxu0 %v5766
      %5911 = vmatpush2.msra.mxu0 %v5765
      %5912 = vmatprep.subr.mxu0 %v5763
      %5913 = vmatpush2.msra.mxu0 %v5762
      %5914 = vmatprep.subr.mxu0 %v5760
      %5915 = vmatpush2.msra.mxu0 %v5759
      %5916 = vmatprep.subr.mxu0 %v5757
      %5917 = vmatpush2.msra.mxu0 %v5756
      %5918 = vmatprep.subr.mxu0 %v5754
      %5919 = vmatpush2.msra.mxu0 %v5753
      %5920 = vmatprep.subr.mxu0 %v5751
      %5921 = vmatpush2.msra.mxu0 %v5750
      %5922 = vmatprep.subr.mxu0 %v5748
      %5923 = vmatpush2.msra.mxu0 %v5747
      %5924 = vmatprep.mubr.f32.mxu0 %v5288
      %5925 = vmatmul.mubr.f32.gmra.mxu0 %v5278
      %v5926 = vpop.f32.mrf.mxu0
      %v5927 = vadd.f32 %v5850, %v5926
      %v5928 = vpop.f32.mrf.mxu0
      %v5929 = vadd.f32 %v5852, %v5928
      %5930 = vmatprep.mubr.f32.mxu0 %v5290
      %5931 = vmatmul.mubr.f32.gmra.mxu0 %v5277
      %v5932 = vpop.f32.mrf.mxu0
      %v5933 = vadd.f32 %v5856, %v5932
      %v5934 = vpop.f32.mrf.mxu0
      %v5935 = vadd.f32 %v5858, %v5934
      %5936 = vdwg.mxu0
      %5937 = vmatprep.subr.mxu0 0.0
      %5938 = vmatpush1.msra.mxu0 %v5650
      %5939 = vmatprep.subr.mxu0 0.0
      %5940 = vmatpush1.msra.mxu0 %v5647
      %5941 = vmatprep.subr.mxu0 0.0
      %5942 = vmatpush1.msra.mxu0 %v5644
      %5943 = vmatprep.subr.mxu0 0.0
      %5944 = vmatpush1.msra.mxu0 %v5641
      %5945 = vmatprep.subr.mxu0 0.0
      %5946 = vmatpush1.msra.mxu0 %v5638
      %5947 = vmatprep.subr.mxu0 0.0
      %5948 = vmatpush1.msra.mxu0 %v5635
      %5949 = vmatprep.subr.mxu0 0.0
      %5950 = vmatpush1.msra.mxu0 %v5632
      %5951 = vmatprep.subr.mxu0 0.0
      %5952 = vmatpush1.msra.mxu0 %v5629
      %5953 = vmatprep.subr.mxu0 0.0
      %5954 = vmatpush1.msra.mxu0 %v5626
      %5955 = vmatprep.subr.mxu0 0.0
      %5956 = vmatpush1.msra.mxu0 %v5623
      %5957 = vmatprep.subr.mxu0 0.0
      %5958 = vmatpush1.msra.mxu0 %v5620
      %5959 = vmatprep.subr.mxu0 0.0
      %5960 = vmatpush1.msra.mxu0 %v5617
      %5961 = vmatprep.subr.mxu0 0.0
      %5962 = vmatpush1.msra.mxu0 %v5614
      %5963 = vmatprep.subr.mxu0 0.0
      %5964 = vmatpush1.msra.mxu0 %v5611
      %5965 = vmatprep.subr.mxu0 0.0
      %5966 = vmatpush1.msra.mxu0 %v5608
      %5967 = vmatprep.subr.mxu0 0.0
      %5968 = vmatpush1.msra.mxu0 %v5605
      %5969 = vmatprep.subr.mxu0 0.0
      %5970 = vmatpush2.msra.mxu0 %v5698
      %5971 = vmatprep.subr.mxu0 0.0
      %5972 = vmatpush2.msra.mxu0 %v5695
      %5973 = vmatprep.subr.mxu0 0.0
      %5974 = vmatpush2.msra.mxu0 %v5692
      %5975 = vmatprep.subr.mxu0 0.0
      %5976 = vmatpush2.msra.mxu0 %v5689
      %5977 = vmatprep.subr.mxu0 0.0
      %5978 = vmatpush2.msra.mxu0 %v5686
      %5979 = vmatprep.subr.mxu0 0.0
      %5980 = vmatpush2.msra.mxu0 %v5683
      %5981 = vmatprep.subr.mxu0 0.0
      %5982 = vmatpush2.msra.mxu0 %v5680
      %5983 = vmatprep.subr.mxu0 0.0
      %5984 = vmatpush2.msra.mxu0 %v5677
      %5985 = vmatprep.subr.mxu0 0.0
      %5986 = vmatpush2.msra.mxu0 %v5674
      %5987 = vmatprep.subr.mxu0 0.0
      %5988 = vmatpush2.msra.mxu0 %v5671
      %5989 = vmatprep.subr.mxu0 0.0
      %5990 = vmatpush2.msra.mxu0 %v5668
      %5991 = vmatprep.subr.mxu0 0.0
      %5992 = vmatpush2.msra.mxu0 %v5665
      %5993 = vmatprep.subr.mxu0 0.0
      %5994 = vmatpush2.msra.mxu0 %v5662
      %5995 = vmatprep.subr.mxu0 0.0
      %5996 = vmatpush2.msra.mxu0 %v5659
      %5997 = vmatprep.subr.mxu0 0.0
      %5998 = vmatpush2.msra.mxu0 %v5656
      %5999 = vmatprep.subr.mxu0 0.0
      %6000 = vmatpush2.msra.mxu0 %v5653
      %6001 = vmatprep.mubr.f32.mxu0 %v5275
      %6002 = vmatmul.mubr.f32.gmra.mxu0 %v5272
      %v6003 = vpop.f32.mrf.mxu0
      %v6004 = vadd.f32 0.0, %v6003
      %v6005 = vpop.f32.mrf.mxu0
      %6006 = vmatprep.mubr.f32.mxu0 %v5274
      %6007 = vmatmul.mubr.f32.gmra.mxu0 %v5271
      %v6008 = vpop.f32.mrf.mxu0
      %v6009 = vadd.f32 0.0, %v6008
      %v6010 = vpop.f32.mrf.mxu0
      %6011 = vdwg.mxu0
      %6012 = vmatprep.subr.mxu0 0.0
      %6013 = vmatpush1.msra.mxu0 %v5746
      %6014 = vmatprep.subr.mxu0 0.0
      %6015 = vmatpush1.msra.mxu0 %v5743
      %6016 = vmatprep.subr.mxu0 0.0
      %6017 = vmatpush1.msra.mxu0 %v5740
      %6018 = vmatprep.subr.mxu0 0.0
      %6019 = vmatpush1.msra.mxu0 %v5737
      %6020 = vmatprep.subr.mxu0 0.0
      %6021 = vmatpush1.msra.mxu0 %v5734
      %6022 = vmatprep.subr.mxu0 0.0
      %6023 = vmatpush1.msra.mxu0 %v5731
      %6024 = vmatprep.subr.mxu0 0.0
      %6025 = vmatpush1.msra.mxu0 %v5728
      %6026 = vmatprep.subr.mxu0 0.0
      %6027 = vmatpush1.msra.mxu0 %v5725
      %6028 = vmatprep.subr.mxu0 0.0
      %6029 = vmatpush1.msra.mxu0 %v5722
      %6030 = vmatprep.subr.mxu0 0.0
      %6031 = vmatpush1.msra.mxu0 %v5719
      %6032 = vmatprep.subr.mxu0 0.0
      %6033 = vmatpush1.msra.mxu0 %v5716
      %6034 = vmatprep.subr.mxu0 0.0
      %6035 = vmatpush1.msra.mxu0 %v5713
      %6036 = vmatprep.subr.mxu0 0.0
      %6037 = vmatpush1.msra.mxu0 %v5710
      %6038 = vmatprep.subr.mxu0 0.0
      %6039 = vmatpush1.msra.mxu0 %v5707
      %6040 = vmatprep.subr.mxu0 0.0
      %6041 = vmatpush1.msra.mxu0 %v5704
      %6042 = vmatprep.subr.mxu0 0.0
      %6043 = vmatpush1.msra.mxu0 %v5701
      %6044 = vmatprep.subr.mxu0 0.0
      %6045 = vmatpush2.msra.mxu0 0.0
      %6046 = vmatprep.subr.mxu0 0.0
      %6047 = vmatpush2.msra.mxu0 0.0
      %6048 = vmatprep.subr.mxu0 0.0
      %6049 = vmatpush2.msra.mxu0 0.0
      %6050 = vmatprep.subr.mxu0 0.0
      %6051 = vmatpush2.msra.mxu0 0.0
      %6052 = vmatprep.subr.mxu0 0.0
      %6053 = vmatpush2.msra.mxu0 %v5782
      %6054 = vmatprep.subr.mxu0 0.0
      %6055 = vmatpush2.msra.mxu0 %v5779
      %6056 = vmatprep.subr.mxu0 0.0
      %6057 = vmatpush2.msra.mxu0 %v5776
      %6058 = vmatprep.subr.mxu0 0.0
      %6059 = vmatpush2.msra.mxu0 %v5773
      %6060 = vmatprep.subr.mxu0 0.0
      %6061 = vmatpush2.msra.mxu0 %v5770
      %6062 = vmatprep.subr.mxu0 0.0
      %6063 = vmatpush2.msra.mxu0 %v5767
      %6064 = vmatprep.subr.mxu0 0.0
      %6065 = vmatpush2.msra.mxu0 %v5764
      %6066 = vmatprep.subr.mxu0 0.0
      %6067 = vmatpush2.msra.mxu0 %v5761
      %6068 = vmatprep.subr.mxu0 0.0
      %6069 = vmatpush2.msra.mxu0 %v5758
      %6070 = vmatprep.subr.mxu0 0.0
      %6071 = vmatpush2.msra.mxu0 %v5755
      %6072 = vmatprep.subr.mxu0 0.0
      %6073 = vmatpush2.msra.mxu0 %v5752
      %6074 = vmatprep.subr.mxu0 0.0
      %6075 = vmatpush2.msra.mxu0 %v5749
      %6076 = vmatprep.mubr.f32.mxu0 %v5288
      %6077 = vmatmul.mubr.f32.gmra.mxu0 %v5278
      %v6078 = vpop.f32.mrf.mxu0
      %v6079 = vadd.f32 %v6004, %v6078
      %v6080 = vpop.f32.mrf.mxu0
      %6081 = vmatprep.mubr.f32.mxu0 %v5290
      %6082 = vmatmul.mubr.f32.gmra.mxu0 %v5277
      %v6083 = vpop.f32.mrf.mxu0
      %v6084 = vadd.f32 %v6009, %v6083
      %v6085 = vpop.f32.mrf.mxu0
      %6086 = vdwg.mxu0
      %v6087 = vadd.f32 %v5083, %v5927
      %v6088 = vadd.f32 %v5084, %v5929
      %v6089 = vadd.f32 %v5085, %v6079
      %v6090 = vadd.f32 %v5086, %v5933
      %v6091 = vadd.f32 %v5087, %v5935
      %v6092 = vadd.f32 %v5088, %v6084
      %s6093 = scalar_lea.vmem %s3, 5760
      %v6094 = vld [vmem:[%s6093] sm:$0xff]
      %v6095 = vld [vmem:[%s6093 + $0x8] sm:$0xff]
      %v6096 = vld [vmem:[%s6093 + $0x10] sm:$0xff]
      %v6097 = vld [vmem:[%s6093 + $0x18] sm:$0xff]
      %v6098 = vld [vmem:[%s6093 + $0x20] sm:$0xff]
      %v6099 = vld [vmem:[%s6093 + $0x28] sm:$0xff]
      %v6100 = vld [vmem:[%s6093 + $0x30] sm:$0xff]
      %v6101 = vld [vmem:[%s6093 + $0x38] sm:$0xff]
      %v6102 = vld [vmem:[%s6093 + $0x40] sm:$0xff]
      %v6103 = vld [vmem:[%s6093 + $0x48] sm:$0xff]
      %v6104 = vld [vmem:[%s6093 + $0x50] sm:$0xff]
      %v6105 = vld [vmem:[%s6093 + $0x58] sm:$0xff]
      %v6106 = vld [vmem:[%s6093 + $0x60] sm:$0xff]
      %v6107 = vld [vmem:[%s6093 + $0x68] sm:$0xff]
      %v6108 = vld [vmem:[%s6093 + $0x70] sm:$0xff]
      %v6109 = vld [vmem:[%s6093 + $0x78] sm:$0xff]
      %v6110 = vld [vmem:[%s6093 + $0x80] sm:$0xff]
      %v6111 = vld [vmem:[%s6093 + $0x88] sm:$0xff]
      %v6112 = vld [vmem:[%s6093 + $0x90] sm:$0xff]
      %v6113 = vld [vmem:[%s6093 + $0x98] sm:$0xff]
      %v6114 = vld [vmem:[%s6093 + $0xa0] sm:$0xff]
      %v6115 = vld [vmem:[%s6093 + $0xa8] sm:$0xff]
      %v6116 = vld [vmem:[%s6093 + $0xb0] sm:$0xff]
      %v6117 = vld [vmem:[%s6093 + $0xb8] sm:$0xff]
      %v6118 = vld [vmem:[%s6093 + $0xc0] sm:$0xff]
      %v6119 = vld [vmem:[%s6093 + $0xc8] sm:$0xff]
      %v6120 = vld [vmem:[%s6093 + $0xd0] sm:$0xff]
      %v6121 = vld [vmem:[%s6093 + $0xd8] sm:$0xff]
      %v6122 = vld [vmem:[%s6093 + $0xe0] sm:$0xff]
      %v6123 = vld [vmem:[%s6093 + $0xe8] sm:$0xff]
      %v6124 = vld [vmem:[%s6093 + $0xf0] sm:$0xff]
      %v6125 = vld [vmem:[%s6093 + $0xf8] sm:$0xff]
      %v6126 = vld [vmem:[%s6093 + $0x100] sm:$0xff]
      %v6127 = vld [vmem:[%s6093 + $0x108] sm:$0xff]
      %v6128 = vld [vmem:[%s6093 + $0x110] sm:$0xff]
      %v6129 = vld [vmem:[%s6093 + $0x118] sm:$0xff]
      %v6130 = vld [vmem:[%s6093 + $0x120] sm:$0xff]
      %v6131 = vld [vmem:[%s6093 + $0x128] sm:$0xff]
      %v6132 = vld [vmem:[%s6093 + $0x130] sm:$0xff]
      %v6133 = vld [vmem:[%s6093 + $0x138] sm:$0xff]
      %v6134 = vld [vmem:[%s6093 + $0x140] sm:$0xff]
      %v6135 = vld [vmem:[%s6093 + $0x148] sm:$0xff]
      %v6136 = vld [vmem:[%s6093 + $0x150] sm:$0xff]
      %v6137 = vld [vmem:[%s6093 + $0x158] sm:$0xff]
      %v6138 = vld [vmem:[%s6093 + $0x160] sm:$0xff]
      %v6139 = vld [vmem:[%s6093 + $0x168] sm:$0xff]
      %v6140 = vld [vmem:[%s6093 + $0x170] sm:$0xff]
      %v6141 = vld [vmem:[%s6093 + $0x178] sm:$0xff]
      %v6142 = vld [vmem:[%s6093 + $0x180] sm:$0xff]
      %v6143 = vld [vmem:[%s6093 + $0x188] sm:$0xff]
      %v6144 = vld [vmem:[%s6093 + $0x190] sm:$0xff]
      %v6145 = vld [vmem:[%s6093 + $0x198] sm:$0xff]
      %v6146 = vld [vmem:[%s6093 + $0x1a0] sm:$0xff]
      %v6147 = vld [vmem:[%s6093 + $0x1a8] sm:$0xff]
      %v6148 = vld [vmem:[%s6093 + $0x1b0] sm:$0xff]
      %v6149 = vld [vmem:[%s6093 + $0x1b8] sm:$0xff]
      %v6150 = vld [vmem:[%s6093 + $0x1c0] sm:$0xff]
      %v6151 = vld [vmem:[%s6093 + $0x1c8] sm:$0xff]
      %v6152 = vld [vmem:[%s6093 + $0x1d0] sm:$0xff]
      %v6153 = vld [vmem:[%s6093 + $0x1d8] sm:$0xff]
      %v6154 = vld [vmem:[%s6093 + $0x1e0] sm:$0xff]
      %v6155 = vld [vmem:[%s6093 + $0x1e8] sm:$0xff]
      %v6156 = vld [vmem:[%s6093 + $0x1f0] sm:$0xff]
      %v6157 = vld [vmem:[%s6093 + $0x1f8] sm:$0xff]
      %v6158 = vld [vmem:[%s6093 + $0x200] sm:$0xff]
      %v6159 = vld [vmem:[%s6093 + $0x208] sm:$0xff]
      %v6160 = vld [vmem:[%s6093 + $0x210] sm:$0xff]
      %v6161 = vld [vmem:[%s6093 + $0x218] sm:$0xff]
      %v6162 = vld [vmem:[%s6093 + $0x220] sm:$0xff]
      %v6163 = vld [vmem:[%s6093 + $0x228] sm:$0xff]
      %v6164 = vld [vmem:[%s6093 + $0x230] sm:$0xff]
      %v6165 = vld [vmem:[%s6093 + $0x238] sm:$0xff]
      %v6166 = vld [vmem:[%s6093 + $0x240] sm:$0xff]
      %v6167 = vld [vmem:[%s6093 + $0x248] sm:$0xff]
      %v6168 = vld [vmem:[%s6093 + $0x250] sm:$0xff]
      %v6169 = vld [vmem:[%s6093 + $0x258] sm:$0xff]
      %v6170 = vld [vmem:[%s6093 + $0x260] sm:$0xff]
      %v6171 = vld [vmem:[%s6093 + $0x268] sm:$0xff]
      %v6172 = vld [vmem:[%s6093 + $0x270] sm:$0xff]
      %v6173 = vld [vmem:[%s6093 + $0x278] sm:$0xff]
      %v6174 = vld [vmem:[%s6093 + $0x280] sm:$0xff]
      %v6175 = vld [vmem:[%s6093 + $0x288] sm:$0xff]
      %v6176 = vld [vmem:[%s6093 + $0x290] sm:$0xff]
      %v6177 = vld [vmem:[%s6093 + $0x298] sm:$0xff]
      %v6178 = vld [vmem:[%s6093 + $0x2a0] sm:$0xff]
      %v6179 = vld [vmem:[%s6093 + $0x2a8] sm:$0xff]
      %v6180 = vld [vmem:[%s6093 + $0x2b0] sm:$0xff]
      %v6181 = vld [vmem:[%s6093 + $0x2b8] sm:$0xff]
      %v6182 = vld [vmem:[%s6093 + $0x2c0] sm:$0xff]
      %v6183 = vld [vmem:[%s6093 + $0x2c8] sm:$0xff]
      %v6184 = vld [vmem:[%s6093 + $0x2d0] sm:$0xff]
      %v6185 = vld [vmem:[%s6093 + $0x2d8] sm:$0xff]
      %v6186 = vld [vmem:[%s6093 + $0x2e0] sm:$0xff]
      %v6187 = vld [vmem:[%s6093 + $0x2e8] sm:$0xff]
      %v6188 = vld [vmem:[%s6093 + $0x2f0] sm:$0xff]
      %v6189 = vld [vmem:[%s6093 + $0x2f8] sm:$0xff]
      %v6190 = vld [vmem:[%s6093 + $0x300] sm:$0xff]
      %v6191 = vld [vmem:[%s6093 + $0x308] sm:$0xff]
      %v6192 = vld [vmem:[%s6093 + $0x310] sm:$0xff]
      %v6193 = vld [vmem:[%s6093 + $0x318] sm:$0xff]
      %v6194 = vld [vmem:[%s6093 + $0x320] sm:$0xff]
      %v6195 = vld [vmem:[%s6093 + $0x328] sm:$0xff]
      %v6196 = vld [vmem:[%s6093 + $0x330] sm:$0xff]
      %v6197 = vld [vmem:[%s6093 + $0x338] sm:$0xff]
      %v6198 = vld [vmem:[%s6093 + $0x340] sm:$0xff]
      %v6199 = vld [vmem:[%s6093 + $0x348] sm:$0xff]
      %v6200 = vld [vmem:[%s6093 + $0x350] sm:$0xff]
      %v6201 = vld [vmem:[%s6093 + $0x358] sm:$0xff]
      %v6202 = vld [vmem:[%s6093 + $0x360] sm:$0xff]
      %v6203 = vld [vmem:[%s6093 + $0x368] sm:$0xff]
      %v6204 = vld [vmem:[%s6093 + $0x370] sm:$0xff]
      %v6205 = vld [vmem:[%s6093 + $0x378] sm:$0xff]
      %v6206 = vld [vmem:[%s6093 + $0x380] sm:$0xff]
      %v6207 = vld [vmem:[%s6093 + $0x388] sm:$0xff]
      %v6208 = vld [vmem:[%s6093 + $0x390] sm:$0xff]
      %v6209 = vld [vmem:[%s6093 + $0x398] sm:$0xff]
      %v6210 = vld [vmem:[%s6093 + $0x3a0] sm:$0xff]
      %v6211 = vld [vmem:[%s6093 + $0x3a8] sm:$0xff]
      %v6212 = vld [vmem:[%s6093 + $0x3b0] sm:$0xff]
      %v6213 = vld [vmem:[%s6093 + $0x3b8] sm:$0xff]
      %v6214 = vld [vmem:[%s6093 + $0x3c0] sm:$0xff]
      %v6215 = vld [vmem:[%s6093 + $0x3c8] sm:$0xff]
      %v6216 = vld [vmem:[%s6093 + $0x3d0] sm:$0xff]
      %v6217 = vld [vmem:[%s6093 + $0x3d8] sm:$0xff]
      %v6218 = vld [vmem:[%s6093 + $0x3e0] sm:$0xff]
      %v6219 = vld [vmem:[%s6093 + $0x3e8] sm:$0xff]
      %v6220 = vld [vmem:[%s6093 + $0x3f0] sm:$0xff]
      %v6221 = vld [vmem:[%s6093 + $0x3f8] sm:$0xff]
      %v6222 = vld [vmem:[%s6093 + $0x400] sm:$0xff]
      %v6223 = vld [vmem:[%s6093 + $0x408] sm:$0xff]
      %v6224 = vld [vmem:[%s6093 + $0x410] sm:$0xff]
      %v6225 = vld [vmem:[%s6093 + $0x418] sm:$0xff]
      %v6226 = vld [vmem:[%s6093 + $0x420] sm:$0xff]
      %v6227 = vld [vmem:[%s6093 + $0x428] sm:$0xff]
      %v6228 = vld [vmem:[%s6093 + $0x430] sm:$0xff]
      %v6229 = vld [vmem:[%s6093 + $0x438] sm:$0xff]
      %v6230 = vld [vmem:[%s6093 + $0x440] sm:$0xff]
      %v6231 = vld [vmem:[%s6093 + $0x448] sm:$0xff]
      %v6232 = vld [vmem:[%s6093 + $0x450] sm:$0xff]
      %v6233 = vld [vmem:[%s6093 + $0x458] sm:$0xff]
      %v6234 = vld [vmem:[%s6093 + $0x460] sm:$0xff]
      %v6235 = vld [vmem:[%s6093 + $0x468] sm:$0xff]
      %v6236 = vld [vmem:[%s6093 + $0x470] sm:$0xff]
      %v6237 = vld [vmem:[%s6093 + $0x478] sm:$0xff]
      %v6238 = vld [vmem:[%s6093 + $0x480] sm:$0xff]
      %v6239 = vld [vmem:[%s6093 + $0x488] sm:$0xff]
      %v6240 = vld [vmem:[%s6093 + $0x490] sm:$0xff]
      %v6241 = vld [vmem:[%s6093 + $0x498] sm:$0xff]
      %v6242 = vld [vmem:[%s6093 + $0x4a0] sm:$0xff]
      %v6243 = vld [vmem:[%s6093 + $0x4a8] sm:$0xff]
      %v6244 = vld [vmem:[%s6093 + $0x4b0] sm:$0xff]
      %v6245 = vld [vmem:[%s6093 + $0x4b8] sm:$0xff]
      %v6246 = vld [vmem:[%s6093 + $0x4c0] sm:$0xff]
      %v6247 = vld [vmem:[%s6093 + $0x4c8] sm:$0xff]
      %v6248 = vld [vmem:[%s6093 + $0x4d0] sm:$0xff]
      %v6249 = vld [vmem:[%s6093 + $0x4d8] sm:$0xff]
      %v6250 = vld [vmem:[%s6093 + $0x4e0] sm:$0xff]
      %v6251 = vld [vmem:[%s6093 + $0x4e8] sm:$0xff]
      %v6252 = vld [vmem:[%s6093 + $0x4f0] sm:$0xff]
      %v6253 = vld [vmem:[%s6093 + $0x4f8] sm:$0xff]
      %v6254 = vld [vmem:[%s6093 + $0x500] sm:$0xff]
      %v6255 = vld [vmem:[%s6093 + $0x508] sm:$0xff]
      %v6256 = vld [vmem:[%s6093 + $0x510] sm:$0xff]
      %v6257 = vld [vmem:[%s6093 + $0x518] sm:$0xff]
      %v6258 = vld [vmem:[%s6093 + $0x520] sm:$0xff]
      %v6259 = vld [vmem:[%s6093 + $0x528] sm:$0xff]
      %v6260 = vld [vmem:[%s6093 + $0x530] sm:$0xff]
      %v6261 = vld [vmem:[%s6093 + $0x538] sm:$0xff]
      %v6262 = vld [vmem:[%s6093 + $0x540] sm:$0xff]
      %v6263 = vld [vmem:[%s6093 + $0x548] sm:$0xff]
      %v6264 = vld [vmem:[%s6093 + $0x550] sm:$0xff]
      %v6265 = vld [vmem:[%s6093 + $0x558] sm:$0xff]
      %v6266 = vld [vmem:[%s6093 + $0x560] sm:$0xff]
      %v6267 = vld [vmem:[%s6093 + $0x568] sm:$0xff]
      %v6268 = vld [vmem:[%s6093 + $0x570] sm:$0xff]
      %v6269 = vld [vmem:[%s6093 + $0x578] sm:$0xff]
      %v6270 = vld [vmem:[%s6093 + $0x580] sm:$0xff]
      %v6271 = vld [vmem:[%s6093 + $0x588] sm:$0xff]
      %v6272 = vld [vmem:[%s6093 + $0x590] sm:$0xff]
      %v6273 = vld [vmem:[%s6093 + $0x598] sm:$0xff]
      %v6274 = vrot.slane %v2105, 4
      %v6275 = vrot.slane %v2109, 4
      %v6276 = vsel %vm2041, %v6274, %v6275
      %v6277 = vrot.slane %v2106, 4
      %v6278 = vrot.slane %v2110, 4
      %v6279 = vsel %vm2041, %v6277, %v6278
      %v6280 = vrot.slane %v2107, 4
      %v6281 = vrot.slane %v2111, 4
      %v6282 = vsel %vm2041, %v6280, %v6281
      %v6283 = vrot.slane %v2108, 4
      %v6284 = vrot.slane %v2112, 4
      %v6285 = vsel %vm2041, %v6283, %v6284
      %v6292 = vsel %vm546, %v6285, 0
      %v6294 = vsel %vm546, %v6284, 0
      %6296 = vmatprep.subr.mxu0 %v6140
      %6297 = vmatpush1.msra.mxu0 %v6139
      %6298 = vmatprep.subr.mxu0 %v6137
      %6299 = vmatpush1.msra.mxu0 %v6136
      %6300 = vmatprep.subr.mxu0 %v6134
      %6301 = vmatpush1.msra.mxu0 %v6133
      %6302 = vmatprep.subr.mxu0 %v6131
      %6303 = vmatpush1.msra.mxu0 %v6130
      %6304 = vmatprep.subr.mxu0 %v6128
      %6305 = vmatpush1.msra.mxu0 %v6127
      %6306 = vmatprep.subr.mxu0 %v6125
      %6307 = vmatpush1.msra.mxu0 %v6124
      %6308 = vmatprep.subr.mxu0 %v6122
      %6309 = vmatpush1.msra.mxu0 %v6121
      %6310 = vmatprep.subr.mxu0 %v6119
      %6311 = vmatpush1.msra.mxu0 %v6118
      %6312 = vmatprep.subr.mxu0 %v6116
      %6313 = vmatpush1.msra.mxu0 %v6115
      %6314 = vmatprep.subr.mxu0 %v6113
      %6315 = vmatpush1.msra.mxu0 %v6112
      %6316 = vmatprep.subr.mxu0 %v6110
      %6317 = vmatpush1.msra.mxu0 %v6109
      %6318 = vmatprep.subr.mxu0 %v6107
      %6319 = vmatpush1.msra.mxu0 %v6106
      %6320 = vmatprep.subr.mxu0 %v6104
      %6321 = vmatpush1.msra.mxu0 %v6103
      %6322 = vmatprep.subr.mxu0 %v6101
      %6323 = vmatpush1.msra.mxu0 %v6100
      %6324 = vmatprep.subr.mxu0 %v6098
      %6325 = vmatpush1.msra.mxu0 %v6097
      %6326 = vmatprep.subr.mxu0 %v6095
      %6327 = vmatpush1.msra.mxu0 %v6094
      %6328 = vmatprep.subr.mxu0 %v6188
      %6329 = vmatpush2.msra.mxu0 %v6187
      %6330 = vmatprep.subr.mxu0 %v6185
      %6331 = vmatpush2.msra.mxu0 %v6184
      %6332 = vmatprep.subr.mxu0 %v6182
      %6333 = vmatpush2.msra.mxu0 %v6181
      %6334 = vmatprep.subr.mxu0 %v6179
      %6335 = vmatpush2.msra.mxu0 %v6178
      %6336 = vmatprep.subr.mxu0 %v6176
      %6337 = vmatpush2.msra.mxu0 %v6175
      %6338 = vmatprep.subr.mxu0 %v6173
      %6339 = vmatpush2.msra.mxu0 %v6172
      %6340 = vmatprep.subr.mxu0 %v6170
      %6341 = vmatpush2.msra.mxu0 %v6169
      %6342 = vmatprep.subr.mxu0 %v6167
      %6343 = vmatpush2.msra.mxu0 %v6166
      %6344 = vmatprep.subr.mxu0 %v6164
      %6345 = vmatpush2.msra.mxu0 %v6163
      %6346 = vmatprep.subr.mxu0 %v6161
      %6347 = vmatpush2.msra.mxu0 %v6160
      %6348 = vmatprep.subr.mxu0 %v6158
      %6349 = vmatpush2.msra.mxu0 %v6157
      %6350 = vmatprep.subr.mxu0 %v6155
      %6351 = vmatpush2.msra.mxu0 %v6154
      %6352 = vmatprep.subr.mxu0 %v6152
      %6353 = vmatpush2.msra.mxu0 %v6151
      %6354 = vmatprep.subr.mxu0 %v6149
      %6355 = vmatpush2.msra.mxu0 %v6148
      %6356 = vmatprep.subr.mxu0 %v6146
      %6357 = vmatpush2.msra.mxu0 %v6145
      %6358 = vmatprep.subr.mxu0 %v6143
      %6359 = vmatpush2.msra.mxu0 %v6142
      %6360 = vmatprep.mubr.f32.mxu0 %v6279
      %6361 = vmatmul.mubr.f32.gmra.mxu0 %v6276
      %v6362 = vpop.f32.mrf.mxu0
      %v6363 = vadd.f32 0.0, %v6362
      %v6364 = vpop.f32.mrf.mxu0
      %v6365 = vadd.f32 0.0, %v6364
      %6366 = vmatprep.mubr.f32.mxu0 %v6278
      %6367 = vmatmul.mubr.f32.gmra.mxu0 %v6275
      %v6368 = vpop.f32.mrf.mxu0
      %v6369 = vadd.f32 0.0, %v6368
      %v6370 = vpop.f32.mrf.mxu0
      %v6371 = vadd.f32 0.0, %v6370
      %6372 = vdwg.mxu0
      %6373 = vmatprep.subr.mxu0 %v6236
      %6374 = vmatpush1.msra.mxu0 %v6235
      %6375 = vmatprep.subr.mxu0 %v6233
      %6376 = vmatpush1.msra.mxu0 %v6232
      %6377 = vmatprep.subr.mxu0 %v6230
      %6378 = vmatpush1.msra.mxu0 %v6229
      %6379 = vmatprep.subr.mxu0 %v6227
      %6380 = vmatpush1.msra.mxu0 %v6226
      %6381 = vmatprep.subr.mxu0 %v6224
      %6382 = vmatpush1.msra.mxu0 %v6223
      %6383 = vmatprep.subr.mxu0 %v6221
      %6384 = vmatpush1.msra.mxu0 %v6220
      %6385 = vmatprep.subr.mxu0 %v6218
      %6386 = vmatpush1.msra.mxu0 %v6217
      %6387 = vmatprep.subr.mxu0 %v6215
      %6388 = vmatpush1.msra.mxu0 %v6214
      %6389 = vmatprep.subr.mxu0 %v6212
      %6390 = vmatpush1.msra.mxu0 %v6211
      %6391 = vmatprep.subr.mxu0 %v6209
      %6392 = vmatpush1.msra.mxu0 %v6208
      %6393 = vmatprep.subr.mxu0 %v6206
      %6394 = vmatpush1.msra.mxu0 %v6205
      %6395 = vmatprep.subr.mxu0 %v6203
      %6396 = vmatpush1.msra.mxu0 %v6202
      %6397 = vmatprep.subr.mxu0 %v6200
      %6398 = vmatpush1.msra.mxu0 %v6199
      %6399 = vmatprep.subr.mxu0 %v6197
      %6400 = vmatpush1.msra.mxu0 %v6196
      %6401 = vmatprep.subr.mxu0 %v6194
      %6402 = vmatpush1.msra.mxu0 %v6193
      %6403 = vmatprep.subr.mxu0 %v6191
      %6404 = vmatpush1.msra.mxu0 %v6190
      %6405 = vmatprep.subr.mxu0 0.0
      %6406 = vmatpush2.msra.mxu0 0.0
      %6407 = vmatprep.subr.mxu0 0.0
      %6408 = vmatpush2.msra.mxu0 0.0
      %6409 = vmatprep.subr.mxu0 0.0
      %6410 = vmatpush2.msra.mxu0 0.0
      %6411 = vmatprep.subr.mxu0 0.0
      %6412 = vmatpush2.msra.mxu0 0.0
      %6413 = vmatprep.subr.mxu0 %v6272
      %6414 = vmatpush2.msra.mxu0 %v6271
      %6415 = vmatprep.subr.mxu0 %v6269
      %6416 = vmatpush2.msra.mxu0 %v6268
      %6417 = vmatprep.subr.mxu0 %v6266
      %6418 = vmatpush2.msra.mxu0 %v6265
      %6419 = vmatprep.subr.mxu0 %v6263
      %6420 = vmatpush2.msra.mxu0 %v6262
      %6421 = vmatprep.subr.mxu0 %v6260
      %6422 = vmatpush2.msra.mxu0 %v6259
      %6423 = vmatprep.subr.mxu0 %v6257
      %6424 = vmatpush2.msra.mxu0 %v6256
      %6425 = vmatprep.subr.mxu0 %v6254
      %6426 = vmatpush2.msra.mxu0 %v6253
      %6427 = vmatprep.subr.mxu0 %v6251
      %6428 = vmatpush2.msra.mxu0 %v6250
      %6429 = vmatprep.subr.mxu0 %v6248
      %6430 = vmatpush2.msra.mxu0 %v6247
      %6431 = vmatprep.subr.mxu0 %v6245
      %6432 = vmatpush2.msra.mxu0 %v6244
      %6433 = vmatprep.subr.mxu0 %v6242
      %6434 = vmatpush2.msra.mxu0 %v6241
      %6435 = vmatprep.subr.mxu0 %v6239
      %6436 = vmatpush2.msra.mxu0 %v6238
      %6437 = vmatprep.mubr.f32.mxu0 %v6292
      %6438 = vmatmul.mubr.f32.gmra.mxu0 %v6282
      %v6439 = vpop.f32.mrf.mxu0
      %v6440 = vadd.f32 %v6363, %v6439
      %v6441 = vpop.f32.mrf.mxu0
      %v6442 = vadd.f32 %v6365, %v6441
      %6443 = vmatprep.mubr.f32.mxu0 %v6294
      %6444 = vmatmul.mubr.f32.gmra.mxu0 %v6281
      %v6445 = vpop.f32.mrf.mxu0
      %v6446 = vadd.f32 %v6369, %v6445
      %v6447 = vpop.f32.mrf.mxu0
      %v6448 = vadd.f32 %v6371, %v6447
      %6449 = vdwg.mxu0
      %6450 = vmatprep.subr.mxu0 0.0
      %6451 = vmatpush1.msra.mxu0 %v6141
      %6452 = vmatprep.subr.mxu0 0.0
      %6453 = vmatpush1.msra.mxu0 %v6138
      %6454 = vmatprep.subr.mxu0 0.0
      %6455 = vmatpush1.msra.mxu0 %v6135
      %6456 = vmatprep.subr.mxu0 0.0
      %6457 = vmatpush1.msra.mxu0 %v6132
      %6458 = vmatprep.subr.mxu0 0.0
      %6459 = vmatpush1.msra.mxu0 %v6129
      %6460 = vmatprep.subr.mxu0 0.0
      %6461 = vmatpush1.msra.mxu0 %v6126
      %6462 = vmatprep.subr.mxu0 0.0
      %6463 = vmatpush1.msra.mxu0 %v6123
      %6464 = vmatprep.subr.mxu0 0.0
      %6465 = vmatpush1.msra.mxu0 %v6120
      %6466 = vmatprep.subr.mxu0 0.0
      %6467 = vmatpush1.msra.mxu0 %v6117
      %6468 = vmatprep.subr.mxu0 0.0
      %6469 = vmatpush1.msra.mxu0 %v6114
      %6470 = vmatprep.subr.mxu0 0.0
      %6471 = vmatpush1.msra.mxu0 %v6111
      %6472 = vmatprep.subr.mxu0 0.0
      %6473 = vmatpush1.msra.mxu0 %v6108
      %6474 = vmatprep.subr.mxu0 0.0
      %6475 = vmatpush1.msra.mxu0 %v6105
      %6476 = vmatprep.subr.mxu0 0.0
      %6477 = vmatpush1.msra.mxu0 %v6102
      %6478 = vmatprep.subr.mxu0 0.0
      %6479 = vmatpush1.msra.mxu0 %v6099
      %6480 = vmatprep.subr.mxu0 0.0
      %6481 = vmatpush1.msra.mxu0 %v6096
      %6482 = vmatprep.subr.mxu0 0.0
      %6483 = vmatpush2.msra.mxu0 %v6189
      %6484 = vmatprep.subr.mxu0 0.0
      %6485 = vmatpush2.msra.mxu0 %v6186
      %6486 = vmatprep.subr.mxu0 0.0
      %6487 = vmatpush2.msra.mxu0 %v6183
      %6488 = vmatprep.subr.mxu0 0.0
      %6489 = vmatpush2.msra.mxu0 %v6180
      %6490 = vmatprep.subr.mxu0 0.0
      %6491 = vmatpush2.msra.mxu0 %v6177
      %6492 = vmatprep.subr.mxu0 0.0
      %6493 = vmatpush2.msra.mxu0 %v6174
      %6494 = vmatprep.subr.mxu0 0.0
      %6495 = vmatpush2.msra.mxu0 %v6171
      %6496 = vmatprep.subr.mxu0 0.0
      %6497 = vmatpush2.msra.mxu0 %v6168
      %6498 = vmatprep.subr.mxu0 0.0
      %6499 = vmatpush2.msra.mxu0 %v6165
      %6500 = vmatprep.subr.mxu0 0.0
      %6501 = vmatpush2.msra.mxu0 %v6162
      %6502 = vmatprep.subr.mxu0 0.0
      %6503 = vmatpush2.msra.mxu0 %v6159
      %6504 = vmatprep.subr.mxu0 0.0
      %6505 = vmatpush2.msra.mxu0 %v6156
      %6506 = vmatprep.subr.mxu0 0.0
      %6507 = vmatpush2.msra.mxu0 %v6153
      %6508 = vmatprep.subr.mxu0 0.0
      %6509 = vmatpush2.msra.mxu0 %v6150
      %6510 = vmatprep.subr.mxu0 0.0
      %6511 = vmatpush2.msra.mxu0 %v6147
      %6512 = vmatprep.subr.mxu0 0.0
      %6513 = vmatpush2.msra.mxu0 %v6144
      %6514 = vmatprep.mubr.f32.mxu0 %v6279
      %6515 = vmatmul.mubr.f32.gmra.mxu0 %v6276
      %v6516 = vpop.f32.mrf.mxu0
      %v6517 = vadd.f32 0.0, %v6516
      %v6518 = vpop.f32.mrf.mxu0
      %6519 = vmatprep.mubr.f32.mxu0 %v6278
      %6520 = vmatmul.mubr.f32.gmra.mxu0 %v6275
      %v6521 = vpop.f32.mrf.mxu0
      %v6522 = vadd.f32 0.0, %v6521
      %v6523 = vpop.f32.mrf.mxu0
      %6524 = vdwg.mxu0
      %6525 = vmatprep.subr.mxu0 0.0
      %6526 = vmatpush1.msra.mxu0 %v6237
      %6527 = vmatprep.subr.mxu0 0.0
      %6528 = vmatpush1.msra.mxu0 %v6234
      %6529 = vmatprep.subr.mxu0 0.0
      %6530 = vmatpush1.msra.mxu0 %v6231
      %6531 = vmatprep.subr.mxu0 0.0
      %6532 = vmatpush1.msra.mxu0 %v6228
      %6533 = vmatprep.subr.mxu0 0.0
      %6534 = vmatpush1.msra.mxu0 %v6225
      %6535 = vmatprep.subr.mxu0 0.0
      %6536 = vmatpush1.msra.mxu0 %v6222
      %6537 = vmatprep.subr.mxu0 0.0
      %6538 = vmatpush1.msra.mxu0 %v6219
      %6539 = vmatprep.subr.mxu0 0.0
      %6540 = vmatpush1.msra.mxu0 %v6216
      %6541 = vmatprep.subr.mxu0 0.0
      %6542 = vmatpush1.msra.mxu0 %v6213
      %6543 = vmatprep.subr.mxu0 0.0
      %6544 = vmatpush1.msra.mxu0 %v6210
      %6545 = vmatprep.subr.mxu0 0.0
      %6546 = vmatpush1.msra.mxu0 %v6207
      %6547 = vmatprep.subr.mxu0 0.0
      %6548 = vmatpush1.msra.mxu0 %v6204
      %6549 = vmatprep.subr.mxu0 0.0
      %6550 = vmatpush1.msra.mxu0 %v6201
      %6551 = vmatprep.subr.mxu0 0.0
      %6552 = vmatpush1.msra.mxu0 %v6198
      %6553 = vmatprep.subr.mxu0 0.0
      %6554 = vmatpush1.msra.mxu0 %v6195
      %6555 = vmatprep.subr.mxu0 0.0
      %6556 = vmatpush1.msra.mxu0 %v6192
      %6557 = vmatprep.subr.mxu0 0.0
      %6558 = vmatpush2.msra.mxu0 0.0
      %6559 = vmatprep.subr.mxu0 0.0
      %6560 = vmatpush2.msra.mxu0 0.0
      %6561 = vmatprep.subr.mxu0 0.0
      %6562 = vmatpush2.msra.mxu0 0.0
      %6563 = vmatprep.subr.mxu0 0.0
      %6564 = vmatpush2.msra.mxu0 0.0
      %6565 = vmatprep.subr.mxu0 0.0
      %6566 = vmatpush2.msra.mxu0 %v6273
      %6567 = vmatprep.subr.mxu0 0.0
      %6568 = vmatpush2.msra.mxu0 %v6270
      %6569 = vmatprep.subr.mxu0 0.0
      %6570 = vmatpush2.msra.mxu0 %v6267
      %6571 = vmatprep.subr.mxu0 0.0
      %6572 = vmatpush2.msra.mxu0 %v6264
      %6573 = vmatprep.subr.mxu0 0.0
      %6574 = vmatpush2.msra.mxu0 %v6261
      %6575 = vmatprep.subr.mxu0 0.0
      %6576 = vmatpush2.msra.mxu0 %v6258
      %6577 = vmatprep.subr.mxu0 0.0
      %6578 = vmatpush2.msra.mxu0 %v6255
      %6579 = vmatprep.subr.mxu0 0.0
      %6580 = vmatpush2.msra.mxu0 %v6252
      %6581 = vmatprep.subr.mxu0 0.0
      %6582 = vmatpush2.msra.mxu0 %v6249
      %6583 = vmatprep.subr.mxu0 0.0
      %6584 = vmatpush2.msra.mxu0 %v6246
      %6585 = vmatprep.subr.mxu0 0.0
      %6586 = vmatpush2.msra.mxu0 %v6243
      %6587 = vmatprep.subr.mxu0 0.0
      %6588 = vmatpush2.msra.mxu0 %v6240
      %6589 = vmatprep.mubr.f32.mxu0 %v6292
      %6590 = vmatmul.mubr.f32.gmra.mxu0 %v6282
      %v6591 = vpop.f32.mrf.mxu0
      %v6592 = vadd.f32 %v6517, %v6591
      %v6593 = vpop.f32.mrf.mxu0
      %6594 = vmatprep.mubr.f32.mxu0 %v6294
      %6595 = vmatmul.mubr.f32.gmra.mxu0 %v6281
      %v6596 = vpop.f32.mrf.mxu0
      %v6597 = vadd.f32 %v6522, %v6596
      %v6598 = vpop.f32.mrf.mxu0
      %6599 = vdwg.mxu0
      %v6600 = vadd.f32 %v5596, %v6440
      %v6601 = vadd.f32 %v5597, %v6442
      %v6602 = vadd.f32 %v5598, %v6592
      %v6603 = vadd.f32 %v5599, %v6446
      %v6604 = vadd.f32 %v5600, %v6448
      %v6605 = vadd.f32 %v5601, %v6597
      %s6606 = scalar_lea.vmem %s4, 5760
      %v6607 = vld [vmem:[%s6606] sm:$0xff]
      %v6608 = vld [vmem:[%s6606 + $0x8] sm:$0xff]
      %v6609 = vld [vmem:[%s6606 + $0x10] sm:$0xff]
      %v6610 = vld [vmem:[%s6606 + $0x18] sm:$0xff]
      %v6611 = vld [vmem:[%s6606 + $0x20] sm:$0xff]
      %v6612 = vld [vmem:[%s6606 + $0x28] sm:$0xff]
      %v6613 = vld [vmem:[%s6606 + $0x30] sm:$0xff]
      %v6614 = vld [vmem:[%s6606 + $0x38] sm:$0xff]
      %v6615 = vld [vmem:[%s6606 + $0x40] sm:$0xff]
      %v6616 = vld [vmem:[%s6606 + $0x48] sm:$0xff]
      %v6617 = vld [vmem:[%s6606 + $0x50] sm:$0xff]
      %v6618 = vld [vmem:[%s6606 + $0x58] sm:$0xff]
      %v6619 = vld [vmem:[%s6606 + $0x60] sm:$0xff]
      %v6620 = vld [vmem:[%s6606 + $0x68] sm:$0xff]
      %v6621 = vld [vmem:[%s6606 + $0x70] sm:$0xff]
      %v6622 = vld [vmem:[%s6606 + $0x78] sm:$0xff]
      %v6623 = vld [vmem:[%s6606 + $0x80] sm:$0xff]
      %v6624 = vld [vmem:[%s6606 + $0x88] sm:$0xff]
      %v6625 = vld [vmem:[%s6606 + $0x90] sm:$0xff]
      %v6626 = vld [vmem:[%s6606 + $0x98] sm:$0xff]
      %v6627 = vld [vmem:[%s6606 + $0xa0] sm:$0xff]
      %v6628 = vld [vmem:[%s6606 + $0xa8] sm:$0xff]
      %v6629 = vld [vmem:[%s6606 + $0xb0] sm:$0xff]
      %v6630 = vld [vmem:[%s6606 + $0xb8] sm:$0xff]
      %v6631 = vld [vmem:[%s6606 + $0xc0] sm:$0xff]
      %v6632 = vld [vmem:[%s6606 + $0xc8] sm:$0xff]
      %v6633 = vld [vmem:[%s6606 + $0xd0] sm:$0xff]
      %v6634 = vld [vmem:[%s6606 + $0xd8] sm:$0xff]
      %v6635 = vld [vmem:[%s6606 + $0xe0] sm:$0xff]
      %v6636 = vld [vmem:[%s6606 + $0xe8] sm:$0xff]
      %v6637 = vld [vmem:[%s6606 + $0xf0] sm:$0xff]
      %v6638 = vld [vmem:[%s6606 + $0xf8] sm:$0xff]
      %v6639 = vld [vmem:[%s6606 + $0x100] sm:$0xff]
      %v6640 = vld [vmem:[%s6606 + $0x108] sm:$0xff]
      %v6641 = vld [vmem:[%s6606 + $0x110] sm:$0xff]
      %v6642 = vld [vmem:[%s6606 + $0x118] sm:$0xff]
      %v6643 = vld [vmem:[%s6606 + $0x120] sm:$0xff]
      %v6644 = vld [vmem:[%s6606 + $0x128] sm:$0xff]
      %v6645 = vld [vmem:[%s6606 + $0x130] sm:$0xff]
      %v6646 = vld [vmem:[%s6606 + $0x138] sm:$0xff]
      %v6647 = vld [vmem:[%s6606 + $0x140] sm:$0xff]
      %v6648 = vld [vmem:[%s6606 + $0x148] sm:$0xff]
      %v6649 = vld [vmem:[%s6606 + $0x150] sm:$0xff]
      %v6650 = vld [vmem:[%s6606 + $0x158] sm:$0xff]
      %v6651 = vld [vmem:[%s6606 + $0x160] sm:$0xff]
      %v6652 = vld [vmem:[%s6606 + $0x168] sm:$0xff]
      %v6653 = vld [vmem:[%s6606 + $0x170] sm:$0xff]
      %v6654 = vld [vmem:[%s6606 + $0x178] sm:$0xff]
      %v6655 = vld [vmem:[%s6606 + $0x180] sm:$0xff]
      %v6656 = vld [vmem:[%s6606 + $0x188] sm:$0xff]
      %v6657 = vld [vmem:[%s6606 + $0x190] sm:$0xff]
      %v6658 = vld [vmem:[%s6606 + $0x198] sm:$0xff]
      %v6659 = vld [vmem:[%s6606 + $0x1a0] sm:$0xff]
      %v6660 = vld [vmem:[%s6606 + $0x1a8] sm:$0xff]
      %v6661 = vld [vmem:[%s6606 + $0x1b0] sm:$0xff]
      %v6662 = vld [vmem:[%s6606 + $0x1b8] sm:$0xff]
      %v6663 = vld [vmem:[%s6606 + $0x1c0] sm:$0xff]
      %v6664 = vld [vmem:[%s6606 + $0x1c8] sm:$0xff]
      %v6665 = vld [vmem:[%s6606 + $0x1d0] sm:$0xff]
      %v6666 = vld [vmem:[%s6606 + $0x1d8] sm:$0xff]
      %v6667 = vld [vmem:[%s6606 + $0x1e0] sm:$0xff]
      %v6668 = vld [vmem:[%s6606 + $0x1e8] sm:$0xff]
      %v6669 = vld [vmem:[%s6606 + $0x1f0] sm:$0xff]
      %v6670 = vld [vmem:[%s6606 + $0x1f8] sm:$0xff]
      %v6671 = vld [vmem:[%s6606 + $0x200] sm:$0xff]
      %v6672 = vld [vmem:[%s6606 + $0x208] sm:$0xff]
      %v6673 = vld [vmem:[%s6606 + $0x210] sm:$0xff]
      %v6674 = vld [vmem:[%s6606 + $0x218] sm:$0xff]
      %v6675 = vld [vmem:[%s6606 + $0x220] sm:$0xff]
      %v6676 = vld [vmem:[%s6606 + $0x228] sm:$0xff]
      %v6677 = vld [vmem:[%s6606 + $0x230] sm:$0xff]
      %v6678 = vld [vmem:[%s6606 + $0x238] sm:$0xff]
      %v6679 = vld [vmem:[%s6606 + $0x240] sm:$0xff]
      %v6680 = vld [vmem:[%s6606 + $0x248] sm:$0xff]
      %v6681 = vld [vmem:[%s6606 + $0x250] sm:$0xff]
      %v6682 = vld [vmem:[%s6606 + $0x258] sm:$0xff]
      %v6683 = vld [vmem:[%s6606 + $0x260] sm:$0xff]
      %v6684 = vld [vmem:[%s6606 + $0x268] sm:$0xff]
      %v6685 = vld [vmem:[%s6606 + $0x270] sm:$0xff]
      %v6686 = vld [vmem:[%s6606 + $0x278] sm:$0xff]
      %v6687 = vld [vmem:[%s6606 + $0x280] sm:$0xff]
      %v6688 = vld [vmem:[%s6606 + $0x288] sm:$0xff]
      %v6689 = vld [vmem:[%s6606 + $0x290] sm:$0xff]
      %v6690 = vld [vmem:[%s6606 + $0x298] sm:$0xff]
      %v6691 = vld [vmem:[%s6606 + $0x2a0] sm:$0xff]
      %v6692 = vld [vmem:[%s6606 + $0x2a8] sm:$0xff]
      %v6693 = vld [vmem:[%s6606 + $0x2b0] sm:$0xff]
      %v6694 = vld [vmem:[%s6606 + $0x2b8] sm:$0xff]
      %v6695 = vld [vmem:[%s6606 + $0x2c0] sm:$0xff]
      %v6696 = vld [vmem:[%s6606 + $0x2c8] sm:$0xff]
      %v6697 = vld [vmem:[%s6606 + $0x2d0] sm:$0xff]
      %v6698 = vld [vmem:[%s6606 + $0x2d8] sm:$0xff]
      %v6699 = vld [vmem:[%s6606 + $0x2e0] sm:$0xff]
      %v6700 = vld [vmem:[%s6606 + $0x2e8] sm:$0xff]
      %v6701 = vld [vmem:[%s6606 + $0x2f0] sm:$0xff]
      %v6702 = vld [vmem:[%s6606 + $0x2f8] sm:$0xff]
      %v6703 = vld [vmem:[%s6606 + $0x300] sm:$0xff]
      %v6704 = vld [vmem:[%s6606 + $0x308] sm:$0xff]
      %v6705 = vld [vmem:[%s6606 + $0x310] sm:$0xff]
      %v6706 = vld [vmem:[%s6606 + $0x318] sm:$0xff]
      %v6707 = vld [vmem:[%s6606 + $0x320] sm:$0xff]
      %v6708 = vld [vmem:[%s6606 + $0x328] sm:$0xff]
      %v6709 = vld [vmem:[%s6606 + $0x330] sm:$0xff]
      %v6710 = vld [vmem:[%s6606 + $0x338] sm:$0xff]
      %v6711 = vld [vmem:[%s6606 + $0x340] sm:$0xff]
      %v6712 = vld [vmem:[%s6606 + $0x348] sm:$0xff]
      %v6713 = vld [vmem:[%s6606 + $0x350] sm:$0xff]
      %v6714 = vld [vmem:[%s6606 + $0x358] sm:$0xff]
      %v6715 = vld [vmem:[%s6606 + $0x360] sm:$0xff]
      %v6716 = vld [vmem:[%s6606 + $0x368] sm:$0xff]
      %v6717 = vld [vmem:[%s6606 + $0x370] sm:$0xff]
      %v6718 = vld [vmem:[%s6606 + $0x378] sm:$0xff]
      %v6719 = vld [vmem:[%s6606 + $0x380] sm:$0xff]
      %v6720 = vld [vmem:[%s6606 + $0x388] sm:$0xff]
      %v6721 = vld [vmem:[%s6606 + $0x390] sm:$0xff]
      %v6722 = vld [vmem:[%s6606 + $0x398] sm:$0xff]
      %v6723 = vld [vmem:[%s6606 + $0x3a0] sm:$0xff]
      %v6724 = vld [vmem:[%s6606 + $0x3a8] sm:$0xff]
      %v6725 = vld [vmem:[%s6606 + $0x3b0] sm:$0xff]
      %v6726 = vld [vmem:[%s6606 + $0x3b8] sm:$0xff]
      %v6727 = vld [vmem:[%s6606 + $0x3c0] sm:$0xff]
      %v6728 = vld [vmem:[%s6606 + $0x3c8] sm:$0xff]
      %v6729 = vld [vmem:[%s6606 + $0x3d0] sm:$0xff]
      %v6730 = vld [vmem:[%s6606 + $0x3d8] sm:$0xff]
      %v6731 = vld [vmem:[%s6606 + $0x3e0] sm:$0xff]
      %v6732 = vld [vmem:[%s6606 + $0x3e8] sm:$0xff]
      %v6733 = vld [vmem:[%s6606 + $0x3f0] sm:$0xff]
      %v6734 = vld [vmem:[%s6606 + $0x3f8] sm:$0xff]
      %v6735 = vld [vmem:[%s6606 + $0x400] sm:$0xff]
      %v6736 = vld [vmem:[%s6606 + $0x408] sm:$0xff]
      %v6737 = vld [vmem:[%s6606 + $0x410] sm:$0xff]
      %v6738 = vld [vmem:[%s6606 + $0x418] sm:$0xff]
      %v6739 = vld [vmem:[%s6606 + $0x420] sm:$0xff]
      %v6740 = vld [vmem:[%s6606 + $0x428] sm:$0xff]
      %v6741 = vld [vmem:[%s6606 + $0x430] sm:$0xff]
      %v6742 = vld [vmem:[%s6606 + $0x438] sm:$0xff]
      %v6743 = vld [vmem:[%s6606 + $0x440] sm:$0xff]
      %v6744 = vld [vmem:[%s6606 + $0x448] sm:$0xff]
      %v6745 = vld [vmem:[%s6606 + $0x450] sm:$0xff]
      %v6746 = vld [vmem:[%s6606 + $0x458] sm:$0xff]
      %v6747 = vld [vmem:[%s6606 + $0x460] sm:$0xff]
      %v6748 = vld [vmem:[%s6606 + $0x468] sm:$0xff]
      %v6749 = vld [vmem:[%s6606 + $0x470] sm:$0xff]
      %v6750 = vld [vmem:[%s6606 + $0x478] sm:$0xff]
      %v6751 = vld [vmem:[%s6606 + $0x480] sm:$0xff]
      %v6752 = vld [vmem:[%s6606 + $0x488] sm:$0xff]
      %v6753 = vld [vmem:[%s6606 + $0x490] sm:$0xff]
      %v6754 = vld [vmem:[%s6606 + $0x498] sm:$0xff]
      %v6755 = vld [vmem:[%s6606 + $0x4a0] sm:$0xff]
      %v6756 = vld [vmem:[%s6606 + $0x4a8] sm:$0xff]
      %v6757 = vld [vmem:[%s6606 + $0x4b0] sm:$0xff]
      %v6758 = vld [vmem:[%s6606 + $0x4b8] sm:$0xff]
      %v6759 = vld [vmem:[%s6606 + $0x4c0] sm:$0xff]
      %v6760 = vld [vmem:[%s6606 + $0x4c8] sm:$0xff]
      %v6761 = vld [vmem:[%s6606 + $0x4d0] sm:$0xff]
      %v6762 = vld [vmem:[%s6606 + $0x4d8] sm:$0xff]
      %v6763 = vld [vmem:[%s6606 + $0x4e0] sm:$0xff]
      %v6764 = vld [vmem:[%s6606 + $0x4e8] sm:$0xff]
      %v6765 = vld [vmem:[%s6606 + $0x4f0] sm:$0xff]
      %v6766 = vld [vmem:[%s6606 + $0x4f8] sm:$0xff]
      %v6767 = vld [vmem:[%s6606 + $0x500] sm:$0xff]
      %v6768 = vld [vmem:[%s6606 + $0x508] sm:$0xff]
      %v6769 = vld [vmem:[%s6606 + $0x510] sm:$0xff]
      %v6770 = vld [vmem:[%s6606 + $0x518] sm:$0xff]
      %v6771 = vld [vmem:[%s6606 + $0x520] sm:$0xff]
      %v6772 = vld [vmem:[%s6606 + $0x528] sm:$0xff]
      %v6773 = vld [vmem:[%s6606 + $0x530] sm:$0xff]
      %v6774 = vld [vmem:[%s6606 + $0x538] sm:$0xff]
      %v6775 = vld [vmem:[%s6606 + $0x540] sm:$0xff]
      %v6776 = vld [vmem:[%s6606 + $0x548] sm:$0xff]
      %v6777 = vld [vmem:[%s6606 + $0x550] sm:$0xff]
      %v6778 = vld [vmem:[%s6606 + $0x558] sm:$0xff]
      %v6779 = vld [vmem:[%s6606 + $0x560] sm:$0xff]
      %v6780 = vld [vmem:[%s6606 + $0x568] sm:$0xff]
      %v6781 = vld [vmem:[%s6606 + $0x570] sm:$0xff]
      %v6782 = vld [vmem:[%s6606 + $0x578] sm:$0xff]
      %v6783 = vld [vmem:[%s6606 + $0x580] sm:$0xff]
      %v6784 = vld [vmem:[%s6606 + $0x588] sm:$0xff]
      %v6785 = vld [vmem:[%s6606 + $0x590] sm:$0xff]
      %v6786 = vld [vmem:[%s6606 + $0x598] sm:$0xff]
      %6787 = vmatprep.subr.mxu0 %v6653
      %6788 = vmatpush1.msra.mxu0 %v6652
      %6789 = vmatprep.subr.mxu0 %v6650
      %6790 = vmatpush1.msra.mxu0 %v6649
      %6791 = vmatprep.subr.mxu0 %v6647
      %6792 = vmatpush1.msra.mxu0 %v6646
      %6793 = vmatprep.subr.mxu0 %v6644
      %6794 = vmatpush1.msra.mxu0 %v6643
      %6795 = vmatprep.subr.mxu0 %v6641
      %6796 = vmatpush1.msra.mxu0 %v6640
      %6797 = vmatprep.subr.mxu0 %v6638
      %6798 = vmatpush1.msra.mxu0 %v6637
      %6799 = vmatprep.subr.mxu0 %v6635
      %6800 = vmatpush1.msra.mxu0 %v6634
      %6801 = vmatprep.subr.mxu0 %v6632
      %6802 = vmatpush1.msra.mxu0 %v6631
      %6803 = vmatprep.subr.mxu0 %v6629
      %6804 = vmatpush1.msra.mxu0 %v6628
      %6805 = vmatprep.subr.mxu0 %v6626
      %6806 = vmatpush1.msra.mxu0 %v6625
      %6807 = vmatprep.subr.mxu0 %v6623
      %6808 = vmatpush1.msra.mxu0 %v6622
      %6809 = vmatprep.subr.mxu0 %v6620
      %6810 = vmatpush1.msra.mxu0 %v6619
      %6811 = vmatprep.subr.mxu0 %v6617
      %6812 = vmatpush1.msra.mxu0 %v6616
      %6813 = vmatprep.subr.mxu0 %v6614
      %6814 = vmatpush1.msra.mxu0 %v6613
      %6815 = vmatprep.subr.mxu0 %v6611
      %6816 = vmatpush1.msra.mxu0 %v6610
      %6817 = vmatprep.subr.mxu0 %v6608
      %6818 = vmatpush1.msra.mxu0 %v6607
      %6819 = vmatprep.subr.mxu0 %v6701
      %6820 = vmatpush2.msra.mxu0 %v6700
      %6821 = vmatprep.subr.mxu0 %v6698
      %6822 = vmatpush2.msra.mxu0 %v6697
      %6823 = vmatprep.subr.mxu0 %v6695
      %6824 = vmatpush2.msra.mxu0 %v6694
      %6825 = vmatprep.subr.mxu0 %v6692
      %6826 = vmatpush2.msra.mxu0 %v6691
      %6827 = vmatprep.subr.mxu0 %v6689
      %6828 = vmatpush2.msra.mxu0 %v6688
      %6829 = vmatprep.subr.mxu0 %v6686
      %6830 = vmatpush2.msra.mxu0 %v6685
      %6831 = vmatprep.subr.mxu0 %v6683
      %6832 = vmatpush2.msra.mxu0 %v6682
      %6833 = vmatprep.subr.mxu0 %v6680
      %6834 = vmatpush2.msra.mxu0 %v6679
      %6835 = vmatprep.subr.mxu0 %v6677
      %6836 = vmatpush2.msra.mxu0 %v6676
      %6837 = vmatprep.subr.mxu0 %v6674
      %6838 = vmatpush2.msra.mxu0 %v6673
      %6839 = vmatprep.subr.mxu0 %v6671
      %6840 = vmatpush2.msra.mxu0 %v6670
      %6841 = vmatprep.subr.mxu0 %v6668
      %6842 = vmatpush2.msra.mxu0 %v6667
      %6843 = vmatprep.subr.mxu0 %v6665
      %6844 = vmatpush2.msra.mxu0 %v6664
      %6845 = vmatprep.subr.mxu0 %v6662
      %6846 = vmatpush2.msra.mxu0 %v6661
      %6847 = vmatprep.subr.mxu0 %v6659
      %6848 = vmatpush2.msra.mxu0 %v6658
      %6849 = vmatprep.subr.mxu0 %v6656
      %6850 = vmatpush2.msra.mxu0 %v6655
      %6851 = vmatprep.mubr.f32.mxu0 %v6279
      %6852 = vmatmul.mubr.f32.gmra.mxu0 %v6276
      %v6853 = vpop.f32.mrf.mxu0
      %v6854 = vadd.f32 0.0, %v6853
      %v6855 = vpop.f32.mrf.mxu0
      %v6856 = vadd.f32 0.0, %v6855
      %6857 = vmatprep.mubr.f32.mxu0 %v6278
      %6858 = vmatmul.mubr.f32.gmra.mxu0 %v6275
      %v6859 = vpop.f32.mrf.mxu0
      %v6860 = vadd.f32 0.0, %v6859
      %v6861 = vpop.f32.mrf.mxu0
      %v6862 = vadd.f32 0.0, %v6861
      %6863 = vdwg.mxu0
      %6864 = vmatprep.subr.mxu0 %v6749
      %6865 = vmatpush1.msra.mxu0 %v6748
      %6866 = vmatprep.subr.mxu0 %v6746
      %6867 = vmatpush1.msra.mxu0 %v6745
      %6868 = vmatprep.subr.mxu0 %v6743
      %6869 = vmatpush1.msra.mxu0 %v6742
      %6870 = vmatprep.subr.mxu0 %v6740
      %6871 = vmatpush1.msra.mxu0 %v6739
      %6872 = vmatprep.subr.mxu0 %v6737
      %6873 = vmatpush1.msra.mxu0 %v6736
      %6874 = vmatprep.subr.mxu0 %v6734
      %6875 = vmatpush1.msra.mxu0 %v6733
      %6876 = vmatprep.subr.mxu0 %v6731
      %6877 = vmatpush1.msra.mxu0 %v6730
      %6878 = vmatprep.subr.mxu0 %v6728
      %6879 = vmatpush1.msra.mxu0 %v6727
      %6880 = vmatprep.subr.mxu0 %v6725
      %6881 = vmatpush1.msra.mxu0 %v6724
      %6882 = vmatprep.subr.mxu0 %v6722
      %6883 = vmatpush1.msra.mxu0 %v6721
      %6884 = vmatprep.subr.mxu0 %v6719
      %6885 = vmatpush1.msra.mxu0 %v6718
      %6886 = vmatprep.subr.mxu0 %v6716
      %6887 = vmatpush1.msra.mxu0 %v6715
      %6888 = vmatprep.subr.mxu0 %v6713
      %6889 = vmatpush1.msra.mxu0 %v6712
      %6890 = vmatprep.subr.mxu0 %v6710
      %6891 = vmatpush1.msra.mxu0 %v6709
      %6892 = vmatprep.subr.mxu0 %v6707
      %6893 = vmatpush1.msra.mxu0 %v6706
      %6894 = vmatprep.subr.mxu0 %v6704
      %6895 = vmatpush1.msra.mxu0 %v6703
      %6896 = vmatprep.subr.mxu0 0.0
      %6897 = vmatpush2.msra.mxu0 0.0
      %6898 = vmatprep.subr.mxu0 0.0
      %6899 = vmatpush2.msra.mxu0 0.0
      %6900 = vmatprep.subr.mxu0 0.0
      %6901 = vmatpush2.msra.mxu0 0.0
      %6902 = vmatprep.subr.mxu0 0.0
      %6903 = vmatpush2.msra.mxu0 0.0
      %6904 = vmatprep.subr.mxu0 %v6785
      %6905 = vmatpush2.msra.mxu0 %v6784
      %6906 = vmatprep.subr.mxu0 %v6782
      %6907 = vmatpush2.msra.mxu0 %v6781
      %6908 = vmatprep.subr.mxu0 %v6779
      %6909 = vmatpush2.msra.mxu0 %v6778
      %6910 = vmatprep.subr.mxu0 %v6776
      %6911 = vmatpush2.msra.mxu0 %v6775
      %6912 = vmatprep.subr.mxu0 %v6773
      %6913 = vmatpush2.msra.mxu0 %v6772
      %6914 = vmatprep.subr.mxu0 %v6770
      %6915 = vmatpush2.msra.mxu0 %v6769
      %6916 = vmatprep.subr.mxu0 %v6767
      %6917 = vmatpush2.msra.mxu0 %v6766
      %6918 = vmatprep.subr.mxu0 %v6764
      %6919 = vmatpush2.msra.mxu0 %v6763
      %6920 = vmatprep.subr.mxu0 %v6761
      %6921 = vmatpush2.msra.mxu0 %v6760
      %6922 = vmatprep.subr.mxu0 %v6758
      %6923 = vmatpush2.msra.mxu0 %v6757
      %6924 = vmatprep.subr.mxu0 %v6755
      %6925 = vmatpush2.msra.mxu0 %v6754
      %6926 = vmatprep.subr.mxu0 %v6752
      %6927 = vmatpush2.msra.mxu0 %v6751
      %6928 = vmatprep.mubr.f32.mxu0 %v6292
      %6929 = vmatmul.mubr.f32.gmra.mxu0 %v6282
      %v6930 = vpop.f32.mrf.mxu0
      %v6931 = vadd.f32 %v6854, %v6930
      %v6932 = vpop.f32.mrf.mxu0
      %v6933 = vadd.f32 %v6856, %v6932
      %6934 = vmatprep.mubr.f32.mxu0 %v6294
      %6935 = vmatmul.mubr.f32.gmra.mxu0 %v6281
      %v6936 = vpop.f32.mrf.mxu0
      %v6937 = vadd.f32 %v6860, %v6936
      %v6938 = vpop.f32.mrf.mxu0
      %v6939 = vadd.f32 %v6862, %v6938
      %6940 = vdwg.mxu0
      %6941 = vmatprep.subr.mxu0 0.0
      %6942 = vmatpush1.msra.mxu0 %v6654
      %6943 = vmatprep.subr.mxu0 0.0
      %6944 = vmatpush1.msra.mxu0 %v6651
      %6945 = vmatprep.subr.mxu0 0.0
      %6946 = vmatpush1.msra.mxu0 %v6648
      %6947 = vmatprep.subr.mxu0 0.0
      %6948 = vmatpush1.msra.mxu0 %v6645
      %6949 = vmatprep.subr.mxu0 0.0
      %6950 = vmatpush1.msra.mxu0 %v6642
      %6951 = vmatprep.subr.mxu0 0.0
      %6952 = vmatpush1.msra.mxu0 %v6639
      %6953 = vmatprep.subr.mxu0 0.0
      %6954 = vmatpush1.msra.mxu0 %v6636
      %6955 = vmatprep.subr.mxu0 0.0
      %6956 = vmatpush1.msra.mxu0 %v6633
      %6957 = vmatprep.subr.mxu0 0.0
      %6958 = vmatpush1.msra.mxu0 %v6630
      %6959 = vmatprep.subr.mxu0 0.0
      %6960 = vmatpush1.msra.mxu0 %v6627
      %6961 = vmatprep.subr.mxu0 0.0
      %6962 = vmatpush1.msra.mxu0 %v6624
      %6963 = vmatprep.subr.mxu0 0.0
      %6964 = vmatpush1.msra.mxu0 %v6621
      %6965 = vmatprep.subr.mxu0 0.0
      %6966 = vmatpush1.msra.mxu0 %v6618
      %6967 = vmatprep.subr.mxu0 0.0
      %6968 = vmatpush1.msra.mxu0 %v6615
      %6969 = vmatprep.subr.mxu0 0.0
      %6970 = vmatpush1.msra.mxu0 %v6612
      %6971 = vmatprep.subr.mxu0 0.0
      %6972 = vmatpush1.msra.mxu0 %v6609
      %6973 = vmatprep.subr.mxu0 0.0
      %6974 = vmatpush2.msra.mxu0 %v6702
      %6975 = vmatprep.subr.mxu0 0.0
      %6976 = vmatpush2.msra.mxu0 %v6699
      %6977 = vmatprep.subr.mxu0 0.0
      %6978 = vmatpush2.msra.mxu0 %v6696
      %6979 = vmatprep.subr.mxu0 0.0
      %6980 = vmatpush2.msra.mxu0 %v6693
      %6981 = vmatprep.subr.mxu0 0.0
      %6982 = vmatpush2.msra.mxu0 %v6690
      %6983 = vmatprep.subr.mxu0 0.0
      %6984 = vmatpush2.msra.mxu0 %v6687
      %6985 = vmatprep.subr.mxu0 0.0
      %6986 = vmatpush2.msra.mxu0 %v6684
      %6987 = vmatprep.subr.mxu0 0.0
      %6988 = vmatpush2.msra.mxu0 %v6681
      %6989 = vmatprep.subr.mxu0 0.0
      %6990 = vmatpush2.msra.mxu0 %v6678
      %6991 = vmatprep.subr.mxu0 0.0
      %6992 = vmatpush2.msra.mxu0 %v6675
      %6993 = vmatprep.subr.mxu0 0.0
      %6994 = vmatpush2.msra.mxu0 %v6672
      %6995 = vmatprep.subr.mxu0 0.0
      %6996 = vmatpush2.msra.mxu0 %v6669
      %6997 = vmatprep.subr.mxu0 0.0
      %6998 = vmatpush2.msra.mxu0 %v6666
      %6999 = vmatprep.subr.mxu0 0.0
      %7000 = vmatpush2.msra.mxu0 %v6663
      %7001 = vmatprep.subr.mxu0 0.0
      %7002 = vmatpush2.msra.mxu0 %v6660
      %7003 = vmatprep.subr.mxu0 0.0
      %7004 = vmatpush2.msra.mxu0 %v6657
      %7005 = vmatprep.mubr.f32.mxu0 %v6279
      %7006 = vmatmul.mubr.f32.gmra.mxu0 %v6276
      %v7007 = vpop.f32.mrf.mxu0
      %v7008 = vadd.f32 0.0, %v7007
      %v7009 = vpop.f32.mrf.mxu0
      %7010 = vmatprep.mubr.f32.mxu0 %v6278
      %7011 = vmatmul.mubr.f32.gmra.mxu0 %v6275
      %v7012 = vpop.f32.mrf.mxu0
      %v7013 = vadd.f32 0.0, %v7012
      %v7014 = vpop.f32.mrf.mxu0
      %7015 = vdwg.mxu0
      %7016 = vmatprep.subr.mxu0 0.0
      %7017 = vmatpush1.msra.mxu0 %v6750
      %7018 = vmatprep.subr.mxu0 0.0
      %7019 = vmatpush1.msra.mxu0 %v6747
      %7020 = vmatprep.subr.mxu0 0.0
      %7021 = vmatpush1.msra.mxu0 %v6744
      %7022 = vmatprep.subr.mxu0 0.0
      %7023 = vmatpush1.msra.mxu0 %v6741
      %7024 = vmatprep.subr.mxu0 0.0
      %7025 = vmatpush1.msra.mxu0 %v6738
      %7026 = vmatprep.subr.mxu0 0.0
      %7027 = vmatpush1.msra.mxu0 %v6735
      %7028 = vmatprep.subr.mxu0 0.0
      %7029 = vmatpush1.msra.mxu0 %v6732
      %7030 = vmatprep.subr.mxu0 0.0
      %7031 = vmatpush1.msra.mxu0 %v6729
      %7032 = vmatprep.subr.mxu0 0.0
      %7033 = vmatpush1.msra.mxu0 %v6726
      %7034 = vmatprep.subr.mxu0 0.0
      %7035 = vmatpush1.msra.mxu0 %v6723
      %7036 = vmatprep.subr.mxu0 0.0
      %7037 = vmatpush1.msra.mxu0 %v6720
      %7038 = vmatprep.subr.mxu0 0.0
      %7039 = vmatpush1.msra.mxu0 %v6717
      %7040 = vmatprep.subr.mxu0 0.0
      %7041 = vmatpush1.msra.mxu0 %v6714
      %7042 = vmatprep.subr.mxu0 0.0
      %7043 = vmatpush1.msra.mxu0 %v6711
      %7044 = vmatprep.subr.mxu0 0.0
      %7045 = vmatpush1.msra.mxu0 %v6708
      %7046 = vmatprep.subr.mxu0 0.0
      %7047 = vmatpush1.msra.mxu0 %v6705
      %7048 = vmatprep.subr.mxu0 0.0
      %7049 = vmatpush2.msra.mxu0 0.0
      %7050 = vmatprep.subr.mxu0 0.0
      %7051 = vmatpush2.msra.mxu0 0.0
      %7052 = vmatprep.subr.mxu0 0.0
      %7053 = vmatpush2.msra.mxu0 0.0
      %7054 = vmatprep.subr.mxu0 0.0
      %7055 = vmatpush2.msra.mxu0 0.0
      %7056 = vmatprep.subr.mxu0 0.0
      %7057 = vmatpush2.msra.mxu0 %v6786
      %7058 = vmatprep.subr.mxu0 0.0
      %7059 = vmatpush2.msra.mxu0 %v6783
      %7060 = vmatprep.subr.mxu0 0.0
      %7061 = vmatpush2.msra.mxu0 %v6780
      %7062 = vmatprep.subr.mxu0 0.0
      %7063 = vmatpush2.msra.mxu0 %v6777
      %7064 = vmatprep.subr.mxu0 0.0
      %7065 = vmatpush2.msra.mxu0 %v6774
      %7066 = vmatprep.subr.mxu0 0.0
      %7067 = vmatpush2.msra.mxu0 %v6771
      %7068 = vmatprep.subr.mxu0 0.0
      %7069 = vmatpush2.msra.mxu0 %v6768
      %7070 = vmatprep.subr.mxu0 0.0
      %7071 = vmatpush2.msra.mxu0 %v6765
      %7072 = vmatprep.subr.mxu0 0.0
      %7073 = vmatpush2.msra.mxu0 %v6762
      %7074 = vmatprep.subr.mxu0 0.0
      %7075 = vmatpush2.msra.mxu0 %v6759
      %7076 = vmatprep.subr.mxu0 0.0
      %7077 = vmatpush2.msra.mxu0 %v6756
      %7078 = vmatprep.subr.mxu0 0.0
      %7079 = vmatpush2.msra.mxu0 %v6753
      %7080 = vmatprep.mubr.f32.mxu0 %v6292
      %7081 = vmatmul.mubr.f32.gmra.mxu0 %v6282
      %v7082 = vpop.f32.mrf.mxu0
      %v7083 = vadd.f32 %v7008, %v7082
      %v7084 = vpop.f32.mrf.mxu0
      %7085 = vmatprep.mubr.f32.mxu0 %v6294
      %7086 = vmatmul.mubr.f32.gmra.mxu0 %v6281
      %v7087 = vpop.f32.mrf.mxu0
      %v7088 = vadd.f32 %v7013, %v7087
      %v7089 = vpop.f32.mrf.mxu0
      %7090 = vdwg.mxu0
      %v7091 = vadd.f32 %v6087, %v6931
      %v7092 = vadd.f32 %v6088, %v6933
      %v7093 = vadd.f32 %v6089, %v7083
      %v7094 = vadd.f32 %v6090, %v6937
      %v7095 = vadd.f32 %v6091, %v6939
      %v7096 = vadd.f32 %v6092, %v7088
      %v7097 = vmax.f32 %v6600, %v7091
      %v7098 = vmax.f32 %v6601, %v7092
      %v7099 = vmax.f32 %v6602, %v7093
      %v7100 = vmax.f32 %v6603, %v7094
      %v7101 = vmax.f32 %v6604, %v7095
      %v7102 = vmax.f32 %v6605, %v7096
      %v7106 = vrot.slane %v7097, 1
      %v7107 = vrot.slane %v7098, 1
      %v7108 = vrot.slane %v7099, 1
      %v7112 = vmax.f32 %v7097, %v7106
      %v7113 = vmax.f32 %v7098, %v7107
      %v7114 = vmax.f32 %v7099, %v7108
      %v7118 = vrot.slane %v7100, 1
      %v7119 = vrot.slane %v7101, 1
      %v7120 = vrot.slane %v7102, 1
      %v7124 = vmax.f32 %v7100, %v7118
      %v7125 = vmax.f32 %v7101, %v7119
      %v7126 = vmax.f32 %v7102, %v7120
      %v7130 = vrot.slane %v7112, 1
      %v7131 = vrot.slane %v7113, 1
      %v7132 = vrot.slane %v7114, 1
      %v7136 = vrot.slane %v7112, 2
      %v7137 = vrot.slane %v7113, 2
      %v7138 = vrot.slane %v7114, 2
      %v7142 = vrot.slane %v7112, 3
      %v7143 = vrot.slane %v7113, 3
      %v7144 = vrot.slane %v7114, 3
      %v7151 = vrot.slane %v7124, 4
      %v7152 = vrot.slane %v7125, 4
      %v7153 = vrot.slane %v7126, 4
      %v7157 = vsel %vm2026, %v7112, %v7130
      %v7158 = vsel %vm2026, %v7113, %v7131
      %v7159 = vsel %vm2026, %v7114, %v7132
      %v7160 = vsel %vm2031, %v7157, %v7136
      %v7161 = vsel %vm2031, %v7158, %v7137
      %v7162 = vsel %vm2031, %v7159, %v7138
      %v7163 = vsel %vm2036, %v7160, %v7142
      %v7164 = vsel %vm2036, %v7161, %v7143
      %v7165 = vsel %vm2036, %v7162, %v7144
      %v7166 = vsel %vm2041, %v7163, %v7151
      %v7167 = vsel %vm2041, %v7164, %v7152
      %v7168 = vsel %vm2041, %v7165, %v7153
      %v7169 = vld [vmem:[%s6] sm:$0x7]
      %v7171 = vlaneseq
      %v7172 = vshrl.u32 %v7171, 7
      %v7173 = vsub.s32 0, %v7172
      %v7174 = vrot.slane %v7169, %v7173
      %v7175 = vlaneseq
      %v7176 = vshrl.u32 %v7175, 7
      %v7177 = vsub.s32 1, %v7176
      %v7178 = vrot.slane %v7169, %v7177
      %v7179 = vlaneseq
      %v7180 = vshrl.u32 %v7179, 7
      %v7181 = vsub.s32 2, %v7180
      %v7182 = vrot.slane %v7169, %v7181
      %v7186 = vadd.f32 %v7166, %v7174
      %v7187 = vadd.f32 %v7167, %v7178
      %v7188 = vadd.f32 %v7168, %v7182
      %v7189 = vsel %vm2046, %v7186, -inf
      %v7190 = vrot.slane %v7189, 4
      %v7191 = vmax.f32 %v7189, %v7190
      %v7192 = vrot.slane %v7191, 2
      %v7193 = vmax.f32 %v7191, %v7192
      %v7194 = vrot.slane %v7193, 1
      %v7195 = vmax.f32 %v7193, %v7194
      %v7196 = vsel %vm2046, %v7187, -inf
      %v7197 = vrot.slane %v7196, 4
      %v7198 = vmax.f32 %v7196, %v7197
      %v7199 = vrot.slane %v7198, 2
      %v7200 = vmax.f32 %v7198, %v7199
      %v7201 = vrot.slane %v7200, 1
      %v7202 = vmax.f32 %v7200, %v7201
      %vm7203 = vcmask 520192
      %v7204 = vsel %vm7203, %v7188, -inf
      %v7205 = vrot.slane %v7204, 4
      %v7206 = vmax.f32 %v7204, %v7205
      %v7207 = vrot.slane %v7206, 2
      %v7208 = vmax.f32 %v7206, %v7207
      %v7209 = vrot.slane %v7208, 1
      %v7210 = vmax.f32 %v7208, %v7209
      %7212 = vrot.lane.b32.xlu0 %v7195, 64
      %v7213 = vpop.permute.xlu0 %7212
      %v7215 = vmax.f32 %v7195, %v7213
      %v7216 = vmax.f32 %v7215, %v7202
      %7218 = vrot.lane.b32.xlu0 %v7202, 64
      %v7219 = vpop.permute.xlu0 %7218
      %v7221 = vmax.f32 %v7216, %v7219
      %v7222 = vmax.f32 %v7221, %v7210
      %v7223 = vld [vmem:[%s7] sm:$0xff]
      %v7224 = vld [vmem:[%s7 + $0x8] sm:$0xff]
      %v7225 = vld [vmem:[%s7 + $0x10] sm:$0xff]
      %v7226 = vld [vmem:[%s7 + $0x18] sm:$0xff]
      %v7227 = vld [vmem:[%s7 + $0x20] sm:$0xff]
      %v7228 = vld [vmem:[%s7 + $0x28] sm:$0xff]
      %v7229 = vld [vmem:[%s7 + $0x30] sm:$0xff]
      %v7230 = vld [vmem:[%s7 + $0x38] sm:$0xff]
      %v7231 = vld [vmem:[%s8] sm:$0x1]
      %vm7232 = vcmask 523264
      %v7234 = vsel %vm7232, %v7222, 0
      %7236 = vmatprep.subr.mxu0 0.0
      %7237 = vmatpush1.msra.mxu0 0.0
      %7238 = vmatprep.subr.mxu0 0.0
      %7239 = vmatpush1.msra.mxu0 0.0
      %7240 = vmatprep.subr.mxu0 0.0
      %7241 = vmatpush1.msra.mxu0 0.0
      %7242 = vmatprep.subr.mxu0 0.0
      %7243 = vmatpush1.msra.mxu0 0.0
      %7244 = vmatprep.subr.mxu0 0.0
      %7245 = vmatpush1.msra.mxu0 0.0
      %7246 = vmatprep.subr.mxu0 0.0
      %7247 = vmatpush1.msra.mxu0 0.0
      %7248 = vmatprep.subr.mxu0 0.0
      %7249 = vmatpush1.msra.mxu0 0.0
      %7250 = vmatprep.subr.mxu0 0.0
      %7251 = vmatpush1.msra.mxu0 0.0
      %7252 = vmatprep.subr.mxu0 0.0
      %7253 = vmatpush1.msra.mxu0 %v7230
      %7254 = vmatprep.subr.mxu0 0.0
      %7255 = vmatpush1.msra.mxu0 %v7229
      %7256 = vmatprep.subr.mxu0 0.0
      %7257 = vmatpush1.msra.mxu0 %v7228
      %7258 = vmatprep.subr.mxu0 0.0
      %7259 = vmatpush1.msra.mxu0 %v7227
      %7260 = vmatprep.subr.mxu0 0.0
      %7261 = vmatpush1.msra.mxu0 %v7226
      %7262 = vmatprep.subr.mxu0 0.0
      %7263 = vmatpush1.msra.mxu0 %v7225
      %7264 = vmatprep.subr.mxu0 0.0
      %7265 = vmatpush1.msra.mxu0 %v7224
      %7266 = vmatprep.subr.mxu0 0.0
      %7267 = vmatpush1.msra.mxu0 %v7223
      %7268 = vmatprep.subr.mxu0 0.0
      %7269 = vmatpush2.msra.mxu0 0.0
      %7270 = vmatprep.subr.mxu0 0.0
      %7271 = vmatpush2.msra.mxu0 0.0
      %7272 = vmatprep.subr.mxu0 0.0
      %7273 = vmatpush2.msra.mxu0 0.0
      %7274 = vmatprep.subr.mxu0 0.0
      %7275 = vmatpush2.msra.mxu0 0.0
      %7276 = vmatprep.subr.mxu0 0.0
      %7277 = vmatpush2.msra.mxu0 0.0
      %7278 = vmatprep.subr.mxu0 0.0
      %7279 = vmatpush2.msra.mxu0 0.0
      %7280 = vmatprep.subr.mxu0 0.0
      %7281 = vmatpush2.msra.mxu0 0.0
      %7282 = vmatprep.subr.mxu0 0.0
      %7283 = vmatpush2.msra.mxu0 0.0
      %7284 = vmatprep.subr.mxu0 0.0
      %7285 = vmatpush2.msra.mxu0 0.0
      %7286 = vmatprep.subr.mxu0 0.0
      %7287 = vmatpush2.msra.mxu0 0.0
      %7288 = vmatprep.subr.mxu0 0.0
      %7289 = vmatpush2.msra.mxu0 0.0
      %7290 = vmatprep.subr.mxu0 0.0
      %7291 = vmatpush2.msra.mxu0 0.0
      %7292 = vmatprep.subr.mxu0 0.0
      %7293 = vmatpush2.msra.mxu0 0.0
      %7294 = vmatprep.subr.mxu0 0.0
      %7295 = vmatpush2.msra.mxu0 0.0
      %7296 = vmatprep.subr.mxu0 0.0
      %7297 = vmatpush2.msra.mxu0 0.0
      %7298 = vmatprep.subr.mxu0 0.0
      %7299 = vmatpush2.msra.mxu0 0.0
      %7300 = vmatprep.mubr.f32.mxu0 0.0
      %7301 = vmatmul.mubr.f32.gmra.mxu0 %v7234
      %v7302 = vpop.f32.mrf.mxu0
      %v7303 = vadd.f32 %v7231, %v7302
      %v7304 = vpop.f32.mrf.mxu0
      %7305 = vdwg.mxu0
      %v7306 = vmax.f32 %v7303, 0.0
      %v7307 = vld [vmem:[%s9] sm:$0xff]
      %v7308 = vld [vmem:[%s9 + $0x8] sm:$0xff]
      %v7309 = vld [vmem:[%s9 + $0x10] sm:$0xff]
      %v7310 = vld [vmem:[%s9 + $0x18] sm:$0xff]
      %v7311 = vld [vmem:[#allocation2] sm:$0x1]
      %vm7312 = vcmask 261120
      %v7314 = vsel %vm7312, %v7306, 0
      %7316 = vmatprep.subr.mxu0 0.0
      %7317 = vmatpush1.msra.mxu0 0.0
      %7318 = vmatprep.subr.mxu0 0.0
      %7319 = vmatpush1.msra.mxu0 0.0
      %7320 = vmatprep.subr.mxu0 0.0
      %7321 = vmatpush1.msra.mxu0 0.0
      %7322 = vmatprep.subr.mxu0 0.0
      %7323 = vmatpush1.msra.mxu0 0.0
      %7324 = vmatprep.subr.mxu0 0.0
      %7325 = vmatpush1.msra.mxu0 0.0
      %7326 = vmatprep.subr.mxu0 0.0
      %7327 = vmatpush1.msra.mxu0 0.0
      %7328 = vmatprep.subr.mxu0 0.0
      %7329 = vmatpush1.msra.mxu0 0.0
      %7330 = vmatprep.subr.mxu0 0.0
      %7331 = vmatpush1.msra.mxu0 0.0
      %7332 = vmatprep.subr.mxu0 0.0
      %7333 = vmatpush1.msra.mxu0 0.0
      %7334 = vmatprep.subr.mxu0 0.0
      %7335 = vmatpush1.msra.mxu0 0.0
      %7336 = vmatprep.subr.mxu0 0.0
      %7337 = vmatpush1.msra.mxu0 0.0
      %7338 = vmatprep.subr.mxu0 0.0
      %7339 = vmatpush1.msra.mxu0 0.0
      %7340 = vmatprep.subr.mxu0 0.0
      %7341 = vmatpush1.msra.mxu0 %v7310
      %7342 = vmatprep.subr.mxu0 0.0
      %7343 = vmatpush1.msra.mxu0 %v7309
      %7344 = vmatprep.subr.mxu0 0.0
      %7345 = vmatpush1.msra.mxu0 %v7308
      %7346 = vmatprep.subr.mxu0 0.0
      %7347 = vmatpush1.msra.mxu0 %v7307
      %7348 = vmatprep.subr.mxu0 0.0
      %7349 = vmatpush2.msra.mxu0 0.0
      %7350 = vmatprep.subr.mxu0 0.0
      %7351 = vmatpush2.msra.mxu0 0.0
      %7352 = vmatprep.subr.mxu0 0.0
      %7353 = vmatpush2.msra.mxu0 0.0
      %7354 = vmatprep.subr.mxu0 0.0
      %7355 = vmatpush2.msra.mxu0 0.0
      %7356 = vmatprep.subr.mxu0 0.0
      %7357 = vmatpush2.msra.mxu0 0.0
      %7358 = vmatprep.subr.mxu0 0.0
      %7359 = vmatpush2.msra.mxu0 0.0
      %7360 = vmatprep.subr.mxu0 0.0
      %7361 = vmatpush2.msra.mxu0 0.0
      %7362 = vmatprep.subr.mxu0 0.0
      %7363 = vmatpush2.msra.mxu0 0.0
      %7364 = vmatprep.subr.mxu0 0.0
      %7365 = vmatpush2.msra.mxu0 0.0
      %7366 = vmatprep.subr.mxu0 0.0
      %7367 = vmatpush2.msra.mxu0 0.0
      %7368 = vmatprep.subr.mxu0 0.0
      %7369 = vmatpush2.msra.mxu0 0.0
      %7370 = vmatprep.subr.mxu0 0.0
      %7371 = vmatpush2.msra.mxu0 0.0
      %7372 = vmatprep.subr.mxu0 0.0
      %7373 = vmatpush2.msra.mxu0 0.0
      %7374 = vmatprep.subr.mxu0 0.0
      %7375 = vmatpush2.msra.mxu0 0.0
      %7376 = vmatprep.subr.mxu0 0.0
      %7377 = vmatpush2.msra.mxu0 0.0
      %7378 = vmatprep.subr.mxu0 0.0
      %7379 = vmatpush2.msra.mxu0 0.0
      %7380 = vmatprep.mubr.f32.mxu0 0.0
      %7381 = vmatmul.mubr.f32.gmra.mxu0 %v7314
      %v7382 = vpop.f32.mrf.mxu0
      %v7383 = vadd.f32 %v7311, %v7382
      %v7384 = vpop.f32.mrf.mxu0
      %7385 = vdwg.mxu0
      %v7386 = vxor.u32 %v7383, 2147483648
      %v7387 = vmul.f32 %v7386, 1.442695
      %v7388 = vpow.pop %v7387
      %v7389 = vadd.f32 %v7388, 1.0
      %v7390 = vrcp.pop %v7389
      %v7391 = vmul.f32 1.0, %v7390
      %vm7392 = vcmask 0
      %7393 = vst.msk [vmem:[%s384] sm:$0x1] %vm7392, %v7391
      %p7394 = scmp.lt.s32.totalorder %s24, 1
      %s7395 = scalar_select %p7394, %s24, 1
      %s7396 = scalar_lea.vmem %s11, %s7395
      // Predicated region
      $region65: #{net_forward.1} parent=63 // pred_check
        %p7397 = pneg %p278
      $region66: #{net_forward.1} parent=63 // pred_check_branch
        %7399 = sbr.rel (%p7397) target = $region68
      $region67: #{net_forward.1} parent=63 // pred_region
        _
      $region68: #{net_forward.1} parent=63 // pred_fallthru
        _
    $region64: #{net_forward.1} parent=5 // pred_fallthru
      _
    %p7400 = scmp.le.s32.totalorder 2, %s19
    // Predicated region
    $region69: #{net_forward.1} parent=5 // pred_check
      %p7401 = pneg %p7400
    $region70: #{net_forward.1} parent=5 // pred_check_branch
      %7403 = sbr.rel (%p7401) target = $region72
    $region71: #{net_forward.1} parent=5 // pred_region
      %s7404 = ssub.s32 %s19, 2
      // Predicated region
      $region73: #{net_forward.1} parent=71 // pred_check
        %p7405 = pneg %p284
      $region74: #{net_forward.1} parent=71 // pred_check_branch
        %7407 = sbr.rel (%p7405) target = $region76
      $region75: #{net_forward.1} parent=71 // pred_region
        %p7408 = scmp.lt.s32.totalorder %s25, 1
        %s7409 = scalar_select %p7408, %s25, 1
        %s7410 = scalar_lea.vmem %s11, %s7409
      $region76: #{net_forward.1} parent=71 // pred_fallthru
        _
    $region72: #{net_forward.1} parent=5 // pred_fallthru
      _
  $region6: #{net_forward.1} parent=0 // loop_footer
    %s23 = sadd.s32 1, %s19
  $region7: #{net_forward.1} parent=0 // loop_footer_branch
    %18 = sbr.rel target = $region3
  $region8: #{net_forward.1} parent=0 // loop_exit
    _

</llo_original>
